<compile_context>
chip_gen: v5e
topology: v5e:2x2
jax: 0.10.0
libtpu: 0.0.40
codegen_flags: <defaults>
</compile_context>

<pallas_src>
import functools
import numpy as np

import jax
import jax.numpy as jnp
from jax import lax
from jax.experimental import pallas as pl
from jax.experimental.pallas import tpu as pltpu


# ----------------------------------------------------------------------------
# Fused per-layer kernel factory
# ----------------------------------------------------------------------------

def _make_layer_kernel(with_attn: bool, with_head: bool):
    """Fused layer kernel for one batch element (one grid step).

    Ref order (inputs):  patches, conv_w, conv_b,
                         [wqkv, bqkv, wout, bout, rel_bias]   if with_attn
                         [cls_w, cls_b]                        if with_head
    Ref order (outputs): o, [pooled, cls]                      if with_head
    """

    def kernel(*refs):
        it = iter(refs)
        p_ref = next(it)            # (1, HW, 9*Cin) im2col patches (f32)
        cw_ref = next(it)           # (9*Cin, C)     conv weight (bf16)
        cb_ref = next(it)           # (1, C)         conv bias (f32)
        if with_attn:
            wqkv_ref = next(it)     # (C, 3*inner)   packed q|k|v, head-major (bf16; scale folded into q)
            bqkv_ref = next(it)     # (1, 3*inner)   (f32; scale folded into q part)
            wout_ref = next(it)     # (inner, C)     packed to_out (bf16)
            bout_ref = next(it)     # (1, C)         (f32)
            bias_ref = next(it)     # (heads, HW, HW) rel-pos bias * scale (bf16)
        if with_head:
            clsw_ref = next(it)     # (C, num_class) (bf16)
            clsb_ref = next(it)     # (1, num_class) (f32)
        o_ref = next(it)            # (1, HW, C)
        if with_head:
            pooled_ref = next(it)   # (1, 1, C)
            cls_ref = next(it)      # (1, 1, num_class)

        hw = p_ref.shape[1]
        C = o_ref.shape[2]
        tq = 128 if hw % 128 == 0 else hw       # query tile bounds the vreg working set

        # ---- 3x3/stride-2 conv as im2col matmul (+bias, ReLU); bf16 MXU, f32 acc ----
        patches = p_ref[0].astype(jnp.bfloat16)
        x = jnp.dot(patches, cw_ref[...], preferred_element_type=jnp.float32)
        x = jnp.maximum(x + cb_ref[...], 0.0)                          # (HW, C) f32

        if with_attn:
            heads = bias_ref.shape[0]
            inner = wout_ref.shape[0]
            dh = inner // heads
            # Packed qkv projection: ONE (HW, C) @ (C, 3*inner) matmul.
            qkv = (jnp.dot(x.astype(jnp.bfloat16), wqkv_ref[...],
                           preferred_element_type=jnp.float32) + bqkv_ref[...])
            kb = qkv[:, inner:2 * inner].astype(jnp.bfloat16)          # (HW, inner)
            vb = qkv[:, 2 * inner:3 * inner].astype(jnp.bfloat16)      # (HW, inner)

        pooled_sum = jnp.zeros((1, C), jnp.float32) if with_head else None

        for q0 in range(0, hw, tq):                                    # static unroll (<=2 tiles)
            xt = x[q0:q0 + tq, :]
            if with_attn:
                outs = []
                for h in range(heads):                                 # static unroll (heads small)
                    qh = qkv[q0:q0 + tq, h * dh:(h + 1) * dh].astype(jnp.bfloat16)
                    kh = kb[:, h * dh:(h + 1) * dh]
                    # (q*scale) @ k^T + scale*bias == (q @ k^T + bias) * scale   (PyTorch order)
                    s = lax.dot_general(qh, kh, (((1,), (1,)), ((), ())),
                                        preferred_element_type=jnp.float32)     # (tq, HW)
                    s = s + bias_ref[h, q0:q0 + tq, :].astype(jnp.float32)
                    m = jnp.max(s, axis=-1, keepdims=True)
                    p = jnp.exp(s - m)
                    l = jnp.sum(p, axis=-1, keepdims=True)
                    oh = jnp.dot(p.astype(jnp.bfloat16), vb[:, h * dh:(h + 1) * dh],
                                 preferred_element_type=jnp.float32)            # (tq, dh)
                    outs.append(oh * pl.reciprocal(l, approx=True))             # softmax denom on EUP
                # Packed to_out: ONE (tq, inner) @ (inner, C) matmul (head reduction on the MXU).
                attn = jnp.concatenate(outs, axis=-1).astype(jnp.bfloat16)
                proj = jnp.dot(attn, wout_ref[...], preferred_element_type=jnp.float32)
                res = xt + proj + bout_ref[...]
            else:
                res = xt
            # Single write per tile (no read-modify-write on the output ref).
            o_ref[0, q0:q0 + tq, :] = res
            if with_head:
                pooled_sum = pooled_sum + jnp.sum(res, axis=0, keepdims=True)

        if with_head:
            # Fused AdaptiveAvgPool2d(1) + Flatten + CLS Linear epilogue.
            pooled = pooled_sum * (1.0 / hw)
            pooled_ref[0] = pooled
            cls_ref[0] = (jnp.dot(pooled.astype(jnp.bfloat16), clsw_ref[...],
                                  preferred_element_type=jnp.float32) + clsb_ref[...])

    return kernel


# ----------------------------------------------------------------------------
# Per-layer wrapper
# ----------------------------------------------------------------------------

def run_layer(z_nhwc, lp, *, with_attn, head_params=None, expected_rs=None):
    """conv3x3/s2/p1 + ReLU [+ LinearAttention + residual] [+ pooled/CLS head]."""
    with_head = head_params is not None
    B, H, W, Cin = z_nhwc.shape
    Ho, Wo = H // 2, W // 2
    hw = Ho * Wo
    Cout = lp["conv_b"].shape[-1]
    if with_attn and expected_rs is not None:
        # TODO(synk): the bilinear 'interp' k/v resize only triggers when H != reduce_size,
        # which never happens for MTL2d_DeepSVDD (reduce_size == feature size per stage).
        assert Ho == expected_rs and Wo == expected_rs

    # XLA-side im2col glue (compact; <100 KiB per layer at these sizes).
    xp = jnp.pad(z_nhwc, ((0, 0), (1, 1), (1, 1), (0, 0)))
    cols = []
    for kh in range(3):
        for kw in range(3):
            cols.append(xp[:, kh:kh + H - 1:2, kw:kw + W - 1:2, :])
    patches = jnp.concatenate(cols, axis=-1).reshape(B, hw, 9 * Cin)

    def resident(arr):
        shape = arr.shape
        return pl.BlockSpec(shape, lambda b, _n=len(shape): (0,) * _n)

    inputs = [patches, lp["conv_w"], lp["conv_b"]]
    in_specs = [pl.BlockSpec((1, hw, 9 * Cin), lambda b: (b, 0, 0)),
                resident(lp["conv_w"]), resident(lp["conv_b"])]
    if with_attn:
        ap = lp["attn"]
        for name in ("wqkv", "bqkv", "wout", "bout", "rel_bias"):
            inputs.append(ap[name])
            in_specs.append(resident(ap[name]))
    if with_head:
        cls_w, cls_b = head_params
        inputs += [cls_w, cls_b]
        in_specs += [resident(cls_w), resident(cls_b)]

    if with_head:
        N = head_params[0].shape[-1]
        out_shape = (jax.ShapeDtypeStruct((B, hw, Cout), jnp.float32),
                     jax.ShapeDtypeStruct((B, 1, Cout), jnp.float32),
                     jax.ShapeDtypeStruct((B, 1, N), jnp.float32))
        out_specs = (pl.BlockSpec((1, hw, Cout), lambda b: (b, 0, 0)),
                     pl.BlockSpec((1, 1, Cout), lambda b: (b, 0, 0)),
                     pl.BlockSpec((1, 1, N), lambda b: (b, 0, 0)))
    else:
        out_shape = jax.ShapeDtypeStruct((B, hw, Cout), jnp.float32)
        out_specs = pl.BlockSpec((1, hw, Cout), lambda b: (b, 0, 0))

    res = pl.pallas_call(
        _make_layer_kernel(with_attn, with_head),
        out_shape=out_shape,
        grid=(B,),
        in_specs=in_specs,
        out_specs=out_specs,
        compiler_params=pltpu.CompilerParams(dimension_semantics=("parallel",)),
    )(*inputs)

    if with_head:
        z_out, pooled, cls = res
        return (z_out.reshape(B, Ho, Wo, Cout),
                pooled.reshape(B, Cout), cls.reshape(B, -1))
    return res.reshape(B, Ho, Wo, Cout)


# ----------------------------------------------------------------------------
# Parameter setup (deterministic, synthetic; PyTorch layouts repacked for the kernel)
# ----------------------------------------------------------------------------

def make_rel_pos_bias(table, h, w):
    """RelativePositionBias for the H==h, W==w case -> (heads, h*w, h*w) (numpy)."""
    coords = np.stack(np.meshgrid(np.arange(h), np.arange(w), indexing="ij"))
    cf = coords.reshape(2, -1)
    rel = cf[:, :, None] - cf[:, None, :]
    rel = rel.transpose(1, 2, 0).astype(np.int64)
    rel[:, :, 0] += h - 1
    rel[:, :, 1] += w - 1
    rel[:, :, 0] *= 2 * h - 1                    # matches the PyTorch code exactly
    idx = rel.sum(-1).reshape(-1)
    bias = table[idx].reshape(h * w, h * w, -1)
    return np.transpose(bias, (2, 0, 1)).astype(np.float32)


def _prepare_attn_params(wqkv, bqkv, wout, bout, table, *, heads, dim_head, reduce_size):
    """Repack PyTorch-layout 1x1-conv params into head-major PACKED arrays.

    PyTorch channel layout for to_qkv output / to_out input is '(dim_head heads)',
    i.e. channel = d*heads + h.  We repack to channel = h*dim_head + d so per-head
    slices inside the kernel are contiguous lane ranges and the projections become
    single wide matmuls.  The softmax scale is folded into the q projection / q bias
    and the rel-pos bias:  (q @ k^T + bias) * scale == (scale*q) @ k^T + scale*bias.
    """
    inner = heads * dim_head
    scale = float(dim_head) ** (-0.5)
    perm = np.concatenate([np.arange(dim_head) * heads + h for h in range(heads)])
    cols = np.concatenate([perm, inner + perm, 2 * inner + perm])

    wqkv_p = np.asarray(wqkv)[:, cols].astype(np.float32)
    bqkv_p = np.asarray(bqkv)[cols].astype(np.float32)
    wqkv_p[:, :inner] *= scale
    bqkv_p[:inner] *= scale
    wout_p = np.asarray(wout)[perm, :].astype(np.float32)
    rel = make_rel_pos_bias(np.asarray(table), reduce_size, reduce_size) * scale
    return {
        "wqkv": jnp.asarray(wqkv_p, jnp.bfloat16),
        "bqkv": jnp.asarray(bqkv_p.reshape(1, -1), jnp.float32),
        "wout": jnp.asarray(wout_p, jnp.bfloat16),
        "bout": jnp.asarray(bout, jnp.float32).reshape(1, -1),
        "rel_bias": jnp.asarray(rel, jnp.bfloat16),
    }


def init_params(key, *, num_class, num_head, input_size, in_channels, num_layer):
    if input_size < 32:                        # matches the PyTorch constructor
        num_layer = min(2, num_layer)
    keys = jax.random.split(key, 8 * num_layer + 2)
    ki = iter(range(len(keys)))

    def nrm(shape, s=0.05):
        return jax.random.normal(keys[next(ki)], shape, jnp.float32) * s

    params = {}
    reduce_sizes = []
    chans = [in_channels, 16, 32, 64, 128, 256]
    for l in range(num_layer):
        cin, cout = chans[l], chans[l + 1]
        dim_head = cout // num_head
        inner = dim_head * num_head
        rs = input_size // (2 ** (l + 1))
        conv_w = nrm((3, 3, cin, cout))
        conv_b = nrm((cout,))
        wqkv = nrm((cout, 3 * inner))
        bqkv = nrm((3 * inner,))
        wout = nrm((inner, cout))
        bout = nrm((cout,))
        table = nrm(((2 * rs - 1) * (2 * rs - 1), num_head), 0.02)
        params[f"layer{l}"] = {
            "conv_w": jnp.asarray(conv_w, jnp.bfloat16).reshape(9 * cin, cout),
            "conv_b": jnp.asarray(conv_b, jnp.float32).reshape(1, cout),
            "attn": _prepare_attn_params(wqkv, bqkv, wout, bout, table,
                                         heads=num_head, dim_head=dim_head,
                                         reduce_size=rs),
        }
        reduce_sizes.append(rs)
    in_chan = 8 * 2 ** num_layer
    params["cls_w"] = jnp.asarray(nrm((in_chan, num_class)), jnp.bfloat16)
    params["cls_b"] = jnp.asarray(nrm((num_class,)), jnp.float32).reshape(1, num_class)
    return params, tuple(reduce_sizes)


# ----------------------------------------------------------------------------
# Full forward
# ----------------------------------------------------------------------------

def mtl2d_deepsvdd_forward(x_nchw, params, *, reduce_sizes, att_layer):
    z = jnp.transpose(x_nchw, (0, 2, 3, 1))               # NCHW -> NHWC
    num_layer = len(reduce_sizes)
    pooled = cls_out = None
    for l, rs in enumerate(reduce_sizes):
        lp = params[f"layer{l}"]
        with_attn = l in att_layer
        if l == num_layer - 1:
            z, pooled, cls_out = run_layer(
                z, lp, with_attn=with_attn, expected_rs=rs,
                head_params=(params["cls_w"], params["cls_b"]))
        else:
            z = run_layer(z, lp, with_attn=with_attn, expected_rs=rs)
    return pooled, cls_out


# ----------------------------------------------------------------------------
# Main
# ----------------------------------------------------------------------------

if __name__ == "__main__":
    num_class, num_head, num_layer = 4, 3, 3
    att_layer = (0, 1, 2)
    input_size, in_channels, batch = 32, 1, 2

    key = jax.random.PRNGKey(0)
    pkey, xkey = jax.random.split(key)
    params, reduce_sizes = init_params(pkey, num_class=num_class, num_head=num_head,
                                       input_size=input_size, in_channels=in_channels,
                                       num_layer=num_layer)
    x = jax.random.normal(xkey, (batch, in_channels, input_size, input_size), jnp.float32)

    fwd = jax.jit(functools.partial(mtl2d_deepsvdd_forward,
                                    reduce_sizes=reduce_sizes, att_layer=att_layer))
    pooled, cls_out = fwd(x, params)
    jax.block_until_ready((pooled, cls_out))

    assert pooled.shape == (batch, 8 * 2 ** len(reduce_sizes))
    assert cls_out.shape == (batch, num_class)
    assert bool(jnp.all(jnp.isfinite(pooled))) and bool(jnp.all(jnp.isfinite(cls_out)))
    print("KERNEL_OK")
</pallas_src>

<mosaic_0001>
module attributes {stable_mosaic.version = 11 : i64} {
  func.func @kernel(%arg0: i32, %arg1: memref<1x256x9xf32, #tpu.memory_space<vmem>>, %arg2: memref<9x16xbf16, #tpu.memory_space<vmem>>, %arg3: memref<1x16xf32, #tpu.memory_space<vmem>>, %arg4: memref<16x45xbf16, #tpu.memory_space<vmem>>, %arg5: memref<1x45xf32, #tpu.memory_space<vmem>>, %arg6: memref<15x16xbf16, #tpu.memory_space<vmem>>, %arg7: memref<1x16xf32, #tpu.memory_space<vmem>>, %arg8: memref<3x256x256xbf16, #tpu.memory_space<vmem>>, %arg9: memref<1x256x16xf32, #tpu.memory_space<vmem>>) attributes {dimension_semantics = [#tpu.dimension_semantics<parallel>], iteration_bounds = array<i64: 2>, scalar_prefetch = 0 : i64, scratch_operands = 0 : i64, tpu.core_type = #tpu.core_type<tc>, window_params = [{transform_indices = @transform_0, window_bounds = array<i64: 1, 256, 9>}, {pipeline_mode = #tpu.pipeline_mode<synchronous>, transform_indices = @transform_1, window_bounds = array<i64: 9, 16>}, {pipeline_mode = #tpu.pipeline_mode<synchronous>, transform_indices = @transform_2, window_bounds = array<i64: 1, 16>}, {pipeline_mode = #tpu.pipeline_mode<synchronous>, transform_indices = @transform_3, window_bounds = array<i64: 16, 45>}, {pipeline_mode = #tpu.pipeline_mode<synchronous>, transform_indices = @transform_4, window_bounds = array<i64: 1, 45>}, {pipeline_mode = #tpu.pipeline_mode<synchronous>, transform_indices = @transform_5, window_bounds = array<i64: 15, 16>}, {pipeline_mode = #tpu.pipeline_mode<synchronous>, transform_indices = @transform_6, window_bounds = array<i64: 1, 16>}, {pipeline_mode = #tpu.pipeline_mode<synchronous>, transform_indices = @transform_7, window_bounds = array<i64: 3, 256, 256>}, {transform_indices = @transform_8, window_bounds = array<i64: 1, 256, 16>}]} {
    %c0 = arith.constant 0 : index
    %c0_0 = arith.constant 0 : index
    %c0_1 = arith.constant 0 : index
    %0 = vector.load %arg1[%c0, %c0_0, %c0_1] : memref<1x256x9xf32, #tpu.memory_space<vmem>>, vector<1x256x9xf32>
    %1 = vector.shape_cast %0 : vector<1x256x9xf32> to vector<256x9xf32>
    %2 = arith.truncf %1 : vector<256x9xf32> to vector<256x9xbf16>
    %c0_2 = arith.constant 0 : index
    %c0_3 = arith.constant 0 : index
    %3 = vector.load %arg2[%c0_2, %c0_3] : memref<9x16xbf16, #tpu.memory_space<vmem>>, vector<9x16xbf16>
    %cst = arith.constant dense<0.000000e+00> : vector<256x16xf32>
    %4 = tpu.matmul %2, %3, %cst {dimension_numbers = #tpu.dot_dimension_numbers<[1], [0], [0], [1], [0, 0, 1, 1], [], []>} : vector<256x9xbf16>, vector<9x16xbf16>, vector<256x16xf32> -> vector<256x16xf32>
    %c0_4 = arith.constant 0 : index
    %c0_5 = arith.constant 0 : index
    %5 = vector.load %arg3[%c0_4, %c0_5] : memref<1x16xf32, #tpu.memory_space<vmem>>, vector<1x16xf32>
    %6 = vector.broadcast %5 : vector<1x16xf32> to vector<256x16xf32>
    %7 = arith.addf %4, %6 : vector<256x16xf32>
    %cst_6 = arith.constant 0.000000e+00 : f32
    %8 = vector.broadcast %cst_6 : f32 to vector<256x16xf32>
    %9 = arith.maximumf %7, %8 : vector<256x16xf32>
    %10 = arith.truncf %9 : vector<256x16xf32> to vector<256x16xbf16>
    %c0_7 = arith.constant 0 : index
    %c0_8 = arith.constant 0 : index
    %11 = vector.load %arg4[%c0_7, %c0_8] : memref<16x45xbf16, #tpu.memory_space<vmem>>, vector<16x45xbf16>
    %cst_9 = arith.constant dense<0.000000e+00> : vector<256x45xf32>
    %12 = tpu.matmul %10, %11, %cst_9 {dimension_numbers = #tpu.dot_dimension_numbers<[1], [0], [0], [1], [0, 0, 1, 1], [], []>} : vector<256x16xbf16>, vector<16x45xbf16>, vector<256x45xf32> -> vector<256x45xf32>
    %c0_10 = arith.constant 0 : index
    %c0_11 = arith.constant 0 : index
    %13 = vector.load %arg5[%c0_10, %c0_11] : memref<1x45xf32, #tpu.memory_space<vmem>>, vector<1x45xf32>
    %14 = vector.broadcast %13 : vector<1x45xf32> to vector<256x45xf32>
    %15 = arith.addf %12, %14 : vector<256x45xf32>
    %16 = vector.extract_strided_slice %15 {offsets = [0, 15], sizes = [256, 15], strides = [1, 1]} : vector<256x45xf32> to vector<256x15xf32>
    %17 = arith.truncf %16 : vector<256x15xf32> to vector<256x15xbf16>
    %18 = vector.extract_strided_slice %15 {offsets = [0, 30], sizes = [256, 15], strides = [1, 1]} : vector<256x45xf32> to vector<256x15xf32>
    %19 = arith.truncf %18 : vector<256x15xf32> to vector<256x15xbf16>
    %20 = vector.extract_strided_slice %9 {offsets = [0, 0], sizes = [128, 16], strides = [1, 1]} : vector<256x16xf32> to vector<128x16xf32>
    %21 = vector.extract_strided_slice %15 {offsets = [0, 0], sizes = [128, 5], strides = [1, 1]} : vector<256x45xf32> to vector<128x5xf32>
    %22 = arith.truncf %21 : vector<128x5xf32> to vector<128x5xbf16>
    %23 = vector.extract_strided_slice %17 {offsets = [0, 0], sizes = [256, 5], strides = [1, 1]} : vector<256x15xbf16> to vector<256x5xbf16>
    %cst_12 = arith.constant dense<0.000000e+00> : vector<128x256xf32>
    %24 = tpu.matmul %22, %23, %cst_12 {dimension_numbers = #tpu.dot_dimension_numbers<[1], [1], [0], [0], [0, 0, 1, 0], [], []>} : vector<128x5xbf16>, vector<256x5xbf16>, vector<128x256xf32> -> vector<128x256xf32>
    %c0_13 = arith.constant 0 : index
    %c0_14 = arith.constant 0 : index
    %c0_15 = arith.constant 0 : index
    %25 = vector.load %arg8[%c0_13, %c0_14, %c0_15] : memref<3x256x256xbf16, #tpu.memory_space<vmem>>, vector<1x128x256xbf16>
    %26 = vector.shape_cast %25 : vector<1x128x256xbf16> to vector<128x256xbf16>
    %27 = arith.extf %26 : vector<128x256xbf16> to vector<128x256xf32>
    %28 = arith.addf %24, %27 : vector<128x256xf32>
    %cst_16 = arith.constant dense<0xFF800000> : vector<128xf32>
    %29 = vector.multi_reduction <maximumf>, %28, %cst_16 [1] : vector<128x256xf32> to vector<128xf32>
    %30 = vector.shape_cast %29 : vector<128xf32> to vector<128x1xf32>
    %31 = vector.broadcast %30 : vector<128x1xf32> to vector<128x256xf32>
    %32 = arith.subf %28, %31 : vector<128x256xf32>
    %33 = math.exp %32 : vector<128x256xf32>
    %cst_17 = arith.constant dense<0.000000e+00> : vector<128xf32>
    %34 = vector.multi_reduction <add>, %33, %cst_17 [1] : vector<128x256xf32> to vector<128xf32>
    %35 = vector.shape_cast %34 : vector<128xf32> to vector<128x1xf32>
    %36 = arith.truncf %33 : vector<128x256xf32> to vector<128x256xbf16>
    %37 = vector.extract_strided_slice %19 {offsets = [0, 0], sizes = [256, 5], strides = [1, 1]} : vector<256x15xbf16> to vector<256x5xbf16>
    %cst_18 = arith.constant dense<0.000000e+00> : vector<128x5xf32>
    %38 = tpu.matmul %36, %37, %cst_18 {dimension_numbers = #tpu.dot_dimension_numbers<[1], [0], [0], [1], [0, 0, 1, 1], [], []>} : vector<128x256xbf16>, vector<256x5xbf16>, vector<128x5xf32> -> vector<128x5xf32>
    %39 = tpu.reciprocal %35 {approx = true} : vector<128x1xf32> -> vector<128x1xf32>
    %40 = vector.broadcast %39 : vector<128x1xf32> to vector<128x5xf32>
    %41 = arith.mulf %38, %40 : vector<128x5xf32>
    %42 = vector.extract_strided_slice %15 {offsets = [0, 5], sizes = [128, 5], strides = [1, 1]} : vector<256x45xf32> to vector<128x5xf32>
    %43 = arith.truncf %42 : vector<128x5xf32> to vector<128x5xbf16>
    %44 = vector.extract_strided_slice %17 {offsets = [0, 5], sizes = [256, 5], strides = [1, 1]} : vector<256x15xbf16> to vector<256x5xbf16>
    %cst_19 = arith.constant dense<0.000000e+00> : vector<128x256xf32>
    %45 = tpu.matmul %43, %44, %cst_19 {dimension_numbers = #tpu.dot_dimension_numbers<[1], [1], [0], [0], [0, 0, 1, 0], [], []>} : vector<128x5xbf16>, vector<256x5xbf16>, vector<128x256xf32> -> vector<128x256xf32>
    %c1 = arith.constant 1 : index
    %c0_20 = arith.constant 0 : index
    %c0_21 = arith.constant 0 : index
    %46 = vector.load %arg8[%c1, %c0_20, %c0_21] : memref<3x256x256xbf16, #tpu.memory_space<vmem>>, vector<1x128x256xbf16>
    %47 = vector.shape_cast %46 : vector<1x128x256xbf16> to vector<128x256xbf16>
    %48 = arith.extf %47 : vector<128x256xbf16> to vector<128x256xf32>
    %49 = arith.addf %45, %48 : vector<128x256xf32>
    %cst_22 = arith.constant dense<0xFF800000> : vector<128xf32>
    %50 = vector.multi_reduction <maximumf>, %49, %cst_22 [1] : vector<128x256xf32> to vector<128xf32>
    %51 = vector.shape_cast %50 : vector<128xf32> to vector<128x1xf32>
    %52 = vector.broadcast %51 : vector<128x1xf32> to vector<128x256xf32>
    %53 = arith.subf %49, %52 : vector<128x256xf32>
    %54 = math.exp %53 : vector<128x256xf32>
    %cst_23 = arith.constant dense<0.000000e+00> : vector<128xf32>
    %55 = vector.multi_reduction <add>, %54, %cst_23 [1] : vector<128x256xf32> to vector<128xf32>
    %56 = vector.shape_cast %55 : vector<128xf32> to vector<128x1xf32>
    %57 = arith.truncf %54 : vector<128x256xf32> to vector<128x256xbf16>
    %58 = vector.extract_strided_slice %19 {offsets = [0, 5], sizes = [256, 5], strides = [1, 1]} : vector<256x15xbf16> to vector<256x5xbf16>
    %cst_24 = arith.constant dense<0.000000e+00> : vector<128x5xf32>
    %59 = tpu.matmul %57, %58, %cst_24 {dimension_numbers = #tpu.dot_dimension_numbers<[1], [0], [0], [1], [0, 0, 1, 1], [], []>} : vector<128x256xbf16>, vector<256x5xbf16>, vector<128x5xf32> -> vector<128x5xf32>
    %60 = tpu.reciprocal %56 {approx = true} : vector<128x1xf32> -> vector<128x1xf32>
    %61 = vector.broadcast %60 : vector<128x1xf32> to vector<128x5xf32>
    %62 = arith.mulf %59, %61 : vector<128x5xf32>
    %63 = vector.extract_strided_slice %15 {offsets = [0, 10], sizes = [128, 5], strides = [1, 1]} : vector<256x45xf32> to vector<128x5xf32>
    %64 = arith.truncf %63 : vector<128x5xf32> to vector<128x5xbf16>
    %65 = vector.extract_strided_slice %17 {offsets = [0, 10], sizes = [256, 5], strides = [1, 1]} : vector<256x15xbf16> to vector<256x5xbf16>
    %cst_25 = arith.constant dense<0.000000e+00> : vector<128x256xf32>
    %66 = tpu.matmul %64, %65, %cst_25 {dimension_numbers = #tpu.dot_dimension_numbers<[1], [1], [0], [0], [0, 0, 1, 0], [], []>} : vector<128x5xbf16>, vector<256x5xbf16>, vector<128x256xf32> -> vector<128x256xf32>
    %c2 = arith.constant 2 : index
    %c0_26 = arith.constant 0 : index
    %c0_27 = arith.constant 0 : index
    %67 = vector.load %arg8[%c2, %c0_26, %c0_27] : memref<3x256x256xbf16, #tpu.memory_space<vmem>>, vector<1x128x256xbf16>
    %68 = vector.shape_cast %67 : vector<1x128x256xbf16> to vector<128x256xbf16>
    %69 = arith.extf %68 : vector<128x256xbf16> to vector<128x256xf32>
    %70 = arith.addf %66, %69 : vector<128x256xf32>
    %cst_28 = arith.constant dense<0xFF800000> : vector<128xf32>
    %71 = vector.multi_reduction <maximumf>, %70, %cst_28 [1] : vector<128x256xf32> to vector<128xf32>
    %72 = vector.shape_cast %71 : vector<128xf32> to vector<128x1xf32>
    %73 = vector.broadcast %72 : vector<128x1xf32> to vector<128x256xf32>
    %74 = arith.subf %70, %73 : vector<128x256xf32>
    %75 = math.exp %74 : vector<128x256xf32>
    %cst_29 = arith.constant dense<0.000000e+00> : vector<128xf32>
    %76 = vector.multi_reduction <add>, %75, %cst_29 [1] : vector<128x256xf32> to vector<128xf32>
    %77 = vector.shape_cast %76 : vector<128xf32> to vector<128x1xf32>
    %78 = arith.truncf %75 : vector<128x256xf32> to vector<128x256xbf16>
    %79 = vector.extract_strided_slice %19 {offsets = [0, 10], sizes = [256, 5], strides = [1, 1]} : vector<256x15xbf16> to vector<256x5xbf16>
    %cst_30 = arith.constant dense<0.000000e+00> : vector<128x5xf32>
    %80 = tpu.matmul %78, %79, %cst_30 {dimension_numbers = #tpu.dot_dimension_numbers<[1], [0], [0], [1], [0, 0, 1, 1], [], []>} : vector<128x256xbf16>, vector<256x5xbf16>, vector<128x5xf32> -> vector<128x5xf32>
    %81 = tpu.reciprocal %77 {approx = true} : vector<128x1xf32> -> vector<128x1xf32>
    %82 = vector.broadcast %81 : vector<128x1xf32> to vector<128x5xf32>
    %83 = arith.mulf %80, %82 : vector<128x5xf32>
    %84 = tpu.concatenate %41, %62, %83 in 1 : vector<128x5xf32>, vector<128x5xf32>, vector<128x5xf32> -> vector<128x15xf32>
    %85 = arith.truncf %84 : vector<128x15xf32> to vector<128x15xbf16>
    %c0_31 = arith.constant 0 : index
    %c0_32 = arith.constant 0 : index
    %86 = vector.load %arg6[%c0_31, %c0_32] : memref<15x16xbf16, #tpu.memory_space<vmem>>, vector<15x16xbf16>
    %cst_33 = arith.constant dense<0.000000e+00> : vector<128x16xf32>
    %87 = tpu.matmul %85, %86, %cst_33 {dimension_numbers = #tpu.dot_dimension_numbers<[1], [0], [0], [1], [0, 0, 1, 1], [], []>} : vector<128x15xbf16>, vector<15x16xbf16>, vector<128x16xf32> -> vector<128x16xf32>
    %88 = arith.addf %20, %87 : vector<128x16xf32>
    %c0_34 = arith.constant 0 : index
    %c0_35 = arith.constant 0 : index
    %89 = vector.load %arg7[%c0_34, %c0_35] : memref<1x16xf32, #tpu.memory_space<vmem>>, vector<1x16xf32>
    %90 = vector.broadcast %89 : vector<1x16xf32> to vector<128x16xf32>
    %91 = arith.addf %88, %90 : vector<128x16xf32>
    %c0_36 = arith.constant 0 : index
    %c0_37 = arith.constant 0 : index
    %c0_38 = arith.constant 0 : index
    %92 = vector.load %arg9[%c0_36, %c0_37, %c0_38] : memref<1x256x16xf32, #tpu.memory_space<vmem>>, vector<1x128x16xf32>
    %93 = vector.shape_cast %92 : vector<1x128x16xf32> to vector<128x16xf32>
    %94 = vector.shape_cast %91 : vector<128x16xf32> to vector<1x128x16xf32>
    tpu.vector_store %arg9[%c0_36, %c0_37, %c0_38], %94 {strides = array<i32>} : memref<1x256x16xf32, #tpu.memory_space<vmem>>, vector<1x128x16xf32>,
    %95 = vector.extract_strided_slice %9 {offsets = [128, 0], sizes = [128, 16], strides = [1, 1]} : vector<256x16xf32> to vector<128x16xf32>
    %96 = vector.extract_strided_slice %15 {offsets = [128, 0], sizes = [128, 5], strides = [1, 1]} : vector<256x45xf32> to vector<128x5xf32>
    %97 = arith.truncf %96 : vector<128x5xf32> to vector<128x5xbf16>
    %98 = vector.extract_strided_slice %17 {offsets = [0, 0], sizes = [256, 5], strides = [1, 1]} : vector<256x15xbf16> to vector<256x5xbf16>
    %cst_39 = arith.constant dense<0.000000e+00> : vector<128x256xf32>
    %99 = tpu.matmul %97, %98, %cst_39 {dimension_numbers = #tpu.dot_dimension_numbers<[1], [1], [0], [0], [0, 0, 1, 0], [], []>} : vector<128x5xbf16>, vector<256x5xbf16>, vector<128x256xf32> -> vector<128x256xf32>
    %c0_40 = arith.constant 0 : index
    %c128 = arith.constant 128 : index
    %c0_41 = arith.constant 0 : index
    %100 = vector.load %arg8[%c0_40, %c128, %c0_41] : memref<3x256x256xbf16, #tpu.memory_space<vmem>>, vector<1x128x256xbf16>
    %101 = vector.shape_cast %100 : vector<1x128x256xbf16> to vector<128x256xbf16>
    %102 = arith.extf %101 : vector<128x256xbf16> to vector<128x256xf32>
    %103 = arith.addf %99, %102 : vector<128x256xf32>
    %cst_42 = arith.constant dense<0xFF800000> : vector<128xf32>
    %104 = vector.multi_reduction <maximumf>, %103, %cst_42 [1] : vector<128x256xf32> to vector<128xf32>
    %105 = vector.shape_cast %104 : vector<128xf32> to vector<128x1xf32>
    %106 = vector.broadcast %105 : vector<128x1xf32> to vector<128x256xf32>
    %107 = arith.subf %103, %106 : vector<128x256xf32>
    %108 = math.exp %107 : vector<128x256xf32>
    %cst_43 = arith.constant dense<0.000000e+00> : vector<128xf32>
    %109 = vector.multi_reduction <add>, %108, %cst_43 [1] : vector<128x256xf32> to vector<128xf32>
    %110 = vector.shape_cast %109 : vector<128xf32> to vector<128x1xf32>
    %111 = arith.truncf %108 : vector<128x256xf32> to vector<128x256xbf16>
    %112 = vector.extract_strided_slice %19 {offsets = [0, 0], sizes = [256, 5], strides = [1, 1]} : vector<256x15xbf16> to vector<256x5xbf16>
    %cst_44 = arith.constant dense<0.000000e+00> : vector<128x5xf32>
    %113 = tpu.matmul %111, %112, %cst_44 {dimension_numbers = #tpu.dot_dimension_numbers<[1], [0], [0], [1], [0, 0, 1, 1], [], []>} : vector<128x256xbf16>, vector<256x5xbf16>, vector<128x5xf32> -> vector<128x5xf32>
    %114 = tpu.reciprocal %110 {approx = true} : vector<128x1xf32> -> vector<128x1xf32>
    %115 = vector.broadcast %114 : vector<128x1xf32> to vector<128x5xf32>
    %116 = arith.mulf %113, %115 : vector<128x5xf32>
    %117 = vector.extract_strided_slice %15 {offsets = [128, 5], sizes = [128, 5], strides = [1, 1]} : vector<256x45xf32> to vector<128x5xf32>
    %118 = arith.truncf %117 : vector<128x5xf32> to vector<128x5xbf16>
    %119 = vector.extract_strided_slice %17 {offsets = [0, 5], sizes = [256, 5], strides = [1, 1]} : vector<256x15xbf16> to vector<256x5xbf16>
    %cst_45 = arith.constant dense<0.000000e+00> : vector<128x256xf32>
    %120 = tpu.matmul %118, %119, %cst_45 {dimension_numbers = #tpu.dot_dimension_numbers<[1], [1], [0], [0], [0, 0, 1, 0], [], []>} : vector<128x5xbf16>, vector<256x5xbf16>, vector<128x256xf32> -> vector<128x256xf32>
    %c1_46 = arith.constant 1 : index
    %c128_47 = arith.constant 128 : index
    %c0_48 = arith.constant 0 : index
    %121 = vector.load %arg8[%c1_46, %c128_47, %c0_48] : memref<3x256x256xbf16, #tpu.memory_space<vmem>>, vector<1x128x256xbf16>
    %122 = vector.shape_cast %121 : vector<1x128x256xbf16> to vector<128x256xbf16>
    %123 = arith.extf %122 : vector<128x256xbf16> to vector<128x256xf32>
    %124 = arith.addf %120, %123 : vector<128x256xf32>
    %cst_49 = arith.constant dense<0xFF800000> : vector<128xf32>
    %125 = vector.multi_reduction <maximumf>, %124, %cst_49 [1] : vector<128x256xf32> to vector<128xf32>
    %126 = vector.shape_cast %125 : vector<128xf32> to vector<128x1xf32>
    %127 = vector.broadcast %126 : vector<128x1xf32> to vector<128x256xf32>
    %128 = arith.subf %124, %127 : vector<128x256xf32>
    %129 = math.exp %128 : vector<128x256xf32>
    %cst_50 = arith.constant dense<0.000000e+00> : vector<128xf32>
    %130 = vector.multi_reduction <add>, %129, %cst_50 [1] : vector<128x256xf32> to vector<128xf32>
    %131 = vector.shape_cast %130 : vector<128xf32> to vector<128x1xf32>
    %132 = arith.truncf %129 : vector<128x256xf32> to vector<128x256xbf16>
    %133 = vector.extract_strided_slice %19 {offsets = [0, 5], sizes = [256, 5], strides = [1, 1]} : vector<256x15xbf16> to vector<256x5xbf16>
    %cst_51 = arith.constant dense<0.000000e+00> : vector<128x5xf32>
    %134 = tpu.matmul %132, %133, %cst_51 {dimension_numbers = #tpu.dot_dimension_numbers<[1], [0], [0], [1], [0, 0, 1, 1], [], []>} : vector<128x256xbf16>, vector<256x5xbf16>, vector<128x5xf32> -> vector<128x5xf32>
    %135 = tpu.reciprocal %131 {approx = true} : vector<128x1xf32> -> vector<128x1xf32>
    %136 = vector.broadcast %135 : vector<128x1xf32> to vector<128x5xf32>
    %137 = arith.mulf %134, %136 : vector<128x5xf32>
    %138 = vector.extract_strided_slice %15 {offsets = [128, 10], sizes = [128, 5], strides = [1, 1]} : vector<256x45xf32> to vector<128x5xf32>
    %139 = arith.truncf %138 : vector<128x5xf32> to vector<128x5xbf16>
    %140 = vector.extract_strided_slice %17 {offsets = [0, 10], sizes = [256, 5], strides = [1, 1]} : vector<256x15xbf16> to vector<256x5xbf16>
    %cst_52 = arith.constant dense<0.000000e+00> : vector<128x256xf32>
    %141 = tpu.matmul %139, %140, %cst_52 {dimension_numbers = #tpu.dot_dimension_numbers<[1], [1], [0], [0], [0, 0, 1, 0], [], []>} : vector<128x5xbf16>, vector<256x5xbf16>, vector<128x256xf32> -> vector<128x256xf32>
    %c2_53 = arith.constant 2 : index
    %c128_54 = arith.constant 128 : index
    %c0_55 = arith.constant 0 : index
    %142 = vector.load %arg8[%c2_53, %c128_54, %c0_55] : memref<3x256x256xbf16, #tpu.memory_space<vmem>>, vector<1x128x256xbf16>
    %143 = vector.shape_cast %142 : vector<1x128x256xbf16> to vector<128x256xbf16>
    %144 = arith.extf %143 : vector<128x256xbf16> to vector<128x256xf32>
    %145 = arith.addf %141, %144 : vector<128x256xf32>
    %cst_56 = arith.constant dense<0xFF800000> : vector<128xf32>
    %146 = vector.multi_reduction <maximumf>, %145, %cst_56 [1] : vector<128x256xf32> to vector<128xf32>
    %147 = vector.shape_cast %146 : vector<128xf32> to vector<128x1xf32>
    %148 = vector.broadcast %147 : vector<128x1xf32> to vector<128x256xf32>
    %149 = arith.subf %145, %148 : vector<128x256xf32>
    %150 = math.exp %149 : vector<128x256xf32>
    %cst_57 = arith.constant dense<0.000000e+00> : vector<128xf32>
    %151 = vector.multi_reduction <add>, %150, %cst_57 [1] : vector<128x256xf32> to vector<128xf32>
    %152 = vector.shape_cast %151 : vector<128xf32> to vector<128x1xf32>
    %153 = arith.truncf %150 : vector<128x256xf32> to vector<128x256xbf16>
    %154 = vector.extract_strided_slice %19 {offsets = [0, 10], sizes = [256, 5], strides = [1, 1]} : vector<256x15xbf16> to vector<256x5xbf16>
    %cst_58 = arith.constant dense<0.000000e+00> : vector<128x5xf32>
    %155 = tpu.matmul %153, %154, %cst_58 {dimension_numbers = #tpu.dot_dimension_numbers<[1], [0], [0], [1], [0, 0, 1, 1], [], []>} : vector<128x256xbf16>, vector<256x5xbf16>, vector<128x5xf32> -> vector<128x5xf32>
    %156 = tpu.reciprocal %152 {approx = true} : vector<128x1xf32> -> vector<128x1xf32>
    %157 = vector.broadcast %156 : vector<128x1xf32> to vector<128x5xf32>
    %158 = arith.mulf %155, %157 : vector<128x5xf32>
    %159 = tpu.concatenate %116, %137, %158 in 1 : vector<128x5xf32>, vector<128x5xf32>, vector<128x5xf32> -> vector<128x15xf32>
    %160 = arith.truncf %159 : vector<128x15xf32> to vector<128x15xbf16>
    %c0_59 = arith.constant 0 : index
    %c0_60 = arith.constant 0 : index
    %161 = vector.load %arg6[%c0_59, %c0_60] : memref<15x16xbf16, #tpu.memory_space<vmem>>, vector<15x16xbf16>
    %cst_61 = arith.constant dense<0.000000e+00> : vector<128x16xf32>
    %162 = tpu.matmul %160, %161, %cst_61 {dimension_numbers = #tpu.dot_dimension_numbers<[1], [0], [0], [1], [0, 0, 1, 1], [], []>} : vector<128x15xbf16>, vector<15x16xbf16>, vector<128x16xf32> -> vector<128x16xf32>
    %163 = arith.addf %95, %162 : vector<128x16xf32>
    %c0_62 = arith.constant 0 : index
    %c0_63 = arith.constant 0 : index
    %164 = vector.load %arg7[%c0_62, %c0_63] : memref<1x16xf32, #tpu.memory_space<vmem>>, vector<1x16xf32>
    %165 = vector.broadcast %164 : vector<1x16xf32> to vector<128x16xf32>
    %166 = arith.addf %163, %165 : vector<128x16xf32>
    %c0_64 = arith.constant 0 : index
    %c128_65 = arith.constant 128 : index
    %c0_66 = arith.constant 0 : index
    %167 = vector.load %arg9[%c0_64, %c128_65, %c0_66] : memref<1x256x16xf32, #tpu.memory_space<vmem>>, vector<1x128x16xf32>
    %168 = vector.shape_cast %167 : vector<1x128x16xf32> to vector<128x16xf32>
    %169 = vector.shape_cast %166 : vector<128x16xf32> to vector<1x128x16xf32>
    tpu.vector_store %arg9[%c0_64, %c128_65, %c0_66], %169 {strides = array<i32>} : memref<1x256x16xf32, #tpu.memory_space<vmem>>, vector<1x128x16xf32>,
    return
  }
  func.func @transform_0(%arg0: i32) -> (i32, i32, i32) {
    %c0_i32 = arith.constant 0 : i32
    %c0_i32_0 = arith.constant 0 : i32
    %c0_i32_1 = arith.constant 0 : i32
    return %arg0, %c0_i32, %c0_i32_0 : i32, i32, i32
  }
  func.func @transform_1(%arg0: i32) -> (i32, i32) {
    %c0_i32 = arith.constant 0 : i32
    %c0_i32_0 = arith.constant 0 : i32
    %c0_i32_1 = arith.constant 0 : i32
    return %c0_i32, %c0_i32_0 : i32, i32
  }
  func.func @transform_2(%arg0: i32) -> (i32, i32) {
    %c0_i32 = arith.constant 0 : i32
    %c0_i32_0 = arith.constant 0 : i32
    %c0_i32_1 = arith.constant 0 : i32
    return %c0_i32, %c0_i32_0 : i32, i32
  }
  func.func @transform_3(%arg0: i32) -> (i32, i32) {
    %c0_i32 = arith.constant 0 : i32
    %c0_i32_0 = arith.constant 0 : i32
    %c0_i32_1 = arith.constant 0 : i32
    return %c0_i32, %c0_i32_0 : i32, i32
  }
  func.func @transform_4(%arg0: i32) -> (i32, i32) {
    %c0_i32 = arith.constant 0 : i32
    %c0_i32_0 = arith.constant 0 : i32
    %c0_i32_1 = arith.constant 0 : i32
    return %c0_i32, %c0_i32_0 : i32, i32
  }
  func.func @transform_5(%arg0: i32) -> (i32, i32) {
    %c0_i32 = arith.constant 0 : i32
    %c0_i32_0 = arith.constant 0 : i32
    %c0_i32_1 = arith.constant 0 : i32
    return %c0_i32, %c0_i32_0 : i32, i32
  }
  func.func @transform_6(%arg0: i32) -> (i32, i32) {
    %c0_i32 = arith.constant 0 : i32
    %c0_i32_0 = arith.constant 0 : i32
    %c0_i32_1 = arith.constant 0 : i32
    return %c0_i32, %c0_i32_0 : i32, i32
  }
  func.func @transform_7(%arg0: i32) -> (i32, i32, i32) {
    %c0_i32 = arith.constant 0 : i32
    %c0_i32_0 = arith.constant 0 : i32
    %c0_i32_1 = arith.constant 0 : i32
    %c0_i32_2 = arith.constant 0 : i32
    return %c0_i32, %c0_i32_0, %c0_i32_1 : i32, i32, i32
  }
  func.func @transform_8(%arg0: i32) -> (i32, i32, i32) {
    %c0_i32 = arith.constant 0 : i32
    %c0_i32_0 = arith.constant 0 : i32
    %c0_i32_1 = arith.constant 0 : i32
    return %arg0, %c0_i32, %c0_i32_0 : i32, i32, i32
  }
}

module attributes {stable_mosaic.version = 11 : i64} {
  func.func @kernel(%arg0: i32, %arg1: memref<1x64x144xf32, #tpu.memory_space<vmem>>, %arg2: memref<144x32xbf16, #tpu.memory_space<vmem>>, %arg3: memref<1x32xf32, #tpu.memory_space<vmem>>, %arg4: memref<32x90xbf16, #tpu.memory_space<vmem>>, %arg5: memref<1x90xf32, #tpu.memory_space<vmem>>, %arg6: memref<30x32xbf16, #tpu.memory_space<vmem>>, %arg7: memref<1x32xf32, #tpu.memory_space<vmem>>, %arg8: memref<3x64x64xbf16, #tpu.memory_space<vmem>>, %arg9: memref<1x64x32xf32, #tpu.memory_space<vmem>>) attributes {dimension_semantics = [#tpu.dimension_semantics<parallel>], iteration_bounds = array<i64: 2>, scalar_prefetch = 0 : i64, scratch_operands = 0 : i64, tpu.core_type = #tpu.core_type<tc>, window_params = [{transform_indices = @transform_0, window_bounds = array<i64: 1, 64, 144>}, {pipeline_mode = #tpu.pipeline_mode<synchronous>, transform_indices = @transform_1, window_bounds = array<i64: 144, 32>}, {pipeline_mode = #tpu.pipeline_mode<synchronous>, transform_indices = @transform_2, window_bounds = array<i64: 1, 32>}, {pipeline_mode = #tpu.pipeline_mode<synchronous>, transform_indices = @transform_3, window_bounds = array<i64: 32, 90>}, {pipeline_mode = #tpu.pipeline_mode<synchronous>, transform_indices = @transform_4, window_bounds = array<i64: 1, 90>}, {pipeline_mode = #tpu.pipeline_mode<synchronous>, transform_indices = @transform_5, window_bounds = array<i64: 30, 32>}, {pipeline_mode = #tpu.pipeline_mode<synchronous>, transform_indices = @transform_6, window_bounds = array<i64: 1, 32>}, {pipeline_mode = #tpu.pipeline_mode<synchronous>, transform_indices = @transform_7, window_bounds = array<i64: 3, 64, 64>}, {transform_indices = @transform_8, window_bounds = array<i64: 1, 64, 32>}]} {
    %c0 = arith.constant 0 : index
    %c0_0 = arith.constant 0 : index
    %c0_1 = arith.constant 0 : index
    %0 = vector.load %arg1[%c0, %c0_0, %c0_1] : memref<1x64x144xf32, #tpu.memory_space<vmem>>, vector<1x64x144xf32>
    %1 = vector.shape_cast %0 : vector<1x64x144xf32> to vector<64x144xf32>
    %2 = arith.truncf %1 : vector<64x144xf32> to vector<64x144xbf16>
    %c0_2 = arith.constant 0 : index
    %c0_3 = arith.constant 0 : index
    %3 = vector.load %arg2[%c0_2, %c0_3] : memref<144x32xbf16, #tpu.memory_space<vmem>>, vector<144x32xbf16>
    %cst = arith.constant dense<0.000000e+00> : vector<64x32xf32>
    %4 = tpu.matmul %2, %3, %cst {dimension_numbers = #tpu.dot_dimension_numbers<[1], [0], [0], [1], [0, 0, 1, 1], [], []>} : vector<64x144xbf16>, vector<144x32xbf16>, vector<64x32xf32> -> vector<64x32xf32>
    %c0_4 = arith.constant 0 : index
    %c0_5 = arith.constant 0 : index
    %5 = vector.load %arg3[%c0_4, %c0_5] : memref<1x32xf32, #tpu.memory_space<vmem>>, vector<1x32xf32>
    %6 = vector.broadcast %5 : vector<1x32xf32> to vector<64x32xf32>
    %7 = arith.addf %4, %6 : vector<64x32xf32>
    %cst_6 = arith.constant 0.000000e+00 : f32
    %8 = vector.broadcast %cst_6 : f32 to vector<64x32xf32>
    %9 = arith.maximumf %7, %8 : vector<64x32xf32>
    %10 = arith.truncf %9 : vector<64x32xf32> to vector<64x32xbf16>
    %c0_7 = arith.constant 0 : index
    %c0_8 = arith.constant 0 : index
    %11 = vector.load %arg4[%c0_7, %c0_8] : memref<32x90xbf16, #tpu.memory_space<vmem>>, vector<32x90xbf16>
    %cst_9 = arith.constant dense<0.000000e+00> : vector<64x90xf32>
    %12 = tpu.matmul %10, %11, %cst_9 {dimension_numbers = #tpu.dot_dimension_numbers<[1], [0], [0], [1], [0, 0, 1, 1], [], []>} : vector<64x32xbf16>, vector<32x90xbf16>, vector<64x90xf32> -> vector<64x90xf32>
    %c0_10 = arith.constant 0 : index
    %c0_11 = arith.constant 0 : index
    %13 = vector.load %arg5[%c0_10, %c0_11] : memref<1x90xf32, #tpu.memory_space<vmem>>, vector<1x90xf32>
    %14 = vector.broadcast %13 : vector<1x90xf32> to vector<64x90xf32>
    %15 = arith.addf %12, %14 : vector<64x90xf32>
    %16 = vector.extract_strided_slice %15 {offsets = [0, 30], sizes = [64, 30], strides = [1, 1]} : vector<64x90xf32> to vector<64x30xf32>
    %17 = arith.truncf %16 : vector<64x30xf32> to vector<64x30xbf16>
    %18 = vector.extract_strided_slice %15 {offsets = [0, 60], sizes = [64, 30], strides = [1, 1]} : vector<64x90xf32> to vector<64x30xf32>
    %19 = arith.truncf %18 : vector<64x30xf32> to vector<64x30xbf16>
    %20 = vector.extract_strided_slice %15 {offsets = [0, 0], sizes = [64, 10], strides = [1, 1]} : vector<64x90xf32> to vector<64x10xf32>
    %21 = arith.truncf %20 : vector<64x10xf32> to vector<64x10xbf16>
    %22 = vector.extract_strided_slice %17 {offsets = [0, 0], sizes = [64, 10], strides = [1, 1]} : vector<64x30xbf16> to vector<64x10xbf16>
    %cst_12 = arith.constant dense<0.000000e+00> : vector<64x64xf32>
    %23 = tpu.matmul %21, %22, %cst_12 {dimension_numbers = #tpu.dot_dimension_numbers<[1], [1], [0], [0], [0, 0, 1, 0], [], []>} : vector<64x10xbf16>, vector<64x10xbf16>, vector<64x64xf32> -> vector<64x64xf32>
    %c0_13 = arith.constant 0 : index
    %c0_14 = arith.constant 0 : index
    %c0_15 = arith.constant 0 : index
    %24 = vector.load %arg8[%c0_13, %c0_14, %c0_15] : memref<3x64x64xbf16, #tpu.memory_space<vmem>>, vector<1x64x64xbf16>
    %25 = vector.shape_cast %24 : vector<1x64x64xbf16> to vector<64x64xbf16>
    %26 = arith.extf %25 : vector<64x64xbf16> to vector<64x64xf32>
    %27 = arith.addf %23, %26 : vector<64x64xf32>
    %cst_16 = arith.constant dense<0xFF800000> : vector<64xf32>
    %28 = vector.multi_reduction <maximumf>, %27, %cst_16 [1] : vector<64x64xf32> to vector<64xf32>
    %29 = vector.shape_cast %28 : vector<64xf32> to vector<64x1xf32>
    %30 = vector.broadcast %29 : vector<64x1xf32> to vector<64x64xf32>
    %31 = arith.subf %27, %30 : vector<64x64xf32>
    %32 = math.exp %31 : vector<64x64xf32>
    %cst_17 = arith.constant dense<0.000000e+00> : vector<64xf32>
    %33 = vector.multi_reduction <add>, %32, %cst_17 [1] : vector<64x64xf32> to vector<64xf32>
    %34 = vector.shape_cast %33 : vector<64xf32> to vector<64x1xf32>
    %35 = arith.truncf %32 : vector<64x64xf32> to vector<64x64xbf16>
    %36 = vector.extract_strided_slice %19 {offsets = [0, 0], sizes = [64, 10], strides = [1, 1]} : vector<64x30xbf16> to vector<64x10xbf16>
    %cst_18 = arith.constant dense<0.000000e+00> : vector<64x10xf32>
    %37 = tpu.matmul %35, %36, %cst_18 {dimension_numbers = #tpu.dot_dimension_numbers<[1], [0], [0], [1], [0, 0, 1, 1], [], []>} : vector<64x64xbf16>, vector<64x10xbf16>, vector<64x10xf32> -> vector<64x10xf32>
    %38 = tpu.reciprocal %34 {approx = true} : vector<64x1xf32> -> vector<64x1xf32>
    %39 = vector.broadcast %38 : vector<64x1xf32> to vector<64x10xf32>
    %40 = arith.mulf %37, %39 : vector<64x10xf32>
    %41 = vector.extract_strided_slice %15 {offsets = [0, 10], sizes = [64, 10], strides = [1, 1]} : vector<64x90xf32> to vector<64x10xf32>
    %42 = arith.truncf %41 : vector<64x10xf32> to vector<64x10xbf16>
    %43 = vector.extract_strided_slice %17 {offsets = [0, 10], sizes = [64, 10], strides = [1, 1]} : vector<64x30xbf16> to vector<64x10xbf16>
    %cst_19 = arith.constant dense<0.000000e+00> : vector<64x64xf32>
    %44 = tpu.matmul %42, %43, %cst_19 {dimension_numbers = #tpu.dot_dimension_numbers<[1], [1], [0], [0], [0, 0, 1, 0], [], []>} : vector<64x10xbf16>, vector<64x10xbf16>, vector<64x64xf32> -> vector<64x64xf32>
    %c1 = arith.constant 1 : index
    %c0_20 = arith.constant 0 : index
    %c0_21 = arith.constant 0 : index
    %45 = vector.load %arg8[%c1, %c0_20, %c0_21] : memref<3x64x64xbf16, #tpu.memory_space<vmem>>, vector<1x64x64xbf16>
    %46 = vector.shape_cast %45 : vector<1x64x64xbf16> to vector<64x64xbf16>
    %47 = arith.extf %46 : vector<64x64xbf16> to vector<64x64xf32>
    %48 = arith.addf %44, %47 : vector<64x64xf32>
    %cst_22 = arith.constant dense<0xFF800000> : vector<64xf32>
    %49 = vector.multi_reduction <maximumf>, %48, %cst_22 [1] : vector<64x64xf32> to vector<64xf32>
    %50 = vector.shape_cast %49 : vector<64xf32> to vector<64x1xf32>
    %51 = vector.broadcast %50 : vector<64x1xf32> to vector<64x64xf32>
    %52 = arith.subf %48, %51 : vector<64x64xf32>
    %53 = math.exp %52 : vector<64x64xf32>
    %cst_23 = arith.constant dense<0.000000e+00> : vector<64xf32>
    %54 = vector.multi_reduction <add>, %53, %cst_23 [1] : vector<64x64xf32> to vector<64xf32>
    %55 = vector.shape_cast %54 : vector<64xf32> to vector<64x1xf32>
    %56 = arith.truncf %53 : vector<64x64xf32> to vector<64x64xbf16>
    %57 = vector.extract_strided_slice %19 {offsets = [0, 10], sizes = [64, 10], strides = [1, 1]} : vector<64x30xbf16> to vector<64x10xbf16>
    %cst_24 = arith.constant dense<0.000000e+00> : vector<64x10xf32>
    %58 = tpu.matmul %56, %57, %cst_24 {dimension_numbers = #tpu.dot_dimension_numbers<[1], [0], [0], [1], [0, 0, 1, 1], [], []>} : vector<64x64xbf16>, vector<64x10xbf16>, vector<64x10xf32> -> vector<64x10xf32>
    %59 = tpu.reciprocal %55 {approx = true} : vector<64x1xf32> -> vector<64x1xf32>
    %60 = vector.broadcast %59 : vector<64x1xf32> to vector<64x10xf32>
    %61 = arith.mulf %58, %60 : vector<64x10xf32>
    %62 = vector.extract_strided_slice %15 {offsets = [0, 20], sizes = [64, 10], strides = [1, 1]} : vector<64x90xf32> to vector<64x10xf32>
    %63 = arith.truncf %62 : vector<64x10xf32> to vector<64x10xbf16>
    %64 = vector.extract_strided_slice %17 {offsets = [0, 20], sizes = [64, 10], strides = [1, 1]} : vector<64x30xbf16> to vector<64x10xbf16>
    %cst_25 = arith.constant dense<0.000000e+00> : vector<64x64xf32>
    %65 = tpu.matmul %63, %64, %cst_25 {dimension_numbers = #tpu.dot_dimension_numbers<[1], [1], [0], [0], [0, 0, 1, 0], [], []>} : vector<64x10xbf16>, vector<64x10xbf16>, vector<64x64xf32> -> vector<64x64xf32>
    %c2 = arith.constant 2 : index
    %c0_26 = arith.constant 0 : index
    %c0_27 = arith.constant 0 : index
    %66 = vector.load %arg8[%c2, %c0_26, %c0_27] : memref<3x64x64xbf16, #tpu.memory_space<vmem>>, vector<1x64x64xbf16>
    %67 = vector.shape_cast %66 : vector<1x64x64xbf16> to vector<64x64xbf16>
    %68 = arith.extf %67 : vector<64x64xbf16> to vector<64x64xf32>
    %69 = arith.addf %65, %68 : vector<64x64xf32>
    %cst_28 = arith.constant dense<0xFF800000> : vector<64xf32>
    %70 = vector.multi_reduction <maximumf>, %69, %cst_28 [1] : vector<64x64xf32> to vector<64xf32>
    %71 = vector.shape_cast %70 : vector<64xf32> to vector<64x1xf32>
    %72 = vector.broadcast %71 : vector<64x1xf32> to vector<64x64xf32>
    %73 = arith.subf %69, %72 : vector<64x64xf32>
    %74 = math.exp %73 : vector<64x64xf32>
    %cst_29 = arith.constant dense<0.000000e+00> : vector<64xf32>
    %75 = vector.multi_reduction <add>, %74, %cst_29 [1] : vector<64x64xf32> to vector<64xf32>
    %76 = vector.shape_cast %75 : vector<64xf32> to vector<64x1xf32>
    %77 = arith.truncf %74 : vector<64x64xf32> to vector<64x64xbf16>
    %78 = vector.extract_strided_slice %19 {offsets = [0, 20], sizes = [64, 10], strides = [1, 1]} : vector<64x30xbf16> to vector<64x10xbf16>
    %cst_30 = arith.constant dense<0.000000e+00> : vector<64x10xf32>
    %79 = tpu.matmul %77, %78, %cst_30 {dimension_numbers = #tpu.dot_dimension_numbers<[1], [0], [0], [1], [0, 0, 1, 1], [], []>} : vector<64x64xbf16>, vector<64x10xbf16>, vector<64x10xf32> -> vector<64x10xf32>
    %80 = tpu.reciprocal %76 {approx = true} : vector<64x1xf32> -> vector<64x1xf32>
    %81 = vector.broadcast %80 : vector<64x1xf32> to vector<64x10xf32>
    %82 = arith.mulf %79, %81 : vector<64x10xf32>
    %83 = tpu.concatenate %40, %61, %82 in 1 : vector<64x10xf32>, vector<64x10xf32>, vector<64x10xf32> -> vector<64x30xf32>
    %84 = arith.truncf %83 : vector<64x30xf32> to vector<64x30xbf16>
    %c0_31 = arith.constant 0 : index
    %c0_32 = arith.constant 0 : index
    %85 = vector.load %arg6[%c0_31, %c0_32] : memref<30x32xbf16, #tpu.memory_space<vmem>>, vector<30x32xbf16>
    %cst_33 = arith.constant dense<0.000000e+00> : vector<64x32xf32>
    %86 = tpu.matmul %84, %85, %cst_33 {dimension_numbers = #tpu.dot_dimension_numbers<[1], [0], [0], [1], [0, 0, 1, 1], [], []>} : vector<64x30xbf16>, vector<30x32xbf16>, vector<64x32xf32> -> vector<64x32xf32>
    %87 = arith.addf %9, %86 : vector<64x32xf32>
    %c0_34 = arith.constant 0 : index
    %c0_35 = arith.constant 0 : index
    %88 = vector.load %arg7[%c0_34, %c0_35] : memref<1x32xf32, #tpu.memory_space<vmem>>, vector<1x32xf32>
    %89 = vector.broadcast %88 : vector<1x32xf32> to vector<64x32xf32>
    %90 = arith.addf %87, %89 : vector<64x32xf32>
    %c0_36 = arith.constant 0 : index
    %c0_37 = arith.constant 0 : index
    %c0_38 = arith.constant 0 : index
    %91 = vector.load %arg9[%c0_36, %c0_37, %c0_38] : memref<1x64x32xf32, #tpu.memory_space<vmem>>, vector<1x64x32xf32>
    %92 = vector.shape_cast %91 : vector<1x64x32xf32> to vector<64x32xf32>
    %93 = vector.shape_cast %90 : vector<64x32xf32> to vector<1x64x32xf32>
    tpu.vector_store %arg9[%c0_36, %c0_37, %c0_38], %93 {strides = array<i32>} : memref<1x64x32xf32, #tpu.memory_space<vmem>>, vector<1x64x32xf32>,
    return
  }
  func.func @transform_0(%arg0: i32) -> (i32, i32, i32) {
    %c0_i32 = arith.constant 0 : i32
    %c0_i32_0 = arith.constant 0 : i32
    %c0_i32_1 = arith.constant 0 : i32
    return %arg0, %c0_i32, %c0_i32_0 : i32, i32, i32
  }
  func.func @transform_1(%arg0: i32) -> (i32, i32) {
    %c0_i32 = arith.constant 0 : i32
    %c0_i32_0 = arith.constant 0 : i32
    %c0_i32_1 = arith.constant 0 : i32
    return %c0_i32, %c0_i32_0 : i32, i32
  }
  func.func @transform_2(%arg0: i32) -> (i32, i32) {
    %c0_i32 = arith.constant 0 : i32
    %c0_i32_0 = arith.constant 0 : i32
    %c0_i32_1 = arith.constant 0 : i32
    return %c0_i32, %c0_i32_0 : i32, i32
  }
  func.func @transform_3(%arg0: i32) -> (i32, i32) {
    %c0_i32 = arith.constant 0 : i32
    %c0_i32_0 = arith.constant 0 : i32
    %c0_i32_1 = arith.constant 0 : i32
    return %c0_i32, %c0_i32_0 : i32, i32
  }
  func.func @transform_4(%arg0: i32) -> (i32, i32) {
    %c0_i32 = arith.constant 0 : i32
    %c0_i32_0 = arith.constant 0 : i32
    %c0_i32_1 = arith.constant 0 : i32
    return %c0_i32, %c0_i32_0 : i32, i32
  }
  func.func @transform_5(%arg0: i32) -> (i32, i32) {
    %c0_i32 = arith.constant 0 : i32
    %c0_i32_0 = arith.constant 0 : i32
    %c0_i32_1 = arith.constant 0 : i32
    return %c0_i32, %c0_i32_0 : i32, i32
  }
  func.func @transform_6(%arg0: i32) -> (i32, i32) {
    %c0_i32 = arith.constant 0 : i32
    %c0_i32_0 = arith.constant 0 : i32
    %c0_i32_1 = arith.constant 0 : i32
    return %c0_i32, %c0_i32_0 : i32, i32
  }
  func.func @transform_7(%arg0: i32) -> (i32, i32, i32) {
    %c0_i32 = arith.constant 0 : i32
    %c0_i32_0 = arith.constant 0 : i32
    %c0_i32_1 = arith.constant 0 : i32
    %c0_i32_2 = arith.constant 0 : i32
    return %c0_i32, %c0_i32_0, %c0_i32_1 : i32, i32, i32
  }
  func.func @transform_8(%arg0: i32) -> (i32, i32, i32) {
    %c0_i32 = arith.constant 0 : i32
    %c0_i32_0 = arith.constant 0 : i32
    %c0_i32_1 = arith.constant 0 : i32
    return %arg0, %c0_i32, %c0_i32_0 : i32, i32, i32
  }
}

module attributes {stable_mosaic.version = 11 : i64} {
  func.func @kernel(%arg0: i32, %arg1: memref<1x16x288xf32, #tpu.memory_space<vmem>>, %arg2: memref<288x64xbf16, #tpu.memory_space<vmem>>, %arg3: memref<1x64xf32, #tpu.memory_space<vmem>>, %arg4: memref<64x189xbf16, #tpu.memory_space<vmem>>, %arg5: memref<1x189xf32, #tpu.memory_space<vmem>>, %arg6: memref<63x64xbf16, #tpu.memory_space<vmem>>, %arg7: memref<1x64xf32, #tpu.memory_space<vmem>>, %arg8: memref<3x16x16xbf16, #tpu.memory_space<vmem>>, %arg9: memref<64x4xbf16, #tpu.memory_space<vmem>>, %arg10: memref<1x4xf32, #tpu.memory_space<vmem>>, %arg11: memref<1x16x64xf32, #tpu.memory_space<vmem>>, %arg12: memref<1x1x64xf32, #tpu.memory_space<vmem>>, %arg13: memref<1x1x4xf32, #tpu.memory_space<vmem>>) attributes {dimension_semantics = [#tpu.dimension_semantics<parallel>], iteration_bounds = array<i64: 2>, scalar_prefetch = 0 : i64, scratch_operands = 0 : i64, tpu.core_type = #tpu.core_type<tc>, window_params = [{transform_indices = @transform_0, window_bounds = array<i64: 1, 16, 288>}, {pipeline_mode = #tpu.pipeline_mode<synchronous>, transform_indices = @transform_1, window_bounds = array<i64: 288, 64>}, {pipeline_mode = #tpu.pipeline_mode<synchronous>, transform_indices = @transform_2, window_bounds = array<i64: 1, 64>}, {pipeline_mode = #tpu.pipeline_mode<synchronous>, transform_indices = @transform_3, window_bounds = array<i64: 64, 189>}, {pipeline_mode = #tpu.pipeline_mode<synchronous>, transform_indices = @transform_4, window_bounds = array<i64: 1, 189>}, {pipeline_mode = #tpu.pipeline_mode<synchronous>, transform_indices = @transform_5, window_bounds = array<i64: 63, 64>}, {pipeline_mode = #tpu.pipeline_mode<synchronous>, transform_indices = @transform_6, window_bounds = array<i64: 1, 64>}, {pipeline_mode = #tpu.pipeline_mode<synchronous>, transform_indices = @transform_7, window_bounds = array<i64: 3, 16, 16>}, {pipeline_mode = #tpu.pipeline_mode<synchronous>, transform_indices = @transform_8, window_bounds = array<i64: 64, 4>}, {pipeline_mode = #tpu.pipeline_mode<synchronous>, transform_indices = @transform_9, window_bounds = array<i64: 1, 4>}, {transform_indices = @transform_10, window_bounds = array<i64: 1, 16, 64>}, {transform_indices = @transform_11, window_bounds = array<i64: 1, 1, 64>}, {transform_indices = @transform_12, window_bounds = array<i64: 1, 1, 4>}]} {
    %c0 = arith.constant 0 : index
    %c0_0 = arith.constant 0 : index
    %c0_1 = arith.constant 0 : index
    %0 = vector.load %arg1[%c0, %c0_0, %c0_1] : memref<1x16x288xf32, #tpu.memory_space<vmem>>, vector<1x16x288xf32>
    %1 = vector.shape_cast %0 : vector<1x16x288xf32> to vector<16x288xf32>
    %2 = arith.truncf %1 : vector<16x288xf32> to vector<16x288xbf16>
    %c0_2 = arith.constant 0 : index
    %c0_3 = arith.constant 0 : index
    %3 = vector.load %arg2[%c0_2, %c0_3] : memref<288x64xbf16, #tpu.memory_space<vmem>>, vector<288x64xbf16>
    %cst = arith.constant dense<0.000000e+00> : vector<16x64xf32>
    %4 = tpu.matmul %2, %3, %cst {dimension_numbers = #tpu.dot_dimension_numbers<[1], [0], [0], [1], [0, 0, 1, 1], [], []>} : vector<16x288xbf16>, vector<288x64xbf16>, vector<16x64xf32> -> vector<16x64xf32>
    %c0_4 = arith.constant 0 : index
    %c0_5 = arith.constant 0 : index
    %5 = vector.load %arg3[%c0_4, %c0_5] : memref<1x64xf32, #tpu.memory_space<vmem>>, vector<1x64xf32>
    %6 = vector.broadcast %5 : vector<1x64xf32> to vector<16x64xf32>
    %7 = arith.addf %4, %6 : vector<16x64xf32>
    %cst_6 = arith.constant 0.000000e+00 : f32
    %8 = vector.broadcast %cst_6 : f32 to vector<16x64xf32>
    %9 = arith.maximumf %7, %8 : vector<16x64xf32>
    %10 = arith.truncf %9 : vector<16x64xf32> to vector<16x64xbf16>
    %c0_7 = arith.constant 0 : index
    %c0_8 = arith.constant 0 : index
    %11 = vector.load %arg4[%c0_7, %c0_8] : memref<64x189xbf16, #tpu.memory_space<vmem>>, vector<64x189xbf16>
    %cst_9 = arith.constant dense<0.000000e+00> : vector<16x189xf32>
    %12 = tpu.matmul %10, %11, %cst_9 {dimension_numbers = #tpu.dot_dimension_numbers<[1], [0], [0], [1], [0, 0, 1, 1], [], []>} : vector<16x64xbf16>, vector<64x189xbf16>, vector<16x189xf32> -> vector<16x189xf32>
    %c0_10 = arith.constant 0 : index
    %c0_11 = arith.constant 0 : index
    %13 = vector.load %arg5[%c0_10, %c0_11] : memref<1x189xf32, #tpu.memory_space<vmem>>, vector<1x189xf32>
    %14 = vector.broadcast %13 : vector<1x189xf32> to vector<16x189xf32>
    %15 = arith.addf %12, %14 : vector<16x189xf32>
    %16 = vector.extract_strided_slice %15 {offsets = [0, 63], sizes = [16, 63], strides = [1, 1]} : vector<16x189xf32> to vector<16x63xf32>
    %17 = arith.truncf %16 : vector<16x63xf32> to vector<16x63xbf16>
    %18 = vector.extract_strided_slice %15 {offsets = [0, 126], sizes = [16, 63], strides = [1, 1]} : vector<16x189xf32> to vector<16x63xf32>
    %19 = arith.truncf %18 : vector<16x63xf32> to vector<16x63xbf16>
    %cst_12 = arith.constant 0.000000e+00 : f32
    %20 = vector.broadcast %cst_12 : f32 to vector<1x64xf32>
    %21 = vector.extract_strided_slice %15 {offsets = [0, 0], sizes = [16, 21], strides = [1, 1]} : vector<16x189xf32> to vector<16x21xf32>
    %22 = arith.truncf %21 : vector<16x21xf32> to vector<16x21xbf16>
    %23 = vector.extract_strided_slice %17 {offsets = [0, 0], sizes = [16, 21], strides = [1, 1]} : vector<16x63xbf16> to vector<16x21xbf16>
    %cst_13 = arith.constant dense<0.000000e+00> : vector<16x16xf32>
    %24 = tpu.matmul %22, %23, %cst_13 {dimension_numbers = #tpu.dot_dimension_numbers<[1], [1], [0], [0], [0, 0, 1, 0], [], []>} : vector<16x21xbf16>, vector<16x21xbf16>, vector<16x16xf32> -> vector<16x16xf32>
    %c0_14 = arith.constant 0 : index
    %c0_15 = arith.constant 0 : index
    %c0_16 = arith.constant 0 : index
    %25 = vector.load %arg8[%c0_14, %c0_15, %c0_16] : memref<3x16x16xbf16, #tpu.memory_space<vmem>>, vector<1x16x16xbf16>
    %26 = vector.shape_cast %25 : vector<1x16x16xbf16> to vector<16x16xbf16>
    %27 = arith.extf %26 : vector<16x16xbf16> to vector<16x16xf32>
    %28 = arith.addf %24, %27 : vector<16x16xf32>
    %cst_17 = arith.constant dense<0xFF800000> : vector<16xf32>
    %29 = vector.multi_reduction <maximumf>, %28, %cst_17 [1] : vector<16x16xf32> to vector<16xf32>
    %30 = vector.shape_cast %29 : vector<16xf32> to vector<16x1xf32>
    %31 = vector.broadcast %30 : vector<16x1xf32> to vector<16x16xf32>
    %32 = arith.subf %28, %31 : vector<16x16xf32>
    %33 = math.exp %32 : vector<16x16xf32>
    %cst_18 = arith.constant dense<0.000000e+00> : vector<16xf32>
    %34 = vector.multi_reduction <add>, %33, %cst_18 [1] : vector<16x16xf32> to vector<16xf32>
    %35 = vector.shape_cast %34 : vector<16xf32> to vector<16x1xf32>
    %36 = arith.truncf %33 : vector<16x16xf32> to vector<16x16xbf16>
    %37 = vector.extract_strided_slice %19 {offsets = [0, 0], sizes = [16, 21], strides = [1, 1]} : vector<16x63xbf16> to vector<16x21xbf16>
    %cst_19 = arith.constant dense<0.000000e+00> : vector<16x21xf32>
    %38 = tpu.matmul %36, %37, %cst_19 {dimension_numbers = #tpu.dot_dimension_numbers<[1], [0], [0], [1], [0, 0, 1, 1], [], []>} : vector<16x16xbf16>, vector<16x21xbf16>, vector<16x21xf32> -> vector<16x21xf32>
    %39 = tpu.reciprocal %35 {approx = true} : vector<16x1xf32> -> vector<16x1xf32>
    %40 = vector.broadcast %39 : vector<16x1xf32> to vector<16x21xf32>
    %41 = arith.mulf %38, %40 : vector<16x21xf32>
    %42 = vector.extract_strided_slice %15 {offsets = [0, 21], sizes = [16, 21], strides = [1, 1]} : vector<16x189xf32> to vector<16x21xf32>
    %43 = arith.truncf %42 : vector<16x21xf32> to vector<16x21xbf16>
    %44 = vector.extract_strided_slice %17 {offsets = [0, 21], sizes = [16, 21], strides = [1, 1]} : vector<16x63xbf16> to vector<16x21xbf16>
    %cst_20 = arith.constant dense<0.000000e+00> : vector<16x16xf32>
    %45 = tpu.matmul %43, %44, %cst_20 {dimension_numbers = #tpu.dot_dimension_numbers<[1], [1], [0], [0], [0, 0, 1, 0], [], []>} : vector<16x21xbf16>, vector<16x21xbf16>, vector<16x16xf32> -> vector<16x16xf32>
    %c1 = arith.constant 1 : index
    %c0_21 = arith.constant 0 : index
    %c0_22 = arith.constant 0 : index
    %46 = vector.load %arg8[%c1, %c0_21, %c0_22] : memref<3x16x16xbf16, #tpu.memory_space<vmem>>, vector<1x16x16xbf16>
    %47 = vector.shape_cast %46 : vector<1x16x16xbf16> to vector<16x16xbf16>
    %48 = arith.extf %47 : vector<16x16xbf16> to vector<16x16xf32>
    %49 = arith.addf %45, %48 : vector<16x16xf32>
    %cst_23 = arith.constant dense<0xFF800000> : vector<16xf32>
    %50 = vector.multi_reduction <maximumf>, %49, %cst_23 [1] : vector<16x16xf32> to vector<16xf32>
    %51 = vector.shape_cast %50 : vector<16xf32> to vector<16x1xf32>
    %52 = vector.broadcast %51 : vector<16x1xf32> to vector<16x16xf32>
    %53 = arith.subf %49, %52 : vector<16x16xf32>
    %54 = math.exp %53 : vector<16x16xf32>
    %cst_24 = arith.constant dense<0.000000e+00> : vector<16xf32>
    %55 = vector.multi_reduction <add>, %54, %cst_24 [1] : vector<16x16xf32> to vector<16xf32>
    %56 = vector.shape_cast %55 : vector<16xf32> to vector<16x1xf32>
    %57 = arith.truncf %54 : vector<16x16xf32> to vector<16x16xbf16>
    %58 = vector.extract_strided_slice %19 {offsets = [0, 21], sizes = [16, 21], strides = [1, 1]} : vector<16x63xbf16> to vector<16x21xbf16>
    %cst_25 = arith.constant dense<0.000000e+00> : vector<16x21xf32>
    %59 = tpu.matmul %57, %58, %cst_25 {dimension_numbers = #tpu.dot_dimension_numbers<[1], [0], [0], [1], [0, 0, 1, 1], [], []>} : vector<16x16xbf16>, vector<16x21xbf16>, vector<16x21xf32> -> vector<16x21xf32>
    %60 = tpu.reciprocal %56 {approx = true} : vector<16x1xf32> -> vector<16x1xf32>
    %61 = vector.broadcast %60 : vector<16x1xf32> to vector<16x21xf32>
    %62 = arith.mulf %59, %61 : vector<16x21xf32>
    %63 = vector.extract_strided_slice %15 {offsets = [0, 42], sizes = [16, 21], strides = [1, 1]} : vector<16x189xf32> to vector<16x21xf32>
    %64 = arith.truncf %63 : vector<16x21xf32> to vector<16x21xbf16>
    %65 = vector.extract_strided_slice %17 {offsets = [0, 42], sizes = [16, 21], strides = [1, 1]} : vector<16x63xbf16> to vector<16x21xbf16>
    %cst_26 = arith.constant dense<0.000000e+00> : vector<16x16xf32>
    %66 = tpu.matmul %64, %65, %cst_26 {dimension_numbers = #tpu.dot_dimension_numbers<[1], [1], [0], [0], [0, 0, 1, 0], [], []>} : vector<16x21xbf16>, vector<16x21xbf16>, vector<16x16xf32> -> vector<16x16xf32>
    %c2 = arith.constant 2 : index
    %c0_27 = arith.constant 0 : index
    %c0_28 = arith.constant 0 : index
    %67 = vector.load %arg8[%c2, %c0_27, %c0_28] : memref<3x16x16xbf16, #tpu.memory_space<vmem>>, vector<1x16x16xbf16>
    %68 = vector.shape_cast %67 : vector<1x16x16xbf16> to vector<16x16xbf16>
    %69 = arith.extf %68 : vector<16x16xbf16> to vector<16x16xf32>
    %70 = arith.addf %66, %69 : vector<16x16xf32>
    %cst_29 = arith.constant dense<0xFF800000> : vector<16xf32>
    %71 = vector.multi_reduction <maximumf>, %70, %cst_29 [1] : vector<16x16xf32> to vector<16xf32>
    %72 = vector.shape_cast %71 : vector<16xf32> to vector<16x1xf32>
    %73 = vector.broadcast %72 : vector<16x1xf32> to vector<16x16xf32>
    %74 = arith.subf %70, %73 : vector<16x16xf32>
    %75 = math.exp %74 : vector<16x16xf32>
    %cst_30 = arith.constant dense<0.000000e+00> : vector<16xf32>
    %76 = vector.multi_reduction <add>, %75, %cst_30 [1] : vector<16x16xf32> to vector<16xf32>
    %77 = vector.shape_cast %76 : vector<16xf32> to vector<16x1xf32>
    %78 = arith.truncf %75 : vector<16x16xf32> to vector<16x16xbf16>
    %79 = vector.extract_strided_slice %19 {offsets = [0, 42], sizes = [16, 21], strides = [1, 1]} : vector<16x63xbf16> to vector<16x21xbf16>
    %cst_31 = arith.constant dense<0.000000e+00> : vector<16x21xf32>
    %80 = tpu.matmul %78, %79, %cst_31 {dimension_numbers = #tpu.dot_dimension_numbers<[1], [0], [0], [1], [0, 0, 1, 1], [], []>} : vector<16x16xbf16>, vector<16x21xbf16>, vector<16x21xf32> -> vector<16x21xf32>
    %81 = tpu.reciprocal %77 {approx = true} : vector<16x1xf32> -> vector<16x1xf32>
    %82 = vector.broadcast %81 : vector<16x1xf32> to vector<16x21xf32>
    %83 = arith.mulf %80, %82 : vector<16x21xf32>
    %84 = tpu.concatenate %41, %62, %83 in 1 : vector<16x21xf32>, vector<16x21xf32>, vector<16x21xf32> -> vector<16x63xf32>
    %85 = arith.truncf %84 : vector<16x63xf32> to vector<16x63xbf16>
    %c0_32 = arith.constant 0 : index
    %c0_33 = arith.constant 0 : index
    %86 = vector.load %arg6[%c0_32, %c0_33] : memref<63x64xbf16, #tpu.memory_space<vmem>>, vector<63x64xbf16>
    %cst_34 = arith.constant dense<0.000000e+00> : vector<16x64xf32>
    %87 = tpu.matmul %85, %86, %cst_34 {dimension_numbers = #tpu.dot_dimension_numbers<[1], [0], [0], [1], [0, 0, 1, 1], [], []>} : vector<16x63xbf16>, vector<63x64xbf16>, vector<16x64xf32> -> vector<16x64xf32>
    %88 = arith.addf %9, %87 : vector<16x64xf32>
    %c0_35 = arith.constant 0 : index
    %c0_36 = arith.constant 0 : index
    %89 = vector.load %arg7[%c0_35, %c0_36] : memref<1x64xf32, #tpu.memory_space<vmem>>, vector<1x64xf32>
    %90 = vector.broadcast %89 : vector<1x64xf32> to vector<16x64xf32>
    %91 = arith.addf %88, %90 : vector<16x64xf32>
    %c0_37 = arith.constant 0 : index
    %c0_38 = arith.constant 0 : index
    %c0_39 = arith.constant 0 : index
    %92 = vector.load %arg11[%c0_37, %c0_38, %c0_39] : memref<1x16x64xf32, #tpu.memory_space<vmem>>, vector<1x16x64xf32>
    %93 = vector.shape_cast %92 : vector<1x16x64xf32> to vector<16x64xf32>
    %94 = vector.shape_cast %91 : vector<16x64xf32> to vector<1x16x64xf32>
    tpu.vector_store %arg11[%c0_37, %c0_38, %c0_39], %94 {strides = array<i32>} : memref<1x16x64xf32, #tpu.memory_space<vmem>>, vector<1x16x64xf32>,
    %cst_40 = arith.constant dense<0.000000e+00> : vector<64xf32>
    %95 = vector.multi_reduction <add>, %91, %cst_40 [0] : vector<16x64xf32> to vector<64xf32>
    %96 = vector.shape_cast %95 : vector<64xf32> to vector<1x64xf32>
    %97 = arith.addf %20, %96 : vector<1x64xf32>
    %cst_41 = arith.constant 6.250000e-02 : f32
    %98 = vector.broadcast %cst_41 : f32 to vector<1x64xf32>
    %99 = arith.mulf %97, %98 : vector<1x64xf32>
    %c0_42 = arith.constant 0 : index
    %c0_43 = arith.constant 0 : index
    %c0_44 = arith.constant 0 : index
    %100 = vector.load %arg12[%c0_42, %c0_43, %c0_44] : memref<1x1x64xf32, #tpu.memory_space<vmem>>, vector<1x1x64xf32>
    %101 = vector.shape_cast %100 : vector<1x1x64xf32> to vector<1x64xf32>
    %102 = vector.shape_cast %99 : vector<1x64xf32> to vector<1x1x64xf32>
    tpu.vector_store %arg12[%c0_42, %c0_43, %c0_44], %102 {strides = array<i32>} : memref<1x1x64xf32, #tpu.memory_space<vmem>>, vector<1x1x64xf32>,
    %103 = arith.truncf %99 : vector<1x64xf32> to vector<1x64xbf16>
    %c0_45 = arith.constant 0 : index
    %c0_46 = arith.constant 0 : index
    %104 = vector.load %arg9[%c0_45, %c0_46] : memref<64x4xbf16, #tpu.memory_space<vmem>>, vector<64x4xbf16>
    %cst_47 = arith.constant dense<0.000000e+00> : vector<1x4xf32>
    %105 = tpu.matmul %103, %104, %cst_47 {dimension_numbers = #tpu.dot_dimension_numbers<[1], [0], [0], [1], [0, 0, 1, 1], [], []>} : vector<1x64xbf16>, vector<64x4xbf16>, vector<1x4xf32> -> vector<1x4xf32>
    %c0_48 = arith.constant 0 : index
    %c0_49 = arith.constant 0 : index
    %106 = vector.load %arg10[%c0_48, %c0_49] : memref<1x4xf32, #tpu.memory_space<vmem>>, vector<1x4xf32>
    %107 = arith.addf %105, %106 : vector<1x4xf32>
    %c0_50 = arith.constant 0 : index
    %c0_51 = arith.constant 0 : index
    %c0_52 = arith.constant 0 : index
    %108 = vector.load %arg13[%c0_50, %c0_51, %c0_52] : memref<1x1x4xf32, #tpu.memory_space<vmem>>, vector<1x1x4xf32>
    %109 = vector.shape_cast %108 : vector<1x1x4xf32> to vector<1x4xf32>
    %110 = vector.shape_cast %107 : vector<1x4xf32> to vector<1x1x4xf32>
    tpu.vector_store %arg13[%c0_50, %c0_51, %c0_52], %110 {strides = array<i32>} : memref<1x1x4xf32, #tpu.memory_space<vmem>>, vector<1x1x4xf32>,
    return
  }
  func.func @transform_0(%arg0: i32) -> (i32, i32, i32) {
    %c0_i32 = arith.constant 0 : i32
    %c0_i32_0 = arith.constant 0 : i32
    %c0_i32_1 = arith.constant 0 : i32
    return %arg0, %c0_i32, %c0_i32_0 : i32, i32, i32
  }
  func.func @transform_1(%arg0: i32) -> (i32, i32) {
    %c0_i32 = arith.constant 0 : i32
    %c0_i32_0 = arith.constant 0 : i32
    %c0_i32_1 = arith.constant 0 : i32
    return %c0_i32, %c0_i32_0 : i32, i32
  }
  func.func @transform_2(%arg0: i32) -> (i32, i32) {
    %c0_i32 = arith.constant 0 : i32
    %c0_i32_0 = arith.constant 0 : i32
    %c0_i32_1 = arith.constant 0 : i32
    return %c0_i32, %c0_i32_0 : i32, i32
  }
  func.func @transform_3(%arg0: i32) -> (i32, i32) {
    %c0_i32 = arith.constant 0 : i32
    %c0_i32_0 = arith.constant 0 : i32
    %c0_i32_1 = arith.constant 0 : i32
    return %c0_i32, %c0_i32_0 : i32, i32
  }
  func.func @transform_4(%arg0: i32) -> (i32, i32) {
    %c0_i32 = arith.constant 0 : i32
    %c0_i32_0 = arith.constant 0 : i32
    %c0_i32_1 = arith.constant 0 : i32
    return %c0_i32, %c0_i32_0 : i32, i32
  }
  func.func @transform_5(%arg0: i32) -> (i32, i32) {
    %c0_i32 = arith.constant 0 : i32
    %c0_i32_0 = arith.constant 0 : i32
    %c0_i32_1 = arith.constant 0 : i32
    return %c0_i32, %c0_i32_0 : i32, i32
  }
  func.func @transform_6(%arg0: i32) -> (i32, i32) {
    %c0_i32 = arith.constant 0 : i32
    %c0_i32_0 = arith.constant 0 : i32
    %c0_i32_1 = arith.constant 0 : i32
    return %c0_i32, %c0_i32_0 : i32, i32
  }
  func.func @transform_7(%arg0: i32) -> (i32, i32, i32) {
    %c0_i32 = arith.constant 0 : i32
    %c0_i32_0 = arith.constant 0 : i32
    %c0_i32_1 = arith.constant 0 : i32
    %c0_i32_2 = arith.constant 0 : i32
    return %c0_i32, %c0_i32_0, %c0_i32_1 : i32, i32, i32
  }
  func.func @transform_8(%arg0: i32) -> (i32, i32) {
    %c0_i32 = arith.constant 0 : i32
    %c0_i32_0 = arith.constant 0 : i32
    %c0_i32_1 = arith.constant 0 : i32
    return %c0_i32, %c0_i32_0 : i32, i32
  }
  func.func @transform_9(%arg0: i32) -> (i32, i32) {
    %c0_i32 = arith.constant 0 : i32
    %c0_i32_0 = arith.constant 0 : i32
    %c0_i32_1 = arith.constant 0 : i32
    return %c0_i32, %c0_i32_0 : i32, i32
  }
  func.func @transform_10(%arg0: i32) -> (i32, i32, i32) {
    %c0_i32 = arith.constant 0 : i32
    %c0_i32_0 = arith.constant 0 : i32
    %c0_i32_1 = arith.constant 0 : i32
    return %arg0, %c0_i32, %c0_i32_0 : i32, i32, i32
  }
  func.func @transform_11(%arg0: i32) -> (i32, i32, i32) {
    %c0_i32 = arith.constant 0 : i32
    %c0_i32_0 = arith.constant 0 : i32
    %c0_i32_1 = arith.constant 0 : i32
    return %arg0, %c0_i32, %c0_i32_0 : i32, i32, i32
  }
  func.func @transform_12(%arg0: i32) -> (i32, i32, i32) {
    %c0_i32 = arith.constant 0 : i32
    %c0_i32_0 = arith.constant 0 : i32
    %c0_i32_1 = arith.constant 0 : i32
    return %arg0, %c0_i32, %c0_i32_0 : i32, i32, i32
  }
}

</mosaic_0001>

<llo_original>
// kernel: mtl2d_deepsvdd_forward.4
$region0: #{mtl2d_deepsvdd_forward.4}
  #allocation0 [shape = 'u32[]', space=smem, size = 0x4, offset = 0x4, fixed_abs, tag = 'smem constant byte address 0x4 - core index']
  #allocation1 [shape = 'u32[72,128]{1,0:T(1,128)}', space=vmem, size = 0x9000, scoped, tag = 'internal scratch']
  %s0 = inlined_call_operand.vmem [shape: f32[2,64,144], index: 0, kind: input, shape index: {}]
  %s1 = inlined_call_operand.vmem [shape: bf16[144,32], index: 1, kind: input, shape index: {}]
  %s2 = inlined_call_operand.vmem [shape: f32[1,32], index: 2, kind: input, shape index: {}]
  %s3 = inlined_call_operand.vmem [shape: bf16[32,90], index: 3, kind: input, shape index: {}]
  %s4 = inlined_call_operand.vmem [shape: f32[1,90], index: 4, kind: input, shape index: {}]
  %s5 = inlined_call_operand.vmem [shape: bf16[30,32], index: 5, kind: input, shape index: {}]
  %s6 = inlined_call_operand.vmem [shape: f32[1,32], index: 6, kind: input, shape index: {}]
  %s7 = inlined_call_operand.vmem [shape: bf16[3,64,64], index: 7, kind: input, shape index: {}]
  %s8 = inlined_call_operand.vmem [shape: f32[2,64,32], index: 8, kind: output, shape index: {}]
  %s9 = sld [smem:[#allocation0]]
  $region65: #{mtl2d_deepsvdd_forward.4} parent=0
    _
  %s11 = ssub.s32 1, %s9
  %s12 = scalar_select 0, %s11, %s9
  loop: start=0, step=1, limit=4
  $region2: #{mtl2d_deepsvdd_forward.4} parent=0 // loop_pre_header
    _
  $region3: #{mtl2d_deepsvdd_forward.4} parent=0 // loop_header
    %s14 = sphi 0, %s18
    %p15 = scmp.ge.s32.totalorder %s14, 4
    %s24 = sphi 0, %s26
    %s27 = sphi 0, %s24
    %s28 = sphi 0, %s27
    %s44 = sphi 0, %s28
    %s48 = sphi 0, %s48
    %s50 = sphi 0, %s48
    %s51 = sphi 0, %s50
    %s65 = sphi 0, %s51
    %s69 = sphi 0, %s69
    %s71 = sphi 0, %s69
    %s72 = sphi 0, %s71
    %s86 = sphi 0, %s72
    %s90 = sphi 0, %s90
    %s92 = sphi 0, %s90
    %s93 = sphi 0, %s92
    %s107 = sphi 0, %s93
    %s111 = sphi 0, %s111
    %s113 = sphi 0, %s111
    %s114 = sphi 0, %s113
    %s128 = sphi 0, %s114
    %s132 = sphi 0, %s132
    %s134 = sphi 0, %s132
    %s135 = sphi 0, %s134
    %s149 = sphi 0, %s135
    %s153 = sphi 0, %s153
    %s155 = sphi 0, %s153
    %s156 = sphi 0, %s155
    %s170 = sphi 0, %s156
    %s174 = sphi 0, %s174
    %s176 = sphi 0, %s174
    %s177 = sphi 0, %s176
    %s191 = sphi 0, %s177
    %s197 = sphi 0, %s199
    %s200 = sphi 0, %s197
    %s201 = sphi 0, %s200
    %s217 = sphi 0, %s201
  $region4: #{mtl2d_deepsvdd_forward.4} parent=0 // loop_header_branch
    %17 = sbr.rel (%p15) target = $region8
  $region5: #{mtl2d_deepsvdd_forward.4} parent=0 // loop_body
    %s19 = ssub.s32 %s14, 1
    %s20 = ssub.s32 %s14, 2
    %s21 = sadd.s32 %s14, 1
    %s22 = ssub.s32 %s14, %s21
    %p23 = scmp.eq.s32.totalorder %s22, 0
    %s25 = sadd.s32 %s24, 1
    %s26 = scalar_select %p23, %s24, %s25
    %p29 = pneg %p23
    %p30 = scmp.eq.s32.totalorder %s14, 1
    %p31 = por %p29, %p30
    %p32 = scmp.ne.s32.totalorder %s24, %s27
    %p33 = scmp.eq.s32.totalorder %s14, 0
    %p34 = por %p32, %p33
    %p35 = scmp.ne.s32.totalorder %s24, %s27
    %p36 = scmp.eq.s32.totalorder %s19, 1
    %p37 = por %p35, %p36
    %p38 = scmp.ne.s32.totalorder %s27, %s28
    %p39 = scmp.eq.s32.totalorder %s19, 0
    %p40 = por %p38, %p39
    %p41 = scmp.ne.s32.totalorder %s27, %s28
    %p42 = scmp.eq.s32.totalorder %s20, 1
    %p43 = por %p41, %p42
    %p45 = scmp.ne.s32.totalorder %s28, %s44
    %p46 = scmp.eq.s32.totalorder %s20, 0
    %p47 = por %p45, %p46
    %s49 = sadd.s32 %s48, 1
    %p52 = scmp.eq.s32.totalorder %s14, 1
    %p53 = scmp.ne.s32.totalorder %s48, %s50
    %p54 = scmp.eq.s32.totalorder %s14, 0
    %p55 = por %p53, %p54
    %p56 = scmp.ne.s32.totalorder %s48, %s50
    %p57 = scmp.eq.s32.totalorder %s19, 1
    %p58 = por %p56, %p57
    %p59 = scmp.ne.s32.totalorder %s50, %s51
    %p60 = scmp.eq.s32.totalorder %s19, 0
    %p61 = por %p59, %p60
    %p62 = scmp.ne.s32.totalorder %s50, %s51
    %p63 = scmp.eq.s32.totalorder %s20, 1
    %p64 = por %p62, %p63
    %p66 = scmp.ne.s32.totalorder %s51, %s65
    %p67 = scmp.eq.s32.totalorder %s20, 0
    %p68 = por %p66, %p67
    %s70 = sadd.s32 %s69, 1
    %p73 = scmp.eq.s32.totalorder %s14, 1
    %p74 = scmp.ne.s32.totalorder %s69, %s71
    %p75 = scmp.eq.s32.totalorder %s14, 0
    %p76 = por %p74, %p75
    %p77 = scmp.ne.s32.totalorder %s69, %s71
    %p78 = scmp.eq.s32.totalorder %s19, 1
    %p79 = por %p77, %p78
    %p80 = scmp.ne.s32.totalorder %s71, %s72
    %p81 = scmp.eq.s32.totalorder %s19, 0
    %p82 = por %p80, %p81
    %p83 = scmp.ne.s32.totalorder %s71, %s72
    %p84 = scmp.eq.s32.totalorder %s20, 1
    %p85 = por %p83, %p84
    %p87 = scmp.ne.s32.totalorder %s72, %s86
    %p88 = scmp.eq.s32.totalorder %s20, 0
    %p89 = por %p87, %p88
    %s91 = sadd.s32 %s90, 1
    %p94 = scmp.eq.s32.totalorder %s14, 1
    %p95 = scmp.ne.s32.totalorder %s90, %s92
    %p96 = scmp.eq.s32.totalorder %s14, 0
    %p97 = por %p95, %p96
    %p98 = scmp.ne.s32.totalorder %s90, %s92
    %p99 = scmp.eq.s32.totalorder %s19, 1
    %p100 = por %p98, %p99
    %p101 = scmp.ne.s32.totalorder %s92, %s93
    %p102 = scmp.eq.s32.totalorder %s19, 0
    %p103 = por %p101, %p102
    %p104 = scmp.ne.s32.totalorder %s92, %s93
    %p105 = scmp.eq.s32.totalorder %s20, 1
    %p106 = por %p104, %p105
    %p108 = scmp.ne.s32.totalorder %s93, %s107
    %p109 = scmp.eq.s32.totalorder %s20, 0
    %p110 = por %p108, %p109
    %s112 = sadd.s32 %s111, 1
    %p115 = scmp.eq.s32.totalorder %s14, 1
    %p116 = scmp.ne.s32.totalorder %s111, %s113
    %p117 = scmp.eq.s32.totalorder %s14, 0
    %p118 = por %p116, %p117
    %p119 = scmp.ne.s32.totalorder %s111, %s113
    %p120 = scmp.eq.s32.totalorder %s19, 1
    %p121 = por %p119, %p120
    %p122 = scmp.ne.s32.totalorder %s113, %s114
    %p123 = scmp.eq.s32.totalorder %s19, 0
    %p124 = por %p122, %p123
    %p125 = scmp.ne.s32.totalorder %s113, %s114
    %p126 = scmp.eq.s32.totalorder %s20, 1
    %p127 = por %p125, %p126
    %p129 = scmp.ne.s32.totalorder %s114, %s128
    %p130 = scmp.eq.s32.totalorder %s20, 0
    %p131 = por %p129, %p130
    %s133 = sadd.s32 %s132, 1
    %p136 = scmp.eq.s32.totalorder %s14, 1
    %p137 = scmp.ne.s32.totalorder %s132, %s134
    %p138 = scmp.eq.s32.totalorder %s14, 0
    %p139 = por %p137, %p138
    %p140 = scmp.ne.s32.totalorder %s132, %s134
    %p141 = scmp.eq.s32.totalorder %s19, 1
    %p142 = por %p140, %p141
    %p143 = scmp.ne.s32.totalorder %s134, %s135
    %p144 = scmp.eq.s32.totalorder %s19, 0
    %p145 = por %p143, %p144
    %p146 = scmp.ne.s32.totalorder %s134, %s135
    %p147 = scmp.eq.s32.totalorder %s20, 1
    %p148 = por %p146, %p147
    %p150 = scmp.ne.s32.totalorder %s135, %s149
    %p151 = scmp.eq.s32.totalorder %s20, 0
    %p152 = por %p150, %p151
    %s154 = sadd.s32 %s153, 1
    %p157 = scmp.eq.s32.totalorder %s14, 1
    %p158 = scmp.ne.s32.totalorder %s153, %s155
    %p159 = scmp.eq.s32.totalorder %s14, 0
    %p160 = por %p158, %p159
    %p161 = scmp.ne.s32.totalorder %s153, %s155
    %p162 = scmp.eq.s32.totalorder %s19, 1
    %p163 = por %p161, %p162
    %p164 = scmp.ne.s32.totalorder %s155, %s156
    %p165 = scmp.eq.s32.totalorder %s19, 0
    %p166 = por %p164, %p165
    %p167 = scmp.ne.s32.totalorder %s155, %s156
    %p168 = scmp.eq.s32.totalorder %s20, 1
    %p169 = por %p167, %p168
    %p171 = scmp.ne.s32.totalorder %s156, %s170
    %p172 = scmp.eq.s32.totalorder %s20, 0
    %p173 = por %p171, %p172
    %s175 = sadd.s32 %s174, 1
    %p178 = scmp.eq.s32.totalorder %s14, 1
    %p179 = scmp.ne.s32.totalorder %s174, %s176
    %p180 = scmp.eq.s32.totalorder %s14, 0
    %p181 = por %p179, %p180
    %p182 = scmp.ne.s32.totalorder %s174, %s176
    %p183 = scmp.eq.s32.totalorder %s19, 1
    %p184 = por %p182, %p183
    %p185 = scmp.ne.s32.totalorder %s176, %s177
    %p186 = scmp.eq.s32.totalorder %s19, 0
    %p187 = por %p185, %p186
    %p188 = scmp.ne.s32.totalorder %s176, %s177
    %p189 = scmp.eq.s32.totalorder %s20, 1
    %p190 = por %p188, %p189
    %p192 = scmp.ne.s32.totalorder %s177, %s191
    %p193 = scmp.eq.s32.totalorder %s20, 0
    %p194 = por %p192, %p193
    %s195 = ssub.s32 %s14, %s21
    %p196 = scmp.eq.s32.totalorder %s195, 0
    %s198 = sadd.s32 %s197, 1
    %s199 = scalar_select %p196, %s197, %s198
    %p202 = pneg %p196
    %p203 = scmp.eq.s32.totalorder %s14, 1
    %p204 = por %p202, %p203
    %p205 = scmp.ne.s32.totalorder %s197, %s200
    %p206 = scmp.eq.s32.totalorder %s14, 0
    %p207 = por %p205, %p206
    %p208 = scmp.ne.s32.totalorder %s197, %s200
    %p209 = scmp.eq.s32.totalorder %s19, 1
    %p210 = por %p208, %p209
    %p211 = scmp.ne.s32.totalorder %s200, %s201
    %p212 = scmp.eq.s32.totalorder %s19, 0
    %p213 = por %p211, %p212
    %p214 = scmp.ne.s32.totalorder %s200, %s201
    %p215 = scmp.eq.s32.totalorder %s20, 1
    %p216 = por %p214, %p215
    %p218 = scmp.ne.s32.totalorder %s201, %s217
    %p219 = scmp.eq.s32.totalorder %s20, 0
    %p220 = por %p218, %p219
    %p221 = scmp.le.s32.totalorder 1, %s14
    %p222 = scmp.lt.s32.totalorder %s14, 3
    %p223 = pnand %p221, %p222
    %p224 = pneg %p223
    // Predicated region
    $region9: #{mtl2d_deepsvdd_forward.4} parent=5 // pred_check
      _
    $region10: #{mtl2d_deepsvdd_forward.4} parent=5 // pred_check_branch
      %226 = sbr.rel (%p223) target = $region12
    $region11: #{mtl2d_deepsvdd_forward.4} parent=5 // pred_region
      %s227 = ssub.s32 %s14, 1
      // Predicated region
      $region13: #{mtl2d_deepsvdd_forward.4} parent=11 // pred_check
        %p228 = pneg %p61
      $region14: #{mtl2d_deepsvdd_forward.4} parent=11 // pred_check_branch
        %230 = sbr.rel (%p228) target = $region16
      $region15: #{mtl2d_deepsvdd_forward.4} parent=11 // pred_region
        _
      $region16: #{mtl2d_deepsvdd_forward.4} parent=11 // pred_fallthru
        _
      // Predicated region
      $region17: #{mtl2d_deepsvdd_forward.4} parent=11 // pred_check
        %p231 = pneg %p82
      $region18: #{mtl2d_deepsvdd_forward.4} parent=11 // pred_check_branch
        %233 = sbr.rel (%p231) target = $region20
      $region19: #{mtl2d_deepsvdd_forward.4} parent=11 // pred_region
        _
      $region20: #{mtl2d_deepsvdd_forward.4} parent=11 // pred_fallthru
        _
      // Predicated region
      $region21: #{mtl2d_deepsvdd_forward.4} parent=11 // pred_check
        %p234 = pneg %p103
      $region22: #{mtl2d_deepsvdd_forward.4} parent=11 // pred_check_branch
        %236 = sbr.rel (%p234) target = $region24
      $region23: #{mtl2d_deepsvdd_forward.4} parent=11 // pred_region
        _
      $region24: #{mtl2d_deepsvdd_forward.4} parent=11 // pred_fallthru
        _
      // Predicated region
      $region25: #{mtl2d_deepsvdd_forward.4} parent=11 // pred_check
        %p237 = pneg %p124
      $region26: #{mtl2d_deepsvdd_forward.4} parent=11 // pred_check_branch
        %239 = sbr.rel (%p237) target = $region28
      $region27: #{mtl2d_deepsvdd_forward.4} parent=11 // pred_region
        _
      $region28: #{mtl2d_deepsvdd_forward.4} parent=11 // pred_fallthru
        _
      // Predicated region
      $region29: #{mtl2d_deepsvdd_forward.4} parent=11 // pred_check
        %p240 = pneg %p145
      $region30: #{mtl2d_deepsvdd_forward.4} parent=11 // pred_check_branch
        %242 = sbr.rel (%p240) target = $region32
      $region31: #{mtl2d_deepsvdd_forward.4} parent=11 // pred_region
        _
      $region32: #{mtl2d_deepsvdd_forward.4} parent=11 // pred_fallthru
        _
      // Predicated region
      $region33: #{mtl2d_deepsvdd_forward.4} parent=11 // pred_check
        %p243 = pneg %p166
      $region34: #{mtl2d_deepsvdd_forward.4} parent=11 // pred_check_branch
        %245 = sbr.rel (%p243) target = $region36
      $region35: #{mtl2d_deepsvdd_forward.4} parent=11 // pred_region
        _
      $region36: #{mtl2d_deepsvdd_forward.4} parent=11 // pred_fallthru
        _
      // Predicated region
      $region37: #{mtl2d_deepsvdd_forward.4} parent=11 // pred_check
        %p246 = pneg %p187
      $region38: #{mtl2d_deepsvdd_forward.4} parent=11 // pred_check_branch
        %248 = sbr.rel (%p246) target = $region40
      $region39: #{mtl2d_deepsvdd_forward.4} parent=11 // pred_region
        _
      $region40: #{mtl2d_deepsvdd_forward.4} parent=11 // pred_fallthru
        _
    $region12: #{mtl2d_deepsvdd_forward.4} parent=5 // pred_fallthru
      _
    %p249 = scmp.lt.s32.totalorder %s14, 2
    // Predicated region
    $region41: #{mtl2d_deepsvdd_forward.4} parent=5 // pred_check
      %p250 = pneg %p249
    $region42: #{mtl2d_deepsvdd_forward.4} parent=5 // pred_check_branch
      %252 = sbr.rel (%p250) target = $region44
    $region43: #{mtl2d_deepsvdd_forward.4} parent=5 // pred_region
      // Predicated region
      $region45: #{mtl2d_deepsvdd_forward.4} parent=43 // pred_check
        %p253 = pneg %p34
      $region46: #{mtl2d_deepsvdd_forward.4} parent=43 // pred_check_branch
        %255 = sbr.rel (%p253) target = $region48
      $region47: #{mtl2d_deepsvdd_forward.4} parent=43 // pred_region
        %p256 = scmp.lt.s32.totalorder %s14, 1
        %s257 = scalar_select %p256, %s14, 1
        %s258 = smul.addr %s257, 16
        %s259 = smul.addr %s258, 8
        %s260 = scalar_lea.vmem %s0, %s259
      $region48: #{mtl2d_deepsvdd_forward.4} parent=43 // pred_fallthru
        _
    $region44: #{mtl2d_deepsvdd_forward.4} parent=5 // pred_fallthru
      _
    %p261 = scmp.le.s32.totalorder 1, %s14
    %p262 = scmp.lt.s32.totalorder %s14, 3
    %p263 = pnand %p261, %p262
    %p264 = pneg %p263
    // Predicated region
    $region49: #{mtl2d_deepsvdd_forward.4} parent=5 // pred_check
      _
    $region50: #{mtl2d_deepsvdd_forward.4} parent=5 // pred_check_branch
      %266 = sbr.rel (%p263) target = $region52
    $region51: #{mtl2d_deepsvdd_forward.4} parent=5 // pred_region
      %s267 = ssub.s32 %s14, 1
      %p268 = scmp.lt.s32.totalorder %s19, 1
      %s269 = scalar_select %p268, %s19, 1
      %s270 = smul.addr %s269, 16
      %s271 = smul.addr %s270, 8
      %s272 = scalar_lea.vmem %s0, %s271
      %p273 = pneg %p40
      %p274 = pneg %p37
      %p275 = pneg %p61
      %p276 = pneg %p58
      %p277 = pneg %p82
      %p278 = pneg %p79
      %p279 = pneg %p103
      %p280 = pneg %p100
      %p281 = pneg %p124
      %p282 = pneg %p121
      %p283 = pneg %p145
      %p284 = pneg %p142
      %p285 = pneg %p166
      %p286 = pneg %p163
      %p287 = pneg %p187
      %p288 = pneg %p184
      %p289 = pneg %p213
      %p290 = pneg %p210
      %p291 = scmp.lt.s32.totalorder %s19, 1
      %s292 = scalar_select %p291, %s19, 1
      %s293 = smul.addr %s292, 8
      %s294 = smul.addr %s293, 8
      %s295 = scalar_lea.vmem %s8, %s294
      %p296 = scmp.lt.s32.totalorder %s19, 1
      %s297 = scalar_select %p296, %s19, 1
      %s298 = smul.addr %s297, 16
      %s299 = smul.addr %s298, 8
      %s300 = scalar_lea.vmem %s0, %s299
      %p301 = scmp.lt.s32.totalorder %s19, 1
      %s302 = scalar_select %p301, %s19, 1
      %s303 = smul.addr %s302, 8
      %s304 = smul.addr %s303, 8
      %s305 = scalar_lea.vmem %s8, %s304
      %v307 = vld [vmem:[%s300] sm:$0xff]
      %v308 = vld [vmem:[%s300 + $0x8] sm:$0xff]
      %v309 = vld [vmem:[%s300 + $0x10] sm:$0xff]
      %v310 = vld [vmem:[%s300 + $0x18] sm:$0xff]
      %v311 = vld [vmem:[%s300 + $0x20] sm:$0xff]
      %v312 = vld [vmem:[%s300 + $0x28] sm:$0xff]
      %v313 = vld [vmem:[%s300 + $0x30] sm:$0xff]
      %v314 = vld [vmem:[%s300 + $0x38] sm:$0xff]
      %v315 = vld [vmem:[%s300 + $0x40] sm:$0xff]
      %v316 = vld [vmem:[%s300 + $0x48] sm:$0xff]
      %v317 = vld [vmem:[%s300 + $0x50] sm:$0xff]
      %v318 = vld [vmem:[%s300 + $0x58] sm:$0xff]
      %v319 = vld [vmem:[%s300 + $0x60] sm:$0xff]
      %v320 = vld [vmem:[%s300 + $0x68] sm:$0xff]
      %v321 = vld [vmem:[%s300 + $0x70] sm:$0xff]
      %v322 = vld [vmem:[%s300 + $0x78] sm:$0xff]
      %v323 = vpack.c.bf16 %v309, %v307
      %v324 = vpack.c.bf16 %v310, %v308
      %v325 = vpack.c.bf16 %v313, %v311
      %v326 = vpack.c.bf16 %v314, %v312
      %v327 = vpack.c.bf16 %v317, %v315
      %v328 = vpack.c.bf16 %v318, %v316
      %v329 = vpack.c.bf16 %v321, %v319
      %v330 = vpack.c.bf16 %v322, %v320
      %v331 = vld [vmem:[%s1] sm:$0xf]
      %v332 = vld [vmem:[%s1 + $0x4] sm:$0xf]
      %v333 = vld [vmem:[%s1 + $0x8] sm:$0xf]
      %v334 = vld [vmem:[%s1 + $0xc] sm:$0xf]
      %v335 = vld [vmem:[%s1 + $0x10] sm:$0xf]
      %v336 = vld [vmem:[%s1 + $0x14] sm:$0xf]
      %v337 = vld [vmem:[%s1 + $0x18] sm:$0xf]
      %v338 = vld [vmem:[%s1 + $0x1c] sm:$0xf]
      %v339 = vld [vmem:[%s1 + $0x20] sm:$0xf]
      %v340 = vld [vmem:[%s1 + $0x24] sm:$0xf]
      %v341 = vld [vmem:[%s1 + $0x28] sm:$0xf]
      %v342 = vld [vmem:[%s1 + $0x2c] sm:$0xf]
      %v343 = vld [vmem:[%s1 + $0x30] sm:$0xf]
      %v344 = vld [vmem:[%s1 + $0x34] sm:$0xf]
      %v345 = vld [vmem:[%s1 + $0x38] sm:$0xf]
      %v346 = vld [vmem:[%s1 + $0x3c] sm:$0xf]
      %v347 = vld [vmem:[%s1 + $0x40] sm:$0xf]
      %v348 = vld [vmem:[%s1 + $0x44] sm:$0xf]
      %v349 = vld [vmem:[%s2] sm:$0x1]
      %v351 = vperm.slane %v349, 0
      %v371 = vunpack.c.l.b16 %v331
      %v372 = vunpack.c.l.b16 %v332
      %v373 = vunpack.c.l.b16 %v333
      %v374 = vunpack.c.l.b16 %v334
      %v375 = vunpack.c.l.b16 %v335
      %v376 = vunpack.c.l.b16 %v336
      %v377 = vunpack.c.l.b16 %v337
      %v378 = vunpack.c.l.b16 %v338
      %v379 = vunpack.c.l.b16 %v339
      %v380 = vunpack.c.l.b16 %v340
      %v381 = vunpack.c.l.b16 %v341
      %v382 = vunpack.c.l.b16 %v342
      %v383 = vunpack.c.l.b16 %v343
      %v384 = vunpack.c.l.b16 %v344
      %v385 = vunpack.c.l.b16 %v345
      %v386 = vunpack.c.l.b16 %v346
      %v387 = vunpack.c.l.b16 %v347
      %v388 = vunpack.c.l.b16 %v348
      %v389 = vpack.c.b16 %v372, %v371
      %v390 = vpack.c.b16 %v374, %v373
      %v391 = vpack.c.b16 %v376, %v375
      %v392 = vpack.c.b16 %v378, %v377
      %v393 = vpack.c.b16 %v380, %v379
      %v394 = vpack.c.b16 %v382, %v381
      %v395 = vpack.c.b16 %v384, %v383
      %v396 = vpack.c.b16 %v386, %v385
      %v397 = vpack.c.b16 %v388, %v387
      %vm407 = vcmask 130048
      %v409 = vsel %vm407, %v324, 0
      %v412 = vsel %vm407, %v326, 0
      %v415 = vsel %vm407, %v328, 0
      %v418 = vsel %vm407, %v330, 0
      %420 = vmatpush.bf16.msra.mxu0 %v396
      %421 = vmatpush.bf16.msra.mxu0 %v395
      %422 = vmatpush.bf16.msra.mxu0 %v394
      %423 = vmatpush.bf16.msra.mxu0 %v393
      %424 = vmatpush.bf16.msra.mxu0 %v392
      %425 = vmatpush.bf16.msra.mxu0 %v391
      %426 = vmatpush.bf16.msra.mxu0 %v390
      %427 = vmatpush.bf16.msra.mxu0 %v389
      %428 = vmatmul.bf16.gmra.mxu0 %v323
      %v429 = vpop.f32.mrf.mxu0
      %v430 = vadd.f32 %v351, %v429
      %v431 = vpop.f32.mrf.mxu0
      %v432 = vadd.f32 %v351, %v431
      %433 = vmatmul.bf16.gmra.mxu0 %v325
      %v434 = vpop.f32.mrf.mxu0
      %v435 = vadd.f32 %v351, %v434
      %v436 = vpop.f32.mrf.mxu0
      %v437 = vadd.f32 %v351, %v436
      %438 = vmatmul.bf16.gmra.mxu0 %v327
      %v439 = vpop.f32.mrf.mxu0
      %v440 = vadd.f32 %v351, %v439
      %v441 = vpop.f32.mrf.mxu0
      %v442 = vadd.f32 %v351, %v441
      %443 = vmatmul.bf16.gmra.mxu0 %v329
      %v444 = vpop.f32.mrf.mxu0
      %v445 = vadd.f32 %v351, %v444
      %v446 = vpop.f32.mrf.mxu0
      %v447 = vadd.f32 %v351, %v446
      %448 = vdwg.mxu0
      %449 = vmatpush.bf16.msra.mxu0 0
      %450 = vmatpush.bf16.msra.mxu0 0
      %451 = vmatpush.bf16.msra.mxu0 0
      %452 = vmatpush.bf16.msra.mxu0 0
      %453 = vmatpush.bf16.msra.mxu0 0
      %454 = vmatpush.bf16.msra.mxu0 0
      %455 = vmatpush.bf16.msra.mxu0 0
      %456 = vmatpush.bf16.msra.mxu0 %v397
      %457 = vmatmul.bf16.gmra.mxu0 %v409
      %v458 = vpop.f32.mrf.mxu0
      %v459 = vadd.f32 %v430, %v458
      %v460 = vpop.f32.mrf.mxu0
      %v461 = vadd.f32 %v432, %v460
      %462 = vmatmul.bf16.gmra.mxu0 %v412
      %v463 = vpop.f32.mrf.mxu0
      %v464 = vadd.f32 %v435, %v463
      %v465 = vpop.f32.mrf.mxu0
      %v466 = vadd.f32 %v437, %v465
      %467 = vmatmul.bf16.gmra.mxu0 %v415
      %v468 = vpop.f32.mrf.mxu0
      %v469 = vadd.f32 %v440, %v468
      %v470 = vpop.f32.mrf.mxu0
      %v471 = vadd.f32 %v442, %v470
      %472 = vmatmul.bf16.gmra.mxu0 %v418
      %v473 = vpop.f32.mrf.mxu0
      %v474 = vadd.f32 %v445, %v473
      %v475 = vpop.f32.mrf.mxu0
      %v476 = vadd.f32 %v447, %v475
      %477 = vdwg.mxu0
      %v478 = vmax.f32 %v459, 0.0
      %v479 = vmax.f32 %v461, 0.0
      %v480 = vmax.f32 %v464, 0.0
      %v481 = vmax.f32 %v466, 0.0
      %v482 = vmax.f32 %v469, 0.0
      %v483 = vmax.f32 %v471, 0.0
      %v484 = vmax.f32 %v474, 0.0
      %v485 = vmax.f32 %v476, 0.0
      %v486 = vpack.c.bf16 %v479, %v478
      %v487 = vpack.c.bf16 %v481, %v480
      %v488 = vpack.c.bf16 %v483, %v482
      %v489 = vpack.c.bf16 %v485, %v484
      %v490 = vld [vmem:[%s3] sm:$0xf]
      %v491 = vld [vmem:[%s3 + $0x4] sm:$0xf]
      %v492 = vld [vmem:[%s3 + $0x8] sm:$0xf]
      %v493 = vld [vmem:[%s3 + $0xc] sm:$0xf]
      %v494 = vld [vmem:[%s4] sm:$0x1]
      %v496 = vperm.slane %v494, 0
      %v502 = vunpack.c.l.b16 %v490
      %v503 = vunpack.c.l.b16 %v491
      %v504 = vunpack.c.l.b16 %v492
      %v505 = vunpack.c.l.b16 %v493
      %v506 = vpack.c.b16 %v503, %v502
      %v507 = vpack.c.b16 %v505, %v504
      %vm510 = vcmask 261120
      %v512 = vsel %vm510, %v486, 0
      %v515 = vsel %vm510, %v487, 0
      %v518 = vsel %vm510, %v488, 0
      %v521 = vsel %vm510, %v489, 0
      %523 = vmatpush.bf16.msra.mxu0 0
      %524 = vmatpush.bf16.msra.mxu0 0
      %525 = vmatpush.bf16.msra.mxu0 0
      %526 = vmatpush.bf16.msra.mxu0 0
      %527 = vmatpush.bf16.msra.mxu0 0
      %528 = vmatpush.bf16.msra.mxu0 0
      %529 = vmatpush.bf16.msra.mxu0 %v507
      %530 = vmatpush.bf16.msra.mxu0 %v506
      %531 = vmatmul.bf16.gmra.mxu0 %v512
      %v532 = vpop.f32.mrf.mxu0
      %v533 = vadd.f32 %v496, %v532
      %v534 = vpop.f32.mrf.mxu0
      %v535 = vadd.f32 %v496, %v534
      %536 = vmatmul.bf16.gmra.mxu0 %v515
      %v537 = vpop.f32.mrf.mxu0
      %v538 = vadd.f32 %v496, %v537
      %v539 = vpop.f32.mrf.mxu0
      %v540 = vadd.f32 %v496, %v539
      %541 = vmatmul.bf16.gmra.mxu0 %v518
      %v542 = vpop.f32.mrf.mxu0
      %v543 = vadd.f32 %v496, %v542
      %v544 = vpop.f32.mrf.mxu0
      %v545 = vadd.f32 %v496, %v544
      %546 = vmatmul.bf16.gmra.mxu0 %v521
      %v547 = vpop.f32.mrf.mxu0
      %v548 = vadd.f32 %v496, %v547
      %v549 = vpop.f32.mrf.mxu0
      %v550 = vadd.f32 %v496, %v549
      %551 = vdwg.mxu0
      %v552 = vpack.c.bf16 %v533, %v533
      %v553 = vpack.c.bf16 %v535, %v535
      %v554 = vpack.c.bf16 %v538, %v538
      %v555 = vpack.c.bf16 %v540, %v540
      %v556 = vpack.c.bf16 %v543, %v543
      %v557 = vpack.c.bf16 %v545, %v545
      %v558 = vpack.c.bf16 %v548, %v548
      %v559 = vpack.c.bf16 %v550, %v550
      %v560 = vpack.c.bf16 %v535, %v533
      %v561 = vpack.c.bf16 %v540, %v538
      %v562 = vpack.c.bf16 %v545, %v543
      %v563 = vpack.c.bf16 %v550, %v548
      %v564 = vld [vmem:[%s7] sm:$0xf]
      %v565 = vld [vmem:[%s7 + $0x4] sm:$0xf]
      %v566 = vld [vmem:[%s7 + $0x8] sm:$0xf]
      %v567 = vld [vmem:[%s7 + $0xc] sm:$0xf]
      %v568 = vld [vmem:[%s7 + $0x10] sm:$0xf]
      %v569 = vld [vmem:[%s7 + $0x14] sm:$0xf]
      %v570 = vld [vmem:[%s7 + $0x18] sm:$0xf]
      %v571 = vld [vmem:[%s7 + $0x1c] sm:$0xf]
      %v572 = vunpack.c.l.bf16 %v564
      %v573 = vunpack.c.l.bf16 %v565
      %v574 = vunpack.c.l.bf16 %v566
      %v575 = vunpack.c.l.bf16 %v567
      %v576 = vunpack.c.l.bf16 %v568
      %v577 = vunpack.c.l.bf16 %v569
      %v578 = vunpack.c.l.bf16 %v570
      %v579 = vunpack.c.l.bf16 %v571
      %v588 = vunpack.c.l.b16 %v552
      %v589 = vunpack.c.l.b16 %v553
      %v590 = vunpack.c.l.b16 %v554
      %v591 = vunpack.c.l.b16 %v555
      %v592 = vunpack.c.l.b16 %v556
      %v593 = vunpack.c.l.b16 %v557
      %v594 = vunpack.c.l.b16 %v558
      %v595 = vunpack.c.l.b16 %v559
      %v596 = vpack.c.b16 %v589, %v588
      %v597 = vpack.c.b16 %v591, %v590
      %v598 = vpack.c.b16 %v593, %v592
      %v599 = vpack.c.b16 %v595, %v594
      %600 = vrot.lane.b32.xlu0 %v596, 98
      %v601 = vpop.permute.xlu0 %600
      %602 = vrot.lane.b32.xlu0 %v597, 98
      %v603 = vpop.permute.xlu0 %602
      %604 = vrot.lane.b32.xlu0 %v598, 98
      %v605 = vpop.permute.xlu0 %604
      %606 = vrot.lane.b32.xlu0 %v599, 98
      %v607 = vpop.permute.xlu0 %606
      %vm608 = vcmask 80896
      %v610 = vsel %vm608, %v560, 0
      %v613 = vsel %vm608, %v561, 0
      %v616 = vsel %vm608, %v562, 0
      %v619 = vsel %vm608, %v563, 0
      %v622 = vsel %vm608, %v601, 0
      %v625 = vsel %vm608, %v603, 0
      %v628 = vsel %vm608, %v605, 0
      %v631 = vsel %vm608, %v607, 0
      %633 = vmatpush.bf16.xpose.msra.mxu0 0
      %634 = vmatpush.bf16.xpose.msra.mxu0 0
      %635 = vmatpush.bf16.xpose.msra.mxu0 0
      %636 = vmatpush.bf16.xpose.msra.mxu0 0
      %637 = vmatpush.bf16.xpose.msra.mxu0 %v631
      %638 = vmatpush.bf16.xpose.msra.mxu0 %v628
      %639 = vmatpush.bf16.xpose.msra.mxu0 %v625
      %640 = vmatpush.bf16.xpose.msra.mxu0 %v622
      %641 = vmatmul.bf16.gmra.mxu0 %v610
      %v642 = vpop.f32.mrf.mxu0
      %v643 = vadd.f32 %v572, %v642
      %v644 = vpop.f32.mrf.mxu0
      %v645 = vadd.f32 %v573, %v644
      %646 = vmatmul.bf16.gmra.mxu0 %v613
      %v647 = vpop.f32.mrf.mxu0
      %v648 = vadd.f32 %v574, %v647
      %v649 = vpop.f32.mrf.mxu0
      %v650 = vadd.f32 %v575, %v649
      %651 = vmatmul.bf16.gmra.mxu0 %v616
      %v652 = vpop.f32.mrf.mxu0
      %v653 = vadd.f32 %v576, %v652
      %v654 = vpop.f32.mrf.mxu0
      %v655 = vadd.f32 %v577, %v654
      %656 = vmatmul.bf16.gmra.mxu0 %v619
      %v657 = vpop.f32.mrf.mxu0
      %v658 = vadd.f32 %v578, %v657
      %v659 = vpop.f32.mrf.mxu0
      %v660 = vadd.f32 %v579, %v659
      %661 = vdwg.mxu0
      %vm662 = vcmask 523264
      %v663 = vsel %vm662, %v643, -inf
      %664 = vmax.xlane.f32.xlu0 %v663
      %v665 = vpop.xlane.xlu0 %664
      %v666 = vsel %vm662, %v645, -inf
      %667 = vmax.xlane.f32.xlu0 %v666
      %v668 = vpop.xlane.xlu0 %667
      %v669 = vsel %vm662, %v648, -inf
      %670 = vmax.xlane.f32.xlu0 %v669
      %v671 = vpop.xlane.xlu0 %670
      %v672 = vsel %vm662, %v650, -inf
      %673 = vmax.xlane.f32.xlu0 %v672
      %v674 = vpop.xlane.xlu0 %673
      %v675 = vsel %vm662, %v653, -inf
      %676 = vmax.xlane.f32.xlu0 %v675
      %v677 = vpop.xlane.xlu0 %676
      %v678 = vsel %vm662, %v655, -inf
      %679 = vmax.xlane.f32.xlu0 %v678
      %v680 = vpop.xlane.xlu0 %679
      %v681 = vsel %vm662, %v658, -inf
      %682 = vmax.xlane.f32.xlu0 %v681
      %v683 = vpop.xlane.xlu0 %682
      %v684 = vsel %vm662, %v660, -inf
      %685 = vmax.xlane.f32.xlu0 %v684
      %v686 = vpop.xlane.xlu0 %685
      %v687 = vsub.f32 %v643, %v665
      %v688 = vsub.f32 %v645, %v668
      %v689 = vsub.f32 %v648, %v671
      %v690 = vsub.f32 %v650, %v674
      %v691 = vsub.f32 %v653, %v677
      %v692 = vsub.f32 %v655, %v680
      %v693 = vsub.f32 %v658, %v683
      %v694 = vsub.f32 %v660, %v686
      %v695 = vmul.f32 %v687, 1.442695
      %v696 = vpow.pop %v695
      %v697 = vmul.f32 %v688, 1.442695
      %v698 = vpow.pop %v697
      %v699 = vmul.f32 %v689, 1.442695
      %v700 = vpow.pop %v699
      %v701 = vmul.f32 %v690, 1.442695
      %v702 = vpow.pop %v701
      %v703 = vmul.f32 %v691, 1.442695
      %v704 = vpow.pop %v703
      %v705 = vmul.f32 %v692, 1.442695
      %v706 = vpow.pop %v705
      %v707 = vmul.f32 %v693, 1.442695
      %v708 = vpow.pop %v707
      %v709 = vmul.f32 %v694, 1.442695
      %v710 = vpow.pop %v709
      %v711 = vsel %vm662, %v696, 0.0
      %712 = vadd.xlane.f32.xlu0 %v711
      %v713 = vpop.xlane.xlu0 %712
      %v714 = vsel %vm662, %v698, 0.0
      %715 = vadd.xlane.f32.xlu0 %v714
      %v716 = vpop.xlane.xlu0 %715
      %v717 = vsel %vm662, %v700, 0.0
      %718 = vadd.xlane.f32.xlu0 %v717
      %v719 = vpop.xlane.xlu0 %718
      %v720 = vsel %vm662, %v702, 0.0
      %721 = vadd.xlane.f32.xlu0 %v720
      %v722 = vpop.xlane.xlu0 %721
      %v723 = vsel %vm662, %v704, 0.0
      %724 = vadd.xlane.f32.xlu0 %v723
      %v725 = vpop.xlane.xlu0 %724
      %v726 = vsel %vm662, %v706, 0.0
      %727 = vadd.xlane.f32.xlu0 %v726
      %v728 = vpop.xlane.xlu0 %727
      %v729 = vsel %vm662, %v708, 0.0
      %730 = vadd.xlane.f32.xlu0 %v729
      %v731 = vpop.xlane.xlu0 %730
      %v732 = vsel %vm662, %v710, 0.0
      %733 = vadd.xlane.f32.xlu0 %v732
      %v734 = vpop.xlane.xlu0 %733
      %v735 = vpack.c.bf16 %v698, %v696
      %v736 = vpack.c.bf16 %v702, %v700
      %v737 = vpack.c.bf16 %v706, %v704
      %v738 = vpack.c.bf16 %v710, %v708
      %739 = vrot.lane.b32.xlu0 %v596, 68
      %v740 = vpop.permute.xlu0 %739
      %741 = vrot.lane.b32.xlu0 %v597, 68
      %v742 = vpop.permute.xlu0 %741
      %743 = vrot.lane.b32.xlu0 %v598, 68
      %v744 = vpop.permute.xlu0 %743
      %745 = vrot.lane.b32.xlu0 %v599, 68
      %v746 = vpop.permute.xlu0 %745
      %v752 = vsel %vm662, %v735, 0
      %v755 = vsel %vm662, %v736, 0
      %v758 = vsel %vm662, %v737, 0
      %v761 = vsel %vm662, %v738, 0
      %763 = vmatpush.bf16.msra.mxu0 0
      %764 = vmatpush.bf16.msra.mxu0 0
      %765 = vmatpush.bf16.msra.mxu0 0
      %766 = vmatpush.bf16.msra.mxu0 0
      %767 = vmatpush.bf16.msra.mxu0 %v746
      %768 = vmatpush.bf16.msra.mxu0 %v744
      %769 = vmatpush.bf16.msra.mxu0 %v742
      %770 = vmatpush.bf16.msra.mxu0 %v740
      %771 = vmatmul.bf16.gmra.mxu0 %v752
      %v772 = vpop.f32.mrf.mxu0
      %v773 = vadd.f32 0.0, %v772
      %v774 = vpop.f32.mrf.mxu0
      %v775 = vadd.f32 0.0, %v774
      %776 = vmatmul.bf16.gmra.mxu0 %v755
      %v777 = vpop.f32.mrf.mxu0
      %v778 = vadd.f32 0.0, %v777
      %v779 = vpop.f32.mrf.mxu0
      %v780 = vadd.f32 0.0, %v779
      %781 = vmatmul.bf16.gmra.mxu0 %v758
      %v782 = vpop.f32.mrf.mxu0
      %v783 = vadd.f32 0.0, %v782
      %v784 = vpop.f32.mrf.mxu0
      %v785 = vadd.f32 0.0, %v784
      %786 = vmatmul.bf16.gmra.mxu0 %v761
      %v787 = vpop.f32.mrf.mxu0
      %v788 = vadd.f32 0.0, %v787
      %v789 = vpop.f32.mrf.mxu0
      %v790 = vadd.f32 0.0, %v789
      %791 = vdwg.mxu0
      %v792 = vrcp.pop %v713
      %v793 = vrcp.pop %v716
      %v794 = vrcp.pop %v719
      %v795 = vrcp.pop %v722
      %v796 = vrcp.pop %v725
      %v797 = vrcp.pop %v728
      %v798 = vrcp.pop %v731
      %v799 = vrcp.pop %v734
      %v800 = vmul.f32 %v773, %v792
      %v801 = vmul.f32 %v775, %v793
      %v802 = vmul.f32 %v778, %v794
      %v803 = vmul.f32 %v780, %v795
      %v804 = vmul.f32 %v783, %v796
      %v805 = vmul.f32 %v785, %v797
      %v806 = vmul.f32 %v788, %v798
      %v807 = vmul.f32 %v790, %v799
      %s808 = scalar_lea.vmem %s7, 32
      %v809 = vld [vmem:[%s808] sm:$0xf]
      %v810 = vld [vmem:[%s808 + $0x4] sm:$0xf]
      %v811 = vld [vmem:[%s808 + $0x8] sm:$0xf]
      %v812 = vld [vmem:[%s808 + $0xc] sm:$0xf]
      %v813 = vld [vmem:[%s808 + $0x10] sm:$0xf]
      %v814 = vld [vmem:[%s808 + $0x14] sm:$0xf]
      %v815 = vld [vmem:[%s808 + $0x18] sm:$0xf]
      %v816 = vld [vmem:[%s808 + $0x1c] sm:$0xf]
      %v817 = vunpack.c.l.bf16 %v809
      %v818 = vunpack.c.l.bf16 %v810
      %v819 = vunpack.c.l.bf16 %v811
      %v820 = vunpack.c.l.bf16 %v812
      %v821 = vunpack.c.l.bf16 %v813
      %v822 = vunpack.c.l.bf16 %v814
      %v823 = vunpack.c.l.bf16 %v815
      %v824 = vunpack.c.l.bf16 %v816
      %829 = vrot.lane.b32.xlu0 %v560, 118
      %v830 = vpop.permute.xlu0 %829
      %831 = vrot.lane.b32.xlu0 %v561, 118
      %v832 = vpop.permute.xlu0 %831
      %833 = vrot.lane.b32.xlu0 %v562, 118
      %v834 = vpop.permute.xlu0 %833
      %835 = vrot.lane.b32.xlu0 %v563, 118
      %v836 = vpop.permute.xlu0 %835
      %837 = vrot.lane.b32.xlu0 %v596, 88
      %v838 = vpop.permute.xlu0 %837
      %839 = vrot.lane.b32.xlu0 %v597, 88
      %v840 = vpop.permute.xlu0 %839
      %841 = vrot.lane.b32.xlu0 %v598, 88
      %v842 = vpop.permute.xlu0 %841
      %843 = vrot.lane.b32.xlu0 %v599, 88
      %v844 = vpop.permute.xlu0 %843
      %v846 = vsel %vm608, %v830, 0
      %v849 = vsel %vm608, %v832, 0
      %v852 = vsel %vm608, %v834, 0
      %v855 = vsel %vm608, %v836, 0
      %v858 = vsel %vm608, %v838, 0
      %v861 = vsel %vm608, %v840, 0
      %v864 = vsel %vm608, %v842, 0
      %v867 = vsel %vm608, %v844, 0
      %869 = vmatpush.bf16.xpose.msra.mxu0 0
      %870 = vmatpush.bf16.xpose.msra.mxu0 0
      %871 = vmatpush.bf16.xpose.msra.mxu0 0
      %872 = vmatpush.bf16.xpose.msra.mxu0 0
      %873 = vmatpush.bf16.xpose.msra.mxu0 %v867
      %874 = vmatpush.bf16.xpose.msra.mxu0 %v864
      %875 = vmatpush.bf16.xpose.msra.mxu0 %v861
      %876 = vmatpush.bf16.xpose.msra.mxu0 %v858
      %877 = vmatmul.bf16.gmra.mxu0 %v846
      %v878 = vpop.f32.mrf.mxu0
      %v879 = vadd.f32 %v817, %v878
      %v880 = vpop.f32.mrf.mxu0
      %v881 = vadd.f32 %v818, %v880
      %882 = vmatmul.bf16.gmra.mxu0 %v849
      %v883 = vpop.f32.mrf.mxu0
      %v884 = vadd.f32 %v819, %v883
      %v885 = vpop.f32.mrf.mxu0
      %v886 = vadd.f32 %v820, %v885
      %887 = vmatmul.bf16.gmra.mxu0 %v852
      %v888 = vpop.f32.mrf.mxu0
      %v889 = vadd.f32 %v821, %v888
      %v890 = vpop.f32.mrf.mxu0
      %v891 = vadd.f32 %v822, %v890
      %892 = vmatmul.bf16.gmra.mxu0 %v855
      %v893 = vpop.f32.mrf.mxu0
      %v894 = vadd.f32 %v823, %v893
      %v895 = vpop.f32.mrf.mxu0
      %v896 = vadd.f32 %v824, %v895
      %897 = vdwg.mxu0
      %v898 = vsel %vm662, %v879, -inf
      %899 = vmax.xlane.f32.xlu0 %v898
      %v900 = vpop.xlane.xlu0 %899
      %v901 = vsel %vm662, %v881, -inf
      %902 = vmax.xlane.f32.xlu0 %v901
      %v903 = vpop.xlane.xlu0 %902
      %v904 = vsel %vm662, %v884, -inf
      %905 = vmax.xlane.f32.xlu0 %v904
      %v906 = vpop.xlane.xlu0 %905
      %v907 = vsel %vm662, %v886, -inf
      %908 = vmax.xlane.f32.xlu0 %v907
      %v909 = vpop.xlane.xlu0 %908
      %v910 = vsel %vm662, %v889, -inf
      %911 = vmax.xlane.f32.xlu0 %v910
      %v912 = vpop.xlane.xlu0 %911
      %v913 = vsel %vm662, %v891, -inf
      %914 = vmax.xlane.f32.xlu0 %v913
      %v915 = vpop.xlane.xlu0 %914
      %v916 = vsel %vm662, %v894, -inf
      %917 = vmax.xlane.f32.xlu0 %v916
      %v918 = vpop.xlane.xlu0 %917
      %v919 = vsel %vm662, %v896, -inf
      %920 = vmax.xlane.f32.xlu0 %v919
      %v921 = vpop.xlane.xlu0 %920
      %v922 = vsub.f32 %v879, %v900
      %v923 = vsub.f32 %v881, %v903
      %v924 = vsub.f32 %v884, %v906
      %v925 = vsub.f32 %v886, %v909
      %v926 = vsub.f32 %v889, %v912
      %v927 = vsub.f32 %v891, %v915
      %v928 = vsub.f32 %v894, %v918
      %v929 = vsub.f32 %v896, %v921
      %v930 = vmul.f32 %v922, 1.442695
      %v931 = vpow.pop %v930
      %v932 = vmul.f32 %v923, 1.442695
      %v933 = vpow.pop %v932
      %v934 = vmul.f32 %v924, 1.442695
      %v935 = vpow.pop %v934
      %v936 = vmul.f32 %v925, 1.442695
      %v937 = vpow.pop %v936
      %v938 = vmul.f32 %v926, 1.442695
      %v939 = vpow.pop %v938
      %v940 = vmul.f32 %v927, 1.442695
      %v941 = vpow.pop %v940
      %v942 = vmul.f32 %v928, 1.442695
      %v943 = vpow.pop %v942
      %v944 = vmul.f32 %v929, 1.442695
      %v945 = vpow.pop %v944
      %v946 = vsel %vm662, %v931, 0.0
      %947 = vadd.xlane.f32.xlu0 %v946
      %v948 = vpop.xlane.xlu0 %947
      %v949 = vsel %vm662, %v933, 0.0
      %950 = vadd.xlane.f32.xlu0 %v949
      %v951 = vpop.xlane.xlu0 %950
      %v952 = vsel %vm662, %v935, 0.0
      %953 = vadd.xlane.f32.xlu0 %v952
      %v954 = vpop.xlane.xlu0 %953
      %v955 = vsel %vm662, %v937, 0.0
      %956 = vadd.xlane.f32.xlu0 %v955
      %v957 = vpop.xlane.xlu0 %956
      %v958 = vsel %vm662, %v939, 0.0
      %959 = vadd.xlane.f32.xlu0 %v958
      %v960 = vpop.xlane.xlu0 %959
      %v961 = vsel %vm662, %v941, 0.0
      %962 = vadd.xlane.f32.xlu0 %v961
      %v963 = vpop.xlane.xlu0 %962
      %v964 = vsel %vm662, %v943, 0.0
      %965 = vadd.xlane.f32.xlu0 %v964
      %v966 = vpop.xlane.xlu0 %965
      %v967 = vsel %vm662, %v945, 0.0
      %968 = vadd.xlane.f32.xlu0 %v967
      %v969 = vpop.xlane.xlu0 %968
      %v970 = vpack.c.bf16 %v933, %v931
      %v971 = vpack.c.bf16 %v937, %v935
      %v972 = vpack.c.bf16 %v941, %v939
      %v973 = vpack.c.bf16 %v945, %v943
      %974 = vrot.lane.b32.xlu0 %v596, 58
      %v975 = vpop.permute.xlu0 %974
      %976 = vrot.lane.b32.xlu0 %v597, 58
      %v977 = vpop.permute.xlu0 %976
      %978 = vrot.lane.b32.xlu0 %v598, 58
      %v979 = vpop.permute.xlu0 %978
      %980 = vrot.lane.b32.xlu0 %v599, 58
      %v981 = vpop.permute.xlu0 %980
      %v987 = vsel %vm662, %v970, 0
      %v990 = vsel %vm662, %v971, 0
      %v993 = vsel %vm662, %v972, 0
      %v996 = vsel %vm662, %v973, 0
      %998 = vmatpush.bf16.msra.mxu0 0
      %999 = vmatpush.bf16.msra.mxu0 0
      %1000 = vmatpush.bf16.msra.mxu0 0
      %1001 = vmatpush.bf16.msra.mxu0 0
      %1002 = vmatpush.bf16.msra.mxu0 %v981
      %1003 = vmatpush.bf16.msra.mxu0 %v979
      %1004 = vmatpush.bf16.msra.mxu0 %v977
      %1005 = vmatpush.bf16.msra.mxu0 %v975
      %1006 = vmatmul.bf16.gmra.mxu0 %v987
      %v1007 = vpop.f32.mrf.mxu0
      %v1008 = vadd.f32 0.0, %v1007
      %v1009 = vpop.f32.mrf.mxu0
      %v1010 = vadd.f32 0.0, %v1009
      %1011 = vmatmul.bf16.gmra.mxu0 %v990
      %v1012 = vpop.f32.mrf.mxu0
      %v1013 = vadd.f32 0.0, %v1012
      %v1014 = vpop.f32.mrf.mxu0
      %v1015 = vadd.f32 0.0, %v1014
      %1016 = vmatmul.bf16.gmra.mxu0 %v993
      %v1017 = vpop.f32.mrf.mxu0
      %v1018 = vadd.f32 0.0, %v1017
      %v1019 = vpop.f32.mrf.mxu0
      %v1020 = vadd.f32 0.0, %v1019
      %1021 = vmatmul.bf16.gmra.mxu0 %v996
      %v1022 = vpop.f32.mrf.mxu0
      %v1023 = vadd.f32 0.0, %v1022
      %v1024 = vpop.f32.mrf.mxu0
      %v1025 = vadd.f32 0.0, %v1024
      %1026 = vdwg.mxu0
      %v1027 = vrcp.pop %v948
      %v1028 = vrcp.pop %v951
      %v1029 = vrcp.pop %v954
      %v1030 = vrcp.pop %v957
      %v1031 = vrcp.pop %v960
      %v1032 = vrcp.pop %v963
      %v1033 = vrcp.pop %v966
      %v1034 = vrcp.pop %v969
      %v1035 = vmul.f32 %v1008, %v1027
      %v1036 = vmul.f32 %v1010, %v1028
      %v1037 = vmul.f32 %v1013, %v1029
      %v1038 = vmul.f32 %v1015, %v1030
      %v1039 = vmul.f32 %v1018, %v1031
      %v1040 = vmul.f32 %v1020, %v1032
      %v1041 = vmul.f32 %v1023, %v1033
      %v1042 = vmul.f32 %v1025, %v1034
      %s1043 = scalar_lea.vmem %s7, 64
      %v1044 = vld [vmem:[%s1043] sm:$0xf]
      %v1045 = vld [vmem:[%s1043 + $0x4] sm:$0xf]
      %v1046 = vld [vmem:[%s1043 + $0x8] sm:$0xf]
      %v1047 = vld [vmem:[%s1043 + $0xc] sm:$0xf]
      %v1048 = vld [vmem:[%s1043 + $0x10] sm:$0xf]
      %v1049 = vld [vmem:[%s1043 + $0x14] sm:$0xf]
      %v1050 = vld [vmem:[%s1043 + $0x18] sm:$0xf]
      %v1051 = vld [vmem:[%s1043 + $0x1c] sm:$0xf]
      %v1052 = vunpack.c.l.bf16 %v1044
      %v1053 = vunpack.c.l.bf16 %v1045
      %v1054 = vunpack.c.l.bf16 %v1046
      %v1055 = vunpack.c.l.bf16 %v1047
      %v1056 = vunpack.c.l.bf16 %v1048
      %v1057 = vunpack.c.l.bf16 %v1049
      %v1058 = vunpack.c.l.bf16 %v1050
      %v1059 = vunpack.c.l.bf16 %v1051
      %1060 = vrot.lane.b32.xlu0 %v560, 108
      %v1061 = vpop.permute.xlu0 %1060
      %1062 = vrot.lane.b32.xlu0 %v561, 108
      %v1063 = vpop.permute.xlu0 %1062
      %1064 = vrot.lane.b32.xlu0 %v562, 108
      %v1065 = vpop.permute.xlu0 %1064
      %1066 = vrot.lane.b32.xlu0 %v563, 108
      %v1067 = vpop.permute.xlu0 %1066
      %1068 = vrot.lane.b32.xlu0 %v596, 78
      %v1069 = vpop.permute.xlu0 %1068
      %1070 = vrot.lane.b32.xlu0 %v597, 78
      %v1071 = vpop.permute.xlu0 %1070
      %1072 = vrot.lane.b32.xlu0 %v598, 78
      %v1073 = vpop.permute.xlu0 %1072
      %1074 = vrot.lane.b32.xlu0 %v599, 78
      %v1075 = vpop.permute.xlu0 %1074
      %v1077 = vsel %vm608, %v1061, 0
      %v1080 = vsel %vm608, %v1063, 0
      %v1083 = vsel %vm608, %v1065, 0
      %v1086 = vsel %vm608, %v1067, 0
      %v1089 = vsel %vm608, %v1069, 0
      %v1092 = vsel %vm608, %v1071, 0
      %v1095 = vsel %vm608, %v1073, 0
      %v1098 = vsel %vm608, %v1075, 0
      %1100 = vmatpush.bf16.xpose.msra.mxu0 0
      %1101 = vmatpush.bf16.xpose.msra.mxu0 0
      %1102 = vmatpush.bf16.xpose.msra.mxu0 0
      %1103 = vmatpush.bf16.xpose.msra.mxu0 0
      %1104 = vmatpush.bf16.xpose.msra.mxu0 %v1098
      %1105 = vmatpush.bf16.xpose.msra.mxu0 %v1095
      %1106 = vmatpush.bf16.xpose.msra.mxu0 %v1092
      %1107 = vmatpush.bf16.xpose.msra.mxu0 %v1089
      %1108 = vmatmul.bf16.gmra.mxu0 %v1077
      %v1109 = vpop.f32.mrf.mxu0
      %v1110 = vadd.f32 %v1052, %v1109
      %v1111 = vpop.f32.mrf.mxu0
      %v1112 = vadd.f32 %v1053, %v1111
      %1113 = vmatmul.bf16.gmra.mxu0 %v1080
      %v1114 = vpop.f32.mrf.mxu0
      %v1115 = vadd.f32 %v1054, %v1114
      %v1116 = vpop.f32.mrf.mxu0
      %v1117 = vadd.f32 %v1055, %v1116
      %1118 = vmatmul.bf16.gmra.mxu0 %v1083
      %v1119 = vpop.f32.mrf.mxu0
      %v1120 = vadd.f32 %v1056, %v1119
      %v1121 = vpop.f32.mrf.mxu0
      %v1122 = vadd.f32 %v1057, %v1121
      %1123 = vmatmul.bf16.gmra.mxu0 %v1086
      %v1124 = vpop.f32.mrf.mxu0
      %v1125 = vadd.f32 %v1058, %v1124
      %v1126 = vpop.f32.mrf.mxu0
      %v1127 = vadd.f32 %v1059, %v1126
      %1128 = vdwg.mxu0
      %v1129 = vsel %vm662, %v1110, -inf
      %1130 = vmax.xlane.f32.xlu0 %v1129
      %v1131 = vpop.xlane.xlu0 %1130
      %v1132 = vsel %vm662, %v1112, -inf
      %1133 = vmax.xlane.f32.xlu0 %v1132
      %v1134 = vpop.xlane.xlu0 %1133
      %v1135 = vsel %vm662, %v1115, -inf
      %1136 = vmax.xlane.f32.xlu0 %v1135
      %v1137 = vpop.xlane.xlu0 %1136
      %v1138 = vsel %vm662, %v1117, -inf
      %1139 = vmax.xlane.f32.xlu0 %v1138
      %v1140 = vpop.xlane.xlu0 %1139
      %v1141 = vsel %vm662, %v1120, -inf
      %1142 = vmax.xlane.f32.xlu0 %v1141
      %v1143 = vpop.xlane.xlu0 %1142
      %v1144 = vsel %vm662, %v1122, -inf
      %1145 = vmax.xlane.f32.xlu0 %v1144
      %v1146 = vpop.xlane.xlu0 %1145
      %v1147 = vsel %vm662, %v1125, -inf
      %1148 = vmax.xlane.f32.xlu0 %v1147
      %v1149 = vpop.xlane.xlu0 %1148
      %v1150 = vsel %vm662, %v1127, -inf
      %1151 = vmax.xlane.f32.xlu0 %v1150
      %v1152 = vpop.xlane.xlu0 %1151
      %v1153 = vsub.f32 %v1110, %v1131
      %v1154 = vsub.f32 %v1112, %v1134
      %v1155 = vsub.f32 %v1115, %v1137
      %v1156 = vsub.f32 %v1117, %v1140
      %v1157 = vsub.f32 %v1120, %v1143
      %v1158 = vsub.f32 %v1122, %v1146
      %v1159 = vsub.f32 %v1125, %v1149
      %v1160 = vsub.f32 %v1127, %v1152
      %v1161 = vmul.f32 %v1153, 1.442695
      %v1162 = vpow.pop %v1161
      %v1163 = vmul.f32 %v1154, 1.442695
      %v1164 = vpow.pop %v1163
      %v1165 = vmul.f32 %v1155, 1.442695
      %v1166 = vpow.pop %v1165
      %v1167 = vmul.f32 %v1156, 1.442695
      %v1168 = vpow.pop %v1167
      %v1169 = vmul.f32 %v1157, 1.442695
      %v1170 = vpow.pop %v1169
      %v1171 = vmul.f32 %v1158, 1.442695
      %v1172 = vpow.pop %v1171
      %v1173 = vmul.f32 %v1159, 1.442695
      %v1174 = vpow.pop %v1173
      %v1175 = vmul.f32 %v1160, 1.442695
      %v1176 = vpow.pop %v1175
      %v1177 = vsel %vm662, %v1162, 0.0
      %1178 = vadd.xlane.f32.xlu0 %v1177
      %v1179 = vpop.xlane.xlu0 %1178
      %v1180 = vsel %vm662, %v1164, 0.0
      %1181 = vadd.xlane.f32.xlu0 %v1180
      %v1182 = vpop.xlane.xlu0 %1181
      %v1183 = vsel %vm662, %v1166, 0.0
      %1184 = vadd.xlane.f32.xlu0 %v1183
      %v1185 = vpop.xlane.xlu0 %1184
      %v1186 = vsel %vm662, %v1168, 0.0
      %1187 = vadd.xlane.f32.xlu0 %v1186
      %v1188 = vpop.xlane.xlu0 %1187
      %v1189 = vsel %vm662, %v1170, 0.0
      %1190 = vadd.xlane.f32.xlu0 %v1189
      %v1191 = vpop.xlane.xlu0 %1190
      %v1192 = vsel %vm662, %v1172, 0.0
      %1193 = vadd.xlane.f32.xlu0 %v1192
      %v1194 = vpop.xlane.xlu0 %1193
      %v1195 = vsel %vm662, %v1174, 0.0
      %1196 = vadd.xlane.f32.xlu0 %v1195
      %v1197 = vpop.xlane.xlu0 %1196
      %v1198 = vsel %vm662, %v1176, 0.0
      %1199 = vadd.xlane.f32.xlu0 %v1198
      %v1200 = vpop.xlane.xlu0 %1199
      %v1201 = vpack.c.bf16 %v1164, %v1162
      %v1202 = vpack.c.bf16 %v1168, %v1166
      %v1203 = vpack.c.bf16 %v1172, %v1170
      %v1204 = vpack.c.bf16 %v1176, %v1174
      %1205 = vrot.lane.b32.xlu0 %v596, 48
      %v1206 = vpop.permute.xlu0 %1205
      %1207 = vrot.lane.b32.xlu0 %v597, 48
      %v1208 = vpop.permute.xlu0 %1207
      %1209 = vrot.lane.b32.xlu0 %v598, 48
      %v1210 = vpop.permute.xlu0 %1209
      %1211 = vrot.lane.b32.xlu0 %v599, 48
      %v1212 = vpop.permute.xlu0 %1211
      %v1218 = vsel %vm662, %v1201, 0
      %v1221 = vsel %vm662, %v1202, 0
      %v1224 = vsel %vm662, %v1203, 0
      %v1227 = vsel %vm662, %v1204, 0
      %1229 = vmatpush.bf16.msra.mxu0 0
      %1230 = vmatpush.bf16.msra.mxu0 0
      %1231 = vmatpush.bf16.msra.mxu0 0
      %1232 = vmatpush.bf16.msra.mxu0 0
      %1233 = vmatpush.bf16.msra.mxu0 %v1212
      %1234 = vmatpush.bf16.msra.mxu0 %v1210
      %1235 = vmatpush.bf16.msra.mxu0 %v1208
      %1236 = vmatpush.bf16.msra.mxu0 %v1206
      %1237 = vmatmul.bf16.gmra.mxu0 %v1218
      %v1238 = vpop.f32.mrf.mxu0
      %v1239 = vadd.f32 0.0, %v1238
      %v1240 = vpop.f32.mrf.mxu0
      %v1241 = vadd.f32 0.0, %v1240
      %1242 = vmatmul.bf16.gmra.mxu0 %v1221
      %v1243 = vpop.f32.mrf.mxu0
      %v1244 = vadd.f32 0.0, %v1243
      %v1245 = vpop.f32.mrf.mxu0
      %v1246 = vadd.f32 0.0, %v1245
      %1247 = vmatmul.bf16.gmra.mxu0 %v1224
      %v1248 = vpop.f32.mrf.mxu0
      %v1249 = vadd.f32 0.0, %v1248
      %v1250 = vpop.f32.mrf.mxu0
      %v1251 = vadd.f32 0.0, %v1250
      %1252 = vmatmul.bf16.gmra.mxu0 %v1227
      %v1253 = vpop.f32.mrf.mxu0
      %v1254 = vadd.f32 0.0, %v1253
      %v1255 = vpop.f32.mrf.mxu0
      %v1256 = vadd.f32 0.0, %v1255
      %1257 = vdwg.mxu0
      %v1258 = vrcp.pop %v1179
      %v1259 = vrcp.pop %v1182
      %v1260 = vrcp.pop %v1185
      %v1261 = vrcp.pop %v1188
      %v1262 = vrcp.pop %v1191
      %v1263 = vrcp.pop %v1194
      %v1264 = vrcp.pop %v1197
      %v1265 = vrcp.pop %v1200
      %v1266 = vmul.f32 %v1239, %v1258
      %v1267 = vmul.f32 %v1241, %v1259
      %v1268 = vmul.f32 %v1244, %v1260
      %v1269 = vmul.f32 %v1246, %v1261
      %v1270 = vmul.f32 %v1249, %v1262
      %v1271 = vmul.f32 %v1251, %v1263
      %v1272 = vmul.f32 %v1254, %v1264
      %v1273 = vmul.f32 %v1256, %v1265
      %1282 = vrot.lane.b32.xlu0 %v1035, 10
      %v1283 = vpop.permute.xlu0 %1282
      %1284 = vrot.lane.b32.xlu0 %v1036, 10
      %v1285 = vpop.permute.xlu0 %1284
      %1286 = vrot.lane.b32.xlu0 %v1037, 10
      %v1287 = vpop.permute.xlu0 %1286
      %1288 = vrot.lane.b32.xlu0 %v1038, 10
      %v1289 = vpop.permute.xlu0 %1288
      %1290 = vrot.lane.b32.xlu0 %v1039, 10
      %v1291 = vpop.permute.xlu0 %1290
      %1292 = vrot.lane.b32.xlu0 %v1040, 10
      %v1293 = vpop.permute.xlu0 %1292
      %1294 = vrot.lane.b32.xlu0 %v1041, 10
      %v1295 = vpop.permute.xlu0 %1294
      %1296 = vrot.lane.b32.xlu0 %v1042, 10
      %v1297 = vpop.permute.xlu0 %1296
      %1314 = vrot.lane.b32.xlu0 %v1266, 20
      %v1315 = vpop.permute.xlu0 %1314
      %1316 = vrot.lane.b32.xlu0 %v1267, 20
      %v1317 = vpop.permute.xlu0 %1316
      %1318 = vrot.lane.b32.xlu0 %v1268, 20
      %v1319 = vpop.permute.xlu0 %1318
      %1320 = vrot.lane.b32.xlu0 %v1269, 20
      %v1321 = vpop.permute.xlu0 %1320
      %1322 = vrot.lane.b32.xlu0 %v1270, 20
      %v1323 = vpop.permute.xlu0 %1322
      %1324 = vrot.lane.b32.xlu0 %v1271, 20
      %v1325 = vpop.permute.xlu0 %1324
      %1326 = vrot.lane.b32.xlu0 %v1272, 20
      %v1327 = vpop.permute.xlu0 %1326
      %1328 = vrot.lane.b32.xlu0 %v1273, 20
      %v1329 = vpop.permute.xlu0 %1328
      %v1338 = vsel %vm608, %v800, %v1283
      %v1339 = vsel %vm608, %v801, %v1285
      %v1340 = vsel %vm608, %v802, %v1287
      %v1341 = vsel %vm608, %v803, %v1289
      %v1342 = vsel %vm608, %v804, %v1291
      %v1343 = vsel %vm608, %v805, %v1293
      %v1344 = vsel %vm608, %v806, %v1295
      %v1345 = vsel %vm608, %v807, %v1297
      %vm1346 = vcmask 162816
      %v1347 = vsel %vm1346, %v1338, %v1315
      %v1348 = vsel %vm1346, %v1339, %v1317
      %v1349 = vsel %vm1346, %v1340, %v1319
      %v1350 = vsel %vm1346, %v1341, %v1321
      %v1351 = vsel %vm1346, %v1342, %v1323
      %v1352 = vsel %vm1346, %v1343, %v1325
      %v1353 = vsel %vm1346, %v1344, %v1327
      %v1354 = vsel %vm1346, %v1345, %v1329
      %v1355 = vpack.c.bf16 %v1348, %v1347
      %v1356 = vpack.c.bf16 %v1350, %v1349
      %v1357 = vpack.c.bf16 %v1352, %v1351
      %v1358 = vpack.c.bf16 %v1354, %v1353
      %v1359 = vld [vmem:[%s5] sm:$0xf]
      %v1360 = vld [vmem:[%s5 + $0x4] sm:$0xf]
      %v1361 = vld [vmem:[%s5 + $0x8] sm:$0xf]
      %v1362 = vld [vmem:[%s5 + $0xc] sm:$0x7]
      %v1367 = vunpack.c.l.b16 %v1359
      %v1368 = vunpack.c.l.b16 %v1360
      %v1369 = vunpack.c.l.b16 %v1361
      %v1370 = vunpack.c.l.b16 %v1362
      %v1371 = vpack.c.b16 %v1368, %v1367
      %v1372 = vpack.c.b16 %v1370, %v1369
      %vm1374 = vcmask 244736
      %v1376 = vsel %vm1374, %v1355, 0
      %v1379 = vsel %vm1374, %v1356, 0
      %v1382 = vsel %vm1374, %v1357, 0
      %v1385 = vsel %vm1374, %v1358, 0
      %vm1387 = vcmask 1046528
      %v1389 = vsel %vm1387, %v1372, 0
      %1391 = vmatpush.bf16.msra.mxu0 0
      %1392 = vmatpush.bf16.msra.mxu0 0
      %1393 = vmatpush.bf16.msra.mxu0 0
      %1394 = vmatpush.bf16.msra.mxu0 0
      %1395 = vmatpush.bf16.msra.mxu0 0
      %1396 = vmatpush.bf16.msra.mxu0 0
      %1397 = vmatpush.bf16.msra.mxu0 %v1389
      %1398 = vmatpush.bf16.msra.mxu0 %v1371
      %1399 = vmatmul.bf16.gmra.mxu0 %v1376
      %v1400 = vpop.f32.mrf.mxu0
      %v1401 = vadd.f32 0.0, %v1400
      %v1402 = vpop.f32.mrf.mxu0
      %v1403 = vadd.f32 0.0, %v1402
      %1404 = vmatmul.bf16.gmra.mxu0 %v1379
      %v1405 = vpop.f32.mrf.mxu0
      %v1406 = vadd.f32 0.0, %v1405
      %v1407 = vpop.f32.mrf.mxu0
      %v1408 = vadd.f32 0.0, %v1407
      %1409 = vmatmul.bf16.gmra.mxu0 %v1382
      %v1410 = vpop.f32.mrf.mxu0
      %v1411 = vadd.f32 0.0, %v1410
      %v1412 = vpop.f32.mrf.mxu0
      %v1413 = vadd.f32 0.0, %v1412
      %1414 = vmatmul.bf16.gmra.mxu0 %v1385
      %v1415 = vpop.f32.mrf.mxu0
      %v1416 = vadd.f32 0.0, %v1415
      %v1417 = vpop.f32.mrf.mxu0
      %v1418 = vadd.f32 0.0, %v1417
      %1419 = vdwg.mxu0
      %v1420 = vadd.f32 %v478, %v1401
      %v1421 = vadd.f32 %v479, %v1403
      %v1422 = vadd.f32 %v480, %v1406
      %v1423 = vadd.f32 %v481, %v1408
      %v1424 = vadd.f32 %v482, %v1411
      %v1425 = vadd.f32 %v483, %v1413
      %v1426 = vadd.f32 %v484, %v1416
      %v1427 = vadd.f32 %v485, %v1418
      %v1428 = vld [vmem:[%s6] sm:$0x1]
      %v1430 = vperm.slane %v1428, 0
      %v1432 = vadd.f32 %v1420, %v1430
      %v1433 = vadd.f32 %v1421, %v1430
      %v1434 = vadd.f32 %v1422, %v1430
      %v1435 = vadd.f32 %v1423, %v1430
      %v1436 = vadd.f32 %v1424, %v1430
      %v1437 = vadd.f32 %v1425, %v1430
      %v1438 = vadd.f32 %v1426, %v1430
      %v1439 = vadd.f32 %v1427, %v1430
      %1440 = vst.msk [vmem:[%s305] sm:$0xff] %vm510, %v1432
      %1441 = vst.msk [vmem:[%s305 + $0x8] sm:$0xff] %vm510, %v1433
      %1442 = vst.msk [vmem:[%s305 + $0x10] sm:$0xff] %vm510, %v1434
      %1443 = vst.msk [vmem:[%s305 + $0x18] sm:$0xff] %vm510, %v1435
      %1444 = vst.msk [vmem:[%s305 + $0x20] sm:$0xff] %vm510, %v1436
      %1445 = vst.msk [vmem:[%s305 + $0x28] sm:$0xff] %vm510, %v1437
      %1446 = vst.msk [vmem:[%s305 + $0x30] sm:$0xff] %vm510, %v1438
      %1447 = vst.msk [vmem:[%s305 + $0x38] sm:$0xff] %vm510, %v1439
      %p1448 = scmp.lt.s32.totalorder %s19, 1
      %s1449 = scalar_select %p1448, %s19, 1
      %s1450 = smul.addr %s1449, 8
      %s1451 = smul.addr %s1450, 8
      %s1452 = scalar_lea.vmem %s8, %s1451
      // Predicated region
      $region53: #{mtl2d_deepsvdd_forward.4} parent=51 // pred_check
        %p1453 = pneg %p210
      $region54: #{mtl2d_deepsvdd_forward.4} parent=51 // pred_check_branch
        %1455 = sbr.rel (%p1453) target = $region56
      $region55: #{mtl2d_deepsvdd_forward.4} parent=51 // pred_region
        _
      $region56: #{mtl2d_deepsvdd_forward.4} parent=51 // pred_fallthru
        _
    $region52: #{mtl2d_deepsvdd_forward.4} parent=5 // pred_fallthru
      _
    %p1456 = scmp.le.s32.totalorder 2, %s14
    // Predicated region
    $region57: #{mtl2d_deepsvdd_forward.4} parent=5 // pred_check
      %p1457 = pneg %p1456
    $region58: #{mtl2d_deepsvdd_forward.4} parent=5 // pred_check_branch
      %1459 = sbr.rel (%p1457) target = $region60
    $region59: #{mtl2d_deepsvdd_forward.4} parent=5 // pred_region
      %s1460 = ssub.s32 %s14, 2
      // Predicated region
      $region61: #{mtl2d_deepsvdd_forward.4} parent=59 // pred_check
        %p1461 = pneg %p216
      $region62: #{mtl2d_deepsvdd_forward.4} parent=59 // pred_check_branch
        %1463 = sbr.rel (%p1461) target = $region64
      $region63: #{mtl2d_deepsvdd_forward.4} parent=59 // pred_region
        %p1464 = scmp.lt.s32.totalorder %s20, 1
        %s1465 = scalar_select %p1464, %s20, 1
        %s1466 = smul.addr %s1465, 8
        %s1467 = smul.addr %s1466, 8
        %s1468 = scalar_lea.vmem %s8, %s1467
      $region64: #{mtl2d_deepsvdd_forward.4} parent=59 // pred_fallthru
        _
    $region60: #{mtl2d_deepsvdd_forward.4} parent=5 // pred_fallthru
      _
  $region6: #{mtl2d_deepsvdd_forward.4} parent=0 // loop_footer
    %s18 = sadd.s32 1, %s14
  $region7: #{mtl2d_deepsvdd_forward.4} parent=0 // loop_footer_branch
    %13 = sbr.rel target = $region3
  $region8: #{mtl2d_deepsvdd_forward.4} parent=0 // loop_exit
    _

// kernel: mtl2d_deepsvdd_forward.3
$region0: #{mtl2d_deepsvdd_forward.3}
  #allocation0 [shape = 'u32[]', space=smem, size = 0x4, offset = 0x4, fixed_abs, tag = 'smem constant byte address 0x4 - core index']
  #allocation1 [shape = 'u32[72,128]{1,0:T(1,128)}', space=vmem, size = 0x9000, scoped, tag = 'internal scratch']
  %s0 = inlined_call_operand.vmem [shape: f32[2,256,9], index: 0, kind: input, shape index: {}]
  %s1 = inlined_call_operand.vmem [shape: bf16[9,16], index: 1, kind: input, shape index: {}]
  %s2 = inlined_call_operand.vmem [shape: f32[1,16], index: 2, kind: input, shape index: {}]
  %s3 = inlined_call_operand.vmem [shape: bf16[16,45], index: 3, kind: input, shape index: {}]
  %s4 = inlined_call_operand.vmem [shape: f32[1,45], index: 4, kind: input, shape index: {}]
  %s5 = inlined_call_operand.vmem [shape: bf16[15,16], index: 5, kind: input, shape index: {}]
  %s6 = inlined_call_operand.vmem [shape: f32[1,16], index: 6, kind: input, shape index: {}]
  %s7 = inlined_call_operand.vmem [shape: bf16[3,256,256], index: 7, kind: input, shape index: {}]
  %s8 = inlined_call_operand.vmem [shape: f32[2,256,16], index: 8, kind: output, shape index: {}]
  %s9 = sld [smem:[#allocation0]]
  $region65: #{mtl2d_deepsvdd_forward.3} parent=0
    _
  %s11 = ssub.s32 1, %s9
  %s12 = scalar_select 0, %s11, %s9
  loop: start=0, step=1, limit=4
  $region2: #{mtl2d_deepsvdd_forward.3} parent=0 // loop_pre_header
    _
  $region3: #{mtl2d_deepsvdd_forward.3} parent=0 // loop_header
    %s14 = sphi 0, %s18
    %p15 = scmp.ge.s32.totalorder %s14, 4
    %s24 = sphi 0, %s26
    %s27 = sphi 0, %s24
    %s28 = sphi 0, %s27
    %s44 = sphi 0, %s28
    %s48 = sphi 0, %s48
    %s50 = sphi 0, %s48
    %s51 = sphi 0, %s50
    %s65 = sphi 0, %s51
    %s69 = sphi 0, %s69
    %s71 = sphi 0, %s69
    %s72 = sphi 0, %s71
    %s86 = sphi 0, %s72
    %s90 = sphi 0, %s90
    %s92 = sphi 0, %s90
    %s93 = sphi 0, %s92
    %s107 = sphi 0, %s93
    %s111 = sphi 0, %s111
    %s113 = sphi 0, %s111
    %s114 = sphi 0, %s113
    %s128 = sphi 0, %s114
    %s132 = sphi 0, %s132
    %s134 = sphi 0, %s132
    %s135 = sphi 0, %s134
    %s149 = sphi 0, %s135
    %s153 = sphi 0, %s153
    %s155 = sphi 0, %s153
    %s156 = sphi 0, %s155
    %s170 = sphi 0, %s156
    %s174 = sphi 0, %s174
    %s176 = sphi 0, %s174
    %s177 = sphi 0, %s176
    %s191 = sphi 0, %s177
    %s197 = sphi 0, %s199
    %s200 = sphi 0, %s197
    %s201 = sphi 0, %s200
    %s217 = sphi 0, %s201
  $region4: #{mtl2d_deepsvdd_forward.3} parent=0 // loop_header_branch
    %17 = sbr.rel (%p15) target = $region8
  $region5: #{mtl2d_deepsvdd_forward.3} parent=0 // loop_body
    %s19 = ssub.s32 %s14, 1
    %s20 = ssub.s32 %s14, 2
    %s21 = sadd.s32 %s14, 1
    %s22 = ssub.s32 %s14, %s21
    %p23 = scmp.eq.s32.totalorder %s22, 0
    %s25 = sadd.s32 %s24, 1
    %s26 = scalar_select %p23, %s24, %s25
    %p29 = pneg %p23
    %p30 = scmp.eq.s32.totalorder %s14, 1
    %p31 = por %p29, %p30
    %p32 = scmp.ne.s32.totalorder %s24, %s27
    %p33 = scmp.eq.s32.totalorder %s14, 0
    %p34 = por %p32, %p33
    %p35 = scmp.ne.s32.totalorder %s24, %s27
    %p36 = scmp.eq.s32.totalorder %s19, 1
    %p37 = por %p35, %p36
    %p38 = scmp.ne.s32.totalorder %s27, %s28
    %p39 = scmp.eq.s32.totalorder %s19, 0
    %p40 = por %p38, %p39
    %p41 = scmp.ne.s32.totalorder %s27, %s28
    %p42 = scmp.eq.s32.totalorder %s20, 1
    %p43 = por %p41, %p42
    %p45 = scmp.ne.s32.totalorder %s28, %s44
    %p46 = scmp.eq.s32.totalorder %s20, 0
    %p47 = por %p45, %p46
    %s49 = sadd.s32 %s48, 1
    %p52 = scmp.eq.s32.totalorder %s14, 1
    %p53 = scmp.ne.s32.totalorder %s48, %s50
    %p54 = scmp.eq.s32.totalorder %s14, 0
    %p55 = por %p53, %p54
    %p56 = scmp.ne.s32.totalorder %s48, %s50
    %p57 = scmp.eq.s32.totalorder %s19, 1
    %p58 = por %p56, %p57
    %p59 = scmp.ne.s32.totalorder %s50, %s51
    %p60 = scmp.eq.s32.totalorder %s19, 0
    %p61 = por %p59, %p60
    %p62 = scmp.ne.s32.totalorder %s50, %s51
    %p63 = scmp.eq.s32.totalorder %s20, 1
    %p64 = por %p62, %p63
    %p66 = scmp.ne.s32.totalorder %s51, %s65
    %p67 = scmp.eq.s32.totalorder %s20, 0
    %p68 = por %p66, %p67
    %s70 = sadd.s32 %s69, 1
    %p73 = scmp.eq.s32.totalorder %s14, 1
    %p74 = scmp.ne.s32.totalorder %s69, %s71
    %p75 = scmp.eq.s32.totalorder %s14, 0
    %p76 = por %p74, %p75
    %p77 = scmp.ne.s32.totalorder %s69, %s71
    %p78 = scmp.eq.s32.totalorder %s19, 1
    %p79 = por %p77, %p78
    %p80 = scmp.ne.s32.totalorder %s71, %s72
    %p81 = scmp.eq.s32.totalorder %s19, 0
    %p82 = por %p80, %p81
    %p83 = scmp.ne.s32.totalorder %s71, %s72
    %p84 = scmp.eq.s32.totalorder %s20, 1
    %p85 = por %p83, %p84
    %p87 = scmp.ne.s32.totalorder %s72, %s86
    %p88 = scmp.eq.s32.totalorder %s20, 0
    %p89 = por %p87, %p88
    %s91 = sadd.s32 %s90, 1
    %p94 = scmp.eq.s32.totalorder %s14, 1
    %p95 = scmp.ne.s32.totalorder %s90, %s92
    %p96 = scmp.eq.s32.totalorder %s14, 0
    %p97 = por %p95, %p96
    %p98 = scmp.ne.s32.totalorder %s90, %s92
    %p99 = scmp.eq.s32.totalorder %s19, 1
    %p100 = por %p98, %p99
    %p101 = scmp.ne.s32.totalorder %s92, %s93
    %p102 = scmp.eq.s32.totalorder %s19, 0
    %p103 = por %p101, %p102
    %p104 = scmp.ne.s32.totalorder %s92, %s93
    %p105 = scmp.eq.s32.totalorder %s20, 1
    %p106 = por %p104, %p105
    %p108 = scmp.ne.s32.totalorder %s93, %s107
    %p109 = scmp.eq.s32.totalorder %s20, 0
    %p110 = por %p108, %p109
    %s112 = sadd.s32 %s111, 1
    %p115 = scmp.eq.s32.totalorder %s14, 1
    %p116 = scmp.ne.s32.totalorder %s111, %s113
    %p117 = scmp.eq.s32.totalorder %s14, 0
    %p118 = por %p116, %p117
    %p119 = scmp.ne.s32.totalorder %s111, %s113
    %p120 = scmp.eq.s32.totalorder %s19, 1
    %p121 = por %p119, %p120
    %p122 = scmp.ne.s32.totalorder %s113, %s114
    %p123 = scmp.eq.s32.totalorder %s19, 0
    %p124 = por %p122, %p123
    %p125 = scmp.ne.s32.totalorder %s113, %s114
    %p126 = scmp.eq.s32.totalorder %s20, 1
    %p127 = por %p125, %p126
    %p129 = scmp.ne.s32.totalorder %s114, %s128
    %p130 = scmp.eq.s32.totalorder %s20, 0
    %p131 = por %p129, %p130
    %s133 = sadd.s32 %s132, 1
    %p136 = scmp.eq.s32.totalorder %s14, 1
    %p137 = scmp.ne.s32.totalorder %s132, %s134
    %p138 = scmp.eq.s32.totalorder %s14, 0
    %p139 = por %p137, %p138
    %p140 = scmp.ne.s32.totalorder %s132, %s134
    %p141 = scmp.eq.s32.totalorder %s19, 1
    %p142 = por %p140, %p141
    %p143 = scmp.ne.s32.totalorder %s134, %s135
    %p144 = scmp.eq.s32.totalorder %s19, 0
    %p145 = por %p143, %p144
    %p146 = scmp.ne.s32.totalorder %s134, %s135
    %p147 = scmp.eq.s32.totalorder %s20, 1
    %p148 = por %p146, %p147
    %p150 = scmp.ne.s32.totalorder %s135, %s149
    %p151 = scmp.eq.s32.totalorder %s20, 0
    %p152 = por %p150, %p151
    %s154 = sadd.s32 %s153, 1
    %p157 = scmp.eq.s32.totalorder %s14, 1
    %p158 = scmp.ne.s32.totalorder %s153, %s155
    %p159 = scmp.eq.s32.totalorder %s14, 0
    %p160 = por %p158, %p159
    %p161 = scmp.ne.s32.totalorder %s153, %s155
    %p162 = scmp.eq.s32.totalorder %s19, 1
    %p163 = por %p161, %p162
    %p164 = scmp.ne.s32.totalorder %s155, %s156
    %p165 = scmp.eq.s32.totalorder %s19, 0
    %p166 = por %p164, %p165
    %p167 = scmp.ne.s32.totalorder %s155, %s156
    %p168 = scmp.eq.s32.totalorder %s20, 1
    %p169 = por %p167, %p168
    %p171 = scmp.ne.s32.totalorder %s156, %s170
    %p172 = scmp.eq.s32.totalorder %s20, 0
    %p173 = por %p171, %p172
    %s175 = sadd.s32 %s174, 1
    %p178 = scmp.eq.s32.totalorder %s14, 1
    %p179 = scmp.ne.s32.totalorder %s174, %s176
    %p180 = scmp.eq.s32.totalorder %s14, 0
    %p181 = por %p179, %p180
    %p182 = scmp.ne.s32.totalorder %s174, %s176
    %p183 = scmp.eq.s32.totalorder %s19, 1
    %p184 = por %p182, %p183
    %p185 = scmp.ne.s32.totalorder %s176, %s177
    %p186 = scmp.eq.s32.totalorder %s19, 0
    %p187 = por %p185, %p186
    %p188 = scmp.ne.s32.totalorder %s176, %s177
    %p189 = scmp.eq.s32.totalorder %s20, 1
    %p190 = por %p188, %p189
    %p192 = scmp.ne.s32.totalorder %s177, %s191
    %p193 = scmp.eq.s32.totalorder %s20, 0
    %p194 = por %p192, %p193
    %s195 = ssub.s32 %s14, %s21
    %p196 = scmp.eq.s32.totalorder %s195, 0
    %s198 = sadd.s32 %s197, 1
    %s199 = scalar_select %p196, %s197, %s198
    %p202 = pneg %p196
    %p203 = scmp.eq.s32.totalorder %s14, 1
    %p204 = por %p202, %p203
    %p205 = scmp.ne.s32.totalorder %s197, %s200
    %p206 = scmp.eq.s32.totalorder %s14, 0
    %p207 = por %p205, %p206
    %p208 = scmp.ne.s32.totalorder %s197, %s200
    %p209 = scmp.eq.s32.totalorder %s19, 1
    %p210 = por %p208, %p209
    %p211 = scmp.ne.s32.totalorder %s200, %s201
    %p212 = scmp.eq.s32.totalorder %s19, 0
    %p213 = por %p211, %p212
    %p214 = scmp.ne.s32.totalorder %s200, %s201
    %p215 = scmp.eq.s32.totalorder %s20, 1
    %p216 = por %p214, %p215
    %p218 = scmp.ne.s32.totalorder %s201, %s217
    %p219 = scmp.eq.s32.totalorder %s20, 0
    %p220 = por %p218, %p219
    %p221 = scmp.le.s32.totalorder 1, %s14
    %p222 = scmp.lt.s32.totalorder %s14, 3
    %p223 = pnand %p221, %p222
    %p224 = pneg %p223
    // Predicated region
    $region9: #{mtl2d_deepsvdd_forward.3} parent=5 // pred_check
      _
    $region10: #{mtl2d_deepsvdd_forward.3} parent=5 // pred_check_branch
      %226 = sbr.rel (%p223) target = $region12
    $region11: #{mtl2d_deepsvdd_forward.3} parent=5 // pred_region
      %s227 = ssub.s32 %s14, 1
      // Predicated region
      $region13: #{mtl2d_deepsvdd_forward.3} parent=11 // pred_check
        %p228 = pneg %p61
      $region14: #{mtl2d_deepsvdd_forward.3} parent=11 // pred_check_branch
        %230 = sbr.rel (%p228) target = $region16
      $region15: #{mtl2d_deepsvdd_forward.3} parent=11 // pred_region
        _
      $region16: #{mtl2d_deepsvdd_forward.3} parent=11 // pred_fallthru
        _
      // Predicated region
      $region17: #{mtl2d_deepsvdd_forward.3} parent=11 // pred_check
        %p231 = pneg %p82
      $region18: #{mtl2d_deepsvdd_forward.3} parent=11 // pred_check_branch
        %233 = sbr.rel (%p231) target = $region20
      $region19: #{mtl2d_deepsvdd_forward.3} parent=11 // pred_region
        _
      $region20: #{mtl2d_deepsvdd_forward.3} parent=11 // pred_fallthru
        _
      // Predicated region
      $region21: #{mtl2d_deepsvdd_forward.3} parent=11 // pred_check
        %p234 = pneg %p103
      $region22: #{mtl2d_deepsvdd_forward.3} parent=11 // pred_check_branch
        %236 = sbr.rel (%p234) target = $region24
      $region23: #{mtl2d_deepsvdd_forward.3} parent=11 // pred_region
        _
      $region24: #{mtl2d_deepsvdd_forward.3} parent=11 // pred_fallthru
        _
      // Predicated region
      $region25: #{mtl2d_deepsvdd_forward.3} parent=11 // pred_check
        %p237 = pneg %p124
      $region26: #{mtl2d_deepsvdd_forward.3} parent=11 // pred_check_branch
        %239 = sbr.rel (%p237) target = $region28
      $region27: #{mtl2d_deepsvdd_forward.3} parent=11 // pred_region
        _
      $region28: #{mtl2d_deepsvdd_forward.3} parent=11 // pred_fallthru
        _
      // Predicated region
      $region29: #{mtl2d_deepsvdd_forward.3} parent=11 // pred_check
        %p240 = pneg %p145
      $region30: #{mtl2d_deepsvdd_forward.3} parent=11 // pred_check_branch
        %242 = sbr.rel (%p240) target = $region32
      $region31: #{mtl2d_deepsvdd_forward.3} parent=11 // pred_region
        _
      $region32: #{mtl2d_deepsvdd_forward.3} parent=11 // pred_fallthru
        _
      // Predicated region
      $region33: #{mtl2d_deepsvdd_forward.3} parent=11 // pred_check
        %p243 = pneg %p166
      $region34: #{mtl2d_deepsvdd_forward.3} parent=11 // pred_check_branch
        %245 = sbr.rel (%p243) target = $region36
      $region35: #{mtl2d_deepsvdd_forward.3} parent=11 // pred_region
        _
      $region36: #{mtl2d_deepsvdd_forward.3} parent=11 // pred_fallthru
        _
      // Predicated region
      $region37: #{mtl2d_deepsvdd_forward.3} parent=11 // pred_check
        %p246 = pneg %p187
      $region38: #{mtl2d_deepsvdd_forward.3} parent=11 // pred_check_branch
        %248 = sbr.rel (%p246) target = $region40
      $region39: #{mtl2d_deepsvdd_forward.3} parent=11 // pred_region
        _
      $region40: #{mtl2d_deepsvdd_forward.3} parent=11 // pred_fallthru
        _
    $region12: #{mtl2d_deepsvdd_forward.3} parent=5 // pred_fallthru
      _
    %p249 = scmp.lt.s32.totalorder %s14, 2
    // Predicated region
    $region41: #{mtl2d_deepsvdd_forward.3} parent=5 // pred_check
      %p250 = pneg %p249
    $region42: #{mtl2d_deepsvdd_forward.3} parent=5 // pred_check_branch
      %252 = sbr.rel (%p250) target = $region44
    $region43: #{mtl2d_deepsvdd_forward.3} parent=5 // pred_region
      // Predicated region
      $region45: #{mtl2d_deepsvdd_forward.3} parent=43 // pred_check
        %p253 = pneg %p34
      $region46: #{mtl2d_deepsvdd_forward.3} parent=43 // pred_check_branch
        %255 = sbr.rel (%p253) target = $region48
      $region47: #{mtl2d_deepsvdd_forward.3} parent=43 // pred_region
        %p256 = scmp.lt.s32.totalorder %s14, 1
        %s257 = scalar_select %p256, %s14, 1
        %s258 = smul.addr %s257, 32
        %s259 = smul.addr %s258, 8
        %s260 = scalar_lea.vmem %s0, %s259
      $region48: #{mtl2d_deepsvdd_forward.3} parent=43 // pred_fallthru
        _
    $region44: #{mtl2d_deepsvdd_forward.3} parent=5 // pred_fallthru
      _
    %p261 = scmp.le.s32.totalorder 1, %s14
    %p262 = scmp.lt.s32.totalorder %s14, 3
    %p263 = pnand %p261, %p262
    %p264 = pneg %p263
    // Predicated region
    $region49: #{mtl2d_deepsvdd_forward.3} parent=5 // pred_check
      _
    $region50: #{mtl2d_deepsvdd_forward.3} parent=5 // pred_check_branch
      %266 = sbr.rel (%p263) target = $region52
    $region51: #{mtl2d_deepsvdd_forward.3} parent=5 // pred_region
      %s267 = ssub.s32 %s14, 1
      %p268 = scmp.lt.s32.totalorder %s19, 1
      %s269 = scalar_select %p268, %s19, 1
      %s270 = smul.addr %s269, 32
      %s271 = smul.addr %s270, 8
      %s272 = scalar_lea.vmem %s0, %s271
      %p273 = pneg %p40
      %p274 = pneg %p37
      %p275 = pneg %p61
      %p276 = pneg %p58
      %p277 = pneg %p82
      %p278 = pneg %p79
      %p279 = pneg %p103
      %p280 = pneg %p100
      %p281 = pneg %p124
      %p282 = pneg %p121
      %p283 = pneg %p145
      %p284 = pneg %p142
      %p285 = pneg %p166
      %p286 = pneg %p163
      %p287 = pneg %p187
      %p288 = pneg %p184
      %p289 = pneg %p213
      %p290 = pneg %p210
      %p291 = scmp.lt.s32.totalorder %s19, 1
      %s292 = scalar_select %p291, %s19, 1
      %s293 = smul.addr %s292, 32
      %s294 = smul.addr %s293, 8
      %s295 = scalar_lea.vmem %s8, %s294
      %p296 = scmp.lt.s32.totalorder %s19, 1
      %s297 = scalar_select %p296, %s19, 1
      %s298 = smul.addr %s297, 32
      %s299 = smul.addr %s298, 8
      %s300 = scalar_lea.vmem %s0, %s299
      %p301 = scmp.lt.s32.totalorder %s19, 1
      %s302 = scalar_select %p301, %s19, 1
      %s303 = smul.addr %s302, 32
      %s304 = smul.addr %s303, 8
      %s305 = scalar_lea.vmem %s8, %s304
      %v307 = vld [vmem:[%s300] sm:$0xff]
      %v308 = vld [vmem:[%s300 + $0x8] sm:$0xff]
      %v309 = vld [vmem:[%s300 + $0x10] sm:$0xff]
      %v310 = vld [vmem:[%s300 + $0x18] sm:$0xff]
      %v311 = vld [vmem:[%s300 + $0x20] sm:$0xff]
      %v312 = vld [vmem:[%s300 + $0x28] sm:$0xff]
      %v313 = vld [vmem:[%s300 + $0x30] sm:$0xff]
      %v314 = vld [vmem:[%s300 + $0x38] sm:$0xff]
      %v315 = vld [vmem:[%s300 + $0x40] sm:$0xff]
      %v316 = vld [vmem:[%s300 + $0x48] sm:$0xff]
      %v317 = vld [vmem:[%s300 + $0x50] sm:$0xff]
      %v318 = vld [vmem:[%s300 + $0x58] sm:$0xff]
      %v319 = vld [vmem:[%s300 + $0x60] sm:$0xff]
      %v320 = vld [vmem:[%s300 + $0x68] sm:$0xff]
      %v321 = vld [vmem:[%s300 + $0x70] sm:$0xff]
      %v322 = vld [vmem:[%s300 + $0x78] sm:$0xff]
      %v323 = vld [vmem:[%s300 + $0x80] sm:$0xff]
      %v324 = vld [vmem:[%s300 + $0x88] sm:$0xff]
      %v325 = vld [vmem:[%s300 + $0x90] sm:$0xff]
      %v326 = vld [vmem:[%s300 + $0x98] sm:$0xff]
      %v327 = vld [vmem:[%s300 + $0xa0] sm:$0xff]
      %v328 = vld [vmem:[%s300 + $0xa8] sm:$0xff]
      %v329 = vld [vmem:[%s300 + $0xb0] sm:$0xff]
      %v330 = vld [vmem:[%s300 + $0xb8] sm:$0xff]
      %v331 = vld [vmem:[%s300 + $0xc0] sm:$0xff]
      %v332 = vld [vmem:[%s300 + $0xc8] sm:$0xff]
      %v333 = vld [vmem:[%s300 + $0xd0] sm:$0xff]
      %v334 = vld [vmem:[%s300 + $0xd8] sm:$0xff]
      %v335 = vld [vmem:[%s300 + $0xe0] sm:$0xff]
      %v336 = vld [vmem:[%s300 + $0xe8] sm:$0xff]
      %v337 = vld [vmem:[%s300 + $0xf0] sm:$0xff]
      %v338 = vld [vmem:[%s300 + $0xf8] sm:$0xff]
      %v339 = vpack.c.bf16 %v308, %v307
      %v340 = vpack.c.bf16 %v310, %v309
      %v341 = vpack.c.bf16 %v312, %v311
      %v342 = vpack.c.bf16 %v314, %v313
      %v343 = vpack.c.bf16 %v316, %v315
      %v344 = vpack.c.bf16 %v318, %v317
      %v345 = vpack.c.bf16 %v320, %v319
      %v346 = vpack.c.bf16 %v322, %v321
      %v347 = vpack.c.bf16 %v324, %v323
      %v348 = vpack.c.bf16 %v326, %v325
      %v349 = vpack.c.bf16 %v328, %v327
      %v350 = vpack.c.bf16 %v330, %v329
      %v351 = vpack.c.bf16 %v332, %v331
      %v352 = vpack.c.bf16 %v334, %v333
      %v353 = vpack.c.bf16 %v336, %v335
      %v354 = vpack.c.bf16 %v338, %v337
      %v355 = vld [vmem:[%s1] sm:$0xf]
      %v356 = vld [vmem:[%s1 + $0x4] sm:$0x1]
      %v357 = vld [vmem:[%s2] sm:$0x1]
      %v359 = vperm.slane %v357, 0
      %v363 = vunpack.c.l.b16 %v355
      %v364 = vunpack.c.l.b16 %v356
      %v365 = vpack.c.b16 %v364, %v363
      %vm366 = vcmask 72704
      %v368 = vsel %vm366, %v339, 0
      %v371 = vsel %vm366, %v340, 0
      %v374 = vsel %vm366, %v341, 0
      %v377 = vsel %vm366, %v342, 0
      %v380 = vsel %vm366, %v343, 0
      %v383 = vsel %vm366, %v344, 0
      %v386 = vsel %vm366, %v345, 0
      %v389 = vsel %vm366, %v346, 0
      %v392 = vsel %vm366, %v347, 0
      %v395 = vsel %vm366, %v348, 0
      %v398 = vsel %vm366, %v349, 0
      %v401 = vsel %vm366, %v350, 0
      %v404 = vsel %vm366, %v351, 0
      %v407 = vsel %vm366, %v352, 0
      %v410 = vsel %vm366, %v353, 0
      %v413 = vsel %vm366, %v354, 0
      %vm415 = vcmask 1043456
      %vm416 = vcmask 1044480
      %v417 = vsel %vm415, 4294967295, 65535
      %v418 = vsel %vm416, %v417, 0
      %v420 = vand.u32 %v365, %v418
      %422 = vmatpush.bf16.msra.mxu0 0
      %423 = vmatpush.bf16.msra.mxu0 0
      %424 = vmatpush.bf16.msra.mxu0 0
      %425 = vmatpush.bf16.msra.mxu0 0
      %426 = vmatpush.bf16.msra.mxu0 0
      %427 = vmatpush.bf16.msra.mxu0 0
      %428 = vmatpush.bf16.msra.mxu0 0
      %429 = vmatpush.bf16.msra.mxu0 %v420
      %430 = vmatmul.bf16.gmra.mxu0 %v368
      %v431 = vpop.f32.mrf.mxu0
      %v432 = vadd.f32 %v359, %v431
      %v433 = vpop.f32.mrf.mxu0
      %v434 = vadd.f32 %v359, %v433
      %435 = vmatmul.bf16.gmra.mxu0 %v371
      %v436 = vpop.f32.mrf.mxu0
      %v437 = vadd.f32 %v359, %v436
      %v438 = vpop.f32.mrf.mxu0
      %v439 = vadd.f32 %v359, %v438
      %440 = vmatmul.bf16.gmra.mxu0 %v374
      %v441 = vpop.f32.mrf.mxu0
      %v442 = vadd.f32 %v359, %v441
      %v443 = vpop.f32.mrf.mxu0
      %v444 = vadd.f32 %v359, %v443
      %445 = vmatmul.bf16.gmra.mxu0 %v377
      %v446 = vpop.f32.mrf.mxu0
      %v447 = vadd.f32 %v359, %v446
      %v448 = vpop.f32.mrf.mxu0
      %v449 = vadd.f32 %v359, %v448
      %450 = vmatmul.bf16.gmra.mxu0 %v380
      %v451 = vpop.f32.mrf.mxu0
      %v452 = vadd.f32 %v359, %v451
      %v453 = vpop.f32.mrf.mxu0
      %v454 = vadd.f32 %v359, %v453
      %455 = vmatmul.bf16.gmra.mxu0 %v383
      %v456 = vpop.f32.mrf.mxu0
      %v457 = vadd.f32 %v359, %v456
      %v458 = vpop.f32.mrf.mxu0
      %v459 = vadd.f32 %v359, %v458
      %460 = vmatmul.bf16.gmra.mxu0 %v386
      %v461 = vpop.f32.mrf.mxu0
      %v462 = vadd.f32 %v359, %v461
      %v463 = vpop.f32.mrf.mxu0
      %v464 = vadd.f32 %v359, %v463
      %465 = vmatmul.bf16.gmra.mxu0 %v389
      %v466 = vpop.f32.mrf.mxu0
      %v467 = vadd.f32 %v359, %v466
      %v468 = vpop.f32.mrf.mxu0
      %v469 = vadd.f32 %v359, %v468
      %470 = vmatmul.bf16.gmra.mxu0 %v392
      %v471 = vpop.f32.mrf.mxu0
      %v472 = vadd.f32 %v359, %v471
      %v473 = vpop.f32.mrf.mxu0
      %v474 = vadd.f32 %v359, %v473
      %475 = vmatmul.bf16.gmra.mxu0 %v395
      %v476 = vpop.f32.mrf.mxu0
      %v477 = vadd.f32 %v359, %v476
      %v478 = vpop.f32.mrf.mxu0
      %v479 = vadd.f32 %v359, %v478
      %480 = vmatmul.bf16.gmra.mxu0 %v398
      %v481 = vpop.f32.mrf.mxu0
      %v482 = vadd.f32 %v359, %v481
      %v483 = vpop.f32.mrf.mxu0
      %v484 = vadd.f32 %v359, %v483
      %485 = vmatmul.bf16.gmra.mxu0 %v401
      %v486 = vpop.f32.mrf.mxu0
      %v487 = vadd.f32 %v359, %v486
      %v488 = vpop.f32.mrf.mxu0
      %v489 = vadd.f32 %v359, %v488
      %490 = vmatmul.bf16.gmra.mxu0 %v404
      %v491 = vpop.f32.mrf.mxu0
      %v492 = vadd.f32 %v359, %v491
      %v493 = vpop.f32.mrf.mxu0
      %v494 = vadd.f32 %v359, %v493
      %495 = vmatmul.bf16.gmra.mxu0 %v407
      %v496 = vpop.f32.mrf.mxu0
      %v497 = vadd.f32 %v359, %v496
      %v498 = vpop.f32.mrf.mxu0
      %v499 = vadd.f32 %v359, %v498
      %500 = vmatmul.bf16.gmra.mxu0 %v410
      %v501 = vpop.f32.mrf.mxu0
      %v502 = vadd.f32 %v359, %v501
      %v503 = vpop.f32.mrf.mxu0
      %v504 = vadd.f32 %v359, %v503
      %505 = vmatmul.bf16.gmra.mxu0 %v413
      %v506 = vpop.f32.mrf.mxu0
      %v507 = vadd.f32 %v359, %v506
      %v508 = vpop.f32.mrf.mxu0
      %v509 = vadd.f32 %v359, %v508
      %510 = vdwg.mxu0
      %v511 = vmax.f32 %v432, 0.0
      %v512 = vmax.f32 %v434, 0.0
      %v513 = vmax.f32 %v437, 0.0
      %v514 = vmax.f32 %v439, 0.0
      %v515 = vmax.f32 %v442, 0.0
      %v516 = vmax.f32 %v444, 0.0
      %v517 = vmax.f32 %v447, 0.0
      %v518 = vmax.f32 %v449, 0.0
      %v519 = vmax.f32 %v452, 0.0
      %v520 = vmax.f32 %v454, 0.0
      %v521 = vmax.f32 %v457, 0.0
      %v522 = vmax.f32 %v459, 0.0
      %v523 = vmax.f32 %v462, 0.0
      %v524 = vmax.f32 %v464, 0.0
      %v525 = vmax.f32 %v467, 0.0
      %v526 = vmax.f32 %v469, 0.0
      %v527 = vmax.f32 %v472, 0.0
      %v528 = vmax.f32 %v474, 0.0
      %v529 = vmax.f32 %v477, 0.0
      %v530 = vmax.f32 %v479, 0.0
      %v531 = vmax.f32 %v482, 0.0
      %v532 = vmax.f32 %v484, 0.0
      %v533 = vmax.f32 %v487, 0.0
      %v534 = vmax.f32 %v489, 0.0
      %v535 = vmax.f32 %v492, 0.0
      %v536 = vmax.f32 %v494, 0.0
      %v537 = vmax.f32 %v497, 0.0
      %v538 = vmax.f32 %v499, 0.0
      %v539 = vmax.f32 %v502, 0.0
      %v540 = vmax.f32 %v504, 0.0
      %v541 = vmax.f32 %v507, 0.0
      %v542 = vmax.f32 %v509, 0.0
      %v543 = vpack.c.bf16 %v512, %v511
      %v544 = vpack.c.bf16 %v514, %v513
      %v545 = vpack.c.bf16 %v516, %v515
      %v546 = vpack.c.bf16 %v518, %v517
      %v547 = vpack.c.bf16 %v520, %v519
      %v548 = vpack.c.bf16 %v522, %v521
      %v549 = vpack.c.bf16 %v524, %v523
      %v550 = vpack.c.bf16 %v526, %v525
      %v551 = vpack.c.bf16 %v528, %v527
      %v552 = vpack.c.bf16 %v530, %v529
      %v553 = vpack.c.bf16 %v532, %v531
      %v554 = vpack.c.bf16 %v534, %v533
      %v555 = vpack.c.bf16 %v536, %v535
      %v556 = vpack.c.bf16 %v538, %v537
      %v557 = vpack.c.bf16 %v540, %v539
      %v558 = vpack.c.bf16 %v542, %v541
      %v559 = vld [vmem:[%s3] sm:$0xf]
      %v560 = vld [vmem:[%s3 + $0x4] sm:$0xf]
      %v561 = vld [vmem:[%s4] sm:$0x1]
      %v563 = vperm.slane %v561, 0
      %v567 = vunpack.c.l.b16 %v559
      %v568 = vunpack.c.l.b16 %v560
      %v569 = vpack.c.b16 %v568, %v567
      %vm571 = vcmask 130048
      %v573 = vsel %vm571, %v543, 0
      %v576 = vsel %vm571, %v544, 0
      %v579 = vsel %vm571, %v545, 0
      %v582 = vsel %vm571, %v546, 0
      %v585 = vsel %vm571, %v547, 0
      %v588 = vsel %vm571, %v548, 0
      %v591 = vsel %vm571, %v549, 0
      %v594 = vsel %vm571, %v550, 0
      %v597 = vsel %vm571, %v551, 0
      %v600 = vsel %vm571, %v552, 0
      %v603 = vsel %vm571, %v553, 0
      %v606 = vsel %vm571, %v554, 0
      %v609 = vsel %vm571, %v555, 0
      %v612 = vsel %vm571, %v556, 0
      %v615 = vsel %vm571, %v557, 0
      %v618 = vsel %vm571, %v558, 0
      %620 = vmatpush.bf16.msra.mxu0 0
      %621 = vmatpush.bf16.msra.mxu0 0
      %622 = vmatpush.bf16.msra.mxu0 0
      %623 = vmatpush.bf16.msra.mxu0 0
      %624 = vmatpush.bf16.msra.mxu0 0
      %625 = vmatpush.bf16.msra.mxu0 0
      %626 = vmatpush.bf16.msra.mxu0 0
      %627 = vmatpush.bf16.msra.mxu0 %v569
      %628 = vmatmul.bf16.gmra.mxu0 %v573
      %v629 = vpop.f32.mrf.mxu0
      %v630 = vadd.f32 %v563, %v629
      %v631 = vpop.f32.mrf.mxu0
      %v632 = vadd.f32 %v563, %v631
      %633 = vmatmul.bf16.gmra.mxu0 %v576
      %v634 = vpop.f32.mrf.mxu0
      %v635 = vadd.f32 %v563, %v634
      %v636 = vpop.f32.mrf.mxu0
      %v637 = vadd.f32 %v563, %v636
      %638 = vmatmul.bf16.gmra.mxu0 %v579
      %v639 = vpop.f32.mrf.mxu0
      %v640 = vadd.f32 %v563, %v639
      %v641 = vpop.f32.mrf.mxu0
      %v642 = vadd.f32 %v563, %v641
      %643 = vmatmul.bf16.gmra.mxu0 %v582
      %v644 = vpop.f32.mrf.mxu0
      %v645 = vadd.f32 %v563, %v644
      %v646 = vpop.f32.mrf.mxu0
      %v647 = vadd.f32 %v563, %v646
      %648 = vmatmul.bf16.gmra.mxu0 %v585
      %v649 = vpop.f32.mrf.mxu0
      %v650 = vadd.f32 %v563, %v649
      %v651 = vpop.f32.mrf.mxu0
      %v652 = vadd.f32 %v563, %v651
      %653 = vmatmul.bf16.gmra.mxu0 %v588
      %v654 = vpop.f32.mrf.mxu0
      %v655 = vadd.f32 %v563, %v654
      %v656 = vpop.f32.mrf.mxu0
      %v657 = vadd.f32 %v563, %v656
      %658 = vmatmul.bf16.gmra.mxu0 %v591
      %v659 = vpop.f32.mrf.mxu0
      %v660 = vadd.f32 %v563, %v659
      %v661 = vpop.f32.mrf.mxu0
      %v662 = vadd.f32 %v563, %v661
      %663 = vmatmul.bf16.gmra.mxu0 %v594
      %v664 = vpop.f32.mrf.mxu0
      %v665 = vadd.f32 %v563, %v664
      %v666 = vpop.f32.mrf.mxu0
      %v667 = vadd.f32 %v563, %v666
      %668 = vmatmul.bf16.gmra.mxu0 %v597
      %v669 = vpop.f32.mrf.mxu0
      %v670 = vadd.f32 %v563, %v669
      %v671 = vpop.f32.mrf.mxu0
      %v672 = vadd.f32 %v563, %v671
      %673 = vmatmul.bf16.gmra.mxu0 %v600
      %v674 = vpop.f32.mrf.mxu0
      %v675 = vadd.f32 %v563, %v674
      %v676 = vpop.f32.mrf.mxu0
      %v677 = vadd.f32 %v563, %v676
      %678 = vmatmul.bf16.gmra.mxu0 %v603
      %v679 = vpop.f32.mrf.mxu0
      %v680 = vadd.f32 %v563, %v679
      %v681 = vpop.f32.mrf.mxu0
      %v682 = vadd.f32 %v563, %v681
      %683 = vmatmul.bf16.gmra.mxu0 %v606
      %v684 = vpop.f32.mrf.mxu0
      %v685 = vadd.f32 %v563, %v684
      %v686 = vpop.f32.mrf.mxu0
      %v687 = vadd.f32 %v563, %v686
      %688 = vmatmul.bf16.gmra.mxu0 %v609
      %v689 = vpop.f32.mrf.mxu0
      %v690 = vadd.f32 %v563, %v689
      %v691 = vpop.f32.mrf.mxu0
      %v692 = vadd.f32 %v563, %v691
      %693 = vmatmul.bf16.gmra.mxu0 %v612
      %v694 = vpop.f32.mrf.mxu0
      %v695 = vadd.f32 %v563, %v694
      %v696 = vpop.f32.mrf.mxu0
      %v697 = vadd.f32 %v563, %v696
      %698 = vmatmul.bf16.gmra.mxu0 %v615
      %v699 = vpop.f32.mrf.mxu0
      %v700 = vadd.f32 %v563, %v699
      %v701 = vpop.f32.mrf.mxu0
      %v702 = vadd.f32 %v563, %v701
      %703 = vmatmul.bf16.gmra.mxu0 %v618
      %v704 = vpop.f32.mrf.mxu0
      %v705 = vadd.f32 %v563, %v704
      %v706 = vpop.f32.mrf.mxu0
      %v707 = vadd.f32 %v563, %v706
      %708 = vdwg.mxu0
      %v709 = vpack.c.bf16 %v630, %v630
      %v710 = vpack.c.bf16 %v632, %v632
      %v711 = vpack.c.bf16 %v635, %v635
      %v712 = vpack.c.bf16 %v637, %v637
      %v713 = vpack.c.bf16 %v640, %v640
      %v714 = vpack.c.bf16 %v642, %v642
      %v715 = vpack.c.bf16 %v645, %v645
      %v716 = vpack.c.bf16 %v647, %v647
      %v717 = vpack.c.bf16 %v650, %v650
      %v718 = vpack.c.bf16 %v652, %v652
      %v719 = vpack.c.bf16 %v655, %v655
      %v720 = vpack.c.bf16 %v657, %v657
      %v721 = vpack.c.bf16 %v660, %v660
      %v722 = vpack.c.bf16 %v662, %v662
      %v723 = vpack.c.bf16 %v665, %v665
      %v724 = vpack.c.bf16 %v667, %v667
      %v725 = vpack.c.bf16 %v670, %v670
      %v726 = vpack.c.bf16 %v672, %v672
      %v727 = vpack.c.bf16 %v675, %v675
      %v728 = vpack.c.bf16 %v677, %v677
      %v729 = vpack.c.bf16 %v680, %v680
      %v730 = vpack.c.bf16 %v682, %v682
      %v731 = vpack.c.bf16 %v685, %v685
      %v732 = vpack.c.bf16 %v687, %v687
      %v733 = vpack.c.bf16 %v690, %v690
      %v734 = vpack.c.bf16 %v692, %v692
      %v735 = vpack.c.bf16 %v695, %v695
      %v736 = vpack.c.bf16 %v697, %v697
      %v737 = vpack.c.bf16 %v700, %v700
      %v738 = vpack.c.bf16 %v702, %v702
      %v739 = vpack.c.bf16 %v705, %v705
      %v740 = vpack.c.bf16 %v707, %v707
      %v741 = vpack.c.bf16 %v632, %v630
      %v742 = vpack.c.bf16 %v637, %v635
      %v743 = vpack.c.bf16 %v642, %v640
      %v744 = vpack.c.bf16 %v647, %v645
      %v745 = vpack.c.bf16 %v652, %v650
      %v746 = vpack.c.bf16 %v657, %v655
      %v747 = vpack.c.bf16 %v662, %v660
      %v748 = vpack.c.bf16 %v667, %v665
      %v749 = vld [vmem:[%s7] sm:$0xff]
      %v750 = vld [vmem:[%s7 + $0x8] sm:$0xff]
      %v751 = vld [vmem:[%s7 + $0x10] sm:$0xff]
      %v752 = vld [vmem:[%s7 + $0x18] sm:$0xff]
      %v753 = vld [vmem:[%s7 + $0x20] sm:$0xff]
      %v754 = vld [vmem:[%s7 + $0x28] sm:$0xff]
      %v755 = vld [vmem:[%s7 + $0x30] sm:$0xff]
      %v756 = vld [vmem:[%s7 + $0x38] sm:$0xff]
      %v757 = vld [vmem:[%s7 + $0x40] sm:$0xff]
      %v758 = vld [vmem:[%s7 + $0x48] sm:$0xff]
      %v759 = vld [vmem:[%s7 + $0x50] sm:$0xff]
      %v760 = vld [vmem:[%s7 + $0x58] sm:$0xff]
      %v761 = vld [vmem:[%s7 + $0x60] sm:$0xff]
      %v762 = vld [vmem:[%s7 + $0x68] sm:$0xff]
      %v763 = vld [vmem:[%s7 + $0x70] sm:$0xff]
      %v764 = vld [vmem:[%s7 + $0x78] sm:$0xff]
      %v765 = vunpack.c.l.bf16 %v749
      %v766 = vunpack.c.h.bf16 %v749
      %v767 = vunpack.c.l.bf16 %v750
      %v768 = vunpack.c.h.bf16 %v750
      %v769 = vunpack.c.l.bf16 %v751
      %v770 = vunpack.c.h.bf16 %v751
      %v771 = vunpack.c.l.bf16 %v752
      %v772 = vunpack.c.h.bf16 %v752
      %v773 = vunpack.c.l.bf16 %v753
      %v774 = vunpack.c.h.bf16 %v753
      %v775 = vunpack.c.l.bf16 %v754
      %v776 = vunpack.c.h.bf16 %v754
      %v777 = vunpack.c.l.bf16 %v755
      %v778 = vunpack.c.h.bf16 %v755
      %v779 = vunpack.c.l.bf16 %v756
      %v780 = vunpack.c.h.bf16 %v756
      %v781 = vunpack.c.l.bf16 %v757
      %v782 = vunpack.c.h.bf16 %v757
      %v783 = vunpack.c.l.bf16 %v758
      %v784 = vunpack.c.h.bf16 %v758
      %v785 = vunpack.c.l.bf16 %v759
      %v786 = vunpack.c.h.bf16 %v759
      %v787 = vunpack.c.l.bf16 %v760
      %v788 = vunpack.c.h.bf16 %v760
      %v789 = vunpack.c.l.bf16 %v761
      %v790 = vunpack.c.h.bf16 %v761
      %v791 = vunpack.c.l.bf16 %v762
      %v792 = vunpack.c.h.bf16 %v762
      %v793 = vunpack.c.l.bf16 %v763
      %v794 = vunpack.c.h.bf16 %v763
      %v795 = vunpack.c.l.bf16 %v764
      %v796 = vunpack.c.h.bf16 %v764
      %v829 = vunpack.c.l.b16 %v709
      %v830 = vunpack.c.l.b16 %v710
      %v831 = vunpack.c.l.b16 %v711
      %v832 = vunpack.c.l.b16 %v712
      %v833 = vunpack.c.l.b16 %v713
      %v834 = vunpack.c.l.b16 %v714
      %v835 = vunpack.c.l.b16 %v715
      %v836 = vunpack.c.l.b16 %v716
      %v837 = vunpack.c.l.b16 %v717
      %v838 = vunpack.c.l.b16 %v718
      %v839 = vunpack.c.l.b16 %v719
      %v840 = vunpack.c.l.b16 %v720
      %v841 = vunpack.c.l.b16 %v721
      %v842 = vunpack.c.l.b16 %v722
      %v843 = vunpack.c.l.b16 %v723
      %v844 = vunpack.c.l.b16 %v724
      %v845 = vunpack.c.l.b16 %v725
      %v846 = vunpack.c.l.b16 %v726
      %v847 = vunpack.c.l.b16 %v727
      %v848 = vunpack.c.l.b16 %v728
      %v849 = vunpack.c.l.b16 %v729
      %v850 = vunpack.c.l.b16 %v730
      %v851 = vunpack.c.l.b16 %v731
      %v852 = vunpack.c.l.b16 %v732
      %v853 = vunpack.c.l.b16 %v733
      %v854 = vunpack.c.l.b16 %v734
      %v855 = vunpack.c.l.b16 %v735
      %v856 = vunpack.c.l.b16 %v736
      %v857 = vunpack.c.l.b16 %v737
      %v858 = vunpack.c.l.b16 %v738
      %v859 = vunpack.c.l.b16 %v739
      %v860 = vunpack.c.l.b16 %v740
      %v861 = vpack.c.b16 %v830, %v829
      %v862 = vpack.c.b16 %v832, %v831
      %v863 = vpack.c.b16 %v834, %v833
      %v864 = vpack.c.b16 %v836, %v835
      %v865 = vpack.c.b16 %v838, %v837
      %v866 = vpack.c.b16 %v840, %v839
      %v867 = vpack.c.b16 %v842, %v841
      %v868 = vpack.c.b16 %v844, %v843
      %v869 = vpack.c.b16 %v846, %v845
      %v870 = vpack.c.b16 %v848, %v847
      %v871 = vpack.c.b16 %v850, %v849
      %v872 = vpack.c.b16 %v852, %v851
      %v873 = vpack.c.b16 %v854, %v853
      %v874 = vpack.c.b16 %v856, %v855
      %v875 = vpack.c.b16 %v858, %v857
      %v876 = vpack.c.b16 %v860, %v859
      %877 = vrot.lane.b32.xlu0 %v861, 113
      %v878 = vpop.permute.xlu0 %877
      %879 = vrot.lane.b32.xlu0 %v862, 113
      %v880 = vpop.permute.xlu0 %879
      %881 = vrot.lane.b32.xlu0 %v863, 113
      %v882 = vpop.permute.xlu0 %881
      %883 = vrot.lane.b32.xlu0 %v864, 113
      %v884 = vpop.permute.xlu0 %883
      %885 = vrot.lane.b32.xlu0 %v865, 113
      %v886 = vpop.permute.xlu0 %885
      %887 = vrot.lane.b32.xlu0 %v866, 113
      %v888 = vpop.permute.xlu0 %887
      %889 = vrot.lane.b32.xlu0 %v867, 113
      %v890 = vpop.permute.xlu0 %889
      %891 = vrot.lane.b32.xlu0 %v868, 113
      %v892 = vpop.permute.xlu0 %891
      %893 = vrot.lane.b32.xlu0 %v869, 113
      %v894 = vpop.permute.xlu0 %893
      %895 = vrot.lane.b32.xlu0 %v870, 113
      %v896 = vpop.permute.xlu0 %895
      %897 = vrot.lane.b32.xlu0 %v871, 113
      %v898 = vpop.permute.xlu0 %897
      %899 = vrot.lane.b32.xlu0 %v872, 113
      %v900 = vpop.permute.xlu0 %899
      %901 = vrot.lane.b32.xlu0 %v873, 113
      %v902 = vpop.permute.xlu0 %901
      %903 = vrot.lane.b32.xlu0 %v874, 113
      %v904 = vpop.permute.xlu0 %903
      %905 = vrot.lane.b32.xlu0 %v875, 113
      %v906 = vpop.permute.xlu0 %905
      %907 = vrot.lane.b32.xlu0 %v876, 113
      %v908 = vpop.permute.xlu0 %907
      %vm909 = vcmask 39936
      %v911 = vsel %vm909, %v741, 0
      %v914 = vsel %vm909, %v742, 0
      %v917 = vsel %vm909, %v743, 0
      %v920 = vsel %vm909, %v744, 0
      %v923 = vsel %vm909, %v745, 0
      %v926 = vsel %vm909, %v746, 0
      %v929 = vsel %vm909, %v747, 0
      %v932 = vsel %vm909, %v748, 0
      %v935 = vsel %vm909, %v878, 0
      %v938 = vsel %vm909, %v880, 0
      %v941 = vsel %vm909, %v882, 0
      %v944 = vsel %vm909, %v884, 0
      %v947 = vsel %vm909, %v886, 0
      %v950 = vsel %vm909, %v888, 0
      %v953 = vsel %vm909, %v890, 0
      %v956 = vsel %vm909, %v892, 0
      %v959 = vsel %vm909, %v894, 0
      %v962 = vsel %vm909, %v896, 0
      %v965 = vsel %vm909, %v898, 0
      %v968 = vsel %vm909, %v900, 0
      %v971 = vsel %vm909, %v902, 0
      %v974 = vsel %vm909, %v904, 0
      %v977 = vsel %vm909, %v906, 0
      %v980 = vsel %vm909, %v908, 0
      %982 = vmatpush.bf16.xpose.msra.mxu0 %v956
      %983 = vmatpush.bf16.xpose.msra.mxu0 %v953
      %984 = vmatpush.bf16.xpose.msra.mxu0 %v950
      %985 = vmatpush.bf16.xpose.msra.mxu0 %v947
      %986 = vmatpush.bf16.xpose.msra.mxu0 %v944
      %987 = vmatpush.bf16.xpose.msra.mxu0 %v941
      %988 = vmatpush.bf16.xpose.msra.mxu0 %v938
      %989 = vmatpush.bf16.xpose.msra.mxu0 %v935
      %990 = vmatmul.bf16.gmra.mxu0 %v911
      %v991 = vpop.f32.mrf.mxu0
      %v992 = vadd.f32 %v765, %v991
      %v993 = vpop.f32.mrf.mxu0
      %v994 = vadd.f32 %v767, %v993
      %995 = vmatmul.bf16.gmra.mxu0 %v914
      %v996 = vpop.f32.mrf.mxu0
      %v997 = vadd.f32 %v769, %v996
      %v998 = vpop.f32.mrf.mxu0
      %v999 = vadd.f32 %v771, %v998
      %1000 = vmatmul.bf16.gmra.mxu0 %v917
      %v1001 = vpop.f32.mrf.mxu0
      %v1002 = vadd.f32 %v773, %v1001
      %v1003 = vpop.f32.mrf.mxu0
      %v1004 = vadd.f32 %v775, %v1003
      %1005 = vmatmul.bf16.gmra.mxu0 %v920
      %v1006 = vpop.f32.mrf.mxu0
      %v1007 = vadd.f32 %v777, %v1006
      %v1008 = vpop.f32.mrf.mxu0
      %v1009 = vadd.f32 %v779, %v1008
      %1010 = vmatmul.bf16.gmra.mxu0 %v923
      %v1011 = vpop.f32.mrf.mxu0
      %v1012 = vadd.f32 %v781, %v1011
      %v1013 = vpop.f32.mrf.mxu0
      %v1014 = vadd.f32 %v783, %v1013
      %1015 = vmatmul.bf16.gmra.mxu0 %v926
      %v1016 = vpop.f32.mrf.mxu0
      %v1017 = vadd.f32 %v785, %v1016
      %v1018 = vpop.f32.mrf.mxu0
      %v1019 = vadd.f32 %v787, %v1018
      %1020 = vmatmul.bf16.gmra.mxu0 %v929
      %v1021 = vpop.f32.mrf.mxu0
      %v1022 = vadd.f32 %v789, %v1021
      %v1023 = vpop.f32.mrf.mxu0
      %v1024 = vadd.f32 %v791, %v1023
      %1025 = vmatmul.bf16.gmra.mxu0 %v932
      %v1026 = vpop.f32.mrf.mxu0
      %v1027 = vadd.f32 %v793, %v1026
      %v1028 = vpop.f32.mrf.mxu0
      %v1029 = vadd.f32 %v795, %v1028
      %1030 = vdwg.mxu0
      %1031 = vmatpush.bf16.xpose.msra.mxu0 %v980
      %1032 = vmatpush.bf16.xpose.msra.mxu0 %v977
      %1033 = vmatpush.bf16.xpose.msra.mxu0 %v974
      %1034 = vmatpush.bf16.xpose.msra.mxu0 %v971
      %1035 = vmatpush.bf16.xpose.msra.mxu0 %v968
      %1036 = vmatpush.bf16.xpose.msra.mxu0 %v965
      %1037 = vmatpush.bf16.xpose.msra.mxu0 %v962
      %1038 = vmatpush.bf16.xpose.msra.mxu0 %v959
      %1039 = vmatmul.bf16.gmra.mxu0 %v911
      %v1040 = vpop.f32.mrf.mxu0
      %v1041 = vadd.f32 %v766, %v1040
      %v1042 = vpop.f32.mrf.mxu0
      %v1043 = vadd.f32 %v768, %v1042
      %1044 = vmatmul.bf16.gmra.mxu0 %v914
      %v1045 = vpop.f32.mrf.mxu0
      %v1046 = vadd.f32 %v770, %v1045
      %v1047 = vpop.f32.mrf.mxu0
      %v1048 = vadd.f32 %v772, %v1047
      %1049 = vmatmul.bf16.gmra.mxu0 %v917
      %v1050 = vpop.f32.mrf.mxu0
      %v1051 = vadd.f32 %v774, %v1050
      %v1052 = vpop.f32.mrf.mxu0
      %v1053 = vadd.f32 %v776, %v1052
      %1054 = vmatmul.bf16.gmra.mxu0 %v920
      %v1055 = vpop.f32.mrf.mxu0
      %v1056 = vadd.f32 %v778, %v1055
      %v1057 = vpop.f32.mrf.mxu0
      %v1058 = vadd.f32 %v780, %v1057
      %1059 = vmatmul.bf16.gmra.mxu0 %v923
      %v1060 = vpop.f32.mrf.mxu0
      %v1061 = vadd.f32 %v782, %v1060
      %v1062 = vpop.f32.mrf.mxu0
      %v1063 = vadd.f32 %v784, %v1062
      %1064 = vmatmul.bf16.gmra.mxu0 %v926
      %v1065 = vpop.f32.mrf.mxu0
      %v1066 = vadd.f32 %v786, %v1065
      %v1067 = vpop.f32.mrf.mxu0
      %v1068 = vadd.f32 %v788, %v1067
      %1069 = vmatmul.bf16.gmra.mxu0 %v929
      %v1070 = vpop.f32.mrf.mxu0
      %v1071 = vadd.f32 %v790, %v1070
      %v1072 = vpop.f32.mrf.mxu0
      %v1073 = vadd.f32 %v792, %v1072
      %1074 = vmatmul.bf16.gmra.mxu0 %v932
      %v1075 = vpop.f32.mrf.mxu0
      %v1076 = vadd.f32 %v794, %v1075
      %v1077 = vpop.f32.mrf.mxu0
      %v1078 = vadd.f32 %v796, %v1077
      %1079 = vdwg.mxu0
      %v1080 = vmax.f32 %v992, %v1041
      %1081 = vmax.xlane.f32.xlu0 %v1080
      %v1082 = vpop.xlane.xlu0 %1081
      %v1083 = vmax.f32 %v994, %v1043
      %1084 = vmax.xlane.f32.xlu0 %v1083
      %v1085 = vpop.xlane.xlu0 %1084
      %v1086 = vmax.f32 %v997, %v1046
      %1087 = vmax.xlane.f32.xlu0 %v1086
      %v1088 = vpop.xlane.xlu0 %1087
      %v1089 = vmax.f32 %v999, %v1048
      %1090 = vmax.xlane.f32.xlu0 %v1089
      %v1091 = vpop.xlane.xlu0 %1090
      %v1092 = vmax.f32 %v1002, %v1051
      %1093 = vmax.xlane.f32.xlu0 %v1092
      %v1094 = vpop.xlane.xlu0 %1093
      %v1095 = vmax.f32 %v1004, %v1053
      %1096 = vmax.xlane.f32.xlu0 %v1095
      %v1097 = vpop.xlane.xlu0 %1096
      %v1098 = vmax.f32 %v1007, %v1056
      %1099 = vmax.xlane.f32.xlu0 %v1098
      %v1100 = vpop.xlane.xlu0 %1099
      %v1101 = vmax.f32 %v1009, %v1058
      %1102 = vmax.xlane.f32.xlu0 %v1101
      %v1103 = vpop.xlane.xlu0 %1102
      %v1104 = vmax.f32 %v1012, %v1061
      %1105 = vmax.xlane.f32.xlu0 %v1104
      %v1106 = vpop.xlane.xlu0 %1105
      %v1107 = vmax.f32 %v1014, %v1063
      %1108 = vmax.xlane.f32.xlu0 %v1107
      %v1109 = vpop.xlane.xlu0 %1108
      %v1110 = vmax.f32 %v1017, %v1066
      %1111 = vmax.xlane.f32.xlu0 %v1110
      %v1112 = vpop.xlane.xlu0 %1111
      %v1113 = vmax.f32 %v1019, %v1068
      %1114 = vmax.xlane.f32.xlu0 %v1113
      %v1115 = vpop.xlane.xlu0 %1114
      %v1116 = vmax.f32 %v1022, %v1071
      %1117 = vmax.xlane.f32.xlu0 %v1116
      %v1118 = vpop.xlane.xlu0 %1117
      %v1119 = vmax.f32 %v1024, %v1073
      %1120 = vmax.xlane.f32.xlu0 %v1119
      %v1121 = vpop.xlane.xlu0 %1120
      %v1122 = vmax.f32 %v1027, %v1076
      %1123 = vmax.xlane.f32.xlu0 %v1122
      %v1124 = vpop.xlane.xlu0 %1123
      %v1125 = vmax.f32 %v1029, %v1078
      %1126 = vmax.xlane.f32.xlu0 %v1125
      %v1127 = vpop.xlane.xlu0 %1126
      %v1128 = vsub.f32 %v992, %v1082
      %v1129 = vsub.f32 %v1041, %v1082
      %v1130 = vsub.f32 %v994, %v1085
      %v1131 = vsub.f32 %v1043, %v1085
      %v1132 = vsub.f32 %v997, %v1088
      %v1133 = vsub.f32 %v1046, %v1088
      %v1134 = vsub.f32 %v999, %v1091
      %v1135 = vsub.f32 %v1048, %v1091
      %v1136 = vsub.f32 %v1002, %v1094
      %v1137 = vsub.f32 %v1051, %v1094
      %v1138 = vsub.f32 %v1004, %v1097
      %v1139 = vsub.f32 %v1053, %v1097
      %v1140 = vsub.f32 %v1007, %v1100
      %v1141 = vsub.f32 %v1056, %v1100
      %v1142 = vsub.f32 %v1009, %v1103
      %v1143 = vsub.f32 %v1058, %v1103
      %v1144 = vsub.f32 %v1012, %v1106
      %v1145 = vsub.f32 %v1061, %v1106
      %v1146 = vsub.f32 %v1014, %v1109
      %v1147 = vsub.f32 %v1063, %v1109
      %v1148 = vsub.f32 %v1017, %v1112
      %v1149 = vsub.f32 %v1066, %v1112
      %v1150 = vsub.f32 %v1019, %v1115
      %v1151 = vsub.f32 %v1068, %v1115
      %v1152 = vsub.f32 %v1022, %v1118
      %v1153 = vsub.f32 %v1071, %v1118
      %v1154 = vsub.f32 %v1024, %v1121
      %v1155 = vsub.f32 %v1073, %v1121
      %v1156 = vsub.f32 %v1027, %v1124
      %v1157 = vsub.f32 %v1076, %v1124
      %v1158 = vsub.f32 %v1029, %v1127
      %v1159 = vsub.f32 %v1078, %v1127
      %v1160 = vmul.f32 %v1128, 1.442695
      %v1161 = vpow.pop %v1160
      %v1162 = vmul.f32 %v1129, 1.442695
      %v1163 = vpow.pop %v1162
      %v1164 = vmul.f32 %v1130, 1.442695
      %v1165 = vpow.pop %v1164
      %v1166 = vmul.f32 %v1131, 1.442695
      %v1167 = vpow.pop %v1166
      %v1168 = vmul.f32 %v1132, 1.442695
      %v1169 = vpow.pop %v1168
      %v1170 = vmul.f32 %v1133, 1.442695
      %v1171 = vpow.pop %v1170
      %v1172 = vmul.f32 %v1134, 1.442695
      %v1173 = vpow.pop %v1172
      %v1174 = vmul.f32 %v1135, 1.442695
      %v1175 = vpow.pop %v1174
      %v1176 = vmul.f32 %v1136, 1.442695
      %v1177 = vpow.pop %v1176
      %v1178 = vmul.f32 %v1137, 1.442695
      %v1179 = vpow.pop %v1178
      %v1180 = vmul.f32 %v1138, 1.442695
      %v1181 = vpow.pop %v1180
      %v1182 = vmul.f32 %v1139, 1.442695
      %v1183 = vpow.pop %v1182
      %v1184 = vmul.f32 %v1140, 1.442695
      %v1185 = vpow.pop %v1184
      %v1186 = vmul.f32 %v1141, 1.442695
      %v1187 = vpow.pop %v1186
      %v1188 = vmul.f32 %v1142, 1.442695
      %v1189 = vpow.pop %v1188
      %v1190 = vmul.f32 %v1143, 1.442695
      %v1191 = vpow.pop %v1190
      %v1192 = vmul.f32 %v1144, 1.442695
      %v1193 = vpow.pop %v1192
      %v1194 = vmul.f32 %v1145, 1.442695
      %v1195 = vpow.pop %v1194
      %v1196 = vmul.f32 %v1146, 1.442695
      %v1197 = vpow.pop %v1196
      %v1198 = vmul.f32 %v1147, 1.442695
      %v1199 = vpow.pop %v1198
      %v1200 = vmul.f32 %v1148, 1.442695
      %v1201 = vpow.pop %v1200
      %v1202 = vmul.f32 %v1149, 1.442695
      %v1203 = vpow.pop %v1202
      %v1204 = vmul.f32 %v1150, 1.442695
      %v1205 = vpow.pop %v1204
      %v1206 = vmul.f32 %v1151, 1.442695
      %v1207 = vpow.pop %v1206
      %v1208 = vmul.f32 %v1152, 1.442695
      %v1209 = vpow.pop %v1208
      %v1210 = vmul.f32 %v1153, 1.442695
      %v1211 = vpow.pop %v1210
      %v1212 = vmul.f32 %v1154, 1.442695
      %v1213 = vpow.pop %v1212
      %v1214 = vmul.f32 %v1155, 1.442695
      %v1215 = vpow.pop %v1214
      %v1216 = vmul.f32 %v1156, 1.442695
      %v1217 = vpow.pop %v1216
      %v1218 = vmul.f32 %v1157, 1.442695
      %v1219 = vpow.pop %v1218
      %v1220 = vmul.f32 %v1158, 1.442695
      %v1221 = vpow.pop %v1220
      %v1222 = vmul.f32 %v1159, 1.442695
      %v1223 = vpow.pop %v1222
      %v1224 = vadd.f32 %v1161, %v1163
      %1225 = vadd.xlane.f32.xlu0 %v1224
      %v1226 = vpop.xlane.xlu0 %1225
      %v1227 = vadd.f32 %v1165, %v1167
      %1228 = vadd.xlane.f32.xlu0 %v1227
      %v1229 = vpop.xlane.xlu0 %1228
      %v1230 = vadd.f32 %v1169, %v1171
      %1231 = vadd.xlane.f32.xlu0 %v1230
      %v1232 = vpop.xlane.xlu0 %1231
      %v1233 = vadd.f32 %v1173, %v1175
      %1234 = vadd.xlane.f32.xlu0 %v1233
      %v1235 = vpop.xlane.xlu0 %1234
      %v1236 = vadd.f32 %v1177, %v1179
      %1237 = vadd.xlane.f32.xlu0 %v1236
      %v1238 = vpop.xlane.xlu0 %1237
      %v1239 = vadd.f32 %v1181, %v1183
      %1240 = vadd.xlane.f32.xlu0 %v1239
      %v1241 = vpop.xlane.xlu0 %1240
      %v1242 = vadd.f32 %v1185, %v1187
      %1243 = vadd.xlane.f32.xlu0 %v1242
      %v1244 = vpop.xlane.xlu0 %1243
      %v1245 = vadd.f32 %v1189, %v1191
      %1246 = vadd.xlane.f32.xlu0 %v1245
      %v1247 = vpop.xlane.xlu0 %1246
      %v1248 = vadd.f32 %v1193, %v1195
      %1249 = vadd.xlane.f32.xlu0 %v1248
      %v1250 = vpop.xlane.xlu0 %1249
      %v1251 = vadd.f32 %v1197, %v1199
      %1252 = vadd.xlane.f32.xlu0 %v1251
      %v1253 = vpop.xlane.xlu0 %1252
      %v1254 = vadd.f32 %v1201, %v1203
      %1255 = vadd.xlane.f32.xlu0 %v1254
      %v1256 = vpop.xlane.xlu0 %1255
      %v1257 = vadd.f32 %v1205, %v1207
      %1258 = vadd.xlane.f32.xlu0 %v1257
      %v1259 = vpop.xlane.xlu0 %1258
      %v1260 = vadd.f32 %v1209, %v1211
      %1261 = vadd.xlane.f32.xlu0 %v1260
      %v1262 = vpop.xlane.xlu0 %1261
      %v1263 = vadd.f32 %v1213, %v1215
      %1264 = vadd.xlane.f32.xlu0 %v1263
      %v1265 = vpop.xlane.xlu0 %1264
      %v1266 = vadd.f32 %v1217, %v1219
      %1267 = vadd.xlane.f32.xlu0 %v1266
      %v1268 = vpop.xlane.xlu0 %1267
      %v1269 = vadd.f32 %v1221, %v1223
      %1270 = vadd.xlane.f32.xlu0 %v1269
      %v1271 = vpop.xlane.xlu0 %1270
      %v1272 = vpack.c.bf16 %v1165, %v1161
      %v1273 = vpack.c.bf16 %v1167, %v1163
      %v1274 = vpack.c.bf16 %v1173, %v1169
      %v1275 = vpack.c.bf16 %v1175, %v1171
      %v1276 = vpack.c.bf16 %v1181, %v1177
      %v1277 = vpack.c.bf16 %v1183, %v1179
      %v1278 = vpack.c.bf16 %v1189, %v1185
      %v1279 = vpack.c.bf16 %v1191, %v1187
      %v1280 = vpack.c.bf16 %v1197, %v1193
      %v1281 = vpack.c.bf16 %v1199, %v1195
      %v1282 = vpack.c.bf16 %v1205, %v1201
      %v1283 = vpack.c.bf16 %v1207, %v1203
      %v1284 = vpack.c.bf16 %v1213, %v1209
      %v1285 = vpack.c.bf16 %v1215, %v1211
      %v1286 = vpack.c.bf16 %v1221, %v1217
      %v1287 = vpack.c.bf16 %v1223, %v1219
      %1288 = vrot.lane.b32.xlu0 %v861, 98
      %v1289 = vpop.permute.xlu0 %1288
      %1290 = vrot.lane.b32.xlu0 %v862, 98
      %v1291 = vpop.permute.xlu0 %1290
      %1292 = vrot.lane.b32.xlu0 %v863, 98
      %v1293 = vpop.permute.xlu0 %1292
      %1294 = vrot.lane.b32.xlu0 %v864, 98
      %v1295 = vpop.permute.xlu0 %1294
      %1296 = vrot.lane.b32.xlu0 %v865, 98
      %v1297 = vpop.permute.xlu0 %1296
      %1298 = vrot.lane.b32.xlu0 %v866, 98
      %v1299 = vpop.permute.xlu0 %1298
      %1300 = vrot.lane.b32.xlu0 %v867, 98
      %v1301 = vpop.permute.xlu0 %1300
      %1302 = vrot.lane.b32.xlu0 %v868, 98
      %v1303 = vpop.permute.xlu0 %1302
      %1304 = vrot.lane.b32.xlu0 %v869, 98
      %v1305 = vpop.permute.xlu0 %1304
      %1306 = vrot.lane.b32.xlu0 %v870, 98
      %v1307 = vpop.permute.xlu0 %1306
      %1308 = vrot.lane.b32.xlu0 %v871, 98
      %v1309 = vpop.permute.xlu0 %1308
      %1310 = vrot.lane.b32.xlu0 %v872, 98
      %v1311 = vpop.permute.xlu0 %1310
      %1312 = vrot.lane.b32.xlu0 %v873, 98
      %v1313 = vpop.permute.xlu0 %1312
      %1314 = vrot.lane.b32.xlu0 %v874, 98
      %v1315 = vpop.permute.xlu0 %1314
      %1316 = vrot.lane.b32.xlu0 %v875, 98
      %v1317 = vpop.permute.xlu0 %1316
      %1318 = vrot.lane.b32.xlu0 %v876, 98
      %v1319 = vpop.permute.xlu0 %1318
      %1336 = vmatpush.bf16.msra.mxu0 %v1303
      %1337 = vmatpush.bf16.msra.mxu0 %v1301
      %1338 = vmatpush.bf16.msra.mxu0 %v1299
      %1339 = vmatpush.bf16.msra.mxu0 %v1297
      %1340 = vmatpush.bf16.msra.mxu0 %v1295
      %1341 = vmatpush.bf16.msra.mxu0 %v1293
      %1342 = vmatpush.bf16.msra.mxu0 %v1291
      %1343 = vmatpush.bf16.msra.mxu0 %v1289
      %1344 = vmatmul.bf16.gmra.mxu0 %v1272
      %v1345 = vpop.f32.mrf.mxu0
      %v1346 = vadd.f32 0.0, %v1345
      %v1347 = vpop.f32.mrf.mxu0
      %v1348 = vadd.f32 0.0, %v1347
      %1349 = vmatmul.bf16.gmra.mxu0 %v1274
      %v1350 = vpop.f32.mrf.mxu0
      %v1351 = vadd.f32 0.0, %v1350
      %v1352 = vpop.f32.mrf.mxu0
      %v1353 = vadd.f32 0.0, %v1352
      %1354 = vmatmul.bf16.gmra.mxu0 %v1276
      %v1355 = vpop.f32.mrf.mxu0
      %v1356 = vadd.f32 0.0, %v1355
      %v1357 = vpop.f32.mrf.mxu0
      %v1358 = vadd.f32 0.0, %v1357
      %1359 = vmatmul.bf16.gmra.mxu0 %v1278
      %v1360 = vpop.f32.mrf.mxu0
      %v1361 = vadd.f32 0.0, %v1360
      %v1362 = vpop.f32.mrf.mxu0
      %v1363 = vadd.f32 0.0, %v1362
      %1364 = vmatmul.bf16.gmra.mxu0 %v1280
      %v1365 = vpop.f32.mrf.mxu0
      %v1366 = vadd.f32 0.0, %v1365
      %v1367 = vpop.f32.mrf.mxu0
      %v1368 = vadd.f32 0.0, %v1367
      %1369 = vmatmul.bf16.gmra.mxu0 %v1282
      %v1370 = vpop.f32.mrf.mxu0
      %v1371 = vadd.f32 0.0, %v1370
      %v1372 = vpop.f32.mrf.mxu0
      %v1373 = vadd.f32 0.0, %v1372
      %1374 = vmatmul.bf16.gmra.mxu0 %v1284
      %v1375 = vpop.f32.mrf.mxu0
      %v1376 = vadd.f32 0.0, %v1375
      %v1377 = vpop.f32.mrf.mxu0
      %v1378 = vadd.f32 0.0, %v1377
      %1379 = vmatmul.bf16.gmra.mxu0 %v1286
      %v1380 = vpop.f32.mrf.mxu0
      %v1381 = vadd.f32 0.0, %v1380
      %v1382 = vpop.f32.mrf.mxu0
      %v1383 = vadd.f32 0.0, %v1382
      %1384 = vdwg.mxu0
      %1385 = vmatpush.bf16.msra.mxu0 %v1319
      %1386 = vmatpush.bf16.msra.mxu0 %v1317
      %1387 = vmatpush.bf16.msra.mxu0 %v1315
      %1388 = vmatpush.bf16.msra.mxu0 %v1313
      %1389 = vmatpush.bf16.msra.mxu0 %v1311
      %1390 = vmatpush.bf16.msra.mxu0 %v1309
      %1391 = vmatpush.bf16.msra.mxu0 %v1307
      %1392 = vmatpush.bf16.msra.mxu0 %v1305
      %1393 = vmatmul.bf16.gmra.mxu0 %v1273
      %v1394 = vpop.f32.mrf.mxu0
      %v1395 = vadd.f32 %v1346, %v1394
      %v1396 = vpop.f32.mrf.mxu0
      %v1397 = vadd.f32 %v1348, %v1396
      %1398 = vmatmul.bf16.gmra.mxu0 %v1275
      %v1399 = vpop.f32.mrf.mxu0
      %v1400 = vadd.f32 %v1351, %v1399
      %v1401 = vpop.f32.mrf.mxu0
      %v1402 = vadd.f32 %v1353, %v1401
      %1403 = vmatmul.bf16.gmra.mxu0 %v1277
      %v1404 = vpop.f32.mrf.mxu0
      %v1405 = vadd.f32 %v1356, %v1404
      %v1406 = vpop.f32.mrf.mxu0
      %v1407 = vadd.f32 %v1358, %v1406
      %1408 = vmatmul.bf16.gmra.mxu0 %v1279
      %v1409 = vpop.f32.mrf.mxu0
      %v1410 = vadd.f32 %v1361, %v1409
      %v1411 = vpop.f32.mrf.mxu0
      %v1412 = vadd.f32 %v1363, %v1411
      %1413 = vmatmul.bf16.gmra.mxu0 %v1281
      %v1414 = vpop.f32.mrf.mxu0
      %v1415 = vadd.f32 %v1366, %v1414
      %v1416 = vpop.f32.mrf.mxu0
      %v1417 = vadd.f32 %v1368, %v1416
      %1418 = vmatmul.bf16.gmra.mxu0 %v1283
      %v1419 = vpop.f32.mrf.mxu0
      %v1420 = vadd.f32 %v1371, %v1419
      %v1421 = vpop.f32.mrf.mxu0
      %v1422 = vadd.f32 %v1373, %v1421
      %1423 = vmatmul.bf16.gmra.mxu0 %v1285
      %v1424 = vpop.f32.mrf.mxu0
      %v1425 = vadd.f32 %v1376, %v1424
      %v1426 = vpop.f32.mrf.mxu0
      %v1427 = vadd.f32 %v1378, %v1426
      %1428 = vmatmul.bf16.gmra.mxu0 %v1287
      %v1429 = vpop.f32.mrf.mxu0
      %v1430 = vadd.f32 %v1381, %v1429
      %v1431 = vpop.f32.mrf.mxu0
      %v1432 = vadd.f32 %v1383, %v1431
      %1433 = vdwg.mxu0
      %v1434 = vrcp.pop %v1226
      %v1435 = vrcp.pop %v1229
      %v1436 = vrcp.pop %v1232
      %v1437 = vrcp.pop %v1235
      %v1438 = vrcp.pop %v1238
      %v1439 = vrcp.pop %v1241
      %v1440 = vrcp.pop %v1244
      %v1441 = vrcp.pop %v1247
      %v1442 = vrcp.pop %v1250
      %v1443 = vrcp.pop %v1253
      %v1444 = vrcp.pop %v1256
      %v1445 = vrcp.pop %v1259
      %v1446 = vrcp.pop %v1262
      %v1447 = vrcp.pop %v1265
      %v1448 = vrcp.pop %v1268
      %v1449 = vrcp.pop %v1271
      %v1450 = vmul.f32 %v1395, %v1434
      %v1451 = vmul.f32 %v1397, %v1435
      %v1452 = vmul.f32 %v1400, %v1436
      %v1453 = vmul.f32 %v1402, %v1437
      %v1454 = vmul.f32 %v1405, %v1438
      %v1455 = vmul.f32 %v1407, %v1439
      %v1456 = vmul.f32 %v1410, %v1440
      %v1457 = vmul.f32 %v1412, %v1441
      %v1458 = vmul.f32 %v1415, %v1442
      %v1459 = vmul.f32 %v1417, %v1443
      %v1460 = vmul.f32 %v1420, %v1444
      %v1461 = vmul.f32 %v1422, %v1445
      %v1462 = vmul.f32 %v1425, %v1446
      %v1463 = vmul.f32 %v1427, %v1447
      %v1464 = vmul.f32 %v1430, %v1448
      %v1465 = vmul.f32 %v1432, %v1449
      %s1466 = scalar_lea.vmem %s7, 256
      %v1467 = vld [vmem:[%s1466] sm:$0xff]
      %v1468 = vld [vmem:[%s1466 + $0x8] sm:$0xff]
      %v1469 = vld [vmem:[%s1466 + $0x10] sm:$0xff]
      %v1470 = vld [vmem:[%s1466 + $0x18] sm:$0xff]
      %v1471 = vld [vmem:[%s1466 + $0x20] sm:$0xff]
      %v1472 = vld [vmem:[%s1466 + $0x28] sm:$0xff]
      %v1473 = vld [vmem:[%s1466 + $0x30] sm:$0xff]
      %v1474 = vld [vmem:[%s1466 + $0x38] sm:$0xff]
      %v1475 = vld [vmem:[%s1466 + $0x40] sm:$0xff]
      %v1476 = vld [vmem:[%s1466 + $0x48] sm:$0xff]
      %v1477 = vld [vmem:[%s1466 + $0x50] sm:$0xff]
      %v1478 = vld [vmem:[%s1466 + $0x58] sm:$0xff]
      %v1479 = vld [vmem:[%s1466 + $0x60] sm:$0xff]
      %v1480 = vld [vmem:[%s1466 + $0x68] sm:$0xff]
      %v1481 = vld [vmem:[%s1466 + $0x70] sm:$0xff]
      %v1482 = vld [vmem:[%s1466 + $0x78] sm:$0xff]
      %v1483 = vunpack.c.l.bf16 %v1467
      %v1484 = vunpack.c.h.bf16 %v1467
      %v1485 = vunpack.c.l.bf16 %v1468
      %v1486 = vunpack.c.h.bf16 %v1468
      %v1487 = vunpack.c.l.bf16 %v1469
      %v1488 = vunpack.c.h.bf16 %v1469
      %v1489 = vunpack.c.l.bf16 %v1470
      %v1490 = vunpack.c.h.bf16 %v1470
      %v1491 = vunpack.c.l.bf16 %v1471
      %v1492 = vunpack.c.h.bf16 %v1471
      %v1493 = vunpack.c.l.bf16 %v1472
      %v1494 = vunpack.c.h.bf16 %v1472
      %v1495 = vunpack.c.l.bf16 %v1473
      %v1496 = vunpack.c.h.bf16 %v1473
      %v1497 = vunpack.c.l.bf16 %v1474
      %v1498 = vunpack.c.h.bf16 %v1474
      %v1499 = vunpack.c.l.bf16 %v1475
      %v1500 = vunpack.c.h.bf16 %v1475
      %v1501 = vunpack.c.l.bf16 %v1476
      %v1502 = vunpack.c.h.bf16 %v1476
      %v1503 = vunpack.c.l.bf16 %v1477
      %v1504 = vunpack.c.h.bf16 %v1477
      %v1505 = vunpack.c.l.bf16 %v1478
      %v1506 = vunpack.c.h.bf16 %v1478
      %v1507 = vunpack.c.l.bf16 %v1479
      %v1508 = vunpack.c.h.bf16 %v1479
      %v1509 = vunpack.c.l.bf16 %v1480
      %v1510 = vunpack.c.h.bf16 %v1480
      %v1511 = vunpack.c.l.bf16 %v1481
      %v1512 = vunpack.c.h.bf16 %v1481
      %v1513 = vunpack.c.l.bf16 %v1482
      %v1514 = vunpack.c.h.bf16 %v1482
      %1523 = vrot.lane.b32.xlu0 %v741, 123
      %v1524 = vpop.permute.xlu0 %1523
      %1525 = vrot.lane.b32.xlu0 %v742, 123
      %v1526 = vpop.permute.xlu0 %1525
      %1527 = vrot.lane.b32.xlu0 %v743, 123
      %v1528 = vpop.permute.xlu0 %1527
      %1529 = vrot.lane.b32.xlu0 %v744, 123
      %v1530 = vpop.permute.xlu0 %1529
      %1531 = vrot.lane.b32.xlu0 %v745, 123
      %v1532 = vpop.permute.xlu0 %1531
      %1533 = vrot.lane.b32.xlu0 %v746, 123
      %v1534 = vpop.permute.xlu0 %1533
      %1535 = vrot.lane.b32.xlu0 %v747, 123
      %v1536 = vpop.permute.xlu0 %1535
      %1537 = vrot.lane.b32.xlu0 %v748, 123
      %v1538 = vpop.permute.xlu0 %1537
      %1539 = vrot.lane.b32.xlu0 %v861, 108
      %v1540 = vpop.permute.xlu0 %1539
      %1541 = vrot.lane.b32.xlu0 %v862, 108
      %v1542 = vpop.permute.xlu0 %1541
      %1543 = vrot.lane.b32.xlu0 %v863, 108
      %v1544 = vpop.permute.xlu0 %1543
      %1545 = vrot.lane.b32.xlu0 %v864, 108
      %v1546 = vpop.permute.xlu0 %1545
      %1547 = vrot.lane.b32.xlu0 %v865, 108
      %v1548 = vpop.permute.xlu0 %1547
      %1549 = vrot.lane.b32.xlu0 %v866, 108
      %v1550 = vpop.permute.xlu0 %1549
      %1551 = vrot.lane.b32.xlu0 %v867, 108
      %v1552 = vpop.permute.xlu0 %1551
      %1553 = vrot.lane.b32.xlu0 %v868, 108
      %v1554 = vpop.permute.xlu0 %1553
      %1555 = vrot.lane.b32.xlu0 %v869, 108
      %v1556 = vpop.permute.xlu0 %1555
      %1557 = vrot.lane.b32.xlu0 %v870, 108
      %v1558 = vpop.permute.xlu0 %1557
      %1559 = vrot.lane.b32.xlu0 %v871, 108
      %v1560 = vpop.permute.xlu0 %1559
      %1561 = vrot.lane.b32.xlu0 %v872, 108
      %v1562 = vpop.permute.xlu0 %1561
      %1563 = vrot.lane.b32.xlu0 %v873, 108
      %v1564 = vpop.permute.xlu0 %1563
      %1565 = vrot.lane.b32.xlu0 %v874, 108
      %v1566 = vpop.permute.xlu0 %1565
      %1567 = vrot.lane.b32.xlu0 %v875, 108
      %v1568 = vpop.permute.xlu0 %1567
      %1569 = vrot.lane.b32.xlu0 %v876, 108
      %v1570 = vpop.permute.xlu0 %1569
      %v1572 = vsel %vm909, %v1524, 0
      %v1575 = vsel %vm909, %v1526, 0
      %v1578 = vsel %vm909, %v1528, 0
      %v1581 = vsel %vm909, %v1530, 0
      %v1584 = vsel %vm909, %v1532, 0
      %v1587 = vsel %vm909, %v1534, 0
      %v1590 = vsel %vm909, %v1536, 0
      %v1593 = vsel %vm909, %v1538, 0
      %v1596 = vsel %vm909, %v1540, 0
      %v1599 = vsel %vm909, %v1542, 0
      %v1602 = vsel %vm909, %v1544, 0
      %v1605 = vsel %vm909, %v1546, 0
      %v1608 = vsel %vm909, %v1548, 0
      %v1611 = vsel %vm909, %v1550, 0
      %v1614 = vsel %vm909, %v1552, 0
      %v1617 = vsel %vm909, %v1554, 0
      %v1620 = vsel %vm909, %v1556, 0
      %v1623 = vsel %vm909, %v1558, 0
      %v1626 = vsel %vm909, %v1560, 0
      %v1629 = vsel %vm909, %v1562, 0
      %v1632 = vsel %vm909, %v1564, 0
      %v1635 = vsel %vm909, %v1566, 0
      %v1638 = vsel %vm909, %v1568, 0
      %v1641 = vsel %vm909, %v1570, 0
      %1643 = vmatpush.bf16.xpose.msra.mxu0 %v1617
      %1644 = vmatpush.bf16.xpose.msra.mxu0 %v1614
      %1645 = vmatpush.bf16.xpose.msra.mxu0 %v1611
      %1646 = vmatpush.bf16.xpose.msra.mxu0 %v1608
      %1647 = vmatpush.bf16.xpose.msra.mxu0 %v1605
      %1648 = vmatpush.bf16.xpose.msra.mxu0 %v1602
      %1649 = vmatpush.bf16.xpose.msra.mxu0 %v1599
      %1650 = vmatpush.bf16.xpose.msra.mxu0 %v1596
      %1651 = vmatmul.bf16.gmra.mxu0 %v1572
      %v1652 = vpop.f32.mrf.mxu0
      %v1653 = vadd.f32 %v1483, %v1652
      %v1654 = vpop.f32.mrf.mxu0
      %v1655 = vadd.f32 %v1485, %v1654
      %1656 = vmatmul.bf16.gmra.mxu0 %v1575
      %v1657 = vpop.f32.mrf.mxu0
      %v1658 = vadd.f32 %v1487, %v1657
      %v1659 = vpop.f32.mrf.mxu0
      %v1660 = vadd.f32 %v1489, %v1659
      %1661 = vmatmul.bf16.gmra.mxu0 %v1578
      %v1662 = vpop.f32.mrf.mxu0
      %v1663 = vadd.f32 %v1491, %v1662
      %v1664 = vpop.f32.mrf.mxu0
      %v1665 = vadd.f32 %v1493, %v1664
      %1666 = vmatmul.bf16.gmra.mxu0 %v1581
      %v1667 = vpop.f32.mrf.mxu0
      %v1668 = vadd.f32 %v1495, %v1667
      %v1669 = vpop.f32.mrf.mxu0
      %v1670 = vadd.f32 %v1497, %v1669
      %1671 = vmatmul.bf16.gmra.mxu0 %v1584
      %v1672 = vpop.f32.mrf.mxu0
      %v1673 = vadd.f32 %v1499, %v1672
      %v1674 = vpop.f32.mrf.mxu0
      %v1675 = vadd.f32 %v1501, %v1674
      %1676 = vmatmul.bf16.gmra.mxu0 %v1587
      %v1677 = vpop.f32.mrf.mxu0
      %v1678 = vadd.f32 %v1503, %v1677
      %v1679 = vpop.f32.mrf.mxu0
      %v1680 = vadd.f32 %v1505, %v1679
      %1681 = vmatmul.bf16.gmra.mxu0 %v1590
      %v1682 = vpop.f32.mrf.mxu0
      %v1683 = vadd.f32 %v1507, %v1682
      %v1684 = vpop.f32.mrf.mxu0
      %v1685 = vadd.f32 %v1509, %v1684
      %1686 = vmatmul.bf16.gmra.mxu0 %v1593
      %v1687 = vpop.f32.mrf.mxu0
      %v1688 = vadd.f32 %v1511, %v1687
      %v1689 = vpop.f32.mrf.mxu0
      %v1690 = vadd.f32 %v1513, %v1689
      %1691 = vdwg.mxu0
      %1692 = vmatpush.bf16.xpose.msra.mxu0 %v1641
      %1693 = vmatpush.bf16.xpose.msra.mxu0 %v1638
      %1694 = vmatpush.bf16.xpose.msra.mxu0 %v1635
      %1695 = vmatpush.bf16.xpose.msra.mxu0 %v1632
      %1696 = vmatpush.bf16.xpose.msra.mxu0 %v1629
      %1697 = vmatpush.bf16.xpose.msra.mxu0 %v1626
      %1698 = vmatpush.bf16.xpose.msra.mxu0 %v1623
      %1699 = vmatpush.bf16.xpose.msra.mxu0 %v1620
      %1700 = vmatmul.bf16.gmra.mxu0 %v1572
      %v1701 = vpop.f32.mrf.mxu0
      %v1702 = vadd.f32 %v1484, %v1701
      %v1703 = vpop.f32.mrf.mxu0
      %v1704 = vadd.f32 %v1486, %v1703
      %1705 = vmatmul.bf16.gmra.mxu0 %v1575
      %v1706 = vpop.f32.mrf.mxu0
      %v1707 = vadd.f32 %v1488, %v1706
      %v1708 = vpop.f32.mrf.mxu0
      %v1709 = vadd.f32 %v1490, %v1708
      %1710 = vmatmul.bf16.gmra.mxu0 %v1578
      %v1711 = vpop.f32.mrf.mxu0
      %v1712 = vadd.f32 %v1492, %v1711
      %v1713 = vpop.f32.mrf.mxu0
      %v1714 = vadd.f32 %v1494, %v1713
      %1715 = vmatmul.bf16.gmra.mxu0 %v1581
      %v1716 = vpop.f32.mrf.mxu0
      %v1717 = vadd.f32 %v1496, %v1716
      %v1718 = vpop.f32.mrf.mxu0
      %v1719 = vadd.f32 %v1498, %v1718
      %1720 = vmatmul.bf16.gmra.mxu0 %v1584
      %v1721 = vpop.f32.mrf.mxu0
      %v1722 = vadd.f32 %v1500, %v1721
      %v1723 = vpop.f32.mrf.mxu0
      %v1724 = vadd.f32 %v1502, %v1723
      %1725 = vmatmul.bf16.gmra.mxu0 %v1587
      %v1726 = vpop.f32.mrf.mxu0
      %v1727 = vadd.f32 %v1504, %v1726
      %v1728 = vpop.f32.mrf.mxu0
      %v1729 = vadd.f32 %v1506, %v1728
      %1730 = vmatmul.bf16.gmra.mxu0 %v1590
      %v1731 = vpop.f32.mrf.mxu0
      %v1732 = vadd.f32 %v1508, %v1731
      %v1733 = vpop.f32.mrf.mxu0
      %v1734 = vadd.f32 %v1510, %v1733
      %1735 = vmatmul.bf16.gmra.mxu0 %v1593
      %v1736 = vpop.f32.mrf.mxu0
      %v1737 = vadd.f32 %v1512, %v1736
      %v1738 = vpop.f32.mrf.mxu0
      %v1739 = vadd.f32 %v1514, %v1738
      %1740 = vdwg.mxu0
      %v1741 = vmax.f32 %v1653, %v1702
      %1742 = vmax.xlane.f32.xlu0 %v1741
      %v1743 = vpop.xlane.xlu0 %1742
      %v1744 = vmax.f32 %v1655, %v1704
      %1745 = vmax.xlane.f32.xlu0 %v1744
      %v1746 = vpop.xlane.xlu0 %1745
      %v1747 = vmax.f32 %v1658, %v1707
      %1748 = vmax.xlane.f32.xlu0 %v1747
      %v1749 = vpop.xlane.xlu0 %1748
      %v1750 = vmax.f32 %v1660, %v1709
      %1751 = vmax.xlane.f32.xlu0 %v1750
      %v1752 = vpop.xlane.xlu0 %1751
      %v1753 = vmax.f32 %v1663, %v1712
      %1754 = vmax.xlane.f32.xlu0 %v1753
      %v1755 = vpop.xlane.xlu0 %1754
      %v1756 = vmax.f32 %v1665, %v1714
      %1757 = vmax.xlane.f32.xlu0 %v1756
      %v1758 = vpop.xlane.xlu0 %1757
      %v1759 = vmax.f32 %v1668, %v1717
      %1760 = vmax.xlane.f32.xlu0 %v1759
      %v1761 = vpop.xlane.xlu0 %1760
      %v1762 = vmax.f32 %v1670, %v1719
      %1763 = vmax.xlane.f32.xlu0 %v1762
      %v1764 = vpop.xlane.xlu0 %1763
      %v1765 = vmax.f32 %v1673, %v1722
      %1766 = vmax.xlane.f32.xlu0 %v1765
      %v1767 = vpop.xlane.xlu0 %1766
      %v1768 = vmax.f32 %v1675, %v1724
      %1769 = vmax.xlane.f32.xlu0 %v1768
      %v1770 = vpop.xlane.xlu0 %1769
      %v1771 = vmax.f32 %v1678, %v1727
      %1772 = vmax.xlane.f32.xlu0 %v1771
      %v1773 = vpop.xlane.xlu0 %1772
      %v1774 = vmax.f32 %v1680, %v1729
      %1775 = vmax.xlane.f32.xlu0 %v1774
      %v1776 = vpop.xlane.xlu0 %1775
      %v1777 = vmax.f32 %v1683, %v1732
      %1778 = vmax.xlane.f32.xlu0 %v1777
      %v1779 = vpop.xlane.xlu0 %1778
      %v1780 = vmax.f32 %v1685, %v1734
      %1781 = vmax.xlane.f32.xlu0 %v1780
      %v1782 = vpop.xlane.xlu0 %1781
      %v1783 = vmax.f32 %v1688, %v1737
      %1784 = vmax.xlane.f32.xlu0 %v1783
      %v1785 = vpop.xlane.xlu0 %1784
      %v1786 = vmax.f32 %v1690, %v1739
      %1787 = vmax.xlane.f32.xlu0 %v1786
      %v1788 = vpop.xlane.xlu0 %1787
      %v1789 = vsub.f32 %v1653, %v1743
      %v1790 = vsub.f32 %v1702, %v1743
      %v1791 = vsub.f32 %v1655, %v1746
      %v1792 = vsub.f32 %v1704, %v1746
      %v1793 = vsub.f32 %v1658, %v1749
      %v1794 = vsub.f32 %v1707, %v1749
      %v1795 = vsub.f32 %v1660, %v1752
      %v1796 = vsub.f32 %v1709, %v1752
      %v1797 = vsub.f32 %v1663, %v1755
      %v1798 = vsub.f32 %v1712, %v1755
      %v1799 = vsub.f32 %v1665, %v1758
      %v1800 = vsub.f32 %v1714, %v1758
      %v1801 = vsub.f32 %v1668, %v1761
      %v1802 = vsub.f32 %v1717, %v1761
      %v1803 = vsub.f32 %v1670, %v1764
      %v1804 = vsub.f32 %v1719, %v1764
      %v1805 = vsub.f32 %v1673, %v1767
      %v1806 = vsub.f32 %v1722, %v1767
      %v1807 = vsub.f32 %v1675, %v1770
      %v1808 = vsub.f32 %v1724, %v1770
      %v1809 = vsub.f32 %v1678, %v1773
      %v1810 = vsub.f32 %v1727, %v1773
      %v1811 = vsub.f32 %v1680, %v1776
      %v1812 = vsub.f32 %v1729, %v1776
      %v1813 = vsub.f32 %v1683, %v1779
      %v1814 = vsub.f32 %v1732, %v1779
      %v1815 = vsub.f32 %v1685, %v1782
      %v1816 = vsub.f32 %v1734, %v1782
      %v1817 = vsub.f32 %v1688, %v1785
      %v1818 = vsub.f32 %v1737, %v1785
      %v1819 = vsub.f32 %v1690, %v1788
      %v1820 = vsub.f32 %v1739, %v1788
      %v1821 = vmul.f32 %v1789, 1.442695
      %v1822 = vpow.pop %v1821
      %v1823 = vmul.f32 %v1790, 1.442695
      %v1824 = vpow.pop %v1823
      %v1825 = vmul.f32 %v1791, 1.442695
      %v1826 = vpow.pop %v1825
      %v1827 = vmul.f32 %v1792, 1.442695
      %v1828 = vpow.pop %v1827
      %v1829 = vmul.f32 %v1793, 1.442695
      %v1830 = vpow.pop %v1829
      %v1831 = vmul.f32 %v1794, 1.442695
      %v1832 = vpow.pop %v1831
      %v1833 = vmul.f32 %v1795, 1.442695
      %v1834 = vpow.pop %v1833
      %v1835 = vmul.f32 %v1796, 1.442695
      %v1836 = vpow.pop %v1835
      %v1837 = vmul.f32 %v1797, 1.442695
      %v1838 = vpow.pop %v1837
      %v1839 = vmul.f32 %v1798, 1.442695
      %v1840 = vpow.pop %v1839
      %v1841 = vmul.f32 %v1799, 1.442695
      %v1842 = vpow.pop %v1841
      %v1843 = vmul.f32 %v1800, 1.442695
      %v1844 = vpow.pop %v1843
      %v1845 = vmul.f32 %v1801, 1.442695
      %v1846 = vpow.pop %v1845
      %v1847 = vmul.f32 %v1802, 1.442695
      %v1848 = vpow.pop %v1847
      %v1849 = vmul.f32 %v1803, 1.442695
      %v1850 = vpow.pop %v1849
      %v1851 = vmul.f32 %v1804, 1.442695
      %v1852 = vpow.pop %v1851
      %v1853 = vmul.f32 %v1805, 1.442695
      %v1854 = vpow.pop %v1853
      %v1855 = vmul.f32 %v1806, 1.442695
      %v1856 = vpow.pop %v1855
      %v1857 = vmul.f32 %v1807, 1.442695
      %v1858 = vpow.pop %v1857
      %v1859 = vmul.f32 %v1808, 1.442695
      %v1860 = vpow.pop %v1859
      %v1861 = vmul.f32 %v1809, 1.442695
      %v1862 = vpow.pop %v1861
      %v1863 = vmul.f32 %v1810, 1.442695
      %v1864 = vpow.pop %v1863
      %v1865 = vmul.f32 %v1811, 1.442695
      %v1866 = vpow.pop %v1865
      %v1867 = vmul.f32 %v1812, 1.442695
      %v1868 = vpow.pop %v1867
      %v1869 = vmul.f32 %v1813, 1.442695
      %v1870 = vpow.pop %v1869
      %v1871 = vmul.f32 %v1814, 1.442695
      %v1872 = vpow.pop %v1871
      %v1873 = vmul.f32 %v1815, 1.442695
      %v1874 = vpow.pop %v1873
      %v1875 = vmul.f32 %v1816, 1.442695
      %v1876 = vpow.pop %v1875
      %v1877 = vmul.f32 %v1817, 1.442695
      %v1878 = vpow.pop %v1877
      %v1879 = vmul.f32 %v1818, 1.442695
      %v1880 = vpow.pop %v1879
      %v1881 = vmul.f32 %v1819, 1.442695
      %v1882 = vpow.pop %v1881
      %v1883 = vmul.f32 %v1820, 1.442695
      %v1884 = vpow.pop %v1883
      %v1885 = vadd.f32 %v1822, %v1824
      %1886 = vadd.xlane.f32.xlu0 %v1885
      %v1887 = vpop.xlane.xlu0 %1886
      %v1888 = vadd.f32 %v1826, %v1828
      %1889 = vadd.xlane.f32.xlu0 %v1888
      %v1890 = vpop.xlane.xlu0 %1889
      %v1891 = vadd.f32 %v1830, %v1832
      %1892 = vadd.xlane.f32.xlu0 %v1891
      %v1893 = vpop.xlane.xlu0 %1892
      %v1894 = vadd.f32 %v1834, %v1836
      %1895 = vadd.xlane.f32.xlu0 %v1894
      %v1896 = vpop.xlane.xlu0 %1895
      %v1897 = vadd.f32 %v1838, %v1840
      %1898 = vadd.xlane.f32.xlu0 %v1897
      %v1899 = vpop.xlane.xlu0 %1898
      %v1900 = vadd.f32 %v1842, %v1844
      %1901 = vadd.xlane.f32.xlu0 %v1900
      %v1902 = vpop.xlane.xlu0 %1901
      %v1903 = vadd.f32 %v1846, %v1848
      %1904 = vadd.xlane.f32.xlu0 %v1903
      %v1905 = vpop.xlane.xlu0 %1904
      %v1906 = vadd.f32 %v1850, %v1852
      %1907 = vadd.xlane.f32.xlu0 %v1906
      %v1908 = vpop.xlane.xlu0 %1907
      %v1909 = vadd.f32 %v1854, %v1856
      %1910 = vadd.xlane.f32.xlu0 %v1909
      %v1911 = vpop.xlane.xlu0 %1910
      %v1912 = vadd.f32 %v1858, %v1860
      %1913 = vadd.xlane.f32.xlu0 %v1912
      %v1914 = vpop.xlane.xlu0 %1913
      %v1915 = vadd.f32 %v1862, %v1864
      %1916 = vadd.xlane.f32.xlu0 %v1915
      %v1917 = vpop.xlane.xlu0 %1916
      %v1918 = vadd.f32 %v1866, %v1868
      %1919 = vadd.xlane.f32.xlu0 %v1918
      %v1920 = vpop.xlane.xlu0 %1919
      %v1921 = vadd.f32 %v1870, %v1872
      %1922 = vadd.xlane.f32.xlu0 %v1921
      %v1923 = vpop.xlane.xlu0 %1922
      %v1924 = vadd.f32 %v1874, %v1876
      %1925 = vadd.xlane.f32.xlu0 %v1924
      %v1926 = vpop.xlane.xlu0 %1925
      %v1927 = vadd.f32 %v1878, %v1880
      %1928 = vadd.xlane.f32.xlu0 %v1927
      %v1929 = vpop.xlane.xlu0 %1928
      %v1930 = vadd.f32 %v1882, %v1884
      %1931 = vadd.xlane.f32.xlu0 %v1930
      %v1932 = vpop.xlane.xlu0 %1931
      %v1933 = vpack.c.bf16 %v1826, %v1822
      %v1934 = vpack.c.bf16 %v1828, %v1824
      %v1935 = vpack.c.bf16 %v1834, %v1830
      %v1936 = vpack.c.bf16 %v1836, %v1832
      %v1937 = vpack.c.bf16 %v1842, %v1838
      %v1938 = vpack.c.bf16 %v1844, %v1840
      %v1939 = vpack.c.bf16 %v1850, %v1846
      %v1940 = vpack.c.bf16 %v1852, %v1848
      %v1941 = vpack.c.bf16 %v1858, %v1854
      %v1942 = vpack.c.bf16 %v1860, %v1856
      %v1943 = vpack.c.bf16 %v1866, %v1862
      %v1944 = vpack.c.bf16 %v1868, %v1864
      %v1945 = vpack.c.bf16 %v1874, %v1870
      %v1946 = vpack.c.bf16 %v1876, %v1872
      %v1947 = vpack.c.bf16 %v1882, %v1878
      %v1948 = vpack.c.bf16 %v1884, %v1880
      %1949 = vrot.lane.b32.xlu0 %v861, 93
      %v1950 = vpop.permute.xlu0 %1949
      %1951 = vrot.lane.b32.xlu0 %v862, 93
      %v1952 = vpop.permute.xlu0 %1951
      %1953 = vrot.lane.b32.xlu0 %v863, 93
      %v1954 = vpop.permute.xlu0 %1953
      %1955 = vrot.lane.b32.xlu0 %v864, 93
      %v1956 = vpop.permute.xlu0 %1955
      %1957 = vrot.lane.b32.xlu0 %v865, 93
      %v1958 = vpop.permute.xlu0 %1957
      %1959 = vrot.lane.b32.xlu0 %v866, 93
      %v1960 = vpop.permute.xlu0 %1959
      %1961 = vrot.lane.b32.xlu0 %v867, 93
      %v1962 = vpop.permute.xlu0 %1961
      %1963 = vrot.lane.b32.xlu0 %v868, 93
      %v1964 = vpop.permute.xlu0 %1963
      %1965 = vrot.lane.b32.xlu0 %v869, 93
      %v1966 = vpop.permute.xlu0 %1965
      %1967 = vrot.lane.b32.xlu0 %v870, 93
      %v1968 = vpop.permute.xlu0 %1967
      %1969 = vrot.lane.b32.xlu0 %v871, 93
      %v1970 = vpop.permute.xlu0 %1969
      %1971 = vrot.lane.b32.xlu0 %v872, 93
      %v1972 = vpop.permute.xlu0 %1971
      %1973 = vrot.lane.b32.xlu0 %v873, 93
      %v1974 = vpop.permute.xlu0 %1973
      %1975 = vrot.lane.b32.xlu0 %v874, 93
      %v1976 = vpop.permute.xlu0 %1975
      %1977 = vrot.lane.b32.xlu0 %v875, 93
      %v1978 = vpop.permute.xlu0 %1977
      %1979 = vrot.lane.b32.xlu0 %v876, 93
      %v1980 = vpop.permute.xlu0 %1979
      %1997 = vmatpush.bf16.msra.mxu0 %v1964
      %1998 = vmatpush.bf16.msra.mxu0 %v1962
      %1999 = vmatpush.bf16.msra.mxu0 %v1960
      %2000 = vmatpush.bf16.msra.mxu0 %v1958
      %2001 = vmatpush.bf16.msra.mxu0 %v1956
      %2002 = vmatpush.bf16.msra.mxu0 %v1954
      %2003 = vmatpush.bf16.msra.mxu0 %v1952
      %2004 = vmatpush.bf16.msra.mxu0 %v1950
      %2005 = vmatmul.bf16.gmra.mxu0 %v1933
      %v2006 = vpop.f32.mrf.mxu0
      %v2007 = vadd.f32 0.0, %v2006
      %v2008 = vpop.f32.mrf.mxu0
      %v2009 = vadd.f32 0.0, %v2008
      %2010 = vmatmul.bf16.gmra.mxu0 %v1935
      %v2011 = vpop.f32.mrf.mxu0
      %v2012 = vadd.f32 0.0, %v2011
      %v2013 = vpop.f32.mrf.mxu0
      %v2014 = vadd.f32 0.0, %v2013
      %2015 = vmatmul.bf16.gmra.mxu0 %v1937
      %v2016 = vpop.f32.mrf.mxu0
      %v2017 = vadd.f32 0.0, %v2016
      %v2018 = vpop.f32.mrf.mxu0
      %v2019 = vadd.f32 0.0, %v2018
      %2020 = vmatmul.bf16.gmra.mxu0 %v1939
      %v2021 = vpop.f32.mrf.mxu0
      %v2022 = vadd.f32 0.0, %v2021
      %v2023 = vpop.f32.mrf.mxu0
      %v2024 = vadd.f32 0.0, %v2023
      %2025 = vmatmul.bf16.gmra.mxu0 %v1941
      %v2026 = vpop.f32.mrf.mxu0
      %v2027 = vadd.f32 0.0, %v2026
      %v2028 = vpop.f32.mrf.mxu0
      %v2029 = vadd.f32 0.0, %v2028
      %2030 = vmatmul.bf16.gmra.mxu0 %v1943
      %v2031 = vpop.f32.mrf.mxu0
      %v2032 = vadd.f32 0.0, %v2031
      %v2033 = vpop.f32.mrf.mxu0
      %v2034 = vadd.f32 0.0, %v2033
      %2035 = vmatmul.bf16.gmra.mxu0 %v1945
      %v2036 = vpop.f32.mrf.mxu0
      %v2037 = vadd.f32 0.0, %v2036
      %v2038 = vpop.f32.mrf.mxu0
      %v2039 = vadd.f32 0.0, %v2038
      %2040 = vmatmul.bf16.gmra.mxu0 %v1947
      %v2041 = vpop.f32.mrf.mxu0
      %v2042 = vadd.f32 0.0, %v2041
      %v2043 = vpop.f32.mrf.mxu0
      %v2044 = vadd.f32 0.0, %v2043
      %2045 = vdwg.mxu0
      %2046 = vmatpush.bf16.msra.mxu0 %v1980
      %2047 = vmatpush.bf16.msra.mxu0 %v1978
      %2048 = vmatpush.bf16.msra.mxu0 %v1976
      %2049 = vmatpush.bf16.msra.mxu0 %v1974
      %2050 = vmatpush.bf16.msra.mxu0 %v1972
      %2051 = vmatpush.bf16.msra.mxu0 %v1970
      %2052 = vmatpush.bf16.msra.mxu0 %v1968
      %2053 = vmatpush.bf16.msra.mxu0 %v1966
      %2054 = vmatmul.bf16.gmra.mxu0 %v1934
      %v2055 = vpop.f32.mrf.mxu0
      %v2056 = vadd.f32 %v2007, %v2055
      %v2057 = vpop.f32.mrf.mxu0
      %v2058 = vadd.f32 %v2009, %v2057
      %2059 = vmatmul.bf16.gmra.mxu0 %v1936
      %v2060 = vpop.f32.mrf.mxu0
      %v2061 = vadd.f32 %v2012, %v2060
      %v2062 = vpop.f32.mrf.mxu0
      %v2063 = vadd.f32 %v2014, %v2062
      %2064 = vmatmul.bf16.gmra.mxu0 %v1938
      %v2065 = vpop.f32.mrf.mxu0
      %v2066 = vadd.f32 %v2017, %v2065
      %v2067 = vpop.f32.mrf.mxu0
      %v2068 = vadd.f32 %v2019, %v2067
      %2069 = vmatmul.bf16.gmra.mxu0 %v1940
      %v2070 = vpop.f32.mrf.mxu0
      %v2071 = vadd.f32 %v2022, %v2070
      %v2072 = vpop.f32.mrf.mxu0
      %v2073 = vadd.f32 %v2024, %v2072
      %2074 = vmatmul.bf16.gmra.mxu0 %v1942
      %v2075 = vpop.f32.mrf.mxu0
      %v2076 = vadd.f32 %v2027, %v2075
      %v2077 = vpop.f32.mrf.mxu0
      %v2078 = vadd.f32 %v2029, %v2077
      %2079 = vmatmul.bf16.gmra.mxu0 %v1944
      %v2080 = vpop.f32.mrf.mxu0
      %v2081 = vadd.f32 %v2032, %v2080
      %v2082 = vpop.f32.mrf.mxu0
      %v2083 = vadd.f32 %v2034, %v2082
      %2084 = vmatmul.bf16.gmra.mxu0 %v1946
      %v2085 = vpop.f32.mrf.mxu0
      %v2086 = vadd.f32 %v2037, %v2085
      %v2087 = vpop.f32.mrf.mxu0
      %v2088 = vadd.f32 %v2039, %v2087
      %2089 = vmatmul.bf16.gmra.mxu0 %v1948
      %v2090 = vpop.f32.mrf.mxu0
      %v2091 = vadd.f32 %v2042, %v2090
      %v2092 = vpop.f32.mrf.mxu0
      %v2093 = vadd.f32 %v2044, %v2092
      %2094 = vdwg.mxu0
      %v2095 = vrcp.pop %v1887
      %v2096 = vrcp.pop %v1890
      %v2097 = vrcp.pop %v1893
      %v2098 = vrcp.pop %v1896
      %v2099 = vrcp.pop %v1899
      %v2100 = vrcp.pop %v1902
      %v2101 = vrcp.pop %v1905
      %v2102 = vrcp.pop %v1908
      %v2103 = vrcp.pop %v1911
      %v2104 = vrcp.pop %v1914
      %v2105 = vrcp.pop %v1917
      %v2106 = vrcp.pop %v1920
      %v2107 = vrcp.pop %v1923
      %v2108 = vrcp.pop %v1926
      %v2109 = vrcp.pop %v1929
      %v2110 = vrcp.pop %v1932
      %v2111 = vmul.f32 %v2056, %v2095
      %v2112 = vmul.f32 %v2058, %v2096
      %v2113 = vmul.f32 %v2061, %v2097
      %v2114 = vmul.f32 %v2063, %v2098
      %v2115 = vmul.f32 %v2066, %v2099
      %v2116 = vmul.f32 %v2068, %v2100
      %v2117 = vmul.f32 %v2071, %v2101
      %v2118 = vmul.f32 %v2073, %v2102
      %v2119 = vmul.f32 %v2076, %v2103
      %v2120 = vmul.f32 %v2078, %v2104
      %v2121 = vmul.f32 %v2081, %v2105
      %v2122 = vmul.f32 %v2083, %v2106
      %v2123 = vmul.f32 %v2086, %v2107
      %v2124 = vmul.f32 %v2088, %v2108
      %v2125 = vmul.f32 %v2091, %v2109
      %v2126 = vmul.f32 %v2093, %v2110
      %s2127 = scalar_lea.vmem %s7, 512
      %v2128 = vld [vmem:[%s2127] sm:$0xff]
      %v2129 = vld [vmem:[%s2127 + $0x8] sm:$0xff]
      %v2130 = vld [vmem:[%s2127 + $0x10] sm:$0xff]
      %v2131 = vld [vmem:[%s2127 + $0x18] sm:$0xff]
      %v2132 = vld [vmem:[%s2127 + $0x20] sm:$0xff]
      %v2133 = vld [vmem:[%s2127 + $0x28] sm:$0xff]
      %v2134 = vld [vmem:[%s2127 + $0x30] sm:$0xff]
      %v2135 = vld [vmem:[%s2127 + $0x38] sm:$0xff]
      %v2136 = vld [vmem:[%s2127 + $0x40] sm:$0xff]
      %v2137 = vld [vmem:[%s2127 + $0x48] sm:$0xff]
      %v2138 = vld [vmem:[%s2127 + $0x50] sm:$0xff]
      %v2139 = vld [vmem:[%s2127 + $0x58] sm:$0xff]
      %v2140 = vld [vmem:[%s2127 + $0x60] sm:$0xff]
      %v2141 = vld [vmem:[%s2127 + $0x68] sm:$0xff]
      %v2142 = vld [vmem:[%s2127 + $0x70] sm:$0xff]
      %v2143 = vld [vmem:[%s2127 + $0x78] sm:$0xff]
      %v2144 = vunpack.c.l.bf16 %v2128
      %v2145 = vunpack.c.h.bf16 %v2128
      %v2146 = vunpack.c.l.bf16 %v2129
      %v2147 = vunpack.c.h.bf16 %v2129
      %v2148 = vunpack.c.l.bf16 %v2130
      %v2149 = vunpack.c.h.bf16 %v2130
      %v2150 = vunpack.c.l.bf16 %v2131
      %v2151 = vunpack.c.h.bf16 %v2131
      %v2152 = vunpack.c.l.bf16 %v2132
      %v2153 = vunpack.c.h.bf16 %v2132
      %v2154 = vunpack.c.l.bf16 %v2133
      %v2155 = vunpack.c.h.bf16 %v2133
      %v2156 = vunpack.c.l.bf16 %v2134
      %v2157 = vunpack.c.h.bf16 %v2134
      %v2158 = vunpack.c.l.bf16 %v2135
      %v2159 = vunpack.c.h.bf16 %v2135
      %v2160 = vunpack.c.l.bf16 %v2136
      %v2161 = vunpack.c.h.bf16 %v2136
      %v2162 = vunpack.c.l.bf16 %v2137
      %v2163 = vunpack.c.h.bf16 %v2137
      %v2164 = vunpack.c.l.bf16 %v2138
      %v2165 = vunpack.c.h.bf16 %v2138
      %v2166 = vunpack.c.l.bf16 %v2139
      %v2167 = vunpack.c.h.bf16 %v2139
      %v2168 = vunpack.c.l.bf16 %v2140
      %v2169 = vunpack.c.h.bf16 %v2140
      %v2170 = vunpack.c.l.bf16 %v2141
      %v2171 = vunpack.c.h.bf16 %v2141
      %v2172 = vunpack.c.l.bf16 %v2142
      %v2173 = vunpack.c.h.bf16 %v2142
      %v2174 = vunpack.c.l.bf16 %v2143
      %v2175 = vunpack.c.h.bf16 %v2143
      %2176 = vrot.lane.b32.xlu0 %v741, 118
      %v2177 = vpop.permute.xlu0 %2176
      %2178 = vrot.lane.b32.xlu0 %v742, 118
      %v2179 = vpop.permute.xlu0 %2178
      %2180 = vrot.lane.b32.xlu0 %v743, 118
      %v2181 = vpop.permute.xlu0 %2180
      %2182 = vrot.lane.b32.xlu0 %v744, 118
      %v2183 = vpop.permute.xlu0 %2182
      %2184 = vrot.lane.b32.xlu0 %v745, 118
      %v2185 = vpop.permute.xlu0 %2184
      %2186 = vrot.lane.b32.xlu0 %v746, 118
      %v2187 = vpop.permute.xlu0 %2186
      %2188 = vrot.lane.b32.xlu0 %v747, 118
      %v2189 = vpop.permute.xlu0 %2188
      %2190 = vrot.lane.b32.xlu0 %v748, 118
      %v2191 = vpop.permute.xlu0 %2190
      %2192 = vrot.lane.b32.xlu0 %v861, 103
      %v2193 = vpop.permute.xlu0 %2192
      %2194 = vrot.lane.b32.xlu0 %v862, 103
      %v2195 = vpop.permute.xlu0 %2194
      %2196 = vrot.lane.b32.xlu0 %v863, 103
      %v2197 = vpop.permute.xlu0 %2196
      %2198 = vrot.lane.b32.xlu0 %v864, 103
      %v2199 = vpop.permute.xlu0 %2198
      %2200 = vrot.lane.b32.xlu0 %v865, 103
      %v2201 = vpop.permute.xlu0 %2200
      %2202 = vrot.lane.b32.xlu0 %v866, 103
      %v2203 = vpop.permute.xlu0 %2202
      %2204 = vrot.lane.b32.xlu0 %v867, 103
      %v2205 = vpop.permute.xlu0 %2204
      %2206 = vrot.lane.b32.xlu0 %v868, 103
      %v2207 = vpop.permute.xlu0 %2206
      %2208 = vrot.lane.b32.xlu0 %v869, 103
      %v2209 = vpop.permute.xlu0 %2208
      %2210 = vrot.lane.b32.xlu0 %v870, 103
      %v2211 = vpop.permute.xlu0 %2210
      %2212 = vrot.lane.b32.xlu0 %v871, 103
      %v2213 = vpop.permute.xlu0 %2212
      %2214 = vrot.lane.b32.xlu0 %v872, 103
      %v2215 = vpop.permute.xlu0 %2214
      %2216 = vrot.lane.b32.xlu0 %v873, 103
      %v2217 = vpop.permute.xlu0 %2216
      %2218 = vrot.lane.b32.xlu0 %v874, 103
      %v2219 = vpop.permute.xlu0 %2218
      %2220 = vrot.lane.b32.xlu0 %v875, 103
      %v2221 = vpop.permute.xlu0 %2220
      %2222 = vrot.lane.b32.xlu0 %v876, 103
      %v2223 = vpop.permute.xlu0 %2222
      %v2225 = vsel %vm909, %v2177, 0
      %v2228 = vsel %vm909, %v2179, 0
      %v2231 = vsel %vm909, %v2181, 0
      %v2234 = vsel %vm909, %v2183, 0
      %v2237 = vsel %vm909, %v2185, 0
      %v2240 = vsel %vm909, %v2187, 0
      %v2243 = vsel %vm909, %v2189, 0
      %v2246 = vsel %vm909, %v2191, 0
      %v2249 = vsel %vm909, %v2193, 0
      %v2252 = vsel %vm909, %v2195, 0
      %v2255 = vsel %vm909, %v2197, 0
      %v2258 = vsel %vm909, %v2199, 0
      %v2261 = vsel %vm909, %v2201, 0
      %v2264 = vsel %vm909, %v2203, 0
      %v2267 = vsel %vm909, %v2205, 0
      %v2270 = vsel %vm909, %v2207, 0
      %v2273 = vsel %vm909, %v2209, 0
      %v2276 = vsel %vm909, %v2211, 0
      %v2279 = vsel %vm909, %v2213, 0
      %v2282 = vsel %vm909, %v2215, 0
      %v2285 = vsel %vm909, %v2217, 0
      %v2288 = vsel %vm909, %v2219, 0
      %v2291 = vsel %vm909, %v2221, 0
      %v2294 = vsel %vm909, %v2223, 0
      %2296 = vmatpush.bf16.xpose.msra.mxu0 %v2270
      %2297 = vmatpush.bf16.xpose.msra.mxu0 %v2267
      %2298 = vmatpush.bf16.xpose.msra.mxu0 %v2264
      %2299 = vmatpush.bf16.xpose.msra.mxu0 %v2261
      %2300 = vmatpush.bf16.xpose.msra.mxu0 %v2258
      %2301 = vmatpush.bf16.xpose.msra.mxu0 %v2255
      %2302 = vmatpush.bf16.xpose.msra.mxu0 %v2252
      %2303 = vmatpush.bf16.xpose.msra.mxu0 %v2249
      %2304 = vmatmul.bf16.gmra.mxu0 %v2225
      %v2305 = vpop.f32.mrf.mxu0
      %v2306 = vadd.f32 %v2144, %v2305
      %v2307 = vpop.f32.mrf.mxu0
      %v2308 = vadd.f32 %v2146, %v2307
      %2309 = vmatmul.bf16.gmra.mxu0 %v2228
      %v2310 = vpop.f32.mrf.mxu0
      %v2311 = vadd.f32 %v2148, %v2310
      %v2312 = vpop.f32.mrf.mxu0
      %v2313 = vadd.f32 %v2150, %v2312
      %2314 = vmatmul.bf16.gmra.mxu0 %v2231
      %v2315 = vpop.f32.mrf.mxu0
      %v2316 = vadd.f32 %v2152, %v2315
      %v2317 = vpop.f32.mrf.mxu0
      %v2318 = vadd.f32 %v2154, %v2317
      %2319 = vmatmul.bf16.gmra.mxu0 %v2234
      %v2320 = vpop.f32.mrf.mxu0
      %v2321 = vadd.f32 %v2156, %v2320
      %v2322 = vpop.f32.mrf.mxu0
      %v2323 = vadd.f32 %v2158, %v2322
      %2324 = vmatmul.bf16.gmra.mxu0 %v2237
      %v2325 = vpop.f32.mrf.mxu0
      %v2326 = vadd.f32 %v2160, %v2325
      %v2327 = vpop.f32.mrf.mxu0
      %v2328 = vadd.f32 %v2162, %v2327
      %2329 = vmatmul.bf16.gmra.mxu0 %v2240
      %v2330 = vpop.f32.mrf.mxu0
      %v2331 = vadd.f32 %v2164, %v2330
      %v2332 = vpop.f32.mrf.mxu0
      %v2333 = vadd.f32 %v2166, %v2332
      %2334 = vmatmul.bf16.gmra.mxu0 %v2243
      %v2335 = vpop.f32.mrf.mxu0
      %v2336 = vadd.f32 %v2168, %v2335
      %v2337 = vpop.f32.mrf.mxu0
      %v2338 = vadd.f32 %v2170, %v2337
      %2339 = vmatmul.bf16.gmra.mxu0 %v2246
      %v2340 = vpop.f32.mrf.mxu0
      %v2341 = vadd.f32 %v2172, %v2340
      %v2342 = vpop.f32.mrf.mxu0
      %v2343 = vadd.f32 %v2174, %v2342
      %2344 = vdwg.mxu0
      %2345 = vmatpush.bf16.xpose.msra.mxu0 %v2294
      %2346 = vmatpush.bf16.xpose.msra.mxu0 %v2291
      %2347 = vmatpush.bf16.xpose.msra.mxu0 %v2288
      %2348 = vmatpush.bf16.xpose.msra.mxu0 %v2285
      %2349 = vmatpush.bf16.xpose.msra.mxu0 %v2282
      %2350 = vmatpush.bf16.xpose.msra.mxu0 %v2279
      %2351 = vmatpush.bf16.xpose.msra.mxu0 %v2276
      %2352 = vmatpush.bf16.xpose.msra.mxu0 %v2273
      %2353 = vmatmul.bf16.gmra.mxu0 %v2225
      %v2354 = vpop.f32.mrf.mxu0
      %v2355 = vadd.f32 %v2145, %v2354
      %v2356 = vpop.f32.mrf.mxu0
      %v2357 = vadd.f32 %v2147, %v2356
      %2358 = vmatmul.bf16.gmra.mxu0 %v2228
      %v2359 = vpop.f32.mrf.mxu0
      %v2360 = vadd.f32 %v2149, %v2359
      %v2361 = vpop.f32.mrf.mxu0
      %v2362 = vadd.f32 %v2151, %v2361
      %2363 = vmatmul.bf16.gmra.mxu0 %v2231
      %v2364 = vpop.f32.mrf.mxu0
      %v2365 = vadd.f32 %v2153, %v2364
      %v2366 = vpop.f32.mrf.mxu0
      %v2367 = vadd.f32 %v2155, %v2366
      %2368 = vmatmul.bf16.gmra.mxu0 %v2234
      %v2369 = vpop.f32.mrf.mxu0
      %v2370 = vadd.f32 %v2157, %v2369
      %v2371 = vpop.f32.mrf.mxu0
      %v2372 = vadd.f32 %v2159, %v2371
      %2373 = vmatmul.bf16.gmra.mxu0 %v2237
      %v2374 = vpop.f32.mrf.mxu0
      %v2375 = vadd.f32 %v2161, %v2374
      %v2376 = vpop.f32.mrf.mxu0
      %v2377 = vadd.f32 %v2163, %v2376
      %2378 = vmatmul.bf16.gmra.mxu0 %v2240
      %v2379 = vpop.f32.mrf.mxu0
      %v2380 = vadd.f32 %v2165, %v2379
      %v2381 = vpop.f32.mrf.mxu0
      %v2382 = vadd.f32 %v2167, %v2381
      %2383 = vmatmul.bf16.gmra.mxu0 %v2243
      %v2384 = vpop.f32.mrf.mxu0
      %v2385 = vadd.f32 %v2169, %v2384
      %v2386 = vpop.f32.mrf.mxu0
      %v2387 = vadd.f32 %v2171, %v2386
      %2388 = vmatmul.bf16.gmra.mxu0 %v2246
      %v2389 = vpop.f32.mrf.mxu0
      %v2390 = vadd.f32 %v2173, %v2389
      %v2391 = vpop.f32.mrf.mxu0
      %v2392 = vadd.f32 %v2175, %v2391
      %2393 = vdwg.mxu0
      %v2394 = vmax.f32 %v2306, %v2355
      %2395 = vmax.xlane.f32.xlu0 %v2394
      %v2396 = vpop.xlane.xlu0 %2395
      %v2397 = vmax.f32 %v2308, %v2357
      %2398 = vmax.xlane.f32.xlu0 %v2397
      %v2399 = vpop.xlane.xlu0 %2398
      %v2400 = vmax.f32 %v2311, %v2360
      %2401 = vmax.xlane.f32.xlu0 %v2400
      %v2402 = vpop.xlane.xlu0 %2401
      %v2403 = vmax.f32 %v2313, %v2362
      %2404 = vmax.xlane.f32.xlu0 %v2403
      %v2405 = vpop.xlane.xlu0 %2404
      %v2406 = vmax.f32 %v2316, %v2365
      %2407 = vmax.xlane.f32.xlu0 %v2406
      %v2408 = vpop.xlane.xlu0 %2407
      %v2409 = vmax.f32 %v2318, %v2367
      %2410 = vmax.xlane.f32.xlu0 %v2409
      %v2411 = vpop.xlane.xlu0 %2410
      %v2412 = vmax.f32 %v2321, %v2370
      %2413 = vmax.xlane.f32.xlu0 %v2412
      %v2414 = vpop.xlane.xlu0 %2413
      %v2415 = vmax.f32 %v2323, %v2372
      %2416 = vmax.xlane.f32.xlu0 %v2415
      %v2417 = vpop.xlane.xlu0 %2416
      %v2418 = vmax.f32 %v2326, %v2375
      %2419 = vmax.xlane.f32.xlu0 %v2418
      %v2420 = vpop.xlane.xlu0 %2419
      %v2421 = vmax.f32 %v2328, %v2377
      %2422 = vmax.xlane.f32.xlu0 %v2421
      %v2423 = vpop.xlane.xlu0 %2422
      %v2424 = vmax.f32 %v2331, %v2380
      %2425 = vmax.xlane.f32.xlu0 %v2424
      %v2426 = vpop.xlane.xlu0 %2425
      %v2427 = vmax.f32 %v2333, %v2382
      %2428 = vmax.xlane.f32.xlu0 %v2427
      %v2429 = vpop.xlane.xlu0 %2428
      %v2430 = vmax.f32 %v2336, %v2385
      %2431 = vmax.xlane.f32.xlu0 %v2430
      %v2432 = vpop.xlane.xlu0 %2431
      %v2433 = vmax.f32 %v2338, %v2387
      %2434 = vmax.xlane.f32.xlu0 %v2433
      %v2435 = vpop.xlane.xlu0 %2434
      %v2436 = vmax.f32 %v2341, %v2390
      %2437 = vmax.xlane.f32.xlu0 %v2436
      %v2438 = vpop.xlane.xlu0 %2437
      %v2439 = vmax.f32 %v2343, %v2392
      %2440 = vmax.xlane.f32.xlu0 %v2439
      %v2441 = vpop.xlane.xlu0 %2440
      %v2442 = vsub.f32 %v2306, %v2396
      %v2443 = vsub.f32 %v2355, %v2396
      %v2444 = vsub.f32 %v2308, %v2399
      %v2445 = vsub.f32 %v2357, %v2399
      %v2446 = vsub.f32 %v2311, %v2402
      %v2447 = vsub.f32 %v2360, %v2402
      %v2448 = vsub.f32 %v2313, %v2405
      %v2449 = vsub.f32 %v2362, %v2405
      %v2450 = vsub.f32 %v2316, %v2408
      %v2451 = vsub.f32 %v2365, %v2408
      %v2452 = vsub.f32 %v2318, %v2411
      %v2453 = vsub.f32 %v2367, %v2411
      %v2454 = vsub.f32 %v2321, %v2414
      %v2455 = vsub.f32 %v2370, %v2414
      %v2456 = vsub.f32 %v2323, %v2417
      %v2457 = vsub.f32 %v2372, %v2417
      %v2458 = vsub.f32 %v2326, %v2420
      %v2459 = vsub.f32 %v2375, %v2420
      %v2460 = vsub.f32 %v2328, %v2423
      %v2461 = vsub.f32 %v2377, %v2423
      %v2462 = vsub.f32 %v2331, %v2426
      %v2463 = vsub.f32 %v2380, %v2426
      %v2464 = vsub.f32 %v2333, %v2429
      %v2465 = vsub.f32 %v2382, %v2429
      %v2466 = vsub.f32 %v2336, %v2432
      %v2467 = vsub.f32 %v2385, %v2432
      %v2468 = vsub.f32 %v2338, %v2435
      %v2469 = vsub.f32 %v2387, %v2435
      %v2470 = vsub.f32 %v2341, %v2438
      %v2471 = vsub.f32 %v2390, %v2438
      %v2472 = vsub.f32 %v2343, %v2441
      %v2473 = vsub.f32 %v2392, %v2441
      %v2474 = vmul.f32 %v2442, 1.442695
      %v2475 = vpow.pop %v2474
      %v2476 = vmul.f32 %v2443, 1.442695
      %v2477 = vpow.pop %v2476
      %v2478 = vmul.f32 %v2444, 1.442695
      %v2479 = vpow.pop %v2478
      %v2480 = vmul.f32 %v2445, 1.442695
      %v2481 = vpow.pop %v2480
      %v2482 = vmul.f32 %v2446, 1.442695
      %v2483 = vpow.pop %v2482
      %v2484 = vmul.f32 %v2447, 1.442695
      %v2485 = vpow.pop %v2484
      %v2486 = vmul.f32 %v2448, 1.442695
      %v2487 = vpow.pop %v2486
      %v2488 = vmul.f32 %v2449, 1.442695
      %v2489 = vpow.pop %v2488
      %v2490 = vmul.f32 %v2450, 1.442695
      %v2491 = vpow.pop %v2490
      %v2492 = vmul.f32 %v2451, 1.442695
      %v2493 = vpow.pop %v2492
      %v2494 = vmul.f32 %v2452, 1.442695
      %v2495 = vpow.pop %v2494
      %v2496 = vmul.f32 %v2453, 1.442695
      %v2497 = vpow.pop %v2496
      %v2498 = vmul.f32 %v2454, 1.442695
      %v2499 = vpow.pop %v2498
      %v2500 = vmul.f32 %v2455, 1.442695
      %v2501 = vpow.pop %v2500
      %v2502 = vmul.f32 %v2456, 1.442695
      %v2503 = vpow.pop %v2502
      %v2504 = vmul.f32 %v2457, 1.442695
      %v2505 = vpow.pop %v2504
      %v2506 = vmul.f32 %v2458, 1.442695
      %v2507 = vpow.pop %v2506
      %v2508 = vmul.f32 %v2459, 1.442695
      %v2509 = vpow.pop %v2508
      %v2510 = vmul.f32 %v2460, 1.442695
      %v2511 = vpow.pop %v2510
      %v2512 = vmul.f32 %v2461, 1.442695
      %v2513 = vpow.pop %v2512
      %v2514 = vmul.f32 %v2462, 1.442695
      %v2515 = vpow.pop %v2514
      %v2516 = vmul.f32 %v2463, 1.442695
      %v2517 = vpow.pop %v2516
      %v2518 = vmul.f32 %v2464, 1.442695
      %v2519 = vpow.pop %v2518
      %v2520 = vmul.f32 %v2465, 1.442695
      %v2521 = vpow.pop %v2520
      %v2522 = vmul.f32 %v2466, 1.442695
      %v2523 = vpow.pop %v2522
      %v2524 = vmul.f32 %v2467, 1.442695
      %v2525 = vpow.pop %v2524
      %v2526 = vmul.f32 %v2468, 1.442695
      %v2527 = vpow.pop %v2526
      %v2528 = vmul.f32 %v2469, 1.442695
      %v2529 = vpow.pop %v2528
      %v2530 = vmul.f32 %v2470, 1.442695
      %v2531 = vpow.pop %v2530
      %v2532 = vmul.f32 %v2471, 1.442695
      %v2533 = vpow.pop %v2532
      %v2534 = vmul.f32 %v2472, 1.442695
      %v2535 = vpow.pop %v2534
      %v2536 = vmul.f32 %v2473, 1.442695
      %v2537 = vpow.pop %v2536
      %v2538 = vadd.f32 %v2475, %v2477
      %2539 = vadd.xlane.f32.xlu0 %v2538
      %v2540 = vpop.xlane.xlu0 %2539
      %v2541 = vadd.f32 %v2479, %v2481
      %2542 = vadd.xlane.f32.xlu0 %v2541
      %v2543 = vpop.xlane.xlu0 %2542
      %v2544 = vadd.f32 %v2483, %v2485
      %2545 = vadd.xlane.f32.xlu0 %v2544
      %v2546 = vpop.xlane.xlu0 %2545
      %v2547 = vadd.f32 %v2487, %v2489
      %2548 = vadd.xlane.f32.xlu0 %v2547
      %v2549 = vpop.xlane.xlu0 %2548
      %v2550 = vadd.f32 %v2491, %v2493
      %2551 = vadd.xlane.f32.xlu0 %v2550
      %v2552 = vpop.xlane.xlu0 %2551
      %v2553 = vadd.f32 %v2495, %v2497
      %2554 = vadd.xlane.f32.xlu0 %v2553
      %v2555 = vpop.xlane.xlu0 %2554
      %v2556 = vadd.f32 %v2499, %v2501
      %2557 = vadd.xlane.f32.xlu0 %v2556
      %v2558 = vpop.xlane.xlu0 %2557
      %v2559 = vadd.f32 %v2503, %v2505
      %2560 = vadd.xlane.f32.xlu0 %v2559
      %v2561 = vpop.xlane.xlu0 %2560
      %v2562 = vadd.f32 %v2507, %v2509
      %2563 = vadd.xlane.f32.xlu0 %v2562
      %v2564 = vpop.xlane.xlu0 %2563
      %v2565 = vadd.f32 %v2511, %v2513
      %2566 = vadd.xlane.f32.xlu0 %v2565
      %v2567 = vpop.xlane.xlu0 %2566
      %v2568 = vadd.f32 %v2515, %v2517
      %2569 = vadd.xlane.f32.xlu0 %v2568
      %v2570 = vpop.xlane.xlu0 %2569
      %v2571 = vadd.f32 %v2519, %v2521
      %2572 = vadd.xlane.f32.xlu0 %v2571
      %v2573 = vpop.xlane.xlu0 %2572
      %v2574 = vadd.f32 %v2523, %v2525
      %2575 = vadd.xlane.f32.xlu0 %v2574
      %v2576 = vpop.xlane.xlu0 %2575
      %v2577 = vadd.f32 %v2527, %v2529
      %2578 = vadd.xlane.f32.xlu0 %v2577
      %v2579 = vpop.xlane.xlu0 %2578
      %v2580 = vadd.f32 %v2531, %v2533
      %2581 = vadd.xlane.f32.xlu0 %v2580
      %v2582 = vpop.xlane.xlu0 %2581
      %v2583 = vadd.f32 %v2535, %v2537
      %2584 = vadd.xlane.f32.xlu0 %v2583
      %v2585 = vpop.xlane.xlu0 %2584
      %v2586 = vpack.c.bf16 %v2479, %v2475
      %v2587 = vpack.c.bf16 %v2481, %v2477
      %v2588 = vpack.c.bf16 %v2487, %v2483
      %v2589 = vpack.c.bf16 %v2489, %v2485
      %v2590 = vpack.c.bf16 %v2495, %v2491
      %v2591 = vpack.c.bf16 %v2497, %v2493
      %v2592 = vpack.c.bf16 %v2503, %v2499
      %v2593 = vpack.c.bf16 %v2505, %v2501
      %v2594 = vpack.c.bf16 %v2511, %v2507
      %v2595 = vpack.c.bf16 %v2513, %v2509
      %v2596 = vpack.c.bf16 %v2519, %v2515
      %v2597 = vpack.c.bf16 %v2521, %v2517
      %v2598 = vpack.c.bf16 %v2527, %v2523
      %v2599 = vpack.c.bf16 %v2529, %v2525
      %v2600 = vpack.c.bf16 %v2535, %v2531
      %v2601 = vpack.c.bf16 %v2537, %v2533
      %2602 = vrot.lane.b32.xlu0 %v861, 88
      %v2603 = vpop.permute.xlu0 %2602
      %2604 = vrot.lane.b32.xlu0 %v862, 88
      %v2605 = vpop.permute.xlu0 %2604
      %2606 = vrot.lane.b32.xlu0 %v863, 88
      %v2607 = vpop.permute.xlu0 %2606
      %2608 = vrot.lane.b32.xlu0 %v864, 88
      %v2609 = vpop.permute.xlu0 %2608
      %2610 = vrot.lane.b32.xlu0 %v865, 88
      %v2611 = vpop.permute.xlu0 %2610
      %2612 = vrot.lane.b32.xlu0 %v866, 88
      %v2613 = vpop.permute.xlu0 %2612
      %2614 = vrot.lane.b32.xlu0 %v867, 88
      %v2615 = vpop.permute.xlu0 %2614
      %2616 = vrot.lane.b32.xlu0 %v868, 88
      %v2617 = vpop.permute.xlu0 %2616
      %2618 = vrot.lane.b32.xlu0 %v869, 88
      %v2619 = vpop.permute.xlu0 %2618
      %2620 = vrot.lane.b32.xlu0 %v870, 88
      %v2621 = vpop.permute.xlu0 %2620
      %2622 = vrot.lane.b32.xlu0 %v871, 88
      %v2623 = vpop.permute.xlu0 %2622
      %2624 = vrot.lane.b32.xlu0 %v872, 88
      %v2625 = vpop.permute.xlu0 %2624
      %2626 = vrot.lane.b32.xlu0 %v873, 88
      %v2627 = vpop.permute.xlu0 %2626
      %2628 = vrot.lane.b32.xlu0 %v874, 88
      %v2629 = vpop.permute.xlu0 %2628
      %2630 = vrot.lane.b32.xlu0 %v875, 88
      %v2631 = vpop.permute.xlu0 %2630
      %2632 = vrot.lane.b32.xlu0 %v876, 88
      %v2633 = vpop.permute.xlu0 %2632
      %2650 = vmatpush.bf16.msra.mxu0 %v2617
      %2651 = vmatpush.bf16.msra.mxu0 %v2615
      %2652 = vmatpush.bf16.msra.mxu0 %v2613
      %2653 = vmatpush.bf16.msra.mxu0 %v2611
      %2654 = vmatpush.bf16.msra.mxu0 %v2609
      %2655 = vmatpush.bf16.msra.mxu0 %v2607
      %2656 = vmatpush.bf16.msra.mxu0 %v2605
      %2657 = vmatpush.bf16.msra.mxu0 %v2603
      %2658 = vmatmul.bf16.gmra.mxu0 %v2586
      %v2659 = vpop.f32.mrf.mxu0
      %v2660 = vadd.f32 0.0, %v2659
      %v2661 = vpop.f32.mrf.mxu0
      %v2662 = vadd.f32 0.0, %v2661
      %2663 = vmatmul.bf16.gmra.mxu0 %v2588
      %v2664 = vpop.f32.mrf.mxu0
      %v2665 = vadd.f32 0.0, %v2664
      %v2666 = vpop.f32.mrf.mxu0
      %v2667 = vadd.f32 0.0, %v2666
      %2668 = vmatmul.bf16.gmra.mxu0 %v2590
      %v2669 = vpop.f32.mrf.mxu0
      %v2670 = vadd.f32 0.0, %v2669
      %v2671 = vpop.f32.mrf.mxu0
      %v2672 = vadd.f32 0.0, %v2671
      %2673 = vmatmul.bf16.gmra.mxu0 %v2592
      %v2674 = vpop.f32.mrf.mxu0
      %v2675 = vadd.f32 0.0, %v2674
      %v2676 = vpop.f32.mrf.mxu0
      %v2677 = vadd.f32 0.0, %v2676
      %2678 = vmatmul.bf16.gmra.mxu0 %v2594
      %v2679 = vpop.f32.mrf.mxu0
      %v2680 = vadd.f32 0.0, %v2679
      %v2681 = vpop.f32.mrf.mxu0
      %v2682 = vadd.f32 0.0, %v2681
      %2683 = vmatmul.bf16.gmra.mxu0 %v2596
      %v2684 = vpop.f32.mrf.mxu0
      %v2685 = vadd.f32 0.0, %v2684
      %v2686 = vpop.f32.mrf.mxu0
      %v2687 = vadd.f32 0.0, %v2686
      %2688 = vmatmul.bf16.gmra.mxu0 %v2598
      %v2689 = vpop.f32.mrf.mxu0
      %v2690 = vadd.f32 0.0, %v2689
      %v2691 = vpop.f32.mrf.mxu0
      %v2692 = vadd.f32 0.0, %v2691
      %2693 = vmatmul.bf16.gmra.mxu0 %v2600
      %v2694 = vpop.f32.mrf.mxu0
      %v2695 = vadd.f32 0.0, %v2694
      %v2696 = vpop.f32.mrf.mxu0
      %v2697 = vadd.f32 0.0, %v2696
      %2698 = vdwg.mxu0
      %2699 = vmatpush.bf16.msra.mxu0 %v2633
      %2700 = vmatpush.bf16.msra.mxu0 %v2631
      %2701 = vmatpush.bf16.msra.mxu0 %v2629
      %2702 = vmatpush.bf16.msra.mxu0 %v2627
      %2703 = vmatpush.bf16.msra.mxu0 %v2625
      %2704 = vmatpush.bf16.msra.mxu0 %v2623
      %2705 = vmatpush.bf16.msra.mxu0 %v2621
      %2706 = vmatpush.bf16.msra.mxu0 %v2619
      %2707 = vmatmul.bf16.gmra.mxu0 %v2587
      %v2708 = vpop.f32.mrf.mxu0
      %v2709 = vadd.f32 %v2660, %v2708
      %v2710 = vpop.f32.mrf.mxu0
      %v2711 = vadd.f32 %v2662, %v2710
      %2712 = vmatmul.bf16.gmra.mxu0 %v2589
      %v2713 = vpop.f32.mrf.mxu0
      %v2714 = vadd.f32 %v2665, %v2713
      %v2715 = vpop.f32.mrf.mxu0
      %v2716 = vadd.f32 %v2667, %v2715
      %2717 = vmatmul.bf16.gmra.mxu0 %v2591
      %v2718 = vpop.f32.mrf.mxu0
      %v2719 = vadd.f32 %v2670, %v2718
      %v2720 = vpop.f32.mrf.mxu0
      %v2721 = vadd.f32 %v2672, %v2720
      %2722 = vmatmul.bf16.gmra.mxu0 %v2593
      %v2723 = vpop.f32.mrf.mxu0
      %v2724 = vadd.f32 %v2675, %v2723
      %v2725 = vpop.f32.mrf.mxu0
      %v2726 = vadd.f32 %v2677, %v2725
      %2727 = vmatmul.bf16.gmra.mxu0 %v2595
      %v2728 = vpop.f32.mrf.mxu0
      %v2729 = vadd.f32 %v2680, %v2728
      %v2730 = vpop.f32.mrf.mxu0
      %v2731 = vadd.f32 %v2682, %v2730
      %2732 = vmatmul.bf16.gmra.mxu0 %v2597
      %v2733 = vpop.f32.mrf.mxu0
      %v2734 = vadd.f32 %v2685, %v2733
      %v2735 = vpop.f32.mrf.mxu0
      %v2736 = vadd.f32 %v2687, %v2735
      %2737 = vmatmul.bf16.gmra.mxu0 %v2599
      %v2738 = vpop.f32.mrf.mxu0
      %v2739 = vadd.f32 %v2690, %v2738
      %v2740 = vpop.f32.mrf.mxu0
      %v2741 = vadd.f32 %v2692, %v2740
      %2742 = vmatmul.bf16.gmra.mxu0 %v2601
      %v2743 = vpop.f32.mrf.mxu0
      %v2744 = vadd.f32 %v2695, %v2743
      %v2745 = vpop.f32.mrf.mxu0
      %v2746 = vadd.f32 %v2697, %v2745
      %2747 = vdwg.mxu0
      %v2748 = vrcp.pop %v2540
      %v2749 = vrcp.pop %v2543
      %v2750 = vrcp.pop %v2546
      %v2751 = vrcp.pop %v2549
      %v2752 = vrcp.pop %v2552
      %v2753 = vrcp.pop %v2555
      %v2754 = vrcp.pop %v2558
      %v2755 = vrcp.pop %v2561
      %v2756 = vrcp.pop %v2564
      %v2757 = vrcp.pop %v2567
      %v2758 = vrcp.pop %v2570
      %v2759 = vrcp.pop %v2573
      %v2760 = vrcp.pop %v2576
      %v2761 = vrcp.pop %v2579
      %v2762 = vrcp.pop %v2582
      %v2763 = vrcp.pop %v2585
      %v2764 = vmul.f32 %v2709, %v2748
      %v2765 = vmul.f32 %v2711, %v2749
      %v2766 = vmul.f32 %v2714, %v2750
      %v2767 = vmul.f32 %v2716, %v2751
      %v2768 = vmul.f32 %v2719, %v2752
      %v2769 = vmul.f32 %v2721, %v2753
      %v2770 = vmul.f32 %v2724, %v2754
      %v2771 = vmul.f32 %v2726, %v2755
      %v2772 = vmul.f32 %v2729, %v2756
      %v2773 = vmul.f32 %v2731, %v2757
      %v2774 = vmul.f32 %v2734, %v2758
      %v2775 = vmul.f32 %v2736, %v2759
      %v2776 = vmul.f32 %v2739, %v2760
      %v2777 = vmul.f32 %v2741, %v2761
      %v2778 = vmul.f32 %v2744, %v2762
      %v2779 = vmul.f32 %v2746, %v2763
      %2796 = vrot.lane.b32.xlu0 %v2111, 5
      %v2797 = vpop.permute.xlu0 %2796
      %2798 = vrot.lane.b32.xlu0 %v2112, 5
      %v2799 = vpop.permute.xlu0 %2798
      %2800 = vrot.lane.b32.xlu0 %v2113, 5
      %v2801 = vpop.permute.xlu0 %2800
      %2802 = vrot.lane.b32.xlu0 %v2114, 5
      %v2803 = vpop.permute.xlu0 %2802
      %2804 = vrot.lane.b32.xlu0 %v2115, 5
      %v2805 = vpop.permute.xlu0 %2804
      %2806 = vrot.lane.b32.xlu0 %v2116, 5
      %v2807 = vpop.permute.xlu0 %2806
      %2808 = vrot.lane.b32.xlu0 %v2117, 5
      %v2809 = vpop.permute.xlu0 %2808
      %2810 = vrot.lane.b32.xlu0 %v2118, 5
      %v2811 = vpop.permute.xlu0 %2810
      %2812 = vrot.lane.b32.xlu0 %v2119, 5
      %v2813 = vpop.permute.xlu0 %2812
      %2814 = vrot.lane.b32.xlu0 %v2120, 5
      %v2815 = vpop.permute.xlu0 %2814
      %2816 = vrot.lane.b32.xlu0 %v2121, 5
      %v2817 = vpop.permute.xlu0 %2816
      %2818 = vrot.lane.b32.xlu0 %v2122, 5
      %v2819 = vpop.permute.xlu0 %2818
      %2820 = vrot.lane.b32.xlu0 %v2123, 5
      %v2821 = vpop.permute.xlu0 %2820
      %2822 = vrot.lane.b32.xlu0 %v2124, 5
      %v2823 = vpop.permute.xlu0 %2822
      %2824 = vrot.lane.b32.xlu0 %v2125, 5
      %v2825 = vpop.permute.xlu0 %2824
      %2826 = vrot.lane.b32.xlu0 %v2126, 5
      %v2827 = vpop.permute.xlu0 %2826
      %2860 = vrot.lane.b32.xlu0 %v2764, 10
      %v2861 = vpop.permute.xlu0 %2860
      %2862 = vrot.lane.b32.xlu0 %v2765, 10
      %v2863 = vpop.permute.xlu0 %2862
      %2864 = vrot.lane.b32.xlu0 %v2766, 10
      %v2865 = vpop.permute.xlu0 %2864
      %2866 = vrot.lane.b32.xlu0 %v2767, 10
      %v2867 = vpop.permute.xlu0 %2866
      %2868 = vrot.lane.b32.xlu0 %v2768, 10
      %v2869 = vpop.permute.xlu0 %2868
      %2870 = vrot.lane.b32.xlu0 %v2769, 10
      %v2871 = vpop.permute.xlu0 %2870
      %2872 = vrot.lane.b32.xlu0 %v2770, 10
      %v2873 = vpop.permute.xlu0 %2872
      %2874 = vrot.lane.b32.xlu0 %v2771, 10
      %v2875 = vpop.permute.xlu0 %2874
      %2876 = vrot.lane.b32.xlu0 %v2772, 10
      %v2877 = vpop.permute.xlu0 %2876
      %2878 = vrot.lane.b32.xlu0 %v2773, 10
      %v2879 = vpop.permute.xlu0 %2878
      %2880 = vrot.lane.b32.xlu0 %v2774, 10
      %v2881 = vpop.permute.xlu0 %2880
      %2882 = vrot.lane.b32.xlu0 %v2775, 10
      %v2883 = vpop.permute.xlu0 %2882
      %2884 = vrot.lane.b32.xlu0 %v2776, 10
      %v2885 = vpop.permute.xlu0 %2884
      %2886 = vrot.lane.b32.xlu0 %v2777, 10
      %v2887 = vpop.permute.xlu0 %2886
      %2888 = vrot.lane.b32.xlu0 %v2778, 10
      %v2889 = vpop.permute.xlu0 %2888
      %2890 = vrot.lane.b32.xlu0 %v2779, 10
      %v2891 = vpop.permute.xlu0 %2890
      %v2908 = vsel %vm909, %v1450, %v2797
      %v2909 = vsel %vm909, %v1451, %v2799
      %v2910 = vsel %vm909, %v1452, %v2801
      %v2911 = vsel %vm909, %v1453, %v2803
      %v2912 = vsel %vm909, %v1454, %v2805
      %v2913 = vsel %vm909, %v1455, %v2807
      %v2914 = vsel %vm909, %v1456, %v2809
      %v2915 = vsel %vm909, %v1457, %v2811
      %v2916 = vsel %vm909, %v1458, %v2813
      %v2917 = vsel %vm909, %v1459, %v2815
      %v2918 = vsel %vm909, %v1460, %v2817
      %v2919 = vsel %vm909, %v1461, %v2819
      %v2920 = vsel %vm909, %v1462, %v2821
      %v2921 = vsel %vm909, %v1463, %v2823
      %v2922 = vsel %vm909, %v1464, %v2825
      %v2923 = vsel %vm909, %v1465, %v2827
      %vm2924 = vcmask 80896
      %v2925 = vsel %vm2924, %v2908, %v2861
      %v2926 = vsel %vm2924, %v2909, %v2863
      %v2927 = vsel %vm2924, %v2910, %v2865
      %v2928 = vsel %vm2924, %v2911, %v2867
      %v2929 = vsel %vm2924, %v2912, %v2869
      %v2930 = vsel %vm2924, %v2913, %v2871
      %v2931 = vsel %vm2924, %v2914, %v2873
      %v2932 = vsel %vm2924, %v2915, %v2875
      %v2933 = vsel %vm2924, %v2916, %v2877
      %v2934 = vsel %vm2924, %v2917, %v2879
      %v2935 = vsel %vm2924, %v2918, %v2881
      %v2936 = vsel %vm2924, %v2919, %v2883
      %v2937 = vsel %vm2924, %v2920, %v2885
      %v2938 = vsel %vm2924, %v2921, %v2887
      %v2939 = vsel %vm2924, %v2922, %v2889
      %v2940 = vsel %vm2924, %v2923, %v2891
      %v2941 = vpack.c.bf16 %v2926, %v2925
      %v2942 = vpack.c.bf16 %v2928, %v2927
      %v2943 = vpack.c.bf16 %v2930, %v2929
      %v2944 = vpack.c.bf16 %v2932, %v2931
      %v2945 = vpack.c.bf16 %v2934, %v2933
      %v2946 = vpack.c.bf16 %v2936, %v2935
      %v2947 = vpack.c.bf16 %v2938, %v2937
      %v2948 = vpack.c.bf16 %v2940, %v2939
      %v2949 = vld [vmem:[%s5] sm:$0xf]
      %v2950 = vld [vmem:[%s5 + $0x4] sm:$0xf]
      %v2953 = vunpack.c.l.b16 %v2949
      %v2954 = vunpack.c.l.b16 %v2950
      %v2955 = vpack.c.b16 %v2954, %v2953
      %vm2956 = vcmask 121856
      %v2958 = vsel %vm2956, %v2941, 0
      %v2961 = vsel %vm2956, %v2942, 0
      %v2964 = vsel %vm2956, %v2943, 0
      %v2967 = vsel %vm2956, %v2944, 0
      %v2970 = vsel %vm2956, %v2945, 0
      %v2973 = vsel %vm2956, %v2946, 0
      %v2976 = vsel %vm2956, %v2947, 0
      %v2979 = vsel %vm2956, %v2948, 0
      %vm2981 = vcmask 1046528
      %vm2982 = vcmask 1047552
      %v2983 = vsel %vm2981, 4294967295, 65535
      %v2984 = vsel %vm2982, %v2983, 0
      %v2986 = vand.u32 %v2955, %v2984
      %2988 = vmatpush.bf16.msra.mxu0 0
      %2989 = vmatpush.bf16.msra.mxu0 0
      %2990 = vmatpush.bf16.msra.mxu0 0
      %2991 = vmatpush.bf16.msra.mxu0 0
      %2992 = vmatpush.bf16.msra.mxu0 0
      %2993 = vmatpush.bf16.msra.mxu0 0
      %2994 = vmatpush.bf16.msra.mxu0 0
      %2995 = vmatpush.bf16.msra.mxu0 %v2986
      %2996 = vmatmul.bf16.gmra.mxu0 %v2958
      %v2997 = vpop.f32.mrf.mxu0
      %v2998 = vadd.f32 0.0, %v2997
      %v2999 = vpop.f32.mrf.mxu0
      %v3000 = vadd.f32 0.0, %v2999
      %3001 = vmatmul.bf16.gmra.mxu0 %v2961
      %v3002 = vpop.f32.mrf.mxu0
      %v3003 = vadd.f32 0.0, %v3002
      %v3004 = vpop.f32.mrf.mxu0
      %v3005 = vadd.f32 0.0, %v3004
      %3006 = vmatmul.bf16.gmra.mxu0 %v2964
      %v3007 = vpop.f32.mrf.mxu0
      %v3008 = vadd.f32 0.0, %v3007
      %v3009 = vpop.f32.mrf.mxu0
      %v3010 = vadd.f32 0.0, %v3009
      %3011 = vmatmul.bf16.gmra.mxu0 %v2967
      %v3012 = vpop.f32.mrf.mxu0
      %v3013 = vadd.f32 0.0, %v3012
      %v3014 = vpop.f32.mrf.mxu0
      %v3015 = vadd.f32 0.0, %v3014
      %3016 = vmatmul.bf16.gmra.mxu0 %v2970
      %v3017 = vpop.f32.mrf.mxu0
      %v3018 = vadd.f32 0.0, %v3017
      %v3019 = vpop.f32.mrf.mxu0
      %v3020 = vadd.f32 0.0, %v3019
      %3021 = vmatmul.bf16.gmra.mxu0 %v2973
      %v3022 = vpop.f32.mrf.mxu0
      %v3023 = vadd.f32 0.0, %v3022
      %v3024 = vpop.f32.mrf.mxu0
      %v3025 = vadd.f32 0.0, %v3024
      %3026 = vmatmul.bf16.gmra.mxu0 %v2976
      %v3027 = vpop.f32.mrf.mxu0
      %v3028 = vadd.f32 0.0, %v3027
      %v3029 = vpop.f32.mrf.mxu0
      %v3030 = vadd.f32 0.0, %v3029
      %3031 = vmatmul.bf16.gmra.mxu0 %v2979
      %v3032 = vpop.f32.mrf.mxu0
      %v3033 = vadd.f32 0.0, %v3032
      %v3034 = vpop.f32.mrf.mxu0
      %v3035 = vadd.f32 0.0, %v3034
      %3036 = vdwg.mxu0
      %v3037 = vadd.f32 %v511, %v2998
      %v3038 = vadd.f32 %v512, %v3000
      %v3039 = vadd.f32 %v513, %v3003
      %v3040 = vadd.f32 %v514, %v3005
      %v3041 = vadd.f32 %v515, %v3008
      %v3042 = vadd.f32 %v516, %v3010
      %v3043 = vadd.f32 %v517, %v3013
      %v3044 = vadd.f32 %v518, %v3015
      %v3045 = vadd.f32 %v519, %v3018
      %v3046 = vadd.f32 %v520, %v3020
      %v3047 = vadd.f32 %v521, %v3023
      %v3048 = vadd.f32 %v522, %v3025
      %v3049 = vadd.f32 %v523, %v3028
      %v3050 = vadd.f32 %v524, %v3030
      %v3051 = vadd.f32 %v525, %v3033
      %v3052 = vadd.f32 %v526, %v3035
      %v3053 = vld [vmem:[%s6] sm:$0x1]
      %v3055 = vperm.slane %v3053, 0
      %v3057 = vadd.f32 %v3037, %v3055
      %v3058 = vadd.f32 %v3038, %v3055
      %v3059 = vadd.f32 %v3039, %v3055
      %v3060 = vadd.f32 %v3040, %v3055
      %v3061 = vadd.f32 %v3041, %v3055
      %v3062 = vadd.f32 %v3042, %v3055
      %v3063 = vadd.f32 %v3043, %v3055
      %v3064 = vadd.f32 %v3044, %v3055
      %v3065 = vadd.f32 %v3045, %v3055
      %v3066 = vadd.f32 %v3046, %v3055
      %v3067 = vadd.f32 %v3047, %v3055
      %v3068 = vadd.f32 %v3048, %v3055
      %v3069 = vadd.f32 %v3049, %v3055
      %v3070 = vadd.f32 %v3050, %v3055
      %v3071 = vadd.f32 %v3051, %v3055
      %v3072 = vadd.f32 %v3052, %v3055
      %3073 = vst.msk [vmem:[%s305] sm:$0xff] %vm571, %v3057
      %3074 = vst.msk [vmem:[%s305 + $0x8] sm:$0xff] %vm571, %v3058
      %3075 = vst.msk [vmem:[%s305 + $0x10] sm:$0xff] %vm571, %v3059
      %3076 = vst.msk [vmem:[%s305 + $0x18] sm:$0xff] %vm571, %v3060
      %3077 = vst.msk [vmem:[%s305 + $0x20] sm:$0xff] %vm571, %v3061
      %3078 = vst.msk [vmem:[%s305 + $0x28] sm:$0xff] %vm571, %v3062
      %3079 = vst.msk [vmem:[%s305 + $0x30] sm:$0xff] %vm571, %v3063
      %3080 = vst.msk [vmem:[%s305 + $0x38] sm:$0xff] %vm571, %v3064
      %3081 = vst.msk [vmem:[%s305 + $0x40] sm:$0xff] %vm571, %v3065
      %3082 = vst.msk [vmem:[%s305 + $0x48] sm:$0xff] %vm571, %v3066
      %3083 = vst.msk [vmem:[%s305 + $0x50] sm:$0xff] %vm571, %v3067
      %3084 = vst.msk [vmem:[%s305 + $0x58] sm:$0xff] %vm571, %v3068
      %3085 = vst.msk [vmem:[%s305 + $0x60] sm:$0xff] %vm571, %v3069
      %3086 = vst.msk [vmem:[%s305 + $0x68] sm:$0xff] %vm571, %v3070
      %3087 = vst.msk [vmem:[%s305 + $0x70] sm:$0xff] %vm571, %v3071
      %3088 = vst.msk [vmem:[%s305 + $0x78] sm:$0xff] %vm571, %v3072
      %v3089 = vpack.c.bf16 %v672, %v670
      %v3090 = vpack.c.bf16 %v677, %v675
      %v3091 = vpack.c.bf16 %v682, %v680
      %v3092 = vpack.c.bf16 %v687, %v685
      %v3093 = vpack.c.bf16 %v692, %v690
      %v3094 = vpack.c.bf16 %v697, %v695
      %v3095 = vpack.c.bf16 %v702, %v700
      %v3096 = vpack.c.bf16 %v707, %v705
      %v3097 = vld [vmem:[%s7 + $0x80] sm:$0xff]
      %v3098 = vld [vmem:[%s7 + $0x88] sm:$0xff]
      %v3099 = vld [vmem:[%s7 + $0x90] sm:$0xff]
      %v3100 = vld [vmem:[%s7 + $0x98] sm:$0xff]
      %v3101 = vld [vmem:[%s7 + $0xa0] sm:$0xff]
      %v3102 = vld [vmem:[%s7 + $0xa8] sm:$0xff]
      %v3103 = vld [vmem:[%s7 + $0xb0] sm:$0xff]
      %v3104 = vld [vmem:[%s7 + $0xb8] sm:$0xff]
      %v3105 = vld [vmem:[%s7 + $0xc0] sm:$0xff]
      %v3106 = vld [vmem:[%s7 + $0xc8] sm:$0xff]
      %v3107 = vld [vmem:[%s7 + $0xd0] sm:$0xff]
      %v3108 = vld [vmem:[%s7 + $0xd8] sm:$0xff]
      %v3109 = vld [vmem:[%s7 + $0xe0] sm:$0xff]
      %v3110 = vld [vmem:[%s7 + $0xe8] sm:$0xff]
      %v3111 = vld [vmem:[%s7 + $0xf0] sm:$0xff]
      %v3112 = vld [vmem:[%s7 + $0xf8] sm:$0xff]
      %v3113 = vunpack.c.l.bf16 %v3097
      %v3114 = vunpack.c.h.bf16 %v3097
      %v3115 = vunpack.c.l.bf16 %v3098
      %v3116 = vunpack.c.h.bf16 %v3098
      %v3117 = vunpack.c.l.bf16 %v3099
      %v3118 = vunpack.c.h.bf16 %v3099
      %v3119 = vunpack.c.l.bf16 %v3100
      %v3120 = vunpack.c.h.bf16 %v3100
      %v3121 = vunpack.c.l.bf16 %v3101
      %v3122 = vunpack.c.h.bf16 %v3101
      %v3123 = vunpack.c.l.bf16 %v3102
      %v3124 = vunpack.c.h.bf16 %v3102
      %v3125 = vunpack.c.l.bf16 %v3103
      %v3126 = vunpack.c.h.bf16 %v3103
      %v3127 = vunpack.c.l.bf16 %v3104
      %v3128 = vunpack.c.h.bf16 %v3104
      %v3129 = vunpack.c.l.bf16 %v3105
      %v3130 = vunpack.c.h.bf16 %v3105
      %v3131 = vunpack.c.l.bf16 %v3106
      %v3132 = vunpack.c.h.bf16 %v3106
      %v3133 = vunpack.c.l.bf16 %v3107
      %v3134 = vunpack.c.h.bf16 %v3107
      %v3135 = vunpack.c.l.bf16 %v3108
      %v3136 = vunpack.c.h.bf16 %v3108
      %v3137 = vunpack.c.l.bf16 %v3109
      %v3138 = vunpack.c.h.bf16 %v3109
      %v3139 = vunpack.c.l.bf16 %v3110
      %v3140 = vunpack.c.h.bf16 %v3110
      %v3141 = vunpack.c.l.bf16 %v3111
      %v3142 = vunpack.c.h.bf16 %v3111
      %v3143 = vunpack.c.l.bf16 %v3112
      %v3144 = vunpack.c.h.bf16 %v3112
      %v3146 = vsel %vm909, %v3089, 0
      %v3149 = vsel %vm909, %v3090, 0
      %v3152 = vsel %vm909, %v3091, 0
      %v3155 = vsel %vm909, %v3092, 0
      %v3158 = vsel %vm909, %v3093, 0
      %v3161 = vsel %vm909, %v3094, 0
      %v3164 = vsel %vm909, %v3095, 0
      %v3167 = vsel %vm909, %v3096, 0
      %3169 = vmatpush.bf16.xpose.msra.mxu0 %v956
      %3170 = vmatpush.bf16.xpose.msra.mxu0 %v953
      %3171 = vmatpush.bf16.xpose.msra.mxu0 %v950
      %3172 = vmatpush.bf16.xpose.msra.mxu0 %v947
      %3173 = vmatpush.bf16.xpose.msra.mxu0 %v944
      %3174 = vmatpush.bf16.xpose.msra.mxu0 %v941
      %3175 = vmatpush.bf16.xpose.msra.mxu0 %v938
      %3176 = vmatpush.bf16.xpose.msra.mxu0 %v935
      %3177 = vmatmul.bf16.gmra.mxu0 %v3146
      %v3178 = vpop.f32.mrf.mxu0
      %v3179 = vadd.f32 %v3113, %v3178
      %v3180 = vpop.f32.mrf.mxu0
      %v3181 = vadd.f32 %v3115, %v3180
      %3182 = vmatmul.bf16.gmra.mxu0 %v3149
      %v3183 = vpop.f32.mrf.mxu0
      %v3184 = vadd.f32 %v3117, %v3183
      %v3185 = vpop.f32.mrf.mxu0
      %v3186 = vadd.f32 %v3119, %v3185
      %3187 = vmatmul.bf16.gmra.mxu0 %v3152
      %v3188 = vpop.f32.mrf.mxu0
      %v3189 = vadd.f32 %v3121, %v3188
      %v3190 = vpop.f32.mrf.mxu0
      %v3191 = vadd.f32 %v3123, %v3190
      %3192 = vmatmul.bf16.gmra.mxu0 %v3155
      %v3193 = vpop.f32.mrf.mxu0
      %v3194 = vadd.f32 %v3125, %v3193
      %v3195 = vpop.f32.mrf.mxu0
      %v3196 = vadd.f32 %v3127, %v3195
      %3197 = vmatmul.bf16.gmra.mxu0 %v3158
      %v3198 = vpop.f32.mrf.mxu0
      %v3199 = vadd.f32 %v3129, %v3198
      %v3200 = vpop.f32.mrf.mxu0
      %v3201 = vadd.f32 %v3131, %v3200
      %3202 = vmatmul.bf16.gmra.mxu0 %v3161
      %v3203 = vpop.f32.mrf.mxu0
      %v3204 = vadd.f32 %v3133, %v3203
      %v3205 = vpop.f32.mrf.mxu0
      %v3206 = vadd.f32 %v3135, %v3205
      %3207 = vmatmul.bf16.gmra.mxu0 %v3164
      %v3208 = vpop.f32.mrf.mxu0
      %v3209 = vadd.f32 %v3137, %v3208
      %v3210 = vpop.f32.mrf.mxu0
      %v3211 = vadd.f32 %v3139, %v3210
      %3212 = vmatmul.bf16.gmra.mxu0 %v3167
      %v3213 = vpop.f32.mrf.mxu0
      %v3214 = vadd.f32 %v3141, %v3213
      %v3215 = vpop.f32.mrf.mxu0
      %v3216 = vadd.f32 %v3143, %v3215
      %3217 = vdwg.mxu0
      %3218 = vmatpush.bf16.xpose.msra.mxu0 %v980
      %3219 = vmatpush.bf16.xpose.msra.mxu0 %v977
      %3220 = vmatpush.bf16.xpose.msra.mxu0 %v974
      %3221 = vmatpush.bf16.xpose.msra.mxu0 %v971
      %3222 = vmatpush.bf16.xpose.msra.mxu0 %v968
      %3223 = vmatpush.bf16.xpose.msra.mxu0 %v965
      %3224 = vmatpush.bf16.xpose.msra.mxu0 %v962
      %3225 = vmatpush.bf16.xpose.msra.mxu0 %v959
      %3226 = vmatmul.bf16.gmra.mxu0 %v3146
      %v3227 = vpop.f32.mrf.mxu0
      %v3228 = vadd.f32 %v3114, %v3227
      %v3229 = vpop.f32.mrf.mxu0
      %v3230 = vadd.f32 %v3116, %v3229
      %3231 = vmatmul.bf16.gmra.mxu0 %v3149
      %v3232 = vpop.f32.mrf.mxu0
      %v3233 = vadd.f32 %v3118, %v3232
      %v3234 = vpop.f32.mrf.mxu0
      %v3235 = vadd.f32 %v3120, %v3234
      %3236 = vmatmul.bf16.gmra.mxu0 %v3152
      %v3237 = vpop.f32.mrf.mxu0
      %v3238 = vadd.f32 %v3122, %v3237
      %v3239 = vpop.f32.mrf.mxu0
      %v3240 = vadd.f32 %v3124, %v3239
      %3241 = vmatmul.bf16.gmra.mxu0 %v3155
      %v3242 = vpop.f32.mrf.mxu0
      %v3243 = vadd.f32 %v3126, %v3242
      %v3244 = vpop.f32.mrf.mxu0
      %v3245 = vadd.f32 %v3128, %v3244
      %3246 = vmatmul.bf16.gmra.mxu0 %v3158
      %v3247 = vpop.f32.mrf.mxu0
      %v3248 = vadd.f32 %v3130, %v3247
      %v3249 = vpop.f32.mrf.mxu0
      %v3250 = vadd.f32 %v3132, %v3249
      %3251 = vmatmul.bf16.gmra.mxu0 %v3161
      %v3252 = vpop.f32.mrf.mxu0
      %v3253 = vadd.f32 %v3134, %v3252
      %v3254 = vpop.f32.mrf.mxu0
      %v3255 = vadd.f32 %v3136, %v3254
      %3256 = vmatmul.bf16.gmra.mxu0 %v3164
      %v3257 = vpop.f32.mrf.mxu0
      %v3258 = vadd.f32 %v3138, %v3257
      %v3259 = vpop.f32.mrf.mxu0
      %v3260 = vadd.f32 %v3140, %v3259
      %3261 = vmatmul.bf16.gmra.mxu0 %v3167
      %v3262 = vpop.f32.mrf.mxu0
      %v3263 = vadd.f32 %v3142, %v3262
      %v3264 = vpop.f32.mrf.mxu0
      %v3265 = vadd.f32 %v3144, %v3264
      %3266 = vdwg.mxu0
      %v3267 = vmax.f32 %v3179, %v3228
      %3268 = vmax.xlane.f32.xlu0 %v3267
      %v3269 = vpop.xlane.xlu0 %3268
      %v3270 = vmax.f32 %v3181, %v3230
      %3271 = vmax.xlane.f32.xlu0 %v3270
      %v3272 = vpop.xlane.xlu0 %3271
      %v3273 = vmax.f32 %v3184, %v3233
      %3274 = vmax.xlane.f32.xlu0 %v3273
      %v3275 = vpop.xlane.xlu0 %3274
      %v3276 = vmax.f32 %v3186, %v3235
      %3277 = vmax.xlane.f32.xlu0 %v3276
      %v3278 = vpop.xlane.xlu0 %3277
      %v3279 = vmax.f32 %v3189, %v3238
      %3280 = vmax.xlane.f32.xlu0 %v3279
      %v3281 = vpop.xlane.xlu0 %3280
      %v3282 = vmax.f32 %v3191, %v3240
      %3283 = vmax.xlane.f32.xlu0 %v3282
      %v3284 = vpop.xlane.xlu0 %3283
      %v3285 = vmax.f32 %v3194, %v3243
      %3286 = vmax.xlane.f32.xlu0 %v3285
      %v3287 = vpop.xlane.xlu0 %3286
      %v3288 = vmax.f32 %v3196, %v3245
      %3289 = vmax.xlane.f32.xlu0 %v3288
      %v3290 = vpop.xlane.xlu0 %3289
      %v3291 = vmax.f32 %v3199, %v3248
      %3292 = vmax.xlane.f32.xlu0 %v3291
      %v3293 = vpop.xlane.xlu0 %3292
      %v3294 = vmax.f32 %v3201, %v3250
      %3295 = vmax.xlane.f32.xlu0 %v3294
      %v3296 = vpop.xlane.xlu0 %3295
      %v3297 = vmax.f32 %v3204, %v3253
      %3298 = vmax.xlane.f32.xlu0 %v3297
      %v3299 = vpop.xlane.xlu0 %3298
      %v3300 = vmax.f32 %v3206, %v3255
      %3301 = vmax.xlane.f32.xlu0 %v3300
      %v3302 = vpop.xlane.xlu0 %3301
      %v3303 = vmax.f32 %v3209, %v3258
      %3304 = vmax.xlane.f32.xlu0 %v3303
      %v3305 = vpop.xlane.xlu0 %3304
      %v3306 = vmax.f32 %v3211, %v3260
      %3307 = vmax.xlane.f32.xlu0 %v3306
      %v3308 = vpop.xlane.xlu0 %3307
      %v3309 = vmax.f32 %v3214, %v3263
      %3310 = vmax.xlane.f32.xlu0 %v3309
      %v3311 = vpop.xlane.xlu0 %3310
      %v3312 = vmax.f32 %v3216, %v3265
      %3313 = vmax.xlane.f32.xlu0 %v3312
      %v3314 = vpop.xlane.xlu0 %3313
      %v3315 = vsub.f32 %v3179, %v3269
      %v3316 = vsub.f32 %v3228, %v3269
      %v3317 = vsub.f32 %v3181, %v3272
      %v3318 = vsub.f32 %v3230, %v3272
      %v3319 = vsub.f32 %v3184, %v3275
      %v3320 = vsub.f32 %v3233, %v3275
      %v3321 = vsub.f32 %v3186, %v3278
      %v3322 = vsub.f32 %v3235, %v3278
      %v3323 = vsub.f32 %v3189, %v3281
      %v3324 = vsub.f32 %v3238, %v3281
      %v3325 = vsub.f32 %v3191, %v3284
      %v3326 = vsub.f32 %v3240, %v3284
      %v3327 = vsub.f32 %v3194, %v3287
      %v3328 = vsub.f32 %v3243, %v3287
      %v3329 = vsub.f32 %v3196, %v3290
      %v3330 = vsub.f32 %v3245, %v3290
      %v3331 = vsub.f32 %v3199, %v3293
      %v3332 = vsub.f32 %v3248, %v3293
      %v3333 = vsub.f32 %v3201, %v3296
      %v3334 = vsub.f32 %v3250, %v3296
      %v3335 = vsub.f32 %v3204, %v3299
      %v3336 = vsub.f32 %v3253, %v3299
      %v3337 = vsub.f32 %v3206, %v3302
      %v3338 = vsub.f32 %v3255, %v3302
      %v3339 = vsub.f32 %v3209, %v3305
      %v3340 = vsub.f32 %v3258, %v3305
      %v3341 = vsub.f32 %v3211, %v3308
      %v3342 = vsub.f32 %v3260, %v3308
      %v3343 = vsub.f32 %v3214, %v3311
      %v3344 = vsub.f32 %v3263, %v3311
      %v3345 = vsub.f32 %v3216, %v3314
      %v3346 = vsub.f32 %v3265, %v3314
      %v3347 = vmul.f32 %v3315, 1.442695
      %v3348 = vpow.pop %v3347
      %v3349 = vmul.f32 %v3316, 1.442695
      %v3350 = vpow.pop %v3349
      %v3351 = vmul.f32 %v3317, 1.442695
      %v3352 = vpow.pop %v3351
      %v3353 = vmul.f32 %v3318, 1.442695
      %v3354 = vpow.pop %v3353
      %v3355 = vmul.f32 %v3319, 1.442695
      %v3356 = vpow.pop %v3355
      %v3357 = vmul.f32 %v3320, 1.442695
      %v3358 = vpow.pop %v3357
      %v3359 = vmul.f32 %v3321, 1.442695
      %v3360 = vpow.pop %v3359
      %v3361 = vmul.f32 %v3322, 1.442695
      %v3362 = vpow.pop %v3361
      %v3363 = vmul.f32 %v3323, 1.442695
      %v3364 = vpow.pop %v3363
      %v3365 = vmul.f32 %v3324, 1.442695
      %v3366 = vpow.pop %v3365
      %v3367 = vmul.f32 %v3325, 1.442695
      %v3368 = vpow.pop %v3367
      %v3369 = vmul.f32 %v3326, 1.442695
      %v3370 = vpow.pop %v3369
      %v3371 = vmul.f32 %v3327, 1.442695
      %v3372 = vpow.pop %v3371
      %v3373 = vmul.f32 %v3328, 1.442695
      %v3374 = vpow.pop %v3373
      %v3375 = vmul.f32 %v3329, 1.442695
      %v3376 = vpow.pop %v3375
      %v3377 = vmul.f32 %v3330, 1.442695
      %v3378 = vpow.pop %v3377
      %v3379 = vmul.f32 %v3331, 1.442695
      %v3380 = vpow.pop %v3379
      %v3381 = vmul.f32 %v3332, 1.442695
      %v3382 = vpow.pop %v3381
      %v3383 = vmul.f32 %v3333, 1.442695
      %v3384 = vpow.pop %v3383
      %v3385 = vmul.f32 %v3334, 1.442695
      %v3386 = vpow.pop %v3385
      %v3387 = vmul.f32 %v3335, 1.442695
      %v3388 = vpow.pop %v3387
      %v3389 = vmul.f32 %v3336, 1.442695
      %v3390 = vpow.pop %v3389
      %v3391 = vmul.f32 %v3337, 1.442695
      %v3392 = vpow.pop %v3391
      %v3393 = vmul.f32 %v3338, 1.442695
      %v3394 = vpow.pop %v3393
      %v3395 = vmul.f32 %v3339, 1.442695
      %v3396 = vpow.pop %v3395
      %v3397 = vmul.f32 %v3340, 1.442695
      %v3398 = vpow.pop %v3397
      %v3399 = vmul.f32 %v3341, 1.442695
      %v3400 = vpow.pop %v3399
      %v3401 = vmul.f32 %v3342, 1.442695
      %v3402 = vpow.pop %v3401
      %v3403 = vmul.f32 %v3343, 1.442695
      %v3404 = vpow.pop %v3403
      %v3405 = vmul.f32 %v3344, 1.442695
      %v3406 = vpow.pop %v3405
      %v3407 = vmul.f32 %v3345, 1.442695
      %v3408 = vpow.pop %v3407
      %v3409 = vmul.f32 %v3346, 1.442695
      %v3410 = vpow.pop %v3409
      %v3411 = vadd.f32 %v3348, %v3350
      %3412 = vadd.xlane.f32.xlu0 %v3411
      %v3413 = vpop.xlane.xlu0 %3412
      %v3414 = vadd.f32 %v3352, %v3354
      %3415 = vadd.xlane.f32.xlu0 %v3414
      %v3416 = vpop.xlane.xlu0 %3415
      %v3417 = vadd.f32 %v3356, %v3358
      %3418 = vadd.xlane.f32.xlu0 %v3417
      %v3419 = vpop.xlane.xlu0 %3418
      %v3420 = vadd.f32 %v3360, %v3362
      %3421 = vadd.xlane.f32.xlu0 %v3420
      %v3422 = vpop.xlane.xlu0 %3421
      %v3423 = vadd.f32 %v3364, %v3366
      %3424 = vadd.xlane.f32.xlu0 %v3423
      %v3425 = vpop.xlane.xlu0 %3424
      %v3426 = vadd.f32 %v3368, %v3370
      %3427 = vadd.xlane.f32.xlu0 %v3426
      %v3428 = vpop.xlane.xlu0 %3427
      %v3429 = vadd.f32 %v3372, %v3374
      %3430 = vadd.xlane.f32.xlu0 %v3429
      %v3431 = vpop.xlane.xlu0 %3430
      %v3432 = vadd.f32 %v3376, %v3378
      %3433 = vadd.xlane.f32.xlu0 %v3432
      %v3434 = vpop.xlane.xlu0 %3433
      %v3435 = vadd.f32 %v3380, %v3382
      %3436 = vadd.xlane.f32.xlu0 %v3435
      %v3437 = vpop.xlane.xlu0 %3436
      %v3438 = vadd.f32 %v3384, %v3386
      %3439 = vadd.xlane.f32.xlu0 %v3438
      %v3440 = vpop.xlane.xlu0 %3439
      %v3441 = vadd.f32 %v3388, %v3390
      %3442 = vadd.xlane.f32.xlu0 %v3441
      %v3443 = vpop.xlane.xlu0 %3442
      %v3444 = vadd.f32 %v3392, %v3394
      %3445 = vadd.xlane.f32.xlu0 %v3444
      %v3446 = vpop.xlane.xlu0 %3445
      %v3447 = vadd.f32 %v3396, %v3398
      %3448 = vadd.xlane.f32.xlu0 %v3447
      %v3449 = vpop.xlane.xlu0 %3448
      %v3450 = vadd.f32 %v3400, %v3402
      %3451 = vadd.xlane.f32.xlu0 %v3450
      %v3452 = vpop.xlane.xlu0 %3451
      %v3453 = vadd.f32 %v3404, %v3406
      %3454 = vadd.xlane.f32.xlu0 %v3453
      %v3455 = vpop.xlane.xlu0 %3454
      %v3456 = vadd.f32 %v3408, %v3410
      %3457 = vadd.xlane.f32.xlu0 %v3456
      %v3458 = vpop.xlane.xlu0 %3457
      %v3459 = vpack.c.bf16 %v3352, %v3348
      %v3460 = vpack.c.bf16 %v3354, %v3350
      %v3461 = vpack.c.bf16 %v3360, %v3356
      %v3462 = vpack.c.bf16 %v3362, %v3358
      %v3463 = vpack.c.bf16 %v3368, %v3364
      %v3464 = vpack.c.bf16 %v3370, %v3366
      %v3465 = vpack.c.bf16 %v3376, %v3372
      %v3466 = vpack.c.bf16 %v3378, %v3374
      %v3467 = vpack.c.bf16 %v3384, %v3380
      %v3468 = vpack.c.bf16 %v3386, %v3382
      %v3469 = vpack.c.bf16 %v3392, %v3388
      %v3470 = vpack.c.bf16 %v3394, %v3390
      %v3471 = vpack.c.bf16 %v3400, %v3396
      %v3472 = vpack.c.bf16 %v3402, %v3398
      %v3473 = vpack.c.bf16 %v3408, %v3404
      %v3474 = vpack.c.bf16 %v3410, %v3406
      %3475 = vmatpush.bf16.msra.mxu0 %v1303
      %3476 = vmatpush.bf16.msra.mxu0 %v1301
      %3477 = vmatpush.bf16.msra.mxu0 %v1299
      %3478 = vmatpush.bf16.msra.mxu0 %v1297
      %3479 = vmatpush.bf16.msra.mxu0 %v1295
      %3480 = vmatpush.bf16.msra.mxu0 %v1293
      %3481 = vmatpush.bf16.msra.mxu0 %v1291
      %3482 = vmatpush.bf16.msra.mxu0 %v1289
      %3483 = vmatmul.bf16.gmra.mxu0 %v3459
      %v3484 = vpop.f32.mrf.mxu0
      %v3485 = vadd.f32 0.0, %v3484
      %v3486 = vpop.f32.mrf.mxu0
      %v3487 = vadd.f32 0.0, %v3486
      %3488 = vmatmul.bf16.gmra.mxu0 %v3461
      %v3489 = vpop.f32.mrf.mxu0
      %v3490 = vadd.f32 0.0, %v3489
      %v3491 = vpop.f32.mrf.mxu0
      %v3492 = vadd.f32 0.0, %v3491
      %3493 = vmatmul.bf16.gmra.mxu0 %v3463
      %v3494 = vpop.f32.mrf.mxu0
      %v3495 = vadd.f32 0.0, %v3494
      %v3496 = vpop.f32.mrf.mxu0
      %v3497 = vadd.f32 0.0, %v3496
      %3498 = vmatmul.bf16.gmra.mxu0 %v3465
      %v3499 = vpop.f32.mrf.mxu0
      %v3500 = vadd.f32 0.0, %v3499
      %v3501 = vpop.f32.mrf.mxu0
      %v3502 = vadd.f32 0.0, %v3501
      %3503 = vmatmul.bf16.gmra.mxu0 %v3467
      %v3504 = vpop.f32.mrf.mxu0
      %v3505 = vadd.f32 0.0, %v3504
      %v3506 = vpop.f32.mrf.mxu0
      %v3507 = vadd.f32 0.0, %v3506
      %3508 = vmatmul.bf16.gmra.mxu0 %v3469
      %v3509 = vpop.f32.mrf.mxu0
      %v3510 = vadd.f32 0.0, %v3509
      %v3511 = vpop.f32.mrf.mxu0
      %v3512 = vadd.f32 0.0, %v3511
      %3513 = vmatmul.bf16.gmra.mxu0 %v3471
      %v3514 = vpop.f32.mrf.mxu0
      %v3515 = vadd.f32 0.0, %v3514
      %v3516 = vpop.f32.mrf.mxu0
      %v3517 = vadd.f32 0.0, %v3516
      %3518 = vmatmul.bf16.gmra.mxu0 %v3473
      %v3519 = vpop.f32.mrf.mxu0
      %v3520 = vadd.f32 0.0, %v3519
      %v3521 = vpop.f32.mrf.mxu0
      %v3522 = vadd.f32 0.0, %v3521
      %3523 = vdwg.mxu0
      %3524 = vmatpush.bf16.msra.mxu0 %v1319
      %3525 = vmatpush.bf16.msra.mxu0 %v1317
      %3526 = vmatpush.bf16.msra.mxu0 %v1315
      %3527 = vmatpush.bf16.msra.mxu0 %v1313
      %3528 = vmatpush.bf16.msra.mxu0 %v1311
      %3529 = vmatpush.bf16.msra.mxu0 %v1309
      %3530 = vmatpush.bf16.msra.mxu0 %v1307
      %3531 = vmatpush.bf16.msra.mxu0 %v1305
      %3532 = vmatmul.bf16.gmra.mxu0 %v3460
      %v3533 = vpop.f32.mrf.mxu0
      %v3534 = vadd.f32 %v3485, %v3533
      %v3535 = vpop.f32.mrf.mxu0
      %v3536 = vadd.f32 %v3487, %v3535
      %3537 = vmatmul.bf16.gmra.mxu0 %v3462
      %v3538 = vpop.f32.mrf.mxu0
      %v3539 = vadd.f32 %v3490, %v3538
      %v3540 = vpop.f32.mrf.mxu0
      %v3541 = vadd.f32 %v3492, %v3540
      %3542 = vmatmul.bf16.gmra.mxu0 %v3464
      %v3543 = vpop.f32.mrf.mxu0
      %v3544 = vadd.f32 %v3495, %v3543
      %v3545 = vpop.f32.mrf.mxu0
      %v3546 = vadd.f32 %v3497, %v3545
      %3547 = vmatmul.bf16.gmra.mxu0 %v3466
      %v3548 = vpop.f32.mrf.mxu0
      %v3549 = vadd.f32 %v3500, %v3548
      %v3550 = vpop.f32.mrf.mxu0
      %v3551 = vadd.f32 %v3502, %v3550
      %3552 = vmatmul.bf16.gmra.mxu0 %v3468
      %v3553 = vpop.f32.mrf.mxu0
      %v3554 = vadd.f32 %v3505, %v3553
      %v3555 = vpop.f32.mrf.mxu0
      %v3556 = vadd.f32 %v3507, %v3555
      %3557 = vmatmul.bf16.gmra.mxu0 %v3470
      %v3558 = vpop.f32.mrf.mxu0
      %v3559 = vadd.f32 %v3510, %v3558
      %v3560 = vpop.f32.mrf.mxu0
      %v3561 = vadd.f32 %v3512, %v3560
      %3562 = vmatmul.bf16.gmra.mxu0 %v3472
      %v3563 = vpop.f32.mrf.mxu0
      %v3564 = vadd.f32 %v3515, %v3563
      %v3565 = vpop.f32.mrf.mxu0
      %v3566 = vadd.f32 %v3517, %v3565
      %3567 = vmatmul.bf16.gmra.mxu0 %v3474
      %v3568 = vpop.f32.mrf.mxu0
      %v3569 = vadd.f32 %v3520, %v3568
      %v3570 = vpop.f32.mrf.mxu0
      %v3571 = vadd.f32 %v3522, %v3570
      %3572 = vdwg.mxu0
      %v3573 = vrcp.pop %v3413
      %v3574 = vrcp.pop %v3416
      %v3575 = vrcp.pop %v3419
      %v3576 = vrcp.pop %v3422
      %v3577 = vrcp.pop %v3425
      %v3578 = vrcp.pop %v3428
      %v3579 = vrcp.pop %v3431
      %v3580 = vrcp.pop %v3434
      %v3581 = vrcp.pop %v3437
      %v3582 = vrcp.pop %v3440
      %v3583 = vrcp.pop %v3443
      %v3584 = vrcp.pop %v3446
      %v3585 = vrcp.pop %v3449
      %v3586 = vrcp.pop %v3452
      %v3587 = vrcp.pop %v3455
      %v3588 = vrcp.pop %v3458
      %v3589 = vmul.f32 %v3534, %v3573
      %v3590 = vmul.f32 %v3536, %v3574
      %v3591 = vmul.f32 %v3539, %v3575
      %v3592 = vmul.f32 %v3541, %v3576
      %v3593 = vmul.f32 %v3544, %v3577
      %v3594 = vmul.f32 %v3546, %v3578
      %v3595 = vmul.f32 %v3549, %v3579
      %v3596 = vmul.f32 %v3551, %v3580
      %v3597 = vmul.f32 %v3554, %v3581
      %v3598 = vmul.f32 %v3556, %v3582
      %v3599 = vmul.f32 %v3559, %v3583
      %v3600 = vmul.f32 %v3561, %v3584
      %v3601 = vmul.f32 %v3564, %v3585
      %v3602 = vmul.f32 %v3566, %v3586
      %v3603 = vmul.f32 %v3569, %v3587
      %v3604 = vmul.f32 %v3571, %v3588
      %v3605 = vld [vmem:[%s1466 + $0x80] sm:$0xff]
      %v3606 = vld [vmem:[%s1466 + $0x88] sm:$0xff]
      %v3607 = vld [vmem:[%s1466 + $0x90] sm:$0xff]
      %v3608 = vld [vmem:[%s1466 + $0x98] sm:$0xff]
      %v3609 = vld [vmem:[%s1466 + $0xa0] sm:$0xff]
      %v3610 = vld [vmem:[%s1466 + $0xa8] sm:$0xff]
      %v3611 = vld [vmem:[%s1466 + $0xb0] sm:$0xff]
      %v3612 = vld [vmem:[%s1466 + $0xb8] sm:$0xff]
      %v3613 = vld [vmem:[%s1466 + $0xc0] sm:$0xff]
      %v3614 = vld [vmem:[%s1466 + $0xc8] sm:$0xff]
      %v3615 = vld [vmem:[%s1466 + $0xd0] sm:$0xff]
      %v3616 = vld [vmem:[%s1466 + $0xd8] sm:$0xff]
      %v3617 = vld [vmem:[%s1466 + $0xe0] sm:$0xff]
      %v3618 = vld [vmem:[%s1466 + $0xe8] sm:$0xff]
      %v3619 = vld [vmem:[%s1466 + $0xf0] sm:$0xff]
      %v3620 = vld [vmem:[%s1466 + $0xf8] sm:$0xff]
      %v3621 = vunpack.c.l.bf16 %v3605
      %v3622 = vunpack.c.h.bf16 %v3605
      %v3623 = vunpack.c.l.bf16 %v3606
      %v3624 = vunpack.c.h.bf16 %v3606
      %v3625 = vunpack.c.l.bf16 %v3607
      %v3626 = vunpack.c.h.bf16 %v3607
      %v3627 = vunpack.c.l.bf16 %v3608
      %v3628 = vunpack.c.h.bf16 %v3608
      %v3629 = vunpack.c.l.bf16 %v3609
      %v3630 = vunpack.c.h.bf16 %v3609
      %v3631 = vunpack.c.l.bf16 %v3610
      %v3632 = vunpack.c.h.bf16 %v3610
      %v3633 = vunpack.c.l.bf16 %v3611
      %v3634 = vunpack.c.h.bf16 %v3611
      %v3635 = vunpack.c.l.bf16 %v3612
      %v3636 = vunpack.c.h.bf16 %v3612
      %v3637 = vunpack.c.l.bf16 %v3613
      %v3638 = vunpack.c.h.bf16 %v3613
      %v3639 = vunpack.c.l.bf16 %v3614
      %v3640 = vunpack.c.h.bf16 %v3614
      %v3641 = vunpack.c.l.bf16 %v3615
      %v3642 = vunpack.c.h.bf16 %v3615
      %v3643 = vunpack.c.l.bf16 %v3616
      %v3644 = vunpack.c.h.bf16 %v3616
      %v3645 = vunpack.c.l.bf16 %v3617
      %v3646 = vunpack.c.h.bf16 %v3617
      %v3647 = vunpack.c.l.bf16 %v3618
      %v3648 = vunpack.c.h.bf16 %v3618
      %v3649 = vunpack.c.l.bf16 %v3619
      %v3650 = vunpack.c.h.bf16 %v3619
      %v3651 = vunpack.c.l.bf16 %v3620
      %v3652 = vunpack.c.h.bf16 %v3620
      %3661 = vrot.lane.b32.xlu0 %v3089, 123
      %v3662 = vpop.permute.xlu0 %3661
      %3663 = vrot.lane.b32.xlu0 %v3090, 123
      %v3664 = vpop.permute.xlu0 %3663
      %3665 = vrot.lane.b32.xlu0 %v3091, 123
      %v3666 = vpop.permute.xlu0 %3665
      %3667 = vrot.lane.b32.xlu0 %v3092, 123
      %v3668 = vpop.permute.xlu0 %3667
      %3669 = vrot.lane.b32.xlu0 %v3093, 123
      %v3670 = vpop.permute.xlu0 %3669
      %3671 = vrot.lane.b32.xlu0 %v3094, 123
      %v3672 = vpop.permute.xlu0 %3671
      %3673 = vrot.lane.b32.xlu0 %v3095, 123
      %v3674 = vpop.permute.xlu0 %3673
      %3675 = vrot.lane.b32.xlu0 %v3096, 123
      %v3676 = vpop.permute.xlu0 %3675
      %v3678 = vsel %vm909, %v3662, 0
      %v3681 = vsel %vm909, %v3664, 0
      %v3684 = vsel %vm909, %v3666, 0
      %v3687 = vsel %vm909, %v3668, 0
      %v3690 = vsel %vm909, %v3670, 0
      %v3693 = vsel %vm909, %v3672, 0
      %v3696 = vsel %vm909, %v3674, 0
      %v3699 = vsel %vm909, %v3676, 0
      %3701 = vmatpush.bf16.xpose.msra.mxu0 %v1617
      %3702 = vmatpush.bf16.xpose.msra.mxu0 %v1614
      %3703 = vmatpush.bf16.xpose.msra.mxu0 %v1611
      %3704 = vmatpush.bf16.xpose.msra.mxu0 %v1608
      %3705 = vmatpush.bf16.xpose.msra.mxu0 %v1605
      %3706 = vmatpush.bf16.xpose.msra.mxu0 %v1602
      %3707 = vmatpush.bf16.xpose.msra.mxu0 %v1599
      %3708 = vmatpush.bf16.xpose.msra.mxu0 %v1596
      %3709 = vmatmul.bf16.gmra.mxu0 %v3678
      %v3710 = vpop.f32.mrf.mxu0
      %v3711 = vadd.f32 %v3621, %v3710
      %v3712 = vpop.f32.mrf.mxu0
      %v3713 = vadd.f32 %v3623, %v3712
      %3714 = vmatmul.bf16.gmra.mxu0 %v3681
      %v3715 = vpop.f32.mrf.mxu0
      %v3716 = vadd.f32 %v3625, %v3715
      %v3717 = vpop.f32.mrf.mxu0
      %v3718 = vadd.f32 %v3627, %v3717
      %3719 = vmatmul.bf16.gmra.mxu0 %v3684
      %v3720 = vpop.f32.mrf.mxu0
      %v3721 = vadd.f32 %v3629, %v3720
      %v3722 = vpop.f32.mrf.mxu0
      %v3723 = vadd.f32 %v3631, %v3722
      %3724 = vmatmul.bf16.gmra.mxu0 %v3687
      %v3725 = vpop.f32.mrf.mxu0
      %v3726 = vadd.f32 %v3633, %v3725
      %v3727 = vpop.f32.mrf.mxu0
      %v3728 = vadd.f32 %v3635, %v3727
      %3729 = vmatmul.bf16.gmra.mxu0 %v3690
      %v3730 = vpop.f32.mrf.mxu0
      %v3731 = vadd.f32 %v3637, %v3730
      %v3732 = vpop.f32.mrf.mxu0
      %v3733 = vadd.f32 %v3639, %v3732
      %3734 = vmatmul.bf16.gmra.mxu0 %v3693
      %v3735 = vpop.f32.mrf.mxu0
      %v3736 = vadd.f32 %v3641, %v3735
      %v3737 = vpop.f32.mrf.mxu0
      %v3738 = vadd.f32 %v3643, %v3737
      %3739 = vmatmul.bf16.gmra.mxu0 %v3696
      %v3740 = vpop.f32.mrf.mxu0
      %v3741 = vadd.f32 %v3645, %v3740
      %v3742 = vpop.f32.mrf.mxu0
      %v3743 = vadd.f32 %v3647, %v3742
      %3744 = vmatmul.bf16.gmra.mxu0 %v3699
      %v3745 = vpop.f32.mrf.mxu0
      %v3746 = vadd.f32 %v3649, %v3745
      %v3747 = vpop.f32.mrf.mxu0
      %v3748 = vadd.f32 %v3651, %v3747
      %3749 = vdwg.mxu0
      %3750 = vmatpush.bf16.xpose.msra.mxu0 %v1641
      %3751 = vmatpush.bf16.xpose.msra.mxu0 %v1638
      %3752 = vmatpush.bf16.xpose.msra.mxu0 %v1635
      %3753 = vmatpush.bf16.xpose.msra.mxu0 %v1632
      %3754 = vmatpush.bf16.xpose.msra.mxu0 %v1629
      %3755 = vmatpush.bf16.xpose.msra.mxu0 %v1626
      %3756 = vmatpush.bf16.xpose.msra.mxu0 %v1623
      %3757 = vmatpush.bf16.xpose.msra.mxu0 %v1620
      %3758 = vmatmul.bf16.gmra.mxu0 %v3678
      %v3759 = vpop.f32.mrf.mxu0
      %v3760 = vadd.f32 %v3622, %v3759
      %v3761 = vpop.f32.mrf.mxu0
      %v3762 = vadd.f32 %v3624, %v3761
      %3763 = vmatmul.bf16.gmra.mxu0 %v3681
      %v3764 = vpop.f32.mrf.mxu0
      %v3765 = vadd.f32 %v3626, %v3764
      %v3766 = vpop.f32.mrf.mxu0
      %v3767 = vadd.f32 %v3628, %v3766
      %3768 = vmatmul.bf16.gmra.mxu0 %v3684
      %v3769 = vpop.f32.mrf.mxu0
      %v3770 = vadd.f32 %v3630, %v3769
      %v3771 = vpop.f32.mrf.mxu0
      %v3772 = vadd.f32 %v3632, %v3771
      %3773 = vmatmul.bf16.gmra.mxu0 %v3687
      %v3774 = vpop.f32.mrf.mxu0
      %v3775 = vadd.f32 %v3634, %v3774
      %v3776 = vpop.f32.mrf.mxu0
      %v3777 = vadd.f32 %v3636, %v3776
      %3778 = vmatmul.bf16.gmra.mxu0 %v3690
      %v3779 = vpop.f32.mrf.mxu0
      %v3780 = vadd.f32 %v3638, %v3779
      %v3781 = vpop.f32.mrf.mxu0
      %v3782 = vadd.f32 %v3640, %v3781
      %3783 = vmatmul.bf16.gmra.mxu0 %v3693
      %v3784 = vpop.f32.mrf.mxu0
      %v3785 = vadd.f32 %v3642, %v3784
      %v3786 = vpop.f32.mrf.mxu0
      %v3787 = vadd.f32 %v3644, %v3786
      %3788 = vmatmul.bf16.gmra.mxu0 %v3696
      %v3789 = vpop.f32.mrf.mxu0
      %v3790 = vadd.f32 %v3646, %v3789
      %v3791 = vpop.f32.mrf.mxu0
      %v3792 = vadd.f32 %v3648, %v3791
      %3793 = vmatmul.bf16.gmra.mxu0 %v3699
      %v3794 = vpop.f32.mrf.mxu0
      %v3795 = vadd.f32 %v3650, %v3794
      %v3796 = vpop.f32.mrf.mxu0
      %v3797 = vadd.f32 %v3652, %v3796
      %3798 = vdwg.mxu0
      %v3799 = vmax.f32 %v3711, %v3760
      %3800 = vmax.xlane.f32.xlu0 %v3799
      %v3801 = vpop.xlane.xlu0 %3800
      %v3802 = vmax.f32 %v3713, %v3762
      %3803 = vmax.xlane.f32.xlu0 %v3802
      %v3804 = vpop.xlane.xlu0 %3803
      %v3805 = vmax.f32 %v3716, %v3765
      %3806 = vmax.xlane.f32.xlu0 %v3805
      %v3807 = vpop.xlane.xlu0 %3806
      %v3808 = vmax.f32 %v3718, %v3767
      %3809 = vmax.xlane.f32.xlu0 %v3808
      %v3810 = vpop.xlane.xlu0 %3809
      %v3811 = vmax.f32 %v3721, %v3770
      %3812 = vmax.xlane.f32.xlu0 %v3811
      %v3813 = vpop.xlane.xlu0 %3812
      %v3814 = vmax.f32 %v3723, %v3772
      %3815 = vmax.xlane.f32.xlu0 %v3814
      %v3816 = vpop.xlane.xlu0 %3815
      %v3817 = vmax.f32 %v3726, %v3775
      %3818 = vmax.xlane.f32.xlu0 %v3817
      %v3819 = vpop.xlane.xlu0 %3818
      %v3820 = vmax.f32 %v3728, %v3777
      %3821 = vmax.xlane.f32.xlu0 %v3820
      %v3822 = vpop.xlane.xlu0 %3821
      %v3823 = vmax.f32 %v3731, %v3780
      %3824 = vmax.xlane.f32.xlu0 %v3823
      %v3825 = vpop.xlane.xlu0 %3824
      %v3826 = vmax.f32 %v3733, %v3782
      %3827 = vmax.xlane.f32.xlu0 %v3826
      %v3828 = vpop.xlane.xlu0 %3827
      %v3829 = vmax.f32 %v3736, %v3785
      %3830 = vmax.xlane.f32.xlu0 %v3829
      %v3831 = vpop.xlane.xlu0 %3830
      %v3832 = vmax.f32 %v3738, %v3787
      %3833 = vmax.xlane.f32.xlu0 %v3832
      %v3834 = vpop.xlane.xlu0 %3833
      %v3835 = vmax.f32 %v3741, %v3790
      %3836 = vmax.xlane.f32.xlu0 %v3835
      %v3837 = vpop.xlane.xlu0 %3836
      %v3838 = vmax.f32 %v3743, %v3792
      %3839 = vmax.xlane.f32.xlu0 %v3838
      %v3840 = vpop.xlane.xlu0 %3839
      %v3841 = vmax.f32 %v3746, %v3795
      %3842 = vmax.xlane.f32.xlu0 %v3841
      %v3843 = vpop.xlane.xlu0 %3842
      %v3844 = vmax.f32 %v3748, %v3797
      %3845 = vmax.xlane.f32.xlu0 %v3844
      %v3846 = vpop.xlane.xlu0 %3845
      %v3847 = vsub.f32 %v3711, %v3801
      %v3848 = vsub.f32 %v3760, %v3801
      %v3849 = vsub.f32 %v3713, %v3804
      %v3850 = vsub.f32 %v3762, %v3804
      %v3851 = vsub.f32 %v3716, %v3807
      %v3852 = vsub.f32 %v3765, %v3807
      %v3853 = vsub.f32 %v3718, %v3810
      %v3854 = vsub.f32 %v3767, %v3810
      %v3855 = vsub.f32 %v3721, %v3813
      %v3856 = vsub.f32 %v3770, %v3813
      %v3857 = vsub.f32 %v3723, %v3816
      %v3858 = vsub.f32 %v3772, %v3816
      %v3859 = vsub.f32 %v3726, %v3819
      %v3860 = vsub.f32 %v3775, %v3819
      %v3861 = vsub.f32 %v3728, %v3822
      %v3862 = vsub.f32 %v3777, %v3822
      %v3863 = vsub.f32 %v3731, %v3825
      %v3864 = vsub.f32 %v3780, %v3825
      %v3865 = vsub.f32 %v3733, %v3828
      %v3866 = vsub.f32 %v3782, %v3828
      %v3867 = vsub.f32 %v3736, %v3831
      %v3868 = vsub.f32 %v3785, %v3831
      %v3869 = vsub.f32 %v3738, %v3834
      %v3870 = vsub.f32 %v3787, %v3834
      %v3871 = vsub.f32 %v3741, %v3837
      %v3872 = vsub.f32 %v3790, %v3837
      %v3873 = vsub.f32 %v3743, %v3840
      %v3874 = vsub.f32 %v3792, %v3840
      %v3875 = vsub.f32 %v3746, %v3843
      %v3876 = vsub.f32 %v3795, %v3843
      %v3877 = vsub.f32 %v3748, %v3846
      %v3878 = vsub.f32 %v3797, %v3846
      %v3879 = vmul.f32 %v3847, 1.442695
      %v3880 = vpow.pop %v3879
      %v3881 = vmul.f32 %v3848, 1.442695
      %v3882 = vpow.pop %v3881
      %v3883 = vmul.f32 %v3849, 1.442695
      %v3884 = vpow.pop %v3883
      %v3885 = vmul.f32 %v3850, 1.442695
      %v3886 = vpow.pop %v3885
      %v3887 = vmul.f32 %v3851, 1.442695
      %v3888 = vpow.pop %v3887
      %v3889 = vmul.f32 %v3852, 1.442695
      %v3890 = vpow.pop %v3889
      %v3891 = vmul.f32 %v3853, 1.442695
      %v3892 = vpow.pop %v3891
      %v3893 = vmul.f32 %v3854, 1.442695
      %v3894 = vpow.pop %v3893
      %v3895 = vmul.f32 %v3855, 1.442695
      %v3896 = vpow.pop %v3895
      %v3897 = vmul.f32 %v3856, 1.442695
      %v3898 = vpow.pop %v3897
      %v3899 = vmul.f32 %v3857, 1.442695
      %v3900 = vpow.pop %v3899
      %v3901 = vmul.f32 %v3858, 1.442695
      %v3902 = vpow.pop %v3901
      %v3903 = vmul.f32 %v3859, 1.442695
      %v3904 = vpow.pop %v3903
      %v3905 = vmul.f32 %v3860, 1.442695
      %v3906 = vpow.pop %v3905
      %v3907 = vmul.f32 %v3861, 1.442695
      %v3908 = vpow.pop %v3907
      %v3909 = vmul.f32 %v3862, 1.442695
      %v3910 = vpow.pop %v3909
      %v3911 = vmul.f32 %v3863, 1.442695
      %v3912 = vpow.pop %v3911
      %v3913 = vmul.f32 %v3864, 1.442695
      %v3914 = vpow.pop %v3913
      %v3915 = vmul.f32 %v3865, 1.442695
      %v3916 = vpow.pop %v3915
      %v3917 = vmul.f32 %v3866, 1.442695
      %v3918 = vpow.pop %v3917
      %v3919 = vmul.f32 %v3867, 1.442695
      %v3920 = vpow.pop %v3919
      %v3921 = vmul.f32 %v3868, 1.442695
      %v3922 = vpow.pop %v3921
      %v3923 = vmul.f32 %v3869, 1.442695
      %v3924 = vpow.pop %v3923
      %v3925 = vmul.f32 %v3870, 1.442695
      %v3926 = vpow.pop %v3925
      %v3927 = vmul.f32 %v3871, 1.442695
      %v3928 = vpow.pop %v3927
      %v3929 = vmul.f32 %v3872, 1.442695
      %v3930 = vpow.pop %v3929
      %v3931 = vmul.f32 %v3873, 1.442695
      %v3932 = vpow.pop %v3931
      %v3933 = vmul.f32 %v3874, 1.442695
      %v3934 = vpow.pop %v3933
      %v3935 = vmul.f32 %v3875, 1.442695
      %v3936 = vpow.pop %v3935
      %v3937 = vmul.f32 %v3876, 1.442695
      %v3938 = vpow.pop %v3937
      %v3939 = vmul.f32 %v3877, 1.442695
      %v3940 = vpow.pop %v3939
      %v3941 = vmul.f32 %v3878, 1.442695
      %v3942 = vpow.pop %v3941
      %v3943 = vadd.f32 %v3880, %v3882
      %3944 = vadd.xlane.f32.xlu0 %v3943
      %v3945 = vpop.xlane.xlu0 %3944
      %v3946 = vadd.f32 %v3884, %v3886
      %3947 = vadd.xlane.f32.xlu0 %v3946
      %v3948 = vpop.xlane.xlu0 %3947
      %v3949 = vadd.f32 %v3888, %v3890
      %3950 = vadd.xlane.f32.xlu0 %v3949
      %v3951 = vpop.xlane.xlu0 %3950
      %v3952 = vadd.f32 %v3892, %v3894
      %3953 = vadd.xlane.f32.xlu0 %v3952
      %v3954 = vpop.xlane.xlu0 %3953
      %v3955 = vadd.f32 %v3896, %v3898
      %3956 = vadd.xlane.f32.xlu0 %v3955
      %v3957 = vpop.xlane.xlu0 %3956
      %v3958 = vadd.f32 %v3900, %v3902
      %3959 = vadd.xlane.f32.xlu0 %v3958
      %v3960 = vpop.xlane.xlu0 %3959
      %v3961 = vadd.f32 %v3904, %v3906
      %3962 = vadd.xlane.f32.xlu0 %v3961
      %v3963 = vpop.xlane.xlu0 %3962
      %v3964 = vadd.f32 %v3908, %v3910
      %3965 = vadd.xlane.f32.xlu0 %v3964
      %v3966 = vpop.xlane.xlu0 %3965
      %v3967 = vadd.f32 %v3912, %v3914
      %3968 = vadd.xlane.f32.xlu0 %v3967
      %v3969 = vpop.xlane.xlu0 %3968
      %v3970 = vadd.f32 %v3916, %v3918
      %3971 = vadd.xlane.f32.xlu0 %v3970
      %v3972 = vpop.xlane.xlu0 %3971
      %v3973 = vadd.f32 %v3920, %v3922
      %3974 = vadd.xlane.f32.xlu0 %v3973
      %v3975 = vpop.xlane.xlu0 %3974
      %v3976 = vadd.f32 %v3924, %v3926
      %3977 = vadd.xlane.f32.xlu0 %v3976
      %v3978 = vpop.xlane.xlu0 %3977
      %v3979 = vadd.f32 %v3928, %v3930
      %3980 = vadd.xlane.f32.xlu0 %v3979
      %v3981 = vpop.xlane.xlu0 %3980
      %v3982 = vadd.f32 %v3932, %v3934
      %3983 = vadd.xlane.f32.xlu0 %v3982
      %v3984 = vpop.xlane.xlu0 %3983
      %v3985 = vadd.f32 %v3936, %v3938
      %3986 = vadd.xlane.f32.xlu0 %v3985
      %v3987 = vpop.xlane.xlu0 %3986
      %v3988 = vadd.f32 %v3940, %v3942
      %3989 = vadd.xlane.f32.xlu0 %v3988
      %v3990 = vpop.xlane.xlu0 %3989
      %v3991 = vpack.c.bf16 %v3884, %v3880
      %v3992 = vpack.c.bf16 %v3886, %v3882
      %v3993 = vpack.c.bf16 %v3892, %v3888
      %v3994 = vpack.c.bf16 %v3894, %v3890
      %v3995 = vpack.c.bf16 %v3900, %v3896
      %v3996 = vpack.c.bf16 %v3902, %v3898
      %v3997 = vpack.c.bf16 %v3908, %v3904
      %v3998 = vpack.c.bf16 %v3910, %v3906
      %v3999 = vpack.c.bf16 %v3916, %v3912
      %v4000 = vpack.c.bf16 %v3918, %v3914
      %v4001 = vpack.c.bf16 %v3924, %v3920
      %v4002 = vpack.c.bf16 %v3926, %v3922
      %v4003 = vpack.c.bf16 %v3932, %v3928
      %v4004 = vpack.c.bf16 %v3934, %v3930
      %v4005 = vpack.c.bf16 %v3940, %v3936
      %v4006 = vpack.c.bf16 %v3942, %v3938
      %4007 = vmatpush.bf16.msra.mxu0 %v1964
      %4008 = vmatpush.bf16.msra.mxu0 %v1962
      %4009 = vmatpush.bf16.msra.mxu0 %v1960
      %4010 = vmatpush.bf16.msra.mxu0 %v1958
      %4011 = vmatpush.bf16.msra.mxu0 %v1956
      %4012 = vmatpush.bf16.msra.mxu0 %v1954
      %4013 = vmatpush.bf16.msra.mxu0 %v1952
      %4014 = vmatpush.bf16.msra.mxu0 %v1950
      %4015 = vmatmul.bf16.gmra.mxu0 %v3991
      %v4016 = vpop.f32.mrf.mxu0
      %v4017 = vadd.f32 0.0, %v4016
      %v4018 = vpop.f32.mrf.mxu0
      %v4019 = vadd.f32 0.0, %v4018
      %4020 = vmatmul.bf16.gmra.mxu0 %v3993
      %v4021 = vpop.f32.mrf.mxu0
      %v4022 = vadd.f32 0.0, %v4021
      %v4023 = vpop.f32.mrf.mxu0
      %v4024 = vadd.f32 0.0, %v4023
      %4025 = vmatmul.bf16.gmra.mxu0 %v3995
      %v4026 = vpop.f32.mrf.mxu0
      %v4027 = vadd.f32 0.0, %v4026
      %v4028 = vpop.f32.mrf.mxu0
      %v4029 = vadd.f32 0.0, %v4028
      %4030 = vmatmul.bf16.gmra.mxu0 %v3997
      %v4031 = vpop.f32.mrf.mxu0
      %v4032 = vadd.f32 0.0, %v4031
      %v4033 = vpop.f32.mrf.mxu0
      %v4034 = vadd.f32 0.0, %v4033
      %4035 = vmatmul.bf16.gmra.mxu0 %v3999
      %v4036 = vpop.f32.mrf.mxu0
      %v4037 = vadd.f32 0.0, %v4036
      %v4038 = vpop.f32.mrf.mxu0
      %v4039 = vadd.f32 0.0, %v4038
      %4040 = vmatmul.bf16.gmra.mxu0 %v4001
      %v4041 = vpop.f32.mrf.mxu0
      %v4042 = vadd.f32 0.0, %v4041
      %v4043 = vpop.f32.mrf.mxu0
      %v4044 = vadd.f32 0.0, %v4043
      %4045 = vmatmul.bf16.gmra.mxu0 %v4003
      %v4046 = vpop.f32.mrf.mxu0
      %v4047 = vadd.f32 0.0, %v4046
      %v4048 = vpop.f32.mrf.mxu0
      %v4049 = vadd.f32 0.0, %v4048
      %4050 = vmatmul.bf16.gmra.mxu0 %v4005
      %v4051 = vpop.f32.mrf.mxu0
      %v4052 = vadd.f32 0.0, %v4051
      %v4053 = vpop.f32.mrf.mxu0
      %v4054 = vadd.f32 0.0, %v4053
      %4055 = vdwg.mxu0
      %4056 = vmatpush.bf16.msra.mxu0 %v1980
      %4057 = vmatpush.bf16.msra.mxu0 %v1978
      %4058 = vmatpush.bf16.msra.mxu0 %v1976
      %4059 = vmatpush.bf16.msra.mxu0 %v1974
      %4060 = vmatpush.bf16.msra.mxu0 %v1972
      %4061 = vmatpush.bf16.msra.mxu0 %v1970
      %4062 = vmatpush.bf16.msra.mxu0 %v1968
      %4063 = vmatpush.bf16.msra.mxu0 %v1966
      %4064 = vmatmul.bf16.gmra.mxu0 %v3992
      %v4065 = vpop.f32.mrf.mxu0
      %v4066 = vadd.f32 %v4017, %v4065
      %v4067 = vpop.f32.mrf.mxu0
      %v4068 = vadd.f32 %v4019, %v4067
      %4069 = vmatmul.bf16.gmra.mxu0 %v3994
      %v4070 = vpop.f32.mrf.mxu0
      %v4071 = vadd.f32 %v4022, %v4070
      %v4072 = vpop.f32.mrf.mxu0
      %v4073 = vadd.f32 %v4024, %v4072
      %4074 = vmatmul.bf16.gmra.mxu0 %v3996
      %v4075 = vpop.f32.mrf.mxu0
      %v4076 = vadd.f32 %v4027, %v4075
      %v4077 = vpop.f32.mrf.mxu0
      %v4078 = vadd.f32 %v4029, %v4077
      %4079 = vmatmul.bf16.gmra.mxu0 %v3998
      %v4080 = vpop.f32.mrf.mxu0
      %v4081 = vadd.f32 %v4032, %v4080
      %v4082 = vpop.f32.mrf.mxu0
      %v4083 = vadd.f32 %v4034, %v4082
      %4084 = vmatmul.bf16.gmra.mxu0 %v4000
      %v4085 = vpop.f32.mrf.mxu0
      %v4086 = vadd.f32 %v4037, %v4085
      %v4087 = vpop.f32.mrf.mxu0
      %v4088 = vadd.f32 %v4039, %v4087
      %4089 = vmatmul.bf16.gmra.mxu0 %v4002
      %v4090 = vpop.f32.mrf.mxu0
      %v4091 = vadd.f32 %v4042, %v4090
      %v4092 = vpop.f32.mrf.mxu0
      %v4093 = vadd.f32 %v4044, %v4092
      %4094 = vmatmul.bf16.gmra.mxu0 %v4004
      %v4095 = vpop.f32.mrf.mxu0
      %v4096 = vadd.f32 %v4047, %v4095
      %v4097 = vpop.f32.mrf.mxu0
      %v4098 = vadd.f32 %v4049, %v4097
      %4099 = vmatmul.bf16.gmra.mxu0 %v4006
      %v4100 = vpop.f32.mrf.mxu0
      %v4101 = vadd.f32 %v4052, %v4100
      %v4102 = vpop.f32.mrf.mxu0
      %v4103 = vadd.f32 %v4054, %v4102
      %4104 = vdwg.mxu0
      %v4105 = vrcp.pop %v3945
      %v4106 = vrcp.pop %v3948
      %v4107 = vrcp.pop %v3951
      %v4108 = vrcp.pop %v3954
      %v4109 = vrcp.pop %v3957
      %v4110 = vrcp.pop %v3960
      %v4111 = vrcp.pop %v3963
      %v4112 = vrcp.pop %v3966
      %v4113 = vrcp.pop %v3969
      %v4114 = vrcp.pop %v3972
      %v4115 = vrcp.pop %v3975
      %v4116 = vrcp.pop %v3978
      %v4117 = vrcp.pop %v3981
      %v4118 = vrcp.pop %v3984
      %v4119 = vrcp.pop %v3987
      %v4120 = vrcp.pop %v3990
      %v4121 = vmul.f32 %v4066, %v4105
      %v4122 = vmul.f32 %v4068, %v4106
      %v4123 = vmul.f32 %v4071, %v4107
      %v4124 = vmul.f32 %v4073, %v4108
      %v4125 = vmul.f32 %v4076, %v4109
      %v4126 = vmul.f32 %v4078, %v4110
      %v4127 = vmul.f32 %v4081, %v4111
      %v4128 = vmul.f32 %v4083, %v4112
      %v4129 = vmul.f32 %v4086, %v4113
      %v4130 = vmul.f32 %v4088, %v4114
      %v4131 = vmul.f32 %v4091, %v4115
      %v4132 = vmul.f32 %v4093, %v4116
      %v4133 = vmul.f32 %v4096, %v4117
      %v4134 = vmul.f32 %v4098, %v4118
      %v4135 = vmul.f32 %v4101, %v4119
      %v4136 = vmul.f32 %v4103, %v4120
      %v4137 = vld [vmem:[%s2127 + $0x80] sm:$0xff]
      %v4138 = vld [vmem:[%s2127 + $0x88] sm:$0xff]
      %v4139 = vld [vmem:[%s2127 + $0x90] sm:$0xff]
      %v4140 = vld [vmem:[%s2127 + $0x98] sm:$0xff]
      %v4141 = vld [vmem:[%s2127 + $0xa0] sm:$0xff]
      %v4142 = vld [vmem:[%s2127 + $0xa8] sm:$0xff]
      %v4143 = vld [vmem:[%s2127 + $0xb0] sm:$0xff]
      %v4144 = vld [vmem:[%s2127 + $0xb8] sm:$0xff]
      %v4145 = vld [vmem:[%s2127 + $0xc0] sm:$0xff]
      %v4146 = vld [vmem:[%s2127 + $0xc8] sm:$0xff]
      %v4147 = vld [vmem:[%s2127 + $0xd0] sm:$0xff]
      %v4148 = vld [vmem:[%s2127 + $0xd8] sm:$0xff]
      %v4149 = vld [vmem:[%s2127 + $0xe0] sm:$0xff]
      %v4150 = vld [vmem:[%s2127 + $0xe8] sm:$0xff]
      %v4151 = vld [vmem:[%s2127 + $0xf0] sm:$0xff]
      %v4152 = vld [vmem:[%s2127 + $0xf8] sm:$0xff]
      %v4153 = vunpack.c.l.bf16 %v4137
      %v4154 = vunpack.c.h.bf16 %v4137
      %v4155 = vunpack.c.l.bf16 %v4138
      %v4156 = vunpack.c.h.bf16 %v4138
      %v4157 = vunpack.c.l.bf16 %v4139
      %v4158 = vunpack.c.h.bf16 %v4139
      %v4159 = vunpack.c.l.bf16 %v4140
      %v4160 = vunpack.c.h.bf16 %v4140
      %v4161 = vunpack.c.l.bf16 %v4141
      %v4162 = vunpack.c.h.bf16 %v4141
      %v4163 = vunpack.c.l.bf16 %v4142
      %v4164 = vunpack.c.h.bf16 %v4142
      %v4165 = vunpack.c.l.bf16 %v4143
      %v4166 = vunpack.c.h.bf16 %v4143
      %v4167 = vunpack.c.l.bf16 %v4144
      %v4168 = vunpack.c.h.bf16 %v4144
      %v4169 = vunpack.c.l.bf16 %v4145
      %v4170 = vunpack.c.h.bf16 %v4145
      %v4171 = vunpack.c.l.bf16 %v4146
      %v4172 = vunpack.c.h.bf16 %v4146
      %v4173 = vunpack.c.l.bf16 %v4147
      %v4174 = vunpack.c.h.bf16 %v4147
      %v4175 = vunpack.c.l.bf16 %v4148
      %v4176 = vunpack.c.h.bf16 %v4148
      %v4177 = vunpack.c.l.bf16 %v4149
      %v4178 = vunpack.c.h.bf16 %v4149
      %v4179 = vunpack.c.l.bf16 %v4150
      %v4180 = vunpack.c.h.bf16 %v4150
      %v4181 = vunpack.c.l.bf16 %v4151
      %v4182 = vunpack.c.h.bf16 %v4151
      %v4183 = vunpack.c.l.bf16 %v4152
      %v4184 = vunpack.c.h.bf16 %v4152
      %4185 = vrot.lane.b32.xlu0 %v3089, 118
      %v4186 = vpop.permute.xlu0 %4185
      %4187 = vrot.lane.b32.xlu0 %v3090, 118
      %v4188 = vpop.permute.xlu0 %4187
      %4189 = vrot.lane.b32.xlu0 %v3091, 118
      %v4190 = vpop.permute.xlu0 %4189
      %4191 = vrot.lane.b32.xlu0 %v3092, 118
      %v4192 = vpop.permute.xlu0 %4191
      %4193 = vrot.lane.b32.xlu0 %v3093, 118
      %v4194 = vpop.permute.xlu0 %4193
      %4195 = vrot.lane.b32.xlu0 %v3094, 118
      %v4196 = vpop.permute.xlu0 %4195
      %4197 = vrot.lane.b32.xlu0 %v3095, 118
      %v4198 = vpop.permute.xlu0 %4197
      %4199 = vrot.lane.b32.xlu0 %v3096, 118
      %v4200 = vpop.permute.xlu0 %4199
      %v4202 = vsel %vm909, %v4186, 0
      %v4205 = vsel %vm909, %v4188, 0
      %v4208 = vsel %vm909, %v4190, 0
      %v4211 = vsel %vm909, %v4192, 0
      %v4214 = vsel %vm909, %v4194, 0
      %v4217 = vsel %vm909, %v4196, 0
      %v4220 = vsel %vm909, %v4198, 0
      %v4223 = vsel %vm909, %v4200, 0
      %4225 = vmatpush.bf16.xpose.msra.mxu0 %v2270
      %4226 = vmatpush.bf16.xpose.msra.mxu0 %v2267
      %4227 = vmatpush.bf16.xpose.msra.mxu0 %v2264
      %4228 = vmatpush.bf16.xpose.msra.mxu0 %v2261
      %4229 = vmatpush.bf16.xpose.msra.mxu0 %v2258
      %4230 = vmatpush.bf16.xpose.msra.mxu0 %v2255
      %4231 = vmatpush.bf16.xpose.msra.mxu0 %v2252
      %4232 = vmatpush.bf16.xpose.msra.mxu0 %v2249
      %4233 = vmatmul.bf16.gmra.mxu0 %v4202
      %v4234 = vpop.f32.mrf.mxu0
      %v4235 = vadd.f32 %v4153, %v4234
      %v4236 = vpop.f32.mrf.mxu0
      %v4237 = vadd.f32 %v4155, %v4236
      %4238 = vmatmul.bf16.gmra.mxu0 %v4205
      %v4239 = vpop.f32.mrf.mxu0
      %v4240 = vadd.f32 %v4157, %v4239
      %v4241 = vpop.f32.mrf.mxu0
      %v4242 = vadd.f32 %v4159, %v4241
      %4243 = vmatmul.bf16.gmra.mxu0 %v4208
      %v4244 = vpop.f32.mrf.mxu0
      %v4245 = vadd.f32 %v4161, %v4244
      %v4246 = vpop.f32.mrf.mxu0
      %v4247 = vadd.f32 %v4163, %v4246
      %4248 = vmatmul.bf16.gmra.mxu0 %v4211
      %v4249 = vpop.f32.mrf.mxu0
      %v4250 = vadd.f32 %v4165, %v4249
      %v4251 = vpop.f32.mrf.mxu0
      %v4252 = vadd.f32 %v4167, %v4251
      %4253 = vmatmul.bf16.gmra.mxu0 %v4214
      %v4254 = vpop.f32.mrf.mxu0
      %v4255 = vadd.f32 %v4169, %v4254
      %v4256 = vpop.f32.mrf.mxu0
      %v4257 = vadd.f32 %v4171, %v4256
      %4258 = vmatmul.bf16.gmra.mxu0 %v4217
      %v4259 = vpop.f32.mrf.mxu0
      %v4260 = vadd.f32 %v4173, %v4259
      %v4261 = vpop.f32.mrf.mxu0
      %v4262 = vadd.f32 %v4175, %v4261
      %4263 = vmatmul.bf16.gmra.mxu0 %v4220
      %v4264 = vpop.f32.mrf.mxu0
      %v4265 = vadd.f32 %v4177, %v4264
      %v4266 = vpop.f32.mrf.mxu0
      %v4267 = vadd.f32 %v4179, %v4266
      %4268 = vmatmul.bf16.gmra.mxu0 %v4223
      %v4269 = vpop.f32.mrf.mxu0
      %v4270 = vadd.f32 %v4181, %v4269
      %v4271 = vpop.f32.mrf.mxu0
      %v4272 = vadd.f32 %v4183, %v4271
      %4273 = vdwg.mxu0
      %4274 = vmatpush.bf16.xpose.msra.mxu0 %v2294
      %4275 = vmatpush.bf16.xpose.msra.mxu0 %v2291
      %4276 = vmatpush.bf16.xpose.msra.mxu0 %v2288
      %4277 = vmatpush.bf16.xpose.msra.mxu0 %v2285
      %4278 = vmatpush.bf16.xpose.msra.mxu0 %v2282
      %4279 = vmatpush.bf16.xpose.msra.mxu0 %v2279
      %4280 = vmatpush.bf16.xpose.msra.mxu0 %v2276
      %4281 = vmatpush.bf16.xpose.msra.mxu0 %v2273
      %4282 = vmatmul.bf16.gmra.mxu0 %v4202
      %v4283 = vpop.f32.mrf.mxu0
      %v4284 = vadd.f32 %v4154, %v4283
      %v4285 = vpop.f32.mrf.mxu0
      %v4286 = vadd.f32 %v4156, %v4285
      %4287 = vmatmul.bf16.gmra.mxu0 %v4205
      %v4288 = vpop.f32.mrf.mxu0
      %v4289 = vadd.f32 %v4158, %v4288
      %v4290 = vpop.f32.mrf.mxu0
      %v4291 = vadd.f32 %v4160, %v4290
      %4292 = vmatmul.bf16.gmra.mxu0 %v4208
      %v4293 = vpop.f32.mrf.mxu0
      %v4294 = vadd.f32 %v4162, %v4293
      %v4295 = vpop.f32.mrf.mxu0
      %v4296 = vadd.f32 %v4164, %v4295
      %4297 = vmatmul.bf16.gmra.mxu0 %v4211
      %v4298 = vpop.f32.mrf.mxu0
      %v4299 = vadd.f32 %v4166, %v4298
      %v4300 = vpop.f32.mrf.mxu0
      %v4301 = vadd.f32 %v4168, %v4300
      %4302 = vmatmul.bf16.gmra.mxu0 %v4214
      %v4303 = vpop.f32.mrf.mxu0
      %v4304 = vadd.f32 %v4170, %v4303
      %v4305 = vpop.f32.mrf.mxu0
      %v4306 = vadd.f32 %v4172, %v4305
      %4307 = vmatmul.bf16.gmra.mxu0 %v4217
      %v4308 = vpop.f32.mrf.mxu0
      %v4309 = vadd.f32 %v4174, %v4308
      %v4310 = vpop.f32.mrf.mxu0
      %v4311 = vadd.f32 %v4176, %v4310
      %4312 = vmatmul.bf16.gmra.mxu0 %v4220
      %v4313 = vpop.f32.mrf.mxu0
      %v4314 = vadd.f32 %v4178, %v4313
      %v4315 = vpop.f32.mrf.mxu0
      %v4316 = vadd.f32 %v4180, %v4315
      %4317 = vmatmul.bf16.gmra.mxu0 %v4223
      %v4318 = vpop.f32.mrf.mxu0
      %v4319 = vadd.f32 %v4182, %v4318
      %v4320 = vpop.f32.mrf.mxu0
      %v4321 = vadd.f32 %v4184, %v4320
      %4322 = vdwg.mxu0
      %v4323 = vmax.f32 %v4235, %v4284
      %4324 = vmax.xlane.f32.xlu0 %v4323
      %v4325 = vpop.xlane.xlu0 %4324
      %v4326 = vmax.f32 %v4237, %v4286
      %4327 = vmax.xlane.f32.xlu0 %v4326
      %v4328 = vpop.xlane.xlu0 %4327
      %v4329 = vmax.f32 %v4240, %v4289
      %4330 = vmax.xlane.f32.xlu0 %v4329
      %v4331 = vpop.xlane.xlu0 %4330
      %v4332 = vmax.f32 %v4242, %v4291
      %4333 = vmax.xlane.f32.xlu0 %v4332
      %v4334 = vpop.xlane.xlu0 %4333
      %v4335 = vmax.f32 %v4245, %v4294
      %4336 = vmax.xlane.f32.xlu0 %v4335
      %v4337 = vpop.xlane.xlu0 %4336
      %v4338 = vmax.f32 %v4247, %v4296
      %4339 = vmax.xlane.f32.xlu0 %v4338
      %v4340 = vpop.xlane.xlu0 %4339
      %v4341 = vmax.f32 %v4250, %v4299
      %4342 = vmax.xlane.f32.xlu0 %v4341
      %v4343 = vpop.xlane.xlu0 %4342
      %v4344 = vmax.f32 %v4252, %v4301
      %4345 = vmax.xlane.f32.xlu0 %v4344
      %v4346 = vpop.xlane.xlu0 %4345
      %v4347 = vmax.f32 %v4255, %v4304
      %4348 = vmax.xlane.f32.xlu0 %v4347
      %v4349 = vpop.xlane.xlu0 %4348
      %v4350 = vmax.f32 %v4257, %v4306
      %4351 = vmax.xlane.f32.xlu0 %v4350
      %v4352 = vpop.xlane.xlu0 %4351
      %v4353 = vmax.f32 %v4260, %v4309
      %4354 = vmax.xlane.f32.xlu0 %v4353
      %v4355 = vpop.xlane.xlu0 %4354
      %v4356 = vmax.f32 %v4262, %v4311
      %4357 = vmax.xlane.f32.xlu0 %v4356
      %v4358 = vpop.xlane.xlu0 %4357
      %v4359 = vmax.f32 %v4265, %v4314
      %4360 = vmax.xlane.f32.xlu0 %v4359
      %v4361 = vpop.xlane.xlu0 %4360
      %v4362 = vmax.f32 %v4267, %v4316
      %4363 = vmax.xlane.f32.xlu0 %v4362
      %v4364 = vpop.xlane.xlu0 %4363
      %v4365 = vmax.f32 %v4270, %v4319
      %4366 = vmax.xlane.f32.xlu0 %v4365
      %v4367 = vpop.xlane.xlu0 %4366
      %v4368 = vmax.f32 %v4272, %v4321
      %4369 = vmax.xlane.f32.xlu0 %v4368
      %v4370 = vpop.xlane.xlu0 %4369
      %v4371 = vsub.f32 %v4235, %v4325
      %v4372 = vsub.f32 %v4284, %v4325
      %v4373 = vsub.f32 %v4237, %v4328
      %v4374 = vsub.f32 %v4286, %v4328
      %v4375 = vsub.f32 %v4240, %v4331
      %v4376 = vsub.f32 %v4289, %v4331
      %v4377 = vsub.f32 %v4242, %v4334
      %v4378 = vsub.f32 %v4291, %v4334
      %v4379 = vsub.f32 %v4245, %v4337
      %v4380 = vsub.f32 %v4294, %v4337
      %v4381 = vsub.f32 %v4247, %v4340
      %v4382 = vsub.f32 %v4296, %v4340
      %v4383 = vsub.f32 %v4250, %v4343
      %v4384 = vsub.f32 %v4299, %v4343
      %v4385 = vsub.f32 %v4252, %v4346
      %v4386 = vsub.f32 %v4301, %v4346
      %v4387 = vsub.f32 %v4255, %v4349
      %v4388 = vsub.f32 %v4304, %v4349
      %v4389 = vsub.f32 %v4257, %v4352
      %v4390 = vsub.f32 %v4306, %v4352
      %v4391 = vsub.f32 %v4260, %v4355
      %v4392 = vsub.f32 %v4309, %v4355
      %v4393 = vsub.f32 %v4262, %v4358
      %v4394 = vsub.f32 %v4311, %v4358
      %v4395 = vsub.f32 %v4265, %v4361
      %v4396 = vsub.f32 %v4314, %v4361
      %v4397 = vsub.f32 %v4267, %v4364
      %v4398 = vsub.f32 %v4316, %v4364
      %v4399 = vsub.f32 %v4270, %v4367
      %v4400 = vsub.f32 %v4319, %v4367
      %v4401 = vsub.f32 %v4272, %v4370
      %v4402 = vsub.f32 %v4321, %v4370
      %v4403 = vmul.f32 %v4371, 1.442695
      %v4404 = vpow.pop %v4403
      %v4405 = vmul.f32 %v4372, 1.442695
      %v4406 = vpow.pop %v4405
      %v4407 = vmul.f32 %v4373, 1.442695
      %v4408 = vpow.pop %v4407
      %v4409 = vmul.f32 %v4374, 1.442695
      %v4410 = vpow.pop %v4409
      %v4411 = vmul.f32 %v4375, 1.442695
      %v4412 = vpow.pop %v4411
      %v4413 = vmul.f32 %v4376, 1.442695
      %v4414 = vpow.pop %v4413
      %v4415 = vmul.f32 %v4377, 1.442695
      %v4416 = vpow.pop %v4415
      %v4417 = vmul.f32 %v4378, 1.442695
      %v4418 = vpow.pop %v4417
      %v4419 = vmul.f32 %v4379, 1.442695
      %v4420 = vpow.pop %v4419
      %v4421 = vmul.f32 %v4380, 1.442695
      %v4422 = vpow.pop %v4421
      %v4423 = vmul.f32 %v4381, 1.442695
      %v4424 = vpow.pop %v4423
      %v4425 = vmul.f32 %v4382, 1.442695
      %v4426 = vpow.pop %v4425
      %v4427 = vmul.f32 %v4383, 1.442695
      %v4428 = vpow.pop %v4427
      %v4429 = vmul.f32 %v4384, 1.442695
      %v4430 = vpow.pop %v4429
      %v4431 = vmul.f32 %v4385, 1.442695
      %v4432 = vpow.pop %v4431
      %v4433 = vmul.f32 %v4386, 1.442695
      %v4434 = vpow.pop %v4433
      %v4435 = vmul.f32 %v4387, 1.442695
      %v4436 = vpow.pop %v4435
      %v4437 = vmul.f32 %v4388, 1.442695
      %v4438 = vpow.pop %v4437
      %v4439 = vmul.f32 %v4389, 1.442695
      %v4440 = vpow.pop %v4439
      %v4441 = vmul.f32 %v4390, 1.442695
      %v4442 = vpow.pop %v4441
      %v4443 = vmul.f32 %v4391, 1.442695
      %v4444 = vpow.pop %v4443
      %v4445 = vmul.f32 %v4392, 1.442695
      %v4446 = vpow.pop %v4445
      %v4447 = vmul.f32 %v4393, 1.442695
      %v4448 = vpow.pop %v4447
      %v4449 = vmul.f32 %v4394, 1.442695
      %v4450 = vpow.pop %v4449
      %v4451 = vmul.f32 %v4395, 1.442695
      %v4452 = vpow.pop %v4451
      %v4453 = vmul.f32 %v4396, 1.442695
      %v4454 = vpow.pop %v4453
      %v4455 = vmul.f32 %v4397, 1.442695
      %v4456 = vpow.pop %v4455
      %v4457 = vmul.f32 %v4398, 1.442695
      %v4458 = vpow.pop %v4457
      %v4459 = vmul.f32 %v4399, 1.442695
      %v4460 = vpow.pop %v4459
      %v4461 = vmul.f32 %v4400, 1.442695
      %v4462 = vpow.pop %v4461
      %v4463 = vmul.f32 %v4401, 1.442695
      %v4464 = vpow.pop %v4463
      %v4465 = vmul.f32 %v4402, 1.442695
      %v4466 = vpow.pop %v4465
      %v4467 = vadd.f32 %v4404, %v4406
      %4468 = vadd.xlane.f32.xlu0 %v4467
      %v4469 = vpop.xlane.xlu0 %4468
      %v4470 = vadd.f32 %v4408, %v4410
      %4471 = vadd.xlane.f32.xlu0 %v4470
      %v4472 = vpop.xlane.xlu0 %4471
      %v4473 = vadd.f32 %v4412, %v4414
      %4474 = vadd.xlane.f32.xlu0 %v4473
      %v4475 = vpop.xlane.xlu0 %4474
      %v4476 = vadd.f32 %v4416, %v4418
      %4477 = vadd.xlane.f32.xlu0 %v4476
      %v4478 = vpop.xlane.xlu0 %4477
      %v4479 = vadd.f32 %v4420, %v4422
      %4480 = vadd.xlane.f32.xlu0 %v4479
      %v4481 = vpop.xlane.xlu0 %4480
      %v4482 = vadd.f32 %v4424, %v4426
      %4483 = vadd.xlane.f32.xlu0 %v4482
      %v4484 = vpop.xlane.xlu0 %4483
      %v4485 = vadd.f32 %v4428, %v4430
      %4486 = vadd.xlane.f32.xlu0 %v4485
      %v4487 = vpop.xlane.xlu0 %4486
      %v4488 = vadd.f32 %v4432, %v4434
      %4489 = vadd.xlane.f32.xlu0 %v4488
      %v4490 = vpop.xlane.xlu0 %4489
      %v4491 = vadd.f32 %v4436, %v4438
      %4492 = vadd.xlane.f32.xlu0 %v4491
      %v4493 = vpop.xlane.xlu0 %4492
      %v4494 = vadd.f32 %v4440, %v4442
      %4495 = vadd.xlane.f32.xlu0 %v4494
      %v4496 = vpop.xlane.xlu0 %4495
      %v4497 = vadd.f32 %v4444, %v4446
      %4498 = vadd.xlane.f32.xlu0 %v4497
      %v4499 = vpop.xlane.xlu0 %4498
      %v4500 = vadd.f32 %v4448, %v4450
      %4501 = vadd.xlane.f32.xlu0 %v4500
      %v4502 = vpop.xlane.xlu0 %4501
      %v4503 = vadd.f32 %v4452, %v4454
      %4504 = vadd.xlane.f32.xlu0 %v4503
      %v4505 = vpop.xlane.xlu0 %4504
      %v4506 = vadd.f32 %v4456, %v4458
      %4507 = vadd.xlane.f32.xlu0 %v4506
      %v4508 = vpop.xlane.xlu0 %4507
      %v4509 = vadd.f32 %v4460, %v4462
      %4510 = vadd.xlane.f32.xlu0 %v4509
      %v4511 = vpop.xlane.xlu0 %4510
      %v4512 = vadd.f32 %v4464, %v4466
      %4513 = vadd.xlane.f32.xlu0 %v4512
      %v4514 = vpop.xlane.xlu0 %4513
      %v4515 = vpack.c.bf16 %v4408, %v4404
      %v4516 = vpack.c.bf16 %v4410, %v4406
      %v4517 = vpack.c.bf16 %v4416, %v4412
      %v4518 = vpack.c.bf16 %v4418, %v4414
      %v4519 = vpack.c.bf16 %v4424, %v4420
      %v4520 = vpack.c.bf16 %v4426, %v4422
      %v4521 = vpack.c.bf16 %v4432, %v4428
      %v4522 = vpack.c.bf16 %v4434, %v4430
      %v4523 = vpack.c.bf16 %v4440, %v4436
      %v4524 = vpack.c.bf16 %v4442, %v4438
      %v4525 = vpack.c.bf16 %v4448, %v4444
      %v4526 = vpack.c.bf16 %v4450, %v4446
      %v4527 = vpack.c.bf16 %v4456, %v4452
      %v4528 = vpack.c.bf16 %v4458, %v4454
      %v4529 = vpack.c.bf16 %v4464, %v4460
      %v4530 = vpack.c.bf16 %v4466, %v4462
      %4531 = vmatpush.bf16.msra.mxu0 %v2617
      %4532 = vmatpush.bf16.msra.mxu0 %v2615
      %4533 = vmatpush.bf16.msra.mxu0 %v2613
      %4534 = vmatpush.bf16.msra.mxu0 %v2611
      %4535 = vmatpush.bf16.msra.mxu0 %v2609
      %4536 = vmatpush.bf16.msra.mxu0 %v2607
      %4537 = vmatpush.bf16.msra.mxu0 %v2605
      %4538 = vmatpush.bf16.msra.mxu0 %v2603
      %4539 = vmatmul.bf16.gmra.mxu0 %v4515
      %v4540 = vpop.f32.mrf.mxu0
      %v4541 = vadd.f32 0.0, %v4540
      %v4542 = vpop.f32.mrf.mxu0
      %v4543 = vadd.f32 0.0, %v4542
      %4544 = vmatmul.bf16.gmra.mxu0 %v4517
      %v4545 = vpop.f32.mrf.mxu0
      %v4546 = vadd.f32 0.0, %v4545
      %v4547 = vpop.f32.mrf.mxu0
      %v4548 = vadd.f32 0.0, %v4547
      %4549 = vmatmul.bf16.gmra.mxu0 %v4519
      %v4550 = vpop.f32.mrf.mxu0
      %v4551 = vadd.f32 0.0, %v4550
      %v4552 = vpop.f32.mrf.mxu0
      %v4553 = vadd.f32 0.0, %v4552
      %4554 = vmatmul.bf16.gmra.mxu0 %v4521
      %v4555 = vpop.f32.mrf.mxu0
      %v4556 = vadd.f32 0.0, %v4555
      %v4557 = vpop.f32.mrf.mxu0
      %v4558 = vadd.f32 0.0, %v4557
      %4559 = vmatmul.bf16.gmra.mxu0 %v4523
      %v4560 = vpop.f32.mrf.mxu0
      %v4561 = vadd.f32 0.0, %v4560
      %v4562 = vpop.f32.mrf.mxu0
      %v4563 = vadd.f32 0.0, %v4562
      %4564 = vmatmul.bf16.gmra.mxu0 %v4525
      %v4565 = vpop.f32.mrf.mxu0
      %v4566 = vadd.f32 0.0, %v4565
      %v4567 = vpop.f32.mrf.mxu0
      %v4568 = vadd.f32 0.0, %v4567
      %4569 = vmatmul.bf16.gmra.mxu0 %v4527
      %v4570 = vpop.f32.mrf.mxu0
      %v4571 = vadd.f32 0.0, %v4570
      %v4572 = vpop.f32.mrf.mxu0
      %v4573 = vadd.f32 0.0, %v4572
      %4574 = vmatmul.bf16.gmra.mxu0 %v4529
      %v4575 = vpop.f32.mrf.mxu0
      %v4576 = vadd.f32 0.0, %v4575
      %v4577 = vpop.f32.mrf.mxu0
      %v4578 = vadd.f32 0.0, %v4577
      %4579 = vdwg.mxu0
      %4580 = vmatpush.bf16.msra.mxu0 %v2633
      %4581 = vmatpush.bf16.msra.mxu0 %v2631
      %4582 = vmatpush.bf16.msra.mxu0 %v2629
      %4583 = vmatpush.bf16.msra.mxu0 %v2627
      %4584 = vmatpush.bf16.msra.mxu0 %v2625
      %4585 = vmatpush.bf16.msra.mxu0 %v2623
      %4586 = vmatpush.bf16.msra.mxu0 %v2621
      %4587 = vmatpush.bf16.msra.mxu0 %v2619
      %4588 = vmatmul.bf16.gmra.mxu0 %v4516
      %v4589 = vpop.f32.mrf.mxu0
      %v4590 = vadd.f32 %v4541, %v4589
      %v4591 = vpop.f32.mrf.mxu0
      %v4592 = vadd.f32 %v4543, %v4591
      %4593 = vmatmul.bf16.gmra.mxu0 %v4518
      %v4594 = vpop.f32.mrf.mxu0
      %v4595 = vadd.f32 %v4546, %v4594
      %v4596 = vpop.f32.mrf.mxu0
      %v4597 = vadd.f32 %v4548, %v4596
      %4598 = vmatmul.bf16.gmra.mxu0 %v4520
      %v4599 = vpop.f32.mrf.mxu0
      %v4600 = vadd.f32 %v4551, %v4599
      %v4601 = vpop.f32.mrf.mxu0
      %v4602 = vadd.f32 %v4553, %v4601
      %4603 = vmatmul.bf16.gmra.mxu0 %v4522
      %v4604 = vpop.f32.mrf.mxu0
      %v4605 = vadd.f32 %v4556, %v4604
      %v4606 = vpop.f32.mrf.mxu0
      %v4607 = vadd.f32 %v4558, %v4606
      %4608 = vmatmul.bf16.gmra.mxu0 %v4524
      %v4609 = vpop.f32.mrf.mxu0
      %v4610 = vadd.f32 %v4561, %v4609
      %v4611 = vpop.f32.mrf.mxu0
      %v4612 = vadd.f32 %v4563, %v4611
      %4613 = vmatmul.bf16.gmra.mxu0 %v4526
      %v4614 = vpop.f32.mrf.mxu0
      %v4615 = vadd.f32 %v4566, %v4614
      %v4616 = vpop.f32.mrf.mxu0
      %v4617 = vadd.f32 %v4568, %v4616
      %4618 = vmatmul.bf16.gmra.mxu0 %v4528
      %v4619 = vpop.f32.mrf.mxu0
      %v4620 = vadd.f32 %v4571, %v4619
      %v4621 = vpop.f32.mrf.mxu0
      %v4622 = vadd.f32 %v4573, %v4621
      %4623 = vmatmul.bf16.gmra.mxu0 %v4530
      %v4624 = vpop.f32.mrf.mxu0
      %v4625 = vadd.f32 %v4576, %v4624
      %v4626 = vpop.f32.mrf.mxu0
      %v4627 = vadd.f32 %v4578, %v4626
      %4628 = vdwg.mxu0
      %v4629 = vrcp.pop %v4469
      %v4630 = vrcp.pop %v4472
      %v4631 = vrcp.pop %v4475
      %v4632 = vrcp.pop %v4478
      %v4633 = vrcp.pop %v4481
      %v4634 = vrcp.pop %v4484
      %v4635 = vrcp.pop %v4487
      %v4636 = vrcp.pop %v4490
      %v4637 = vrcp.pop %v4493
      %v4638 = vrcp.pop %v4496
      %v4639 = vrcp.pop %v4499
      %v4640 = vrcp.pop %v4502
      %v4641 = vrcp.pop %v4505
      %v4642 = vrcp.pop %v4508
      %v4643 = vrcp.pop %v4511
      %v4644 = vrcp.pop %v4514
      %v4645 = vmul.f32 %v4590, %v4629
      %v4646 = vmul.f32 %v4592, %v4630
      %v4647 = vmul.f32 %v4595, %v4631
      %v4648 = vmul.f32 %v4597, %v4632
      %v4649 = vmul.f32 %v4600, %v4633
      %v4650 = vmul.f32 %v4602, %v4634
      %v4651 = vmul.f32 %v4605, %v4635
      %v4652 = vmul.f32 %v4607, %v4636
      %v4653 = vmul.f32 %v4610, %v4637
      %v4654 = vmul.f32 %v4612, %v4638
      %v4655 = vmul.f32 %v4615, %v4639
      %v4656 = vmul.f32 %v4617, %v4640
      %v4657 = vmul.f32 %v4620, %v4641
      %v4658 = vmul.f32 %v4622, %v4642
      %v4659 = vmul.f32 %v4625, %v4643
      %v4660 = vmul.f32 %v4627, %v4644
      %4677 = vrot.lane.b32.xlu0 %v4121, 5
      %v4678 = vpop.permute.xlu0 %4677
      %4679 = vrot.lane.b32.xlu0 %v4122, 5
      %v4680 = vpop.permute.xlu0 %4679
      %4681 = vrot.lane.b32.xlu0 %v4123, 5
      %v4682 = vpop.permute.xlu0 %4681
      %4683 = vrot.lane.b32.xlu0 %v4124, 5
      %v4684 = vpop.permute.xlu0 %4683
      %4685 = vrot.lane.b32.xlu0 %v4125, 5
      %v4686 = vpop.permute.xlu0 %4685
      %4687 = vrot.lane.b32.xlu0 %v4126, 5
      %v4688 = vpop.permute.xlu0 %4687
      %4689 = vrot.lane.b32.xlu0 %v4127, 5
      %v4690 = vpop.permute.xlu0 %4689
      %4691 = vrot.lane.b32.xlu0 %v4128, 5
      %v4692 = vpop.permute.xlu0 %4691
      %4693 = vrot.lane.b32.xlu0 %v4129, 5
      %v4694 = vpop.permute.xlu0 %4693
      %4695 = vrot.lane.b32.xlu0 %v4130, 5
      %v4696 = vpop.permute.xlu0 %4695
      %4697 = vrot.lane.b32.xlu0 %v4131, 5
      %v4698 = vpop.permute.xlu0 %4697
      %4699 = vrot.lane.b32.xlu0 %v4132, 5
      %v4700 = vpop.permute.xlu0 %4699
      %4701 = vrot.lane.b32.xlu0 %v4133, 5
      %v4702 = vpop.permute.xlu0 %4701
      %4703 = vrot.lane.b32.xlu0 %v4134, 5
      %v4704 = vpop.permute.xlu0 %4703
      %4705 = vrot.lane.b32.xlu0 %v4135, 5
      %v4706 = vpop.permute.xlu0 %4705
      %4707 = vrot.lane.b32.xlu0 %v4136, 5
      %v4708 = vpop.permute.xlu0 %4707
      %4741 = vrot.lane.b32.xlu0 %v4645, 10
      %v4742 = vpop.permute.xlu0 %4741
      %4743 = vrot.lane.b32.xlu0 %v4646, 10
      %v4744 = vpop.permute.xlu0 %4743
      %4745 = vrot.lane.b32.xlu0 %v4647, 10
      %v4746 = vpop.permute.xlu0 %4745
      %4747 = vrot.lane.b32.xlu0 %v4648, 10
      %v4748 = vpop.permute.xlu0 %4747
      %4749 = vrot.lane.b32.xlu0 %v4649, 10
      %v4750 = vpop.permute.xlu0 %4749
      %4751 = vrot.lane.b32.xlu0 %v4650, 10
      %v4752 = vpop.permute.xlu0 %4751
      %4753 = vrot.lane.b32.xlu0 %v4651, 10
      %v4754 = vpop.permute.xlu0 %4753
      %4755 = vrot.lane.b32.xlu0 %v4652, 10
      %v4756 = vpop.permute.xlu0 %4755
      %4757 = vrot.lane.b32.xlu0 %v4653, 10
      %v4758 = vpop.permute.xlu0 %4757
      %4759 = vrot.lane.b32.xlu0 %v4654, 10
      %v4760 = vpop.permute.xlu0 %4759
      %4761 = vrot.lane.b32.xlu0 %v4655, 10
      %v4762 = vpop.permute.xlu0 %4761
      %4763 = vrot.lane.b32.xlu0 %v4656, 10
      %v4764 = vpop.permute.xlu0 %4763
      %4765 = vrot.lane.b32.xlu0 %v4657, 10
      %v4766 = vpop.permute.xlu0 %4765
      %4767 = vrot.lane.b32.xlu0 %v4658, 10
      %v4768 = vpop.permute.xlu0 %4767
      %4769 = vrot.lane.b32.xlu0 %v4659, 10
      %v4770 = vpop.permute.xlu0 %4769
      %4771 = vrot.lane.b32.xlu0 %v4660, 10
      %v4772 = vpop.permute.xlu0 %4771
      %v4789 = vsel %vm909, %v3589, %v4678
      %v4790 = vsel %vm909, %v3590, %v4680
      %v4791 = vsel %vm909, %v3591, %v4682
      %v4792 = vsel %vm909, %v3592, %v4684
      %v4793 = vsel %vm909, %v3593, %v4686
      %v4794 = vsel %vm909, %v3594, %v4688
      %v4795 = vsel %vm909, %v3595, %v4690
      %v4796 = vsel %vm909, %v3596, %v4692
      %v4797 = vsel %vm909, %v3597, %v4694
      %v4798 = vsel %vm909, %v3598, %v4696
      %v4799 = vsel %vm909, %v3599, %v4698
      %v4800 = vsel %vm909, %v3600, %v4700
      %v4801 = vsel %vm909, %v3601, %v4702
      %v4802 = vsel %vm909, %v3602, %v4704
      %v4803 = vsel %vm909, %v3603, %v4706
      %v4804 = vsel %vm909, %v3604, %v4708
      %v4805 = vsel %vm2924, %v4789, %v4742
      %v4806 = vsel %vm2924, %v4790, %v4744
      %v4807 = vsel %vm2924, %v4791, %v4746
      %v4808 = vsel %vm2924, %v4792, %v4748
      %v4809 = vsel %vm2924, %v4793, %v4750
      %v4810 = vsel %vm2924, %v4794, %v4752
      %v4811 = vsel %vm2924, %v4795, %v4754
      %v4812 = vsel %vm2924, %v4796, %v4756
      %v4813 = vsel %vm2924, %v4797, %v4758
      %v4814 = vsel %vm2924, %v4798, %v4760
      %v4815 = vsel %vm2924, %v4799, %v4762
      %v4816 = vsel %vm2924, %v4800, %v4764
      %v4817 = vsel %vm2924, %v4801, %v4766
      %v4818 = vsel %vm2924, %v4802, %v4768
      %v4819 = vsel %vm2924, %v4803, %v4770
      %v4820 = vsel %vm2924, %v4804, %v4772
      %v4821 = vpack.c.bf16 %v4806, %v4805
      %v4822 = vpack.c.bf16 %v4808, %v4807
      %v4823 = vpack.c.bf16 %v4810, %v4809
      %v4824 = vpack.c.bf16 %v4812, %v4811
      %v4825 = vpack.c.bf16 %v4814, %v4813
      %v4826 = vpack.c.bf16 %v4816, %v4815
      %v4827 = vpack.c.bf16 %v4818, %v4817
      %v4828 = vpack.c.bf16 %v4820, %v4819
      %v4829 = vld [vmem:[%s5] sm:$0xf]
      %v4830 = vld [vmem:[%s5 + $0x4] sm:$0xf]
      %v4833 = vunpack.c.l.b16 %v4829
      %v4834 = vunpack.c.l.b16 %v4830
      %v4835 = vpack.c.b16 %v4834, %v4833
      %v4837 = vsel %vm2956, %v4821, 0
      %v4840 = vsel %vm2956, %v4822, 0
      %v4843 = vsel %vm2956, %v4823, 0
      %v4846 = vsel %vm2956, %v4824, 0
      %v4849 = vsel %vm2956, %v4825, 0
      %v4852 = vsel %vm2956, %v4826, 0
      %v4855 = vsel %vm2956, %v4827, 0
      %v4858 = vsel %vm2956, %v4828, 0
      %v4861 = vand.u32 %v4835, %v2984
      %4863 = vmatpush.bf16.msra.mxu0 0
      %4864 = vmatpush.bf16.msra.mxu0 0
      %4865 = vmatpush.bf16.msra.mxu0 0
      %4866 = vmatpush.bf16.msra.mxu0 0
      %4867 = vmatpush.bf16.msra.mxu0 0
      %4868 = vmatpush.bf16.msra.mxu0 0
      %4869 = vmatpush.bf16.msra.mxu0 0
      %4870 = vmatpush.bf16.msra.mxu0 %v4861
      %4871 = vmatmul.bf16.gmra.mxu0 %v4837
      %v4872 = vpop.f32.mrf.mxu0
      %v4873 = vadd.f32 0.0, %v4872
      %v4874 = vpop.f32.mrf.mxu0
      %v4875 = vadd.f32 0.0, %v4874
      %4876 = vmatmul.bf16.gmra.mxu0 %v4840
      %v4877 = vpop.f32.mrf.mxu0
      %v4878 = vadd.f32 0.0, %v4877
      %v4879 = vpop.f32.mrf.mxu0
      %v4880 = vadd.f32 0.0, %v4879
      %4881 = vmatmul.bf16.gmra.mxu0 %v4843
      %v4882 = vpop.f32.mrf.mxu0
      %v4883 = vadd.f32 0.0, %v4882
      %v4884 = vpop.f32.mrf.mxu0
      %v4885 = vadd.f32 0.0, %v4884
      %4886 = vmatmul.bf16.gmra.mxu0 %v4846
      %v4887 = vpop.f32.mrf.mxu0
      %v4888 = vadd.f32 0.0, %v4887
      %v4889 = vpop.f32.mrf.mxu0
      %v4890 = vadd.f32 0.0, %v4889
      %4891 = vmatmul.bf16.gmra.mxu0 %v4849
      %v4892 = vpop.f32.mrf.mxu0
      %v4893 = vadd.f32 0.0, %v4892
      %v4894 = vpop.f32.mrf.mxu0
      %v4895 = vadd.f32 0.0, %v4894
      %4896 = vmatmul.bf16.gmra.mxu0 %v4852
      %v4897 = vpop.f32.mrf.mxu0
      %v4898 = vadd.f32 0.0, %v4897
      %v4899 = vpop.f32.mrf.mxu0
      %v4900 = vadd.f32 0.0, %v4899
      %4901 = vmatmul.bf16.gmra.mxu0 %v4855
      %v4902 = vpop.f32.mrf.mxu0
      %v4903 = vadd.f32 0.0, %v4902
      %v4904 = vpop.f32.mrf.mxu0
      %v4905 = vadd.f32 0.0, %v4904
      %4906 = vmatmul.bf16.gmra.mxu0 %v4858
      %v4907 = vpop.f32.mrf.mxu0
      %v4908 = vadd.f32 0.0, %v4907
      %v4909 = vpop.f32.mrf.mxu0
      %v4910 = vadd.f32 0.0, %v4909
      %4911 = vdwg.mxu0
      %v4912 = vadd.f32 %v527, %v4873
      %v4913 = vadd.f32 %v528, %v4875
      %v4914 = vadd.f32 %v529, %v4878
      %v4915 = vadd.f32 %v530, %v4880
      %v4916 = vadd.f32 %v531, %v4883
      %v4917 = vadd.f32 %v532, %v4885
      %v4918 = vadd.f32 %v533, %v4888
      %v4919 = vadd.f32 %v534, %v4890
      %v4920 = vadd.f32 %v535, %v4893
      %v4921 = vadd.f32 %v536, %v4895
      %v4922 = vadd.f32 %v537, %v4898
      %v4923 = vadd.f32 %v538, %v4900
      %v4924 = vadd.f32 %v539, %v4903
      %v4925 = vadd.f32 %v540, %v4905
      %v4926 = vadd.f32 %v541, %v4908
      %v4927 = vadd.f32 %v542, %v4910
      %v4928 = vld [vmem:[%s6] sm:$0x1]
      %v4930 = vperm.slane %v4928, 0
      %v4932 = vadd.f32 %v4912, %v4930
      %v4933 = vadd.f32 %v4913, %v4930
      %v4934 = vadd.f32 %v4914, %v4930
      %v4935 = vadd.f32 %v4915, %v4930
      %v4936 = vadd.f32 %v4916, %v4930
      %v4937 = vadd.f32 %v4917, %v4930
      %v4938 = vadd.f32 %v4918, %v4930
      %v4939 = vadd.f32 %v4919, %v4930
      %v4940 = vadd.f32 %v4920, %v4930
      %v4941 = vadd.f32 %v4921, %v4930
      %v4942 = vadd.f32 %v4922, %v4930
      %v4943 = vadd.f32 %v4923, %v4930
      %v4944 = vadd.f32 %v4924, %v4930
      %v4945 = vadd.f32 %v4925, %v4930
      %v4946 = vadd.f32 %v4926, %v4930
      %v4947 = vadd.f32 %v4927, %v4930
      %4948 = vst.msk [vmem:[%s305 + $0x80] sm:$0xff] %vm571, %v4932
      %4949 = vst.msk [vmem:[%s305 + $0x88] sm:$0xff] %vm571, %v4933
      %4950 = vst.msk [vmem:[%s305 + $0x90] sm:$0xff] %vm571, %v4934
      %4951 = vst.msk [vmem:[%s305 + $0x98] sm:$0xff] %vm571, %v4935
      %4952 = vst.msk [vmem:[%s305 + $0xa0] sm:$0xff] %vm571, %v4936
      %4953 = vst.msk [vmem:[%s305 + $0xa8] sm:$0xff] %vm571, %v4937
      %4954 = vst.msk [vmem:[%s305 + $0xb0] sm:$0xff] %vm571, %v4938
      %4955 = vst.msk [vmem:[%s305 + $0xb8] sm:$0xff] %vm571, %v4939
      %4956 = vst.msk [vmem:[%s305 + $0xc0] sm:$0xff] %vm571, %v4940
      %4957 = vst.msk [vmem:[%s305 + $0xc8] sm:$0xff] %vm571, %v4941
      %4958 = vst.msk [vmem:[%s305 + $0xd0] sm:$0xff] %vm571, %v4942
      %4959 = vst.msk [vmem:[%s305 + $0xd8] sm:$0xff] %vm571, %v4943
      %4960 = vst.msk [vmem:[%s305 + $0xe0] sm:$0xff] %vm571, %v4944
      %4961 = vst.msk [vmem:[%s305 + $0xe8] sm:$0xff] %vm571, %v4945
      %4962 = vst.msk [vmem:[%s305 + $0xf0] sm:$0xff] %vm571, %v4946
      %4963 = vst.msk [vmem:[%s305 + $0xf8] sm:$0xff] %vm571, %v4947
      %p4964 = scmp.lt.s32.totalorder %s19, 1
      %s4965 = scalar_select %p4964, %s19, 1
      %s4966 = smul.addr %s4965, 32
      %s4967 = smul.addr %s4966, 8
      %s4968 = scalar_lea.vmem %s8, %s4967
      // Predicated region
      $region53: #{mtl2d_deepsvdd_forward.3} parent=51 // pred_check
        %p4969 = pneg %p210
      $region54: #{mtl2d_deepsvdd_forward.3} parent=51 // pred_check_branch
        %4971 = sbr.rel (%p4969) target = $region56
      $region55: #{mtl2d_deepsvdd_forward.3} parent=51 // pred_region
        _
      $region56: #{mtl2d_deepsvdd_forward.3} parent=51 // pred_fallthru
        _
    $region52: #{mtl2d_deepsvdd_forward.3} parent=5 // pred_fallthru
      _
    %p4972 = scmp.le.s32.totalorder 2, %s14
    // Predicated region
    $region57: #{mtl2d_deepsvdd_forward.3} parent=5 // pred_check
      %p4973 = pneg %p4972
    $region58: #{mtl2d_deepsvdd_forward.3} parent=5 // pred_check_branch
      %4975 = sbr.rel (%p4973) target = $region60
    $region59: #{mtl2d_deepsvdd_forward.3} parent=5 // pred_region
      %s4976 = ssub.s32 %s14, 2
      // Predicated region
      $region61: #{mtl2d_deepsvdd_forward.3} parent=59 // pred_check
        %p4977 = pneg %p216
      $region62: #{mtl2d_deepsvdd_forward.3} parent=59 // pred_check_branch
        %4979 = sbr.rel (%p4977) target = $region64
      $region63: #{mtl2d_deepsvdd_forward.3} parent=59 // pred_region
        %p4980 = scmp.lt.s32.totalorder %s20, 1
        %s4981 = scalar_select %p4980, %s20, 1
        %s4982 = smul.addr %s4981, 32
        %s4983 = smul.addr %s4982, 8
        %s4984 = scalar_lea.vmem %s8, %s4983
      $region64: #{mtl2d_deepsvdd_forward.3} parent=59 // pred_fallthru
        _
    $region60: #{mtl2d_deepsvdd_forward.3} parent=5 // pred_fallthru
      _
  $region6: #{mtl2d_deepsvdd_forward.3} parent=0 // loop_footer
    %s18 = sadd.s32 1, %s14
  $region7: #{mtl2d_deepsvdd_forward.3} parent=0 // loop_footer_branch
    %13 = sbr.rel target = $region3
  $region8: #{mtl2d_deepsvdd_forward.3} parent=0 // loop_exit
    _

// kernel: mtl2d_deepsvdd_forward.5
$region0: #{mtl2d_deepsvdd_forward.5}
  #allocation0 [shape = 'u32[]', space=smem, size = 0x4, offset = 0x4, fixed_abs, tag = 'smem constant byte address 0x4 - core index']
  #allocation1 [shape = 'u32[72,128]{1,0:T(1,128)}', space=vmem, size = 0x9000, scoped, tag = 'internal scratch']
  %s0 = inlined_call_operand.vmem [shape: f32[2,16,288], index: 0, kind: input, shape index: {}]
  %s1 = inlined_call_operand.vmem [shape: bf16[288,64], index: 1, kind: input, shape index: {}]
  %s2 = inlined_call_operand.vmem [shape: f32[1,64], index: 2, kind: input, shape index: {}]
  %s3 = inlined_call_operand.vmem [shape: bf16[64,189], index: 3, kind: input, shape index: {}]
  %s4 = inlined_call_operand.vmem [shape: f32[1,189], index: 4, kind: input, shape index: {}]
  %s5 = inlined_call_operand.vmem [shape: bf16[63,64], index: 5, kind: input, shape index: {}]
  %s6 = inlined_call_operand.vmem [shape: f32[1,64], index: 6, kind: input, shape index: {}]
  %s7 = inlined_call_operand.vmem [shape: bf16[3,16,16], index: 7, kind: input, shape index: {}]
  %s8 = inlined_call_operand.vmem [shape: bf16[64,4], index: 8, kind: input, shape index: {}]
  %s9 = inlined_call_operand.vmem [shape: f32[1,4], index: 9, kind: input, shape index: {}]
  %s10 = inlined_call_operand.hbm [shape: f32[2,16,64], index: 10, kind: output, shape index: {0}]
  %s11 = inlined_call_operand.hbm [shape: f32[2,1,64], index: 11, kind: output, shape index: {1}]
  %s12 = inlined_call_operand.hbm [shape: f32[2,1,4], index: 12, kind: output, shape index: {2}]
  %13 = xla_tuple %s10, %s11, %s12
  %s14 = sld [smem:[#allocation0]]
  $region89: #{mtl2d_deepsvdd_forward.5} parent=0
    _
  %s16 = ssub.s32 1, %s14
  %s17 = scalar_select 0, %s16, %s14
  $region1: #{mtl2d_deepsvdd_forward.5} parent=0
    #allocation2 [shape = 'u8[16384]{0}', space=vmem, size = 0x4000, scoped, tag = 'output window, operand 0']
    #allocation3 [shape = 's32[2]{0}', space=sflag, size = 0x8, scoped, tag = 'scoped memory for mtl2d_deepsvdd_forward.5']
    #allocation4 [shape = 'u8[1024]{0}', space=vmem, size = 0x400, scoped, tag = 'output window, operand 1']
    #allocation5 [shape = 's32[2]{0}', space=sflag, size = 0x8, scoped, tag = 'scoped memory for mtl2d_deepsvdd_forward.5']
    #allocation6 [shape = 'u8[1024]{0}', space=vmem, size = 0x400, scoped, tag = 'output window, operand 2']
    %18 = vsyncpa [#allocation3], 0
    %s19 = scalar_lea.sflag [#allocation3], 1
    %20 = vsyncpa %s19, 0
    %21 = vsyncpa [#allocation5], 0
    %s22 = scalar_lea.sflag [#allocation5], 1
    %23 = vsyncpa %s22, 0
    loop: start=0, step=1, limit=4
    $region2: #{mtl2d_deepsvdd_forward.5} parent=1 // loop_pre_header
      _
    $region3: #{mtl2d_deepsvdd_forward.5} parent=1 // loop_header
      %s25 = sphi 0, %s29
      %p26 = scmp.ge.s32.totalorder %s25, 4
      %s35 = sphi 0, %s37
      %s38 = sphi 0, %s35
      %s39 = sphi 0, %s38
      %s55 = sphi 0, %s39
      %s59 = sphi 0, %s59
      %s61 = sphi 0, %s59
      %s62 = sphi 0, %s61
      %s76 = sphi 0, %s62
      %s80 = sphi 0, %s80
      %s82 = sphi 0, %s80
      %s83 = sphi 0, %s82
      %s97 = sphi 0, %s83
      %s101 = sphi 0, %s101
      %s103 = sphi 0, %s101
      %s104 = sphi 0, %s103
      %s118 = sphi 0, %s104
      %s122 = sphi 0, %s122
      %s124 = sphi 0, %s122
      %s125 = sphi 0, %s124
      %s139 = sphi 0, %s125
      %s143 = sphi 0, %s143
      %s145 = sphi 0, %s143
      %s146 = sphi 0, %s145
      %s160 = sphi 0, %s146
      %s164 = sphi 0, %s164
      %s166 = sphi 0, %s164
      %s167 = sphi 0, %s166
      %s181 = sphi 0, %s167
      %s185 = sphi 0, %s185
      %s187 = sphi 0, %s185
      %s188 = sphi 0, %s187
      %s202 = sphi 0, %s188
      %s206 = sphi 0, %s206
      %s208 = sphi 0, %s206
      %s209 = sphi 0, %s208
      %s223 = sphi 0, %s209
      %s227 = sphi 0, %s227
      %s229 = sphi 0, %s227
      %s230 = sphi 0, %s229
      %s244 = sphi 0, %s230
      %s250 = sphi 0, %s252
      %s253 = sphi 0, %s250
      %s254 = sphi 0, %s253
      %s270 = sphi 0, %s254
      %s276 = sphi 0, %s278
      %s279 = sphi 0, %s276
      %s280 = sphi 0, %s279
      %s296 = sphi 0, %s280
      %s302 = sphi 0, %s304
      %s305 = sphi 0, %s302
      %s306 = sphi 0, %s305
      %s322 = sphi 0, %s306
    $region4: #{mtl2d_deepsvdd_forward.5} parent=1 // loop_header_branch
      %28 = sbr.rel (%p26) target = $region8
    $region5: #{mtl2d_deepsvdd_forward.5} parent=1 // loop_body
      %s30 = ssub.s32 %s25, 1
      %s31 = ssub.s32 %s25, 2
      %s32 = sadd.s32 %s25, 1
      %s33 = ssub.s32 %s25, %s32
      %p34 = scmp.eq.s32.totalorder %s33, 0
      %s36 = sadd.s32 %s35, 1
      %s37 = scalar_select %p34, %s35, %s36
      %p40 = pneg %p34
      %p41 = scmp.eq.s32.totalorder %s25, 1
      %p42 = por %p40, %p41
      %p43 = scmp.ne.s32.totalorder %s35, %s38
      %p44 = scmp.eq.s32.totalorder %s25, 0
      %p45 = por %p43, %p44
      %p46 = scmp.ne.s32.totalorder %s35, %s38
      %p47 = scmp.eq.s32.totalorder %s30, 1
      %p48 = por %p46, %p47
      %p49 = scmp.ne.s32.totalorder %s38, %s39
      %p50 = scmp.eq.s32.totalorder %s30, 0
      %p51 = por %p49, %p50
      %p52 = scmp.ne.s32.totalorder %s38, %s39
      %p53 = scmp.eq.s32.totalorder %s31, 1
      %p54 = por %p52, %p53
      %p56 = scmp.ne.s32.totalorder %s39, %s55
      %p57 = scmp.eq.s32.totalorder %s31, 0
      %p58 = por %p56, %p57
      %s60 = sadd.s32 %s59, 1
      %p63 = scmp.eq.s32.totalorder %s25, 1
      %p64 = scmp.ne.s32.totalorder %s59, %s61
      %p65 = scmp.eq.s32.totalorder %s25, 0
      %p66 = por %p64, %p65
      %p67 = scmp.ne.s32.totalorder %s59, %s61
      %p68 = scmp.eq.s32.totalorder %s30, 1
      %p69 = por %p67, %p68
      %p70 = scmp.ne.s32.totalorder %s61, %s62
      %p71 = scmp.eq.s32.totalorder %s30, 0
      %p72 = por %p70, %p71
      %p73 = scmp.ne.s32.totalorder %s61, %s62
      %p74 = scmp.eq.s32.totalorder %s31, 1
      %p75 = por %p73, %p74
      %p77 = scmp.ne.s32.totalorder %s62, %s76
      %p78 = scmp.eq.s32.totalorder %s31, 0
      %p79 = por %p77, %p78
      %s81 = sadd.s32 %s80, 1
      %p84 = scmp.eq.s32.totalorder %s25, 1
      %p85 = scmp.ne.s32.totalorder %s80, %s82
      %p86 = scmp.eq.s32.totalorder %s25, 0
      %p87 = por %p85, %p86
      %p88 = scmp.ne.s32.totalorder %s80, %s82
      %p89 = scmp.eq.s32.totalorder %s30, 1
      %p90 = por %p88, %p89
      %p91 = scmp.ne.s32.totalorder %s82, %s83
      %p92 = scmp.eq.s32.totalorder %s30, 0
      %p93 = por %p91, %p92
      %p94 = scmp.ne.s32.totalorder %s82, %s83
      %p95 = scmp.eq.s32.totalorder %s31, 1
      %p96 = por %p94, %p95
      %p98 = scmp.ne.s32.totalorder %s83, %s97
      %p99 = scmp.eq.s32.totalorder %s31, 0
      %p100 = por %p98, %p99
      %s102 = sadd.s32 %s101, 1
      %p105 = scmp.eq.s32.totalorder %s25, 1
      %p106 = scmp.ne.s32.totalorder %s101, %s103
      %p107 = scmp.eq.s32.totalorder %s25, 0
      %p108 = por %p106, %p107
      %p109 = scmp.ne.s32.totalorder %s101, %s103
      %p110 = scmp.eq.s32.totalorder %s30, 1
      %p111 = por %p109, %p110
      %p112 = scmp.ne.s32.totalorder %s103, %s104
      %p113 = scmp.eq.s32.totalorder %s30, 0
      %p114 = por %p112, %p113
      %p115 = scmp.ne.s32.totalorder %s103, %s104
      %p116 = scmp.eq.s32.totalorder %s31, 1
      %p117 = por %p115, %p116
      %p119 = scmp.ne.s32.totalorder %s104, %s118
      %p120 = scmp.eq.s32.totalorder %s31, 0
      %p121 = por %p119, %p120
      %s123 = sadd.s32 %s122, 1
      %p126 = scmp.eq.s32.totalorder %s25, 1
      %p127 = scmp.ne.s32.totalorder %s122, %s124
      %p128 = scmp.eq.s32.totalorder %s25, 0
      %p129 = por %p127, %p128
      %p130 = scmp.ne.s32.totalorder %s122, %s124
      %p131 = scmp.eq.s32.totalorder %s30, 1
      %p132 = por %p130, %p131
      %p133 = scmp.ne.s32.totalorder %s124, %s125
      %p134 = scmp.eq.s32.totalorder %s30, 0
      %p135 = por %p133, %p134
      %p136 = scmp.ne.s32.totalorder %s124, %s125
      %p137 = scmp.eq.s32.totalorder %s31, 1
      %p138 = por %p136, %p137
      %p140 = scmp.ne.s32.totalorder %s125, %s139
      %p141 = scmp.eq.s32.totalorder %s31, 0
      %p142 = por %p140, %p141
      %s144 = sadd.s32 %s143, 1
      %p147 = scmp.eq.s32.totalorder %s25, 1
      %p148 = scmp.ne.s32.totalorder %s143, %s145
      %p149 = scmp.eq.s32.totalorder %s25, 0
      %p150 = por %p148, %p149
      %p151 = scmp.ne.s32.totalorder %s143, %s145
      %p152 = scmp.eq.s32.totalorder %s30, 1
      %p153 = por %p151, %p152
      %p154 = scmp.ne.s32.totalorder %s145, %s146
      %p155 = scmp.eq.s32.totalorder %s30, 0
      %p156 = por %p154, %p155
      %p157 = scmp.ne.s32.totalorder %s145, %s146
      %p158 = scmp.eq.s32.totalorder %s31, 1
      %p159 = por %p157, %p158
      %p161 = scmp.ne.s32.totalorder %s146, %s160
      %p162 = scmp.eq.s32.totalorder %s31, 0
      %p163 = por %p161, %p162
      %s165 = sadd.s32 %s164, 1
      %p168 = scmp.eq.s32.totalorder %s25, 1
      %p169 = scmp.ne.s32.totalorder %s164, %s166
      %p170 = scmp.eq.s32.totalorder %s25, 0
      %p171 = por %p169, %p170
      %p172 = scmp.ne.s32.totalorder %s164, %s166
      %p173 = scmp.eq.s32.totalorder %s30, 1
      %p174 = por %p172, %p173
      %p175 = scmp.ne.s32.totalorder %s166, %s167
      %p176 = scmp.eq.s32.totalorder %s30, 0
      %p177 = por %p175, %p176
      %p178 = scmp.ne.s32.totalorder %s166, %s167
      %p179 = scmp.eq.s32.totalorder %s31, 1
      %p180 = por %p178, %p179
      %p182 = scmp.ne.s32.totalorder %s167, %s181
      %p183 = scmp.eq.s32.totalorder %s31, 0
      %p184 = por %p182, %p183
      %s186 = sadd.s32 %s185, 1
      %p189 = scmp.eq.s32.totalorder %s25, 1
      %p190 = scmp.ne.s32.totalorder %s185, %s187
      %p191 = scmp.eq.s32.totalorder %s25, 0
      %p192 = por %p190, %p191
      %p193 = scmp.ne.s32.totalorder %s185, %s187
      %p194 = scmp.eq.s32.totalorder %s30, 1
      %p195 = por %p193, %p194
      %p196 = scmp.ne.s32.totalorder %s187, %s188
      %p197 = scmp.eq.s32.totalorder %s30, 0
      %p198 = por %p196, %p197
      %p199 = scmp.ne.s32.totalorder %s187, %s188
      %p200 = scmp.eq.s32.totalorder %s31, 1
      %p201 = por %p199, %p200
      %p203 = scmp.ne.s32.totalorder %s188, %s202
      %p204 = scmp.eq.s32.totalorder %s31, 0
      %p205 = por %p203, %p204
      %s207 = sadd.s32 %s206, 1
      %p210 = scmp.eq.s32.totalorder %s25, 1
      %p211 = scmp.ne.s32.totalorder %s206, %s208
      %p212 = scmp.eq.s32.totalorder %s25, 0
      %p213 = por %p211, %p212
      %p214 = scmp.ne.s32.totalorder %s206, %s208
      %p215 = scmp.eq.s32.totalorder %s30, 1
      %p216 = por %p214, %p215
      %p217 = scmp.ne.s32.totalorder %s208, %s209
      %p218 = scmp.eq.s32.totalorder %s30, 0
      %p219 = por %p217, %p218
      %p220 = scmp.ne.s32.totalorder %s208, %s209
      %p221 = scmp.eq.s32.totalorder %s31, 1
      %p222 = por %p220, %p221
      %p224 = scmp.ne.s32.totalorder %s209, %s223
      %p225 = scmp.eq.s32.totalorder %s31, 0
      %p226 = por %p224, %p225
      %s228 = sadd.s32 %s227, 1
      %p231 = scmp.eq.s32.totalorder %s25, 1
      %p232 = scmp.ne.s32.totalorder %s227, %s229
      %p233 = scmp.eq.s32.totalorder %s25, 0
      %p234 = por %p232, %p233
      %p235 = scmp.ne.s32.totalorder %s227, %s229
      %p236 = scmp.eq.s32.totalorder %s30, 1
      %p237 = por %p235, %p236
      %p238 = scmp.ne.s32.totalorder %s229, %s230
      %p239 = scmp.eq.s32.totalorder %s30, 0
      %p240 = por %p238, %p239
      %p241 = scmp.ne.s32.totalorder %s229, %s230
      %p242 = scmp.eq.s32.totalorder %s31, 1
      %p243 = por %p241, %p242
      %p245 = scmp.ne.s32.totalorder %s230, %s244
      %p246 = scmp.eq.s32.totalorder %s31, 0
      %p247 = por %p245, %p246
      %s248 = ssub.s32 %s25, %s32
      %p249 = scmp.eq.s32.totalorder %s248, 0
      %s251 = sadd.s32 %s250, 1
      %s252 = scalar_select %p249, %s250, %s251
      %p255 = pneg %p249
      %p256 = scmp.eq.s32.totalorder %s25, 1
      %p257 = por %p255, %p256
      %p258 = scmp.ne.s32.totalorder %s250, %s253
      %p259 = scmp.eq.s32.totalorder %s25, 0
      %p260 = por %p258, %p259
      %p261 = scmp.ne.s32.totalorder %s250, %s253
      %p262 = scmp.eq.s32.totalorder %s30, 1
      %p263 = por %p261, %p262
      %p264 = scmp.ne.s32.totalorder %s253, %s254
      %p265 = scmp.eq.s32.totalorder %s30, 0
      %p266 = por %p264, %p265
      %p267 = scmp.ne.s32.totalorder %s253, %s254
      %p268 = scmp.eq.s32.totalorder %s31, 1
      %p269 = por %p267, %p268
      %p271 = scmp.ne.s32.totalorder %s254, %s270
      %p272 = scmp.eq.s32.totalorder %s31, 0
      %p273 = por %p271, %p272
      %s274 = ssub.s32 %s25, %s32
      %p275 = scmp.eq.s32.totalorder %s274, 0
      %s277 = sadd.s32 %s276, 1
      %s278 = scalar_select %p275, %s276, %s277
      %p281 = pneg %p275
      %p282 = scmp.eq.s32.totalorder %s25, 1
      %p283 = por %p281, %p282
      %p284 = scmp.ne.s32.totalorder %s276, %s279
      %p285 = scmp.eq.s32.totalorder %s25, 0
      %p286 = por %p284, %p285
      %p287 = scmp.ne.s32.totalorder %s276, %s279
      %p288 = scmp.eq.s32.totalorder %s30, 1
      %p289 = por %p287, %p288
      %p290 = scmp.ne.s32.totalorder %s279, %s280
      %p291 = scmp.eq.s32.totalorder %s30, 0
      %p292 = por %p290, %p291
      %p293 = scmp.ne.s32.totalorder %s279, %s280
      %p294 = scmp.eq.s32.totalorder %s31, 1
      %p295 = por %p293, %p294
      %p297 = scmp.ne.s32.totalorder %s280, %s296
      %p298 = scmp.eq.s32.totalorder %s31, 0
      %p299 = por %p297, %p298
      %s300 = ssub.s32 %s25, %s32
      %p301 = scmp.eq.s32.totalorder %s300, 0
      %s303 = sadd.s32 %s302, 1
      %s304 = scalar_select %p301, %s302, %s303
      %p307 = pneg %p301
      %p308 = scmp.eq.s32.totalorder %s25, 1
      %p309 = por %p307, %p308
      %p310 = scmp.ne.s32.totalorder %s302, %s305
      %p311 = scmp.eq.s32.totalorder %s25, 0
      %p312 = por %p310, %p311
      %p313 = scmp.ne.s32.totalorder %s302, %s305
      %p314 = scmp.eq.s32.totalorder %s30, 1
      %p315 = por %p313, %p314
      %p316 = scmp.ne.s32.totalorder %s305, %s306
      %p317 = scmp.eq.s32.totalorder %s30, 0
      %p318 = por %p316, %p317
      %p319 = scmp.ne.s32.totalorder %s305, %s306
      %p320 = scmp.eq.s32.totalorder %s31, 1
      %p321 = por %p319, %p320
      %p323 = scmp.ne.s32.totalorder %s306, %s322
      %p324 = scmp.eq.s32.totalorder %s31, 0
      %p325 = por %p323, %p324
      %p326 = scmp.le.s32.totalorder 1, %s25
      %p327 = scmp.lt.s32.totalorder %s25, 3
      %p328 = pnand %p326, %p327
      %p329 = pneg %p328
      // Predicated region
      $region9: #{mtl2d_deepsvdd_forward.5} parent=5 // pred_check
        _
      $region10: #{mtl2d_deepsvdd_forward.5} parent=5 // pred_check_branch
        %331 = sbr.rel (%p328) target = $region12
      $region11: #{mtl2d_deepsvdd_forward.5} parent=5 // pred_region
        %s332 = ssub.s32 %s25, 1
        // Predicated region
        $region13: #{mtl2d_deepsvdd_forward.5} parent=11 // pred_check
          %p333 = pneg %p72
        $region14: #{mtl2d_deepsvdd_forward.5} parent=11 // pred_check_branch
          %335 = sbr.rel (%p333) target = $region16
        $region15: #{mtl2d_deepsvdd_forward.5} parent=11 // pred_region
          _
        $region16: #{mtl2d_deepsvdd_forward.5} parent=11 // pred_fallthru
          _
        // Predicated region
        $region17: #{mtl2d_deepsvdd_forward.5} parent=11 // pred_check
          %p336 = pneg %p93
        $region18: #{mtl2d_deepsvdd_forward.5} parent=11 // pred_check_branch
          %338 = sbr.rel (%p336) target = $region20
        $region19: #{mtl2d_deepsvdd_forward.5} parent=11 // pred_region
          _
        $region20: #{mtl2d_deepsvdd_forward.5} parent=11 // pred_fallthru
          _
        // Predicated region
        $region21: #{mtl2d_deepsvdd_forward.5} parent=11 // pred_check
          %p339 = pneg %p114
        $region22: #{mtl2d_deepsvdd_forward.5} parent=11 // pred_check_branch
          %341 = sbr.rel (%p339) target = $region24
        $region23: #{mtl2d_deepsvdd_forward.5} parent=11 // pred_region
          _
        $region24: #{mtl2d_deepsvdd_forward.5} parent=11 // pred_fallthru
          _
        // Predicated region
        $region25: #{mtl2d_deepsvdd_forward.5} parent=11 // pred_check
          %p342 = pneg %p135
        $region26: #{mtl2d_deepsvdd_forward.5} parent=11 // pred_check_branch
          %344 = sbr.rel (%p342) target = $region28
        $region27: #{mtl2d_deepsvdd_forward.5} parent=11 // pred_region
          _
        $region28: #{mtl2d_deepsvdd_forward.5} parent=11 // pred_fallthru
          _
        // Predicated region
        $region29: #{mtl2d_deepsvdd_forward.5} parent=11 // pred_check
          %p345 = pneg %p156
        $region30: #{mtl2d_deepsvdd_forward.5} parent=11 // pred_check_branch
          %347 = sbr.rel (%p345) target = $region32
        $region31: #{mtl2d_deepsvdd_forward.5} parent=11 // pred_region
          _
        $region32: #{mtl2d_deepsvdd_forward.5} parent=11 // pred_fallthru
          _
        // Predicated region
        $region33: #{mtl2d_deepsvdd_forward.5} parent=11 // pred_check
          %p348 = pneg %p177
        $region34: #{mtl2d_deepsvdd_forward.5} parent=11 // pred_check_branch
          %350 = sbr.rel (%p348) target = $region36
        $region35: #{mtl2d_deepsvdd_forward.5} parent=11 // pred_region
          _
        $region36: #{mtl2d_deepsvdd_forward.5} parent=11 // pred_fallthru
          _
        // Predicated region
        $region37: #{mtl2d_deepsvdd_forward.5} parent=11 // pred_check
          %p351 = pneg %p198
        $region38: #{mtl2d_deepsvdd_forward.5} parent=11 // pred_check_branch
          %353 = sbr.rel (%p351) target = $region40
        $region39: #{mtl2d_deepsvdd_forward.5} parent=11 // pred_region
          _
        $region40: #{mtl2d_deepsvdd_forward.5} parent=11 // pred_fallthru
          _
        // Predicated region
        $region41: #{mtl2d_deepsvdd_forward.5} parent=11 // pred_check
          %p354 = pneg %p219
        $region42: #{mtl2d_deepsvdd_forward.5} parent=11 // pred_check_branch
          %356 = sbr.rel (%p354) target = $region44
        $region43: #{mtl2d_deepsvdd_forward.5} parent=11 // pred_region
          _
        $region44: #{mtl2d_deepsvdd_forward.5} parent=11 // pred_fallthru
          _
        // Predicated region
        $region45: #{mtl2d_deepsvdd_forward.5} parent=11 // pred_check
          %p357 = pneg %p240
        $region46: #{mtl2d_deepsvdd_forward.5} parent=11 // pred_check_branch
          %359 = sbr.rel (%p357) target = $region48
        $region47: #{mtl2d_deepsvdd_forward.5} parent=11 // pred_region
          _
        $region48: #{mtl2d_deepsvdd_forward.5} parent=11 // pred_fallthru
          _
      $region12: #{mtl2d_deepsvdd_forward.5} parent=5 // pred_fallthru
        _
      %p360 = scmp.lt.s32.totalorder %s25, 2
      // Predicated region
      $region49: #{mtl2d_deepsvdd_forward.5} parent=5 // pred_check
        %p361 = pneg %p360
      $region50: #{mtl2d_deepsvdd_forward.5} parent=5 // pred_check_branch
        %363 = sbr.rel (%p361) target = $region52
      $region51: #{mtl2d_deepsvdd_forward.5} parent=5 // pred_region
        // Predicated region
        $region53: #{mtl2d_deepsvdd_forward.5} parent=51 // pred_check
          %p364 = pneg %p45
        $region54: #{mtl2d_deepsvdd_forward.5} parent=51 // pred_check_branch
          %366 = sbr.rel (%p364) target = $region56
        $region55: #{mtl2d_deepsvdd_forward.5} parent=51 // pred_region
          %p367 = scmp.lt.s32.totalorder %s25, 1
          %s368 = scalar_select %p367, %s25, 1
          %s369 = smul.addr %s368, 6
          %s370 = smul.addr %s369, 8
          %s371 = scalar_lea.vmem %s0, %s370
        $region56: #{mtl2d_deepsvdd_forward.5} parent=51 // pred_fallthru
          _
      $region52: #{mtl2d_deepsvdd_forward.5} parent=5 // pred_fallthru
        _
      %p372 = scmp.le.s32.totalorder 1, %s25
      %p373 = scmp.lt.s32.totalorder %s25, 3
      %p374 = pnand %p372, %p373
      %p375 = pneg %p374
      // Predicated region
      $region57: #{mtl2d_deepsvdd_forward.5} parent=5 // pred_check
        _
      $region58: #{mtl2d_deepsvdd_forward.5} parent=5 // pred_check_branch
        %377 = sbr.rel (%p374) target = $region60
      $region59: #{mtl2d_deepsvdd_forward.5} parent=5 // pred_region
        %s378 = ssub.s32 %s25, 1
        %p379 = scmp.lt.s32.totalorder %s30, 1
        %s380 = scalar_select %p379, %s30, 1
        %s381 = smul.addr %s380, 6
        %s382 = smul.addr %s381, 8
        %s383 = scalar_lea.vmem %s0, %s382
        %p384 = pneg %p51
        %p385 = pneg %p48
        %p386 = pneg %p72
        %p387 = pneg %p69
        %p388 = pneg %p93
        %p389 = pneg %p90
        %p390 = pneg %p114
        %p391 = pneg %p111
        %p392 = pneg %p135
        %p393 = pneg %p132
        %p394 = pneg %p156
        %p395 = pneg %p153
        %p396 = pneg %p177
        %p397 = pneg %p174
        %p398 = pneg %p198
        %p399 = pneg %p195
        %p400 = pneg %p219
        %p401 = pneg %p216
        %p402 = pneg %p240
        %p403 = pneg %p237
        %p404 = pneg %p266
        %p405 = pneg %p263
        %s406 = sand.u32 %s253, 1
        %s407 = scalar_lea.sflag [#allocation3], %s406
        %s408 = sand.u32 %s253, 1
        %s409 = smul.addr %s408, 16
        %s410 = scalar_lea.vmem [#allocation2], %s409
        %p411 = pneg %p292
        %p412 = pneg %p289
        %s413 = sand.u32 %s30, 1
        %s414 = scalar_lea.sflag [#allocation5], %s413
        %s415 = sand.u32 %s279, 1
        %s416 = scalar_lea.vmem [#allocation4], %s415
        %p417 = pneg %p318
        %p418 = pneg %p315
        %s419 = sand.u32 %s30, 1
        %s420 = scalar_lea.sflag [#allocation5], %s419
        %s421 = sand.u32 %s305, 1
        %s422 = scalar_lea.vmem [#allocation6], %s421
        %p423 = scmp.lt.s32.totalorder %s30, 1
        %s424 = scalar_select %p423, %s30, 1
        %s425 = smul.addr %s424, 6
        %s426 = smul.addr %s425, 8
        %s427 = scalar_lea.vmem %s0, %s426
        %v429 = vld [vmem:[%s427] sm:$0xff]
        %v430 = vld [vmem:[%s427 + $0x8] sm:$0xff]
        %v431 = vld [vmem:[%s427 + $0x10] sm:$0xff]
        %v432 = vld [vmem:[%s427 + $0x18] sm:$0xff]
        %v433 = vld [vmem:[%s427 + $0x20] sm:$0xff]
        %v434 = vld [vmem:[%s427 + $0x28] sm:$0xff]
        %v435 = vpack.c.bf16 %v432, %v429
        %v436 = vpack.c.bf16 %v433, %v430
        %v437 = vpack.c.bf16 %v434, %v431
        %v438 = vld [vmem:[%s1] sm:$0xf]
        %v439 = vld [vmem:[%s1 + $0x4] sm:$0xf]
        %v440 = vld [vmem:[%s1 + $0x8] sm:$0xf]
        %v441 = vld [vmem:[%s1 + $0xc] sm:$0xf]
        %v442 = vld [vmem:[%s1 + $0x10] sm:$0xf]
        %v443 = vld [vmem:[%s1 + $0x14] sm:$0xf]
        %v444 = vld [vmem:[%s1 + $0x18] sm:$0xf]
        %v445 = vld [vmem:[%s1 + $0x1c] sm:$0xf]
        %v446 = vld [vmem:[%s1 + $0x20] sm:$0xf]
        %v447 = vld [vmem:[%s1 + $0x24] sm:$0xf]
        %v448 = vld [vmem:[%s1 + $0x28] sm:$0xf]
        %v449 = vld [vmem:[%s1 + $0x2c] sm:$0xf]
        %v450 = vld [vmem:[%s1 + $0x30] sm:$0xf]
        %v451 = vld [vmem:[%s1 + $0x34] sm:$0xf]
        %v452 = vld [vmem:[%s1 + $0x38] sm:$0xf]
        %v453 = vld [vmem:[%s1 + $0x3c] sm:$0xf]
        %v454 = vld [vmem:[%s1 + $0x40] sm:$0xf]
        %v455 = vld [vmem:[%s1 + $0x44] sm:$0xf]
        %v456 = vld [vmem:[%s1 + $0x48] sm:$0xf]
        %v457 = vld [vmem:[%s1 + $0x4c] sm:$0xf]
        %v458 = vld [vmem:[%s1 + $0x50] sm:$0xf]
        %v459 = vld [vmem:[%s1 + $0x54] sm:$0xf]
        %v460 = vld [vmem:[%s1 + $0x58] sm:$0xf]
        %v461 = vld [vmem:[%s1 + $0x5c] sm:$0xf]
        %v462 = vld [vmem:[%s1 + $0x60] sm:$0xf]
        %v463 = vld [vmem:[%s1 + $0x64] sm:$0xf]
        %v464 = vld [vmem:[%s1 + $0x68] sm:$0xf]
        %v465 = vld [vmem:[%s1 + $0x6c] sm:$0xf]
        %v466 = vld [vmem:[%s1 + $0x70] sm:$0xf]
        %v467 = vld [vmem:[%s1 + $0x74] sm:$0xf]
        %v468 = vld [vmem:[%s1 + $0x78] sm:$0xf]
        %v469 = vld [vmem:[%s1 + $0x7c] sm:$0xf]
        %v470 = vld [vmem:[%s1 + $0x80] sm:$0xf]
        %v471 = vld [vmem:[%s1 + $0x84] sm:$0xf]
        %v472 = vld [vmem:[%s1 + $0x88] sm:$0xf]
        %v473 = vld [vmem:[%s1 + $0x8c] sm:$0xf]
        %v474 = vld [vmem:[%s2] sm:$0x1]
        %v476 = vperm.slane %v474, 0
        %v514 = vunpack.c.l.b16 %v438
        %v515 = vunpack.c.l.b16 %v439
        %v516 = vunpack.c.l.b16 %v440
        %v517 = vunpack.c.l.b16 %v441
        %v518 = vunpack.c.l.b16 %v442
        %v519 = vunpack.c.l.b16 %v443
        %v520 = vunpack.c.l.b16 %v444
        %v521 = vunpack.c.l.b16 %v445
        %v522 = vunpack.c.l.b16 %v446
        %v523 = vunpack.c.l.b16 %v447
        %v524 = vunpack.c.l.b16 %v448
        %v525 = vunpack.c.l.b16 %v449
        %v526 = vunpack.c.l.b16 %v450
        %v527 = vunpack.c.l.b16 %v451
        %v528 = vunpack.c.l.b16 %v452
        %v529 = vunpack.c.l.b16 %v453
        %v530 = vunpack.c.l.b16 %v454
        %v531 = vunpack.c.l.b16 %v455
        %v532 = vunpack.c.l.b16 %v456
        %v533 = vunpack.c.l.b16 %v457
        %v534 = vunpack.c.l.b16 %v458
        %v535 = vunpack.c.l.b16 %v459
        %v536 = vunpack.c.l.b16 %v460
        %v537 = vunpack.c.l.b16 %v461
        %v538 = vunpack.c.l.b16 %v462
        %v539 = vunpack.c.l.b16 %v463
        %v540 = vunpack.c.l.b16 %v464
        %v541 = vunpack.c.l.b16 %v465
        %v542 = vunpack.c.l.b16 %v466
        %v543 = vunpack.c.l.b16 %v467
        %v544 = vunpack.c.l.b16 %v468
        %v545 = vunpack.c.l.b16 %v469
        %v546 = vunpack.c.l.b16 %v470
        %v547 = vunpack.c.l.b16 %v471
        %v548 = vunpack.c.l.b16 %v472
        %v549 = vunpack.c.l.b16 %v473
        %v550 = vpack.c.b16 %v515, %v514
        %v551 = vpack.c.b16 %v517, %v516
        %v552 = vpack.c.b16 %v519, %v518
        %v553 = vpack.c.b16 %v521, %v520
        %v554 = vpack.c.b16 %v523, %v522
        %v555 = vpack.c.b16 %v525, %v524
        %v556 = vpack.c.b16 %v527, %v526
        %v557 = vpack.c.b16 %v529, %v528
        %v558 = vpack.c.b16 %v531, %v530
        %v559 = vpack.c.b16 %v533, %v532
        %v560 = vpack.c.b16 %v535, %v534
        %v561 = vpack.c.b16 %v537, %v536
        %v562 = vpack.c.b16 %v539, %v538
        %v563 = vpack.c.b16 %v541, %v540
        %v564 = vpack.c.b16 %v543, %v542
        %v565 = vpack.c.b16 %v545, %v544
        %v566 = vpack.c.b16 %v547, %v546
        %v567 = vpack.c.b16 %v549, %v548
        %vm586 = vcmask 261120
        %v588 = vsel %vm586, %v437, 0
        %590 = vmatpush.bf16.msra.mxu0 %v557
        %591 = vmatpush.bf16.msra.mxu0 %v556
        %592 = vmatpush.bf16.msra.mxu0 %v555
        %593 = vmatpush.bf16.msra.mxu0 %v554
        %594 = vmatpush.bf16.msra.mxu0 %v553
        %595 = vmatpush.bf16.msra.mxu0 %v552
        %596 = vmatpush.bf16.msra.mxu0 %v551
        %597 = vmatpush.bf16.msra.mxu0 %v550
        %598 = vmatmul.bf16.gmra.mxu0 %v435
        %v599 = vpop.f32.mrf.mxu0
        %v600 = vadd.f32 %v476, %v599
        %v601 = vpop.f32.mrf.mxu0
        %v602 = vadd.f32 %v476, %v601
        %603 = vdwg.mxu0
        %604 = vmatpush.bf16.msra.mxu0 %v565
        %605 = vmatpush.bf16.msra.mxu0 %v564
        %606 = vmatpush.bf16.msra.mxu0 %v563
        %607 = vmatpush.bf16.msra.mxu0 %v562
        %608 = vmatpush.bf16.msra.mxu0 %v561
        %609 = vmatpush.bf16.msra.mxu0 %v560
        %610 = vmatpush.bf16.msra.mxu0 %v559
        %611 = vmatpush.bf16.msra.mxu0 %v558
        %612 = vmatmul.bf16.gmra.mxu0 %v436
        %v613 = vpop.f32.mrf.mxu0
        %v614 = vadd.f32 %v600, %v613
        %v615 = vpop.f32.mrf.mxu0
        %v616 = vadd.f32 %v602, %v615
        %617 = vdwg.mxu0
        %618 = vmatpush.bf16.msra.mxu0 0
        %619 = vmatpush.bf16.msra.mxu0 0
        %620 = vmatpush.bf16.msra.mxu0 0
        %621 = vmatpush.bf16.msra.mxu0 0
        %622 = vmatpush.bf16.msra.mxu0 0
        %623 = vmatpush.bf16.msra.mxu0 0
        %624 = vmatpush.bf16.msra.mxu0 %v567
        %625 = vmatpush.bf16.msra.mxu0 %v566
        %626 = vmatmul.bf16.gmra.mxu0 %v588
        %v627 = vpop.f32.mrf.mxu0
        %v628 = vadd.f32 %v614, %v627
        %v629 = vpop.f32.mrf.mxu0
        %v630 = vadd.f32 %v616, %v629
        %631 = vdwg.mxu0
        %v632 = vmax.f32 %v628, 0.0
        %v633 = vmax.f32 %v630, 0.0
        %v634 = vpack.c.bf16 %v633, %v632
        %v635 = vld [vmem:[%s3] sm:$0xff]
        %v636 = vld [vmem:[%s3 + $0x8] sm:$0xff]
        %v637 = vld [vmem:[%s3 + $0x10] sm:$0xff]
        %v638 = vld [vmem:[%s3 + $0x18] sm:$0xff]
        %v639 = vld [vmem:[%s3 + $0x20] sm:$0xff]
        %v640 = vld [vmem:[%s3 + $0x28] sm:$0xff]
        %v641 = vld [vmem:[%s3 + $0x30] sm:$0xff]
        %v642 = vld [vmem:[%s3 + $0x38] sm:$0xff]
        %v643 = vld [vmem:[%s4] sm:$0x3]
        %v645 = vperm.slane %v643, 0
        %v646 = vperm.slane %v643, 1
        %v657 = vunpack.c.l.b16 %v635
        %v658 = vunpack.c.h.b16 %v635
        %v659 = vunpack.c.l.b16 %v636
        %v660 = vunpack.c.h.b16 %v636
        %v661 = vunpack.c.l.b16 %v637
        %v662 = vunpack.c.h.b16 %v637
        %v663 = vunpack.c.l.b16 %v638
        %v664 = vunpack.c.h.b16 %v638
        %v665 = vunpack.c.l.b16 %v639
        %v666 = vunpack.c.h.b16 %v639
        %v667 = vunpack.c.l.b16 %v640
        %v668 = vunpack.c.h.b16 %v640
        %v669 = vunpack.c.l.b16 %v641
        %v670 = vunpack.c.h.b16 %v641
        %v671 = vunpack.c.l.b16 %v642
        %v672 = vunpack.c.h.b16 %v642
        %v673 = vpack.c.b16 %v659, %v657
        %v674 = vpack.c.b16 %v660, %v658
        %v675 = vpack.c.b16 %v663, %v661
        %v676 = vpack.c.b16 %v664, %v662
        %v677 = vpack.c.b16 %v667, %v665
        %v678 = vpack.c.b16 %v668, %v666
        %v679 = vpack.c.b16 %v671, %v669
        %v680 = vpack.c.b16 %v672, %v670
        %vm689 = vcmask 523264
        %v691 = vsel %vm689, %v634, 0
        %693 = vmatpush.bf16.msra.mxu0 0
        %694 = vmatpush.bf16.msra.mxu0 0
        %695 = vmatpush.bf16.msra.mxu0 0
        %696 = vmatpush.bf16.msra.mxu0 0
        %697 = vmatpush.bf16.msra.mxu0 %v679
        %698 = vmatpush.bf16.msra.mxu0 %v677
        %699 = vmatpush.bf16.msra.mxu0 %v675
        %700 = vmatpush.bf16.msra.mxu0 %v673
        %701 = vmatmul.bf16.gmra.mxu0 %v691
        %v702 = vpop.f32.mrf.mxu0
        %v703 = vadd.f32 %v645, %v702
        %v704 = vpop.f32.mrf.mxu0
        %v705 = vadd.f32 %v645, %v704
        %706 = vdwg.mxu0
        %707 = vmatpush.bf16.msra.mxu0 0
        %708 = vmatpush.bf16.msra.mxu0 0
        %709 = vmatpush.bf16.msra.mxu0 0
        %710 = vmatpush.bf16.msra.mxu0 0
        %711 = vmatpush.bf16.msra.mxu0 %v680
        %712 = vmatpush.bf16.msra.mxu0 %v678
        %713 = vmatpush.bf16.msra.mxu0 %v676
        %714 = vmatpush.bf16.msra.mxu0 %v674
        %715 = vmatmul.bf16.gmra.mxu0 %v691
        %v716 = vpop.f32.mrf.mxu0
        %v717 = vadd.f32 %v646, %v716
        %v718 = vpop.f32.mrf.mxu0
        %v719 = vadd.f32 %v646, %v718
        %720 = vdwg.mxu0
        %v721 = vpack.c.bf16 %v703, %v703
        %v722 = vpack.c.bf16 %v705, %v705
        %v723 = vpack.c.bf16 %v717, %v703
        %v724 = vpack.c.bf16 %v719, %v705
        %v725 = vpack.c.bf16 %v705, %v703
        %v726 = vld [vmem:[%s7] sm:$0xf]
        %v727 = vld [vmem:[%s7 + $0x4] sm:$0xf]
        %v728 = vunpack.c.l.bf16 %v726
        %v729 = vunpack.c.l.bf16 %v727
        %v732 = vunpack.c.l.b16 %v721
        %v733 = vunpack.c.l.b16 %v722
        %v734 = vpack.c.b16 %v733, %v732
        %735 = vrot.lane.b32.xlu0 %v734, 65
        %v736 = vpop.permute.xlu0 %735
        %vm737 = vcmask 171008
        %v739 = vsel %vm737, %v725, 0
        %v742 = vsel %vm737, %v736, 0
        %744 = vmatpush.bf16.xpose.msra.mxu0 0
        %745 = vmatpush.bf16.xpose.msra.mxu0 0
        %746 = vmatpush.bf16.xpose.msra.mxu0 0
        %747 = vmatpush.bf16.xpose.msra.mxu0 0
        %748 = vmatpush.bf16.xpose.msra.mxu0 0
        %749 = vmatpush.bf16.xpose.msra.mxu0 0
        %750 = vmatpush.bf16.xpose.msra.mxu0 0
        %751 = vmatpush.bf16.xpose.msra.mxu0 %v742
        %752 = vmatmul.bf16.gmra.mxu0 %v739
        %v753 = vpop.f32.mrf.mxu0
        %v754 = vadd.f32 %v728, %v753
        %v755 = vpop.f32.mrf.mxu0
        %v756 = vadd.f32 %v729, %v755
        %757 = vdwg.mxu0
        %vm758 = vcmask 130048
        %v759 = vsel %vm758, %v754, -inf
        %760 = vmax.xlane.f32.xlu0 %v759
        %v761 = vpop.xlane.xlu0 %760
        %v762 = vsel %vm758, %v756, -inf
        %763 = vmax.xlane.f32.xlu0 %v762
        %v764 = vpop.xlane.xlu0 %763
        %v765 = vsub.f32 %v754, %v761
        %v766 = vsub.f32 %v756, %v764
        %v767 = vmul.f32 %v765, 1.442695
        %v768 = vpow.pop %v767
        %v769 = vmul.f32 %v766, 1.442695
        %v770 = vpow.pop %v769
        %v771 = vsel %vm758, %v768, 0.0
        %772 = vadd.xlane.f32.xlu0 %v771
        %v773 = vpop.xlane.xlu0 %772
        %v774 = vsel %vm758, %v770, 0.0
        %775 = vadd.xlane.f32.xlu0 %v774
        %v776 = vpop.xlane.xlu0 %775
        %v777 = vpack.c.bf16 %v770, %v768
        %v780 = vunpack.c.l.b16 %v723
        %v781 = vunpack.c.h.b16 %v723
        %v782 = vunpack.c.l.b16 %v724
        %v783 = vunpack.c.h.b16 %v724
        %v784 = vpack.c.b16 %v782, %v780
        %v785 = vpack.c.b16 %v783, %v781
        %786 = vrot.lane.b32.xlu0 %v784, 2
        %v787 = vpop.permute.xlu0 %786
        %788 = vrot.lane.b32.xlu0 %v785, 2
        %v789 = vpop.permute.xlu0 %788
        %vm790 = vcmask 15360
        %v791 = vsel %vm790, %v787, %v789
        %v794 = vsel %vm758, %v777, 0
        %796 = vmatpush.bf16.msra.mxu0 0
        %797 = vmatpush.bf16.msra.mxu0 0
        %798 = vmatpush.bf16.msra.mxu0 0
        %799 = vmatpush.bf16.msra.mxu0 0
        %800 = vmatpush.bf16.msra.mxu0 0
        %801 = vmatpush.bf16.msra.mxu0 0
        %802 = vmatpush.bf16.msra.mxu0 0
        %803 = vmatpush.bf16.msra.mxu0 %v791
        %804 = vmatmul.bf16.gmra.mxu0 %v794
        %v805 = vpop.f32.mrf.mxu0
        %v806 = vadd.f32 0.0, %v805
        %v807 = vpop.f32.mrf.mxu0
        %v808 = vadd.f32 0.0, %v807
        %809 = vdwg.mxu0
        %v810 = vrcp.pop %v773
        %v811 = vrcp.pop %v776
        %v812 = vmul.f32 %v806, %v810
        %v813 = vmul.f32 %v808, %v811
        %s814 = scalar_lea.vmem %s7, 8
        %v815 = vld [vmem:[%s814] sm:$0xf]
        %v816 = vld [vmem:[%s814 + $0x4] sm:$0xf]
        %v817 = vunpack.c.l.bf16 %v815
        %v818 = vunpack.c.l.bf16 %v816
        %820 = vrot.lane.b32.xlu0 %v725, 107
        %v821 = vpop.permute.xlu0 %820
        %822 = vrot.lane.b32.xlu0 %v734, 44
        %v823 = vpop.permute.xlu0 %822
        %v825 = vsel %vm737, %v821, 0
        %v828 = vsel %vm737, %v823, 0
        %830 = vmatpush.bf16.xpose.msra.mxu0 0
        %831 = vmatpush.bf16.xpose.msra.mxu0 0
        %832 = vmatpush.bf16.xpose.msra.mxu0 0
        %833 = vmatpush.bf16.xpose.msra.mxu0 0
        %834 = vmatpush.bf16.xpose.msra.mxu0 0
        %835 = vmatpush.bf16.xpose.msra.mxu0 0
        %836 = vmatpush.bf16.xpose.msra.mxu0 0
        %837 = vmatpush.bf16.xpose.msra.mxu0 %v828
        %838 = vmatmul.bf16.gmra.mxu0 %v825
        %v839 = vpop.f32.mrf.mxu0
        %v840 = vadd.f32 %v817, %v839
        %v841 = vpop.f32.mrf.mxu0
        %v842 = vadd.f32 %v818, %v841
        %843 = vdwg.mxu0
        %v844 = vsel %vm758, %v840, -inf
        %845 = vmax.xlane.f32.xlu0 %v844
        %v846 = vpop.xlane.xlu0 %845
        %v847 = vsel %vm758, %v842, -inf
        %848 = vmax.xlane.f32.xlu0 %v847
        %v849 = vpop.xlane.xlu0 %848
        %v850 = vsub.f32 %v840, %v846
        %v851 = vsub.f32 %v842, %v849
        %v852 = vmul.f32 %v850, 1.442695
        %v853 = vpow.pop %v852
        %v854 = vmul.f32 %v851, 1.442695
        %v855 = vpow.pop %v854
        %v856 = vsel %vm758, %v853, 0.0
        %857 = vadd.xlane.f32.xlu0 %v856
        %v858 = vpop.xlane.xlu0 %857
        %v859 = vsel %vm758, %v855, 0.0
        %860 = vadd.xlane.f32.xlu0 %v859
        %v861 = vpop.xlane.xlu0 %860
        %v862 = vpack.c.bf16 %v855, %v853
        %863 = vrot.lane.b32.xlu0 %v785, 109
        %v864 = vpop.permute.xlu0 %863
        %v867 = vsel %vm758, %v862, 0
        %869 = vmatpush.bf16.msra.mxu0 0
        %870 = vmatpush.bf16.msra.mxu0 0
        %871 = vmatpush.bf16.msra.mxu0 0
        %872 = vmatpush.bf16.msra.mxu0 0
        %873 = vmatpush.bf16.msra.mxu0 0
        %874 = vmatpush.bf16.msra.mxu0 0
        %875 = vmatpush.bf16.msra.mxu0 0
        %876 = vmatpush.bf16.msra.mxu0 %v864
        %877 = vmatmul.bf16.gmra.mxu0 %v867
        %v878 = vpop.f32.mrf.mxu0
        %v879 = vadd.f32 0.0, %v878
        %v880 = vpop.f32.mrf.mxu0
        %v881 = vadd.f32 0.0, %v880
        %882 = vdwg.mxu0
        %v883 = vrcp.pop %v858
        %v884 = vrcp.pop %v861
        %v885 = vmul.f32 %v879, %v883
        %v886 = vmul.f32 %v881, %v884
        %s887 = scalar_lea.vmem %s7, 16
        %v888 = vld [vmem:[%s887] sm:$0xf]
        %v889 = vld [vmem:[%s887 + $0x4] sm:$0xf]
        %v890 = vunpack.c.l.bf16 %v888
        %v891 = vunpack.c.l.bf16 %v889
        %892 = vrot.lane.b32.xlu0 %v725, 86
        %v893 = vpop.permute.xlu0 %892
        %894 = vrot.lane.b32.xlu0 %v734, 23
        %v895 = vpop.permute.xlu0 %894
        %v897 = vsel %vm737, %v893, 0
        %v900 = vsel %vm737, %v895, 0
        %902 = vmatpush.bf16.xpose.msra.mxu0 0
        %903 = vmatpush.bf16.xpose.msra.mxu0 0
        %904 = vmatpush.bf16.xpose.msra.mxu0 0
        %905 = vmatpush.bf16.xpose.msra.mxu0 0
        %906 = vmatpush.bf16.xpose.msra.mxu0 0
        %907 = vmatpush.bf16.xpose.msra.mxu0 0
        %908 = vmatpush.bf16.xpose.msra.mxu0 0
        %909 = vmatpush.bf16.xpose.msra.mxu0 %v900
        %910 = vmatmul.bf16.gmra.mxu0 %v897
        %v911 = vpop.f32.mrf.mxu0
        %v912 = vadd.f32 %v890, %v911
        %v913 = vpop.f32.mrf.mxu0
        %v914 = vadd.f32 %v891, %v913
        %915 = vdwg.mxu0
        %v916 = vsel %vm758, %v912, -inf
        %917 = vmax.xlane.f32.xlu0 %v916
        %v918 = vpop.xlane.xlu0 %917
        %v919 = vsel %vm758, %v914, -inf
        %920 = vmax.xlane.f32.xlu0 %v919
        %v921 = vpop.xlane.xlu0 %920
        %v922 = vsub.f32 %v912, %v918
        %v923 = vsub.f32 %v914, %v921
        %v924 = vmul.f32 %v922, 1.442695
        %v925 = vpow.pop %v924
        %v926 = vmul.f32 %v923, 1.442695
        %v927 = vpow.pop %v926
        %v928 = vsel %vm758, %v925, 0.0
        %929 = vadd.xlane.f32.xlu0 %v928
        %v930 = vpop.xlane.xlu0 %929
        %v931 = vsel %vm758, %v927, 0.0
        %932 = vadd.xlane.f32.xlu0 %v931
        %v933 = vpop.xlane.xlu0 %932
        %v934 = vpack.c.bf16 %v927, %v925
        %935 = vrot.lane.b32.xlu0 %v785, 88
        %v936 = vpop.permute.xlu0 %935
        %v939 = vsel %vm758, %v934, 0
        %941 = vmatpush.bf16.msra.mxu0 0
        %942 = vmatpush.bf16.msra.mxu0 0
        %943 = vmatpush.bf16.msra.mxu0 0
        %944 = vmatpush.bf16.msra.mxu0 0
        %945 = vmatpush.bf16.msra.mxu0 0
        %946 = vmatpush.bf16.msra.mxu0 0
        %947 = vmatpush.bf16.msra.mxu0 0
        %948 = vmatpush.bf16.msra.mxu0 %v936
        %949 = vmatmul.bf16.gmra.mxu0 %v939
        %v950 = vpop.f32.mrf.mxu0
        %v951 = vadd.f32 0.0, %v950
        %v952 = vpop.f32.mrf.mxu0
        %v953 = vadd.f32 0.0, %v952
        %954 = vdwg.mxu0
        %v955 = vrcp.pop %v930
        %v956 = vrcp.pop %v933
        %v957 = vmul.f32 %v951, %v955
        %v958 = vmul.f32 %v953, %v956
        %961 = vrot.lane.b32.xlu0 %v885, 21
        %v962 = vpop.permute.xlu0 %961
        %963 = vrot.lane.b32.xlu0 %v886, 21
        %v964 = vpop.permute.xlu0 %963
        %969 = vrot.lane.b32.xlu0 %v957, 42
        %v970 = vpop.permute.xlu0 %969
        %971 = vrot.lane.b32.xlu0 %v958, 42
        %v972 = vpop.permute.xlu0 %971
        %v975 = vsel %vm737, %v812, %v962
        %v976 = vsel %vm737, %v813, %v964
        %vm977 = vcmask 343040
        %v978 = vsel %vm977, %v975, %v970
        %v979 = vsel %vm977, %v976, %v972
        %v980 = vpack.c.bf16 %v979, %v978
        %v981 = vld [vmem:[%s5] sm:$0xf]
        %v982 = vld [vmem:[%s5 + $0x4] sm:$0xf]
        %v983 = vld [vmem:[%s5 + $0x8] sm:$0xf]
        %v984 = vld [vmem:[%s5 + $0xc] sm:$0xf]
        %v985 = vld [vmem:[%s5 + $0x10] sm:$0xf]
        %v986 = vld [vmem:[%s5 + $0x14] sm:$0xf]
        %v987 = vld [vmem:[%s5 + $0x18] sm:$0xf]
        %v988 = vld [vmem:[%s5 + $0x1c] sm:$0xf]
        %v997 = vunpack.c.l.b16 %v981
        %v998 = vunpack.c.l.b16 %v982
        %v999 = vunpack.c.l.b16 %v983
        %v1000 = vunpack.c.l.b16 %v984
        %v1001 = vunpack.c.l.b16 %v985
        %v1002 = vunpack.c.l.b16 %v986
        %v1003 = vunpack.c.l.b16 %v987
        %v1004 = vunpack.c.l.b16 %v988
        %v1005 = vpack.c.b16 %v998, %v997
        %v1006 = vpack.c.b16 %v1000, %v999
        %v1007 = vpack.c.b16 %v1002, %v1001
        %v1008 = vpack.c.b16 %v1004, %v1003
        %vm1012 = vcmask 515072
        %v1014 = vsel %vm1012, %v980, 0
        %vm1016 = vcmask 1046528
        %vm1017 = vcmask 1047552
        %v1018 = vsel %vm1016, 4294967295, 65535
        %v1019 = vsel %vm1017, %v1018, 0
        %v1021 = vand.u32 %v1008, %v1019
        %1023 = vmatpush.bf16.msra.mxu0 0
        %1024 = vmatpush.bf16.msra.mxu0 0
        %1025 = vmatpush.bf16.msra.mxu0 0
        %1026 = vmatpush.bf16.msra.mxu0 0
        %1027 = vmatpush.bf16.msra.mxu0 %v1021
        %1028 = vmatpush.bf16.msra.mxu0 %v1007
        %1029 = vmatpush.bf16.msra.mxu0 %v1006
        %1030 = vmatpush.bf16.msra.mxu0 %v1005
        %1031 = vmatmul.bf16.gmra.mxu0 %v1014
        %v1032 = vpop.f32.mrf.mxu0
        %v1033 = vadd.f32 0.0, %v1032
        %v1034 = vpop.f32.mrf.mxu0
        %v1035 = vadd.f32 0.0, %v1034
        %1036 = vdwg.mxu0
        %v1037 = vadd.f32 %v632, %v1033
        %v1038 = vadd.f32 %v633, %v1035
        %v1039 = vld [vmem:[%s6] sm:$0x1]
        %v1041 = vperm.slane %v1039, 0
        %v1043 = vadd.f32 %v1037, %v1041
        %v1044 = vadd.f32 %v1038, %v1041
        %1045 = vst.msk [vmem:[%s410] sm:$0xff] %vm689, %v1043
        %1046 = vst.msk [vmem:[%s410 + $0x8] sm:$0xff] %vm689, %v1044
        %v1047 = vsel %vm689, %v1043, 0.0
        %v1048 = vsel %vm689, %v1044, 0.0
        %v1049 = vadd.f32 %v1047, %v1048
        %v1050 = vrot.slane %v1049, 4
        %v1051 = vadd.f32 %v1049, %v1050
        %v1052 = vrot.slane %v1051, 2
        %v1053 = vadd.f32 %v1051, %v1052
        %v1054 = vrot.slane %v1053, 1
        %v1055 = vadd.f32 %v1053, %v1054
        %v1056 = vadd.f32 %v1055, 0.0
        %v1057 = vmul.f32 %v1056, 0.0625
        %vm1058 = vcmask 516096
        %1059 = vst.msk [vmem:[%s416] sm:$0x1] %vm1058, %v1057
        %v1060 = vpack.c.bf16 %v1057, %v1057
        %v1061 = vld [vmem:[%s8] sm:$0xf]
        %v1062 = vld [vmem:[%s8 + $0x4] sm:$0xf]
        %v1063 = vld [vmem:[%s8 + $0x8] sm:$0xf]
        %v1064 = vld [vmem:[%s8 + $0xc] sm:$0xf]
        %v1065 = vld [vmem:[%s8 + $0x10] sm:$0xf]
        %v1066 = vld [vmem:[%s8 + $0x14] sm:$0xf]
        %v1067 = vld [vmem:[%s8 + $0x18] sm:$0xf]
        %v1068 = vld [vmem:[%s8 + $0x1c] sm:$0xf]
        %v1069 = vld [vmem:[%s9] sm:$0x1]
        %v1078 = vunpack.c.l.b16 %v1061
        %v1079 = vunpack.c.l.b16 %v1062
        %v1080 = vunpack.c.l.b16 %v1063
        %v1081 = vunpack.c.l.b16 %v1064
        %v1082 = vunpack.c.l.b16 %v1065
        %v1083 = vunpack.c.l.b16 %v1066
        %v1084 = vunpack.c.l.b16 %v1067
        %v1085 = vunpack.c.l.b16 %v1068
        %v1086 = vpack.c.b16 %v1079, %v1078
        %v1087 = vpack.c.b16 %v1081, %v1080
        %v1088 = vpack.c.b16 %v1083, %v1082
        %v1089 = vpack.c.b16 %v1085, %v1084
        %v1095 = vsel %vm689, %v1060, 0
        %1097 = vmatpush.bf16.msra.mxu0 0
        %1098 = vmatpush.bf16.msra.mxu0 0
        %1099 = vmatpush.bf16.msra.mxu0 0
        %1100 = vmatpush.bf16.msra.mxu0 0
        %1101 = vmatpush.bf16.msra.mxu0 %v1089
        %1102 = vmatpush.bf16.msra.mxu0 %v1088
        %1103 = vmatpush.bf16.msra.mxu0 %v1087
        %1104 = vmatpush.bf16.msra.mxu0 %v1086
        %1105 = vmatmul.bf16.gmra.mxu0 %v1095
        %v1106 = vpop.f32.mrf.mxu0
        %v1107 = vadd.f32 %v1069, %v1106
        %v1108 = vpop.f32.mrf.mxu0
        %1109 = vdwg.mxu0
        %vm1110 = vcmask 24576
        %1111 = vst.msk [vmem:[%s422] sm:$0x1] %vm1110, %v1107
        %s1112 = sand.u32 %s253, 1
        %s1113 = scalar_lea.sflag [#allocation3], %s1112
        %s1114 = sand.u32 %s253, 1
        %s1115 = smul.addr %s1114, 16
        %s1116 = scalar_lea.vmem [#allocation2], %s1115
        %s1117 = sand.u32 %s30, 1
        %s1118 = scalar_lea.sflag [#allocation5], %s1117
        %s1119 = sand.u32 %s279, 1
        %s1120 = scalar_lea.vmem [#allocation4], %s1119
        %s1121 = sand.u32 %s30, 1
        %s1122 = scalar_lea.sflag [#allocation5], %s1121
        %s1123 = sand.u32 %s305, 1
        %s1124 = scalar_lea.vmem [#allocation6], %s1123
        // Predicated region
        $region61: #{mtl2d_deepsvdd_forward.5} parent=59 // pred_check
          %p1125 = pneg %p263
        $region62: #{mtl2d_deepsvdd_forward.5} parent=59 // pred_check_branch
          %1127 = sbr.rel (%p1125) target = $region64
        $region63: #{mtl2d_deepsvdd_forward.5} parent=59 // pred_region
          %1129 = vsyncadd %s1113, 0
          %s1130 = smul.addr %s30, 2
          %s1131 = smul.addr %s1130, 8
          %s1132 = scalar_lea.hbm %s10, %s1131
          %s1133 = sshll.u32 %s1116, 4
          %s1134 = int_to_ptr.vmem [resolvable:$true] %s1133
          %s1135 = sshll.u32 %s1132, 4
          %s1136 = int_to_ptr.hbm [resolvable:$true] %s1135
          %1141 = dma.vmem_to_hbm [thread:$0]  %s1134, 256, %s1136, %s1113, 128, 128, 8
        $region64: #{mtl2d_deepsvdd_forward.5} parent=59 // pred_fallthru
          _
        // Predicated region
        $region65: #{mtl2d_deepsvdd_forward.5} parent=59 // pred_check
          %p1142 = pneg %p289
        $region66: #{mtl2d_deepsvdd_forward.5} parent=59 // pred_check_branch
          %1144 = sbr.rel (%p1142) target = $region68
        $region67: #{mtl2d_deepsvdd_forward.5} parent=59 // pred_region
          %1146 = vsyncadd %s1118, 0
          %s1147 = scalar_lea.hbm %s11, %s30
          %s1149 = sshll.u32 %s1120, 4
          %s1150 = int_to_ptr.vmem [resolvable:$true] %s1149
          %s1151 = sshll.u32 %s1147, 4
          %s1152 = int_to_ptr.hbm [resolvable:$true] %s1151
          %1154 = dma.vmem_to_hbm [thread:$0]  %s1150, 16, %s1152, %s1118
        $region68: #{mtl2d_deepsvdd_forward.5} parent=59 // pred_fallthru
          _
        // Predicated region
        $region69: #{mtl2d_deepsvdd_forward.5} parent=59 // pred_check
          %p1155 = pneg %p315
        $region70: #{mtl2d_deepsvdd_forward.5} parent=59 // pred_check_branch
          %1157 = sbr.rel (%p1155) target = $region72
        $region71: #{mtl2d_deepsvdd_forward.5} parent=59 // pred_region
          %1159 = vsyncadd %s1122, 0
          %s1160 = scalar_lea.hbm %s12, %s30
          %s1162 = sshll.u32 %s1124, 4
          %s1163 = int_to_ptr.vmem [resolvable:$true] %s1162
          %s1164 = sshll.u32 %s1160, 4
          %s1165 = int_to_ptr.hbm [resolvable:$true] %s1164
          %1167 = dma.vmem_to_hbm [thread:$0]  %s1163, 16, %s1165, %s1122
        $region72: #{mtl2d_deepsvdd_forward.5} parent=59 // pred_fallthru
          _
      $region60: #{mtl2d_deepsvdd_forward.5} parent=5 // pred_fallthru
        _
      %p1168 = scmp.le.s32.totalorder 2, %s25
      // Predicated region
      $region73: #{mtl2d_deepsvdd_forward.5} parent=5 // pred_check
        %p1169 = pneg %p1168
      $region74: #{mtl2d_deepsvdd_forward.5} parent=5 // pred_check_branch
        %1171 = sbr.rel (%p1169) target = $region76
      $region75: #{mtl2d_deepsvdd_forward.5} parent=5 // pred_region
        %s1172 = ssub.s32 %s25, 2
        // Predicated region
        $region77: #{mtl2d_deepsvdd_forward.5} parent=75 // pred_check
          %p1173 = pneg %p269
        $region78: #{mtl2d_deepsvdd_forward.5} parent=75 // pred_check_branch
          %1175 = sbr.rel (%p1173) target = $region80
        $region79: #{mtl2d_deepsvdd_forward.5} parent=75 // pred_region
          %s1176 = sand.u32 %s254, 1
          %s1177 = scalar_lea.sflag [#allocation3], %s1176
          %s1178 = sand.u32 %s254, 1
          %s1179 = smul.addr %s1178, 16
          %s1180 = scalar_lea.vmem [#allocation2], %s1179
          %1182 = dma.done %s1177, 256
        $region80: #{mtl2d_deepsvdd_forward.5} parent=75 // pred_fallthru
          _
        // Predicated region
        $region81: #{mtl2d_deepsvdd_forward.5} parent=75 // pred_check
          %p1183 = pneg %p295
        $region82: #{mtl2d_deepsvdd_forward.5} parent=75 // pred_check_branch
          %1185 = sbr.rel (%p1183) target = $region84
        $region83: #{mtl2d_deepsvdd_forward.5} parent=75 // pred_region
          %s1186 = sand.u32 %s31, 1
          %s1187 = scalar_lea.sflag [#allocation5], %s1186
          %s1188 = sand.u32 %s280, 1
          %s1189 = scalar_lea.vmem [#allocation4], %s1188
          %1191 = dma.done %s1187, 16
        $region84: #{mtl2d_deepsvdd_forward.5} parent=75 // pred_fallthru
          _
        // Predicated region
        $region85: #{mtl2d_deepsvdd_forward.5} parent=75 // pred_check
          %p1192 = pneg %p321
        $region86: #{mtl2d_deepsvdd_forward.5} parent=75 // pred_check_branch
          %1194 = sbr.rel (%p1192) target = $region88
        $region87: #{mtl2d_deepsvdd_forward.5} parent=75 // pred_region
          %s1195 = sand.u32 %s31, 1
          %s1196 = scalar_lea.sflag [#allocation5], %s1195
          %s1197 = sand.u32 %s306, 1
          %s1198 = scalar_lea.vmem [#allocation6], %s1197
          %1200 = dma.done %s1196, 16
        $region88: #{mtl2d_deepsvdd_forward.5} parent=75 // pred_fallthru
          _
      $region76: #{mtl2d_deepsvdd_forward.5} parent=5 // pred_fallthru
        _
    $region6: #{mtl2d_deepsvdd_forward.5} parent=1 // loop_footer
      %s29 = sadd.s32 1, %s25
    $region7: #{mtl2d_deepsvdd_forward.5} parent=1 // loop_footer_branch
      %24 = sbr.rel target = $region3
    $region8: #{mtl2d_deepsvdd_forward.5} parent=1 // loop_exit
      _
    %1201 = vsyncpa [#allocation3], 1
    %s1202 = scalar_lea.sflag [#allocation3], 1
    %1203 = vsyncpa %s1202, 1
    %1204 = vsyncpa [#allocation5], 1
    %s1205 = scalar_lea.sflag [#allocation5], 1
    %1206 = vsyncpa %s1205, 1

</llo_original>
